<compile_context>
chip_gen: v7x
topology: tpu7x:2x2x1
jax: 0.10.0
libtpu: 0.0.40
codegen_flags: <defaults>
</compile_context>

<pallas_src>
import functools

import numpy as np
import jax
import jax.numpy as jnp
from jax.experimental import pallas as pl
from jax.experimental.pallas import tpu as pltpu

# ------------------------- small configuration ------------------------------
# (scaled-down but structurally consistent with CompNet's defaults; EMBED_DIM=1
#  with is_dual_rnn=False is a legal TCNN configuration and avoids InterIntraRNN)
WIN_SIZE = 32
WIN_SHIFT = 16
FFT_NUM = 32
FREQ_DIM = FFT_NUM // 2 + 1        # 17
EMBED_DIM = 1
D_FEAT = 32
CD1 = 8
KD1 = 5
GROUP_NUM = 1
DILATIONS = (1, 2)
NDIL = len(DILATIONS)
GATE_W = 128                       # lane-aligned pitch for packed GRU gates

EPS = float(np.finfo(np.float32).eps)   # == torch.finfo(torch.float32).eps


def _round_up(x, m):
    return (x + m - 1) // m * m


def _max_shift_rows(B):
    return (KD1 - 1) * max(DILATIONS) * B


# ============================ in-kernel helpers ==============================
def _dot(a, b):
    return jnp.dot(a, b, preferred_element_type=jnp.float32)


def _prelu(x, alpha=0.25):
    # TODO(synk): PReLU is learnable per-channel in PyTorch; fixed default
    # init value 0.25 is used as the stand-in.
    return jnp.where(x >= 0, x, alpha * x)


def _chan_ln(x, gamma, beta, eps=1e-5):
    # TODO(synk): exact 'iLN' norm definition not provided; per-frame channel
    # LayerNorm is used as the causal-safe stand-in.
    mean = jnp.mean(x, axis=-1, keepdims=True)
    cen = x - mean
    var = jnp.mean(cen * cen, axis=-1, keepdims=True)
    return gamma * cen * jax.lax.rsqrt(var + eps) + beta


def _tcm_block(x, tcm, blk, dil, B, R, shift_buf):
    """One dilated causal TCM residual block.  x: (R, D_FEAT), R = T*B (T-major).

    The causal shift of s frames == s*B rows.  Shifted taps are realised by
    writing y into a zero-headed VMEM scratch and reading KD1 row-offset
    windows (replaces the old (T,T) shift-matrix matmuls); the KD1 taps are
    lane-concatenated and consumed by a single fused matmul.
    """
    # TODO(synk): TCMList internals not provided; standard dilated TCM residual
    # block (1x1 down, causal dilated conv, 1x1 up, PReLU + norm) is used.
    ms = shift_buf.shape[0] - R
    y = _prelu(_dot(x, tcm['w_in'][blk]) + tcm['b_in'][blk])      # (R, CD1)
    y = _chan_ln(y, tcm['g1'][blk], tcm['be1'][blk])

    shift_buf[ms:ms + R, :] = y
    taps = []
    for j in range(KD1):
        s = (KD1 - 1 - j) * dil * B                               # row shift
        taps.append(shift_buf[ms - s:ms - s + R, :])              # causal view
    z = jnp.concatenate(taps, axis=-1)                            # (R, KD1*CD1)

    acc = _prelu(_dot(z, tcm['w_dil'][blk]) + tcm['b_dil'][blk])  # one matmul
    y2 = _chan_ln(acc, tcm['g2'][blk], tcm['be2'][blk])
    return x + _dot(y2, tcm['w_out'][blk]) + tcm['b_out'][blk]    # (R, D_FEAT)


# ======================= fused pre-separate (TCNN) kernel ====================
def _pre_kernel(B, R,
                frames_ref, enc_w_ref, enc_b_ref,
                tw_in, tb_in, tg1, tbe1, tw_dil, tb_dil, tg2, tbe2,
                tw_out, tb_out, dec_w_ref, dec_b_ref,
                out_ref, shift_buf):
    # TODO(synk): FrameUNetEncoder/FrameUNetDecoder definitions not provided;
    # dense projections producing the documented shapes stand in for them.
    tcm = dict(w_in=tw_in, b_in=tb_in, g1=tg1, be1=tbe1, w_dil=tw_dil,
               b_dil=tb_dil, g2=tg2, be2=tbe2, w_out=tw_out, b_out=tb_out)
    ms = shift_buf.shape[0] - R
    shift_buf[0:ms, :] = jnp.zeros((ms, CD1), jnp.float32)        # causal pad

    x = frames_ref[...]                                           # (R, K)
    cur = _prelu(_dot(x, enc_w_ref[...]) + enc_b_ref[...])        # (R, D_FEAT)
    acc = jnp.zeros_like(cur)
    blk = 0
    for _ in range(GROUP_NUM):
        for d in DILATIONS:
            cur = _tcm_block(cur, tcm, blk, d, B, R, shift_buf)
            blk += 1
        acc = acc + cur
    out_ref[...] = _dot(acc, dec_w_ref[...]) + dec_b_ref[...]     # (R, K)


def pre_separate_fused(frames_tb, p, B):
    R, _ = frames_tb.shape
    tcm = p['tcm']
    args = (frames_tb, p['enc_w'], p['enc_b'],
            tcm['w_in'], tcm['b_in'], tcm['g1'], tcm['be1'],
            tcm['w_dil'], tcm['b_dil'], tcm['g2'], tcm['be2'],
            tcm['w_out'], tcm['b_out'],
            p['dec_w'], p['dec_b'])
    vmem = pl.BlockSpec(memory_space=pltpu.MemorySpace.VMEM)
    return pl.pallas_call(
        functools.partial(_pre_kernel, B, R),
        out_shape=jax.ShapeDtypeStruct((R, EMBED_DIM * WIN_SIZE), jnp.float32),
        in_specs=[vmem] * len(args),
        out_specs=vmem,
        scratch_shapes=[pltpu.VMEM((_max_shift_rows(B) + R, CD1), jnp.float32)],
        compiler_params=pltpu.CompilerParams(vmem_limit_bytes=32 * 1024 * 1024),
    )(*args)


# ============ fused post-processing kernel (incl. dual GRU + decode) =========
def _post_kernel(B, T, R,
                 mixf_ref, estf_ref, dftcs_ref,
                 encw_ref, encb_ref,
                 ginw_ref, ginb_ref, rinw_ref, rinb_ref,
                 tw_in, tb_in, tg1, tbe1, tw_dil, tb_dil, tg2, tbe2,
                 tw_out, tb_out,
                 goutw_ref, goutb_ref, routw_ref, routb_ref,
                 wx_ref, bx_ref, wh_ref, bh_ref, wdec_ref,
                 emag_ref, dec_ref, shift_buf, hall_ref):
    F = FREQ_DIM
    tcm = dict(w_in=tw_in, b_in=tb_in, g1=tg1, be1=tbe1, w_dil=tw_dil,
               b_dil=tb_dil, g2=tg2, be2=tbe2, w_out=tw_out, b_out=tb_out)
    ms = shift_buf.shape[0] - R
    shift_buf[0:ms, :] = jnp.zeros((ms, CD1), jnp.float32)        # causal pad

    # ---- STFT of mix / estimate via fused windowed-DFT matmul ([cos|-sin]) --
    mix_ri = _dot(mixf_ref[...], dftcs_ref[...])                  # (R, 2F)
    est_ri = _dot(estf_ref[...], dftcs_ref[...])
    mr, mi = mix_ri[:, :F], mix_ri[:, F:2 * F]
    er, ei = est_ri[:, :F], est_ri[:, F:2 * F]

    # ---- mag / phase composition (mu-compression p = 0.5) ----
    s_e = er * er + ei * ei
    s_m = mr * mr + mi * mi
    inv_e = jax.lax.rsqrt(s_e + 1e-24)
    inv_m = jax.lax.rsqrt(s_m + 1e-24)
    e_abs = s_e * inv_e
    m_abs = s_m * inv_m
    e_mag = jnp.sqrt(e_abs + EPS)
    m_mag = jnp.sqrt(m_abs + EPS)
    # TODO(synk): cos/sin of atan2 computed as re/|z|, im/|z|; |z|==0 mapped to
    # cos=1, sin=0 to match torch.atan2(0, 0) = 0.
    cos_e = jnp.where(e_abs > 0.0, er * inv_e, 1.0)
    sin_e = jnp.where(e_abs > 0.0, ei * inv_e, 0.0)
    cos_m = jnp.where(m_abs > 0.0, mr * inv_m, 1.0)
    sin_m = jnp.where(m_abs > 0.0, mi * inv_m, 0.0)
    cp0 = m_mag * cos_e                      # mix_mag * cos(esti_phase)
    cp1 = m_mag * sin_e
    cm0 = e_mag * cos_m                      # esti_mag * cos(mix_phase)
    cm1 = e_mag * sin_m

    # lane-dense e_mag store (padded to 128 lanes; pad lanes sliced off in XLA)
    emag_ref[...] = jnp.concatenate(
        [e_mag, jnp.zeros((R, GATE_W - F), jnp.float32)], axis=-1)

    # ---- encoder stand-in over channels [cm0, cm1, cp0, cp1] (one matmul) ---
    # TODO(synk): FreqU2NetEncoder definition not provided; a dense projection
    # (4F -> d_feat) stands in for it.
    chan = jnp.concatenate([cm0, cm1, cp0, cp1], axis=-1)         # (R, 4F)
    en = _prelu(_dot(chan, encw_ref[...]) + encb_ref[...])        # (R, D_FEAT)

    # gain branch input (note: torch.norm(comp_mag, dim=1) == e_mag exactly)
    gain_x = _dot(jnp.concatenate([en, e_mag], axis=-1),
                  ginw_ref[...]) + ginb_ref[...]
    resi_x = _dot(jnp.concatenate([en, cp0, cp1], axis=-1),
                  rinw_ref[...]) + rinb_ref[...]

    # ---- TCM stacks (blocks 0..nb-1 gain, nb..2nb-1 resi) ----
    blk = 0
    for _ in range(GROUP_NUM):
        for d in DILATIONS:
            gain_x = _tcm_block(gain_x, tcm, blk, d, B, R, shift_buf)
            blk += 1
    for _ in range(GROUP_NUM):
        for d in DILATIONS:
            resi_x = _tcm_block(resi_x, tcm, blk, d, B, R, shift_buf)
            blk += 1

    gain = jax.nn.sigmoid(_dot(gain_x, goutw_ref[...]) + goutb_ref[...])
    resi = _dot(resi_x, routw_ref[...]) + routb_ref[...]          # (R, 2F)
    resi_r, resi_i = resi[:, :F], resi[:, F:2 * F]

    cp0n = cp0 * gain
    cp1n = cp1 * gain
    cm0n = cm0 + resi_r
    cm1n = cm1 + resi_i

    # ---- combined (real+imag) GRU input projection, gate-packed to 3*128 ----
    chan_new = jnp.concatenate([cp0n, cm0n, cp1n, cm1n], axis=-1)  # (R, 4F)
    xproj = _dot(chan_new, wx_ref[...]) + bx_ref[...]              # (R, 384)

    # ---- fused real+imag GRU over T steps (batch folded into rows) ----
    hall_ref[...] = jnp.zeros((R, GATE_W), jnp.float32)
    wh = wh_ref[...]
    bh = bh_ref[...]
    h = jnp.zeros((B, GATE_W), jnp.float32)        # [h_real | h_imag | zeros]
    for t in range(T):                             # static unroll (T ~ 11)
        xt = xproj[t * B:(t + 1) * B, :]
        hh = _dot(h, wh) + bh                      # one fused recurrent dot
        r = jax.nn.sigmoid(xt[:, 0:GATE_W] + hh[:, 0:GATE_W])
        z = jax.nn.sigmoid(xt[:, GATE_W:2 * GATE_W] + hh[:, GATE_W:2 * GATE_W])
        n = jnp.tanh(xt[:, 2 * GATE_W:3 * GATE_W]
                     + r * hh[:, 2 * GATE_W:3 * GATE_W])
        h = (1.0 - z) * n + z * h
        hall_ref[t * B:(t + 1) * B, :] = h

    # single fused bias-free decode (block-diag real/imag) + one dense store
    dec_ref[...] = _dot(hall_ref[...], wdec_ref[...])


def post_front_fused(mixf_tb, estf_tb, dft_cs, p, B, T):
    R, _ = mixf_tb.shape
    tcm = p['tcm']
    args = (mixf_tb, estf_tb, dft_cs,
            p['enc_w'], p['enc_b'],
            p['gin_w'], p['gin_b'], p['rin_w'], p['rin_b'],
            tcm['w_in'], tcm['b_in'], tcm['g1'], tcm['be1'],
            tcm['w_dil'], tcm['b_dil'], tcm['g2'], tcm['be2'],
            tcm['w_out'], tcm['b_out'],
            p['gout_w'], p['gout_b'], p['rout_w'], p['rout_b'],
            p['wx'], p['bx'], p['gru_wh'], p['gru_bh'], p['gru_wdec'])
    vmem = pl.BlockSpec(memory_space=pltpu.MemorySpace.VMEM)
    out_shape = (jax.ShapeDtypeStruct((R, GATE_W), jnp.float32),   # e_mag (padded)
                 jax.ShapeDtypeStruct((R, GATE_W), jnp.float32))   # decoded GRU
    return pl.pallas_call(
        functools.partial(_post_kernel, B, T, R),
        out_shape=out_shape,
        in_specs=[vmem] * len(args),
        out_specs=(vmem, vmem),
        scratch_shapes=[pltpu.VMEM((_max_shift_rows(B) + R, CD1), jnp.float32),
                        pltpu.VMEM((R, GATE_W), jnp.float32)],
        compiler_params=pltpu.CompilerParams(vmem_limit_bytes=32 * 1024 * 1024),
    )(*args)


# ============================== glue (XLA side) ==============================
def make_dft():
    n = np.arange(FFT_NUM)
    f = np.arange(FREQ_DIM)
    win = np.sqrt(0.5 * (1.0 - np.cos(2.0 * np.pi * n / WIN_SIZE)))  # sqrt(hann)
    ang = 2.0 * np.pi * np.outer(n, f) / FFT_NUM
    dft_c = (win[:, None] * np.cos(ang)).astype(np.float32)
    dft_s = (-win[:, None] * np.sin(ang)).astype(np.float32)
    return jnp.asarray(np.concatenate([dft_c, dft_s], axis=1))      # (N, 2F)


def enframe(x):
    # TODO(synk): TorchSignalToFrames source not provided; plain hop framing
    # (exact for (T-1)*shift + size == L) as a single gather.
    B, L = x.shape
    T = (L - WIN_SIZE) // WIN_SHIFT + 1
    idx = np.arange(T)[:, None] * WIN_SHIFT + np.arange(WIN_SIZE)[None, :]
    return x[:, idx]                                       # (B, T, K)


def ola(frames, L):
    # TODO(synk): TorchOLA source not provided; overlap-add normalised by the
    # (constant, precomputed) overlap count.
    B, T, K = frames.shape
    idx = np.arange(T)[:, None] * WIN_SHIFT + np.arange(K)[None, :]
    cnt = np.zeros((L,), np.float32)
    np.add.at(cnt, idx.reshape(-1), 1.0)
    sig = jnp.zeros((B, L), jnp.float32).at[:, idx].add(frames)
    return sig * jnp.asarray(1.0 / cnt, jnp.float32)


def stft_frames(x):
    """torch.stft(center=True, reflect) framing as one pad + one gather."""
    B, L = x.shape
    pad = FFT_NUM // 2
    xp = jnp.pad(x, ((0, 0), (pad, pad)), mode='reflect')
    T = L // WIN_SHIFT + 1
    idx = np.arange(T)[:, None] * WIN_SHIFT + np.arange(FFT_NUM)[None, :]
    return xp[:, idx]                                      # (B, T, N)


def _fold_tb(x_btc, R):
    """(B, T, C) -> (R, C) in T-major (time outer, batch inner) row order."""
    B, T, C = x_btc.shape
    x = jnp.transpose(x_btc, (1, 0, 2)).reshape(T * B, C)
    return jnp.pad(x, ((0, R - T * B), (0, 0)))


def _unfold_tb(x_rc, B, T):
    """(R, C) T-major -> (B, T, C), dropping padded rows."""
    C = x_rc.shape[-1]
    return jnp.transpose(x_rc[:T * B].reshape(T, B, C), (1, 0, 2))


# ============================== full model ===================================
def compnet_forward(inpt, params):
    B, L = inpt.shape
    F = FREQ_DIM

    # -------- pre-separation branch (TCNN) --------
    frames = enframe(inpt)                                  # (B, T_fr, K)
    T_fr = frames.shape[1]
    R_fr = _round_up(T_fr * B, 8)
    esti_tb = pre_separate_fused(_fold_tb(frames, R_fr), params['pre'], B)
    esti_x = _unfold_tb(esti_tb, B, T_fr)                   # (B, T_fr, K)
    esti_wav = ola(esti_x, L)                               # (B, L)

    # -------- post-processing branch (STFT + collaborative post + GRUs) -----
    mixf = stft_frames(inpt)                                # (B, T, N)
    estf = stft_frames(esti_wav)
    T = mixf.shape[1]
    R = _round_up(T * B, 8)
    emag_p, dec_p = post_front_fused(_fold_tb(mixf, R), _fold_tb(estf, R),
                                     params['dft_cs'], params['post'], B, T)

    esti_mag = _unfold_tb(emag_p[:, :F], B, T)              # (B, T, F)
    real_o = _unfold_tb(dec_p[:, :F], B, T)
    imag_o = _unfold_tb(dec_p[:, F:2 * F], B, T)
    post_x = jnp.stack((real_o, imag_o), axis=1)            # (B, 2, T, F)
    return (esti_wav, esti_mag), post_x


# ============================ parameter init =================================
def _init(key, shape, scale=0.1):
    return scale * jax.random.normal(key, shape, jnp.float32)


def make_tcm_stack(key, nb):
    k = jax.random.split(key, 3)
    return dict(
        w_in=_init(k[0], (nb, D_FEAT, CD1)),
        b_in=jnp.zeros((nb, 1, CD1), jnp.float32),
        g1=jnp.ones((nb, 1, CD1), jnp.float32),
        be1=jnp.zeros((nb, 1, CD1), jnp.float32),
        # fused tap weights: KD1 taps stacked along K -> one matmul per block
        w_dil=_init(k[1], (nb, KD1 * CD1, CD1)),
        b_dil=jnp.zeros((nb, 1, CD1), jnp.float32),
        g2=jnp.ones((nb, 1, CD1), jnp.float32),
        be2=jnp.zeros((nb, 1, CD1), jnp.float32),
        w_out=_init(k[2], (nb, CD1, D_FEAT)),
        b_out=jnp.zeros((nb, 1, D_FEAT), jnp.float32),
    )


def _pack_gates(a_real, a_imag):
    """(.., 3H) gate-major [r|z|n] pair -> (.., 3*GATE_W) padded lane layout."""
    H = FREQ_DIM
    lead = a_real.shape[:-1]
    out = jnp.zeros(lead + (3 * GATE_W,), jnp.float32)
    for g in range(3):
        out = out.at[..., g * GATE_W:g * GATE_W + H].set(
            a_real[..., g * H:(g + 1) * H])
        out = out.at[..., g * GATE_W + H:g * GATE_W + 2 * H].set(
            a_imag[..., g * H:(g + 1) * H])
    return out


def make_gru_params(key):
    H = FREQ_DIM
    k = jax.random.split(key, 10)
    w_ih_r = _init(k[0], (2 * H, 3 * H)); w_ih_i = _init(k[1], (2 * H, 3 * H))
    w_hh_r = _init(k[2], (H, 3 * H));     w_hh_i = _init(k[3], (H, 3 * H))
    b_ih_r = _init(k[4], (1, 3 * H));     b_ih_i = _init(k[5], (1, 3 * H))
    b_hh_r = _init(k[6], (1, 3 * H));     b_hh_i = _init(k[7], (1, 3 * H))
    dec_r = _init(k[8], (H, H));          dec_i = _init(k[9], (H, H))

    # input rows: [cp0n(17) | cm0n(17)] feed the real gates,
    #             [cp1n(17) | cm1n(17)] feed the imag gates.
    wx = jnp.concatenate(
        [_pack_gates(w_ih_r, jnp.zeros_like(w_ih_r)),
         _pack_gates(jnp.zeros_like(w_ih_i), w_ih_i)], axis=0)   # (4F, 384)
    bx = _pack_gates(b_ih_r, b_ih_i)                             # (1, 384)

    wh = jnp.zeros((GATE_W, 3 * GATE_W), jnp.float32)
    wh = wh.at[0:H, :].set(_pack_gates(w_hh_r, jnp.zeros_like(w_hh_r)))
    wh = wh.at[H:2 * H, :].set(_pack_gates(jnp.zeros_like(w_hh_i), w_hh_i))
    bh = _pack_gates(b_hh_r, b_hh_i)                             # (1, 384)

    wdec = jnp.zeros((GATE_W, GATE_W), jnp.float32)              # bias-free Linear
    wdec = wdec.at[0:H, 0:H].set(dec_r)
    wdec = wdec.at[H:2 * H, H:2 * H].set(dec_i)
    return dict(wx=wx, bx=bx, gru_wh=wh, gru_bh=bh, gru_wdec=wdec)


def init_params(key):
    F = FREQ_DIM
    ks = jax.random.split(key, 12)
    nb = GROUP_NUM * NDIL
    pre = dict(
        enc_w=_init(ks[0], (WIN_SIZE, D_FEAT)),
        enc_b=jnp.zeros((1, D_FEAT), jnp.float32),
        tcm=make_tcm_stack(ks[1], nb),
        dec_w=_init(ks[2], (D_FEAT, EMBED_DIM * WIN_SIZE)),
        dec_b=jnp.zeros((1, EMBED_DIM * WIN_SIZE), jnp.float32),
    )
    post = dict(
        enc_w=_init(ks[3], (4 * F, D_FEAT)),            # [cm0|cm1|cp0|cp1] -> d_feat
        enc_b=jnp.zeros((1, D_FEAT), jnp.float32),
        gin_w=_init(ks[4], (D_FEAT + F, D_FEAT)),       # [en|mag] -> d_feat
        gin_b=jnp.zeros((1, D_FEAT), jnp.float32),
        rin_w=_init(ks[6], (D_FEAT + 2 * F, D_FEAT)),   # [en|cp0|cp1] -> d_feat
        rin_b=jnp.zeros((1, D_FEAT), jnp.float32),
        tcm=make_tcm_stack(ks[8], 2 * nb),
        gout_w=_init(ks[9], (D_FEAT, F)),
        gout_b=jnp.zeros((1, F), jnp.float32),
        rout_w=_init(ks[10], (D_FEAT, 2 * F)),          # fused real|imag resi conv
        rout_b=jnp.zeros((1, 2 * F), jnp.float32),
    )
    post.update(make_gru_params(ks[11]))
    return dict(pre=pre, post=post, dft_cs=make_dft())


# ================================= main ======================================
if __name__ == "__main__":
    B = 2
    L = 160   # => 9 enframe frames, 11 STFT frames, OLA reproduces length L
    key = jax.random.PRNGKey(0)
    kx, kp = jax.random.split(key)
    x = jax.random.normal(kx, (B, L), jnp.float32)
    params = init_params(kp)

    fwd = jax.jit(compnet_forward)
    (esti_wav, esti_mag), post_x = fwd(x, params)
    jax.block_until_ready((esti_wav, esti_mag, post_x))

    assert esti_wav.shape == (B, L)
    assert esti_mag.shape == (B, L // WIN_SHIFT + 1, FREQ_DIM)
    assert post_x.shape == (B, 2, L // WIN_SHIFT + 1, FREQ_DIM)
    assert bool(jnp.all(jnp.isfinite(esti_wav)))
    assert bool(jnp.all(jnp.isfinite(esti_mag)))
    assert bool(jnp.all(jnp.isfinite(post_x)))
    print("KERNEL_OK")
</pallas_src>

<mosaic_0001>
module attributes {stable_mosaic.version = 11 : i64} {
  func.func @_pre_kernel(%arg0: memref<24x32xf32, #tpu.memory_space<vmem>>, %arg1: memref<32x32xf32, #tpu.memory_space<vmem>>, %arg2: memref<1x32xf32, #tpu.memory_space<vmem>>, %arg3: memref<2x32x8xf32, #tpu.memory_space<vmem>>, %arg4: memref<2x1x8xf32, #tpu.memory_space<vmem>>, %arg5: memref<2x1x8xf32, #tpu.memory_space<vmem>>, %arg6: memref<2x1x8xf32, #tpu.memory_space<vmem>>, %arg7: memref<2x40x8xf32, #tpu.memory_space<vmem>>, %arg8: memref<2x1x8xf32, #tpu.memory_space<vmem>>, %arg9: memref<2x1x8xf32, #tpu.memory_space<vmem>>, %arg10: memref<2x1x8xf32, #tpu.memory_space<vmem>>, %arg11: memref<2x8x32xf32, #tpu.memory_space<vmem>>, %arg12: memref<2x1x32xf32, #tpu.memory_space<vmem>>, %arg13: memref<32x32xf32, #tpu.memory_space<vmem>>, %arg14: memref<1x32xf32, #tpu.memory_space<vmem>>, %arg15: memref<24x32xf32, #tpu.memory_space<vmem>>, %arg16: memref<40x8xf32, #tpu.memory_space<vmem>>) attributes {dimension_semantics = [], scalar_prefetch = 0 : i64, scratch_operands = 1 : i64, tpu.core_type = #tpu.core_type<tc>} {
    %cst = arith.constant 0.000000e+00 : f32
    %0 = vector.broadcast %cst : f32 to vector<16x8xf32>
    %c0 = arith.constant 0 : index
    %c0_0 = arith.constant 0 : index
    %1 = vector.load %arg16[%c0, %c0_0] : memref<40x8xf32, #tpu.memory_space<vmem>>, vector<16x8xf32>
    tpu.vector_store %arg16[%c0, %c0_0], %0 {strides = array<i32>} : memref<40x8xf32, #tpu.memory_space<vmem>>, vector<16x8xf32>,
    %c0_1 = arith.constant 0 : index
    %c0_2 = arith.constant 0 : index
    %2 = vector.load %arg0[%c0_1, %c0_2] : memref<24x32xf32, #tpu.memory_space<vmem>>, vector<24x32xf32>
    %c0_3 = arith.constant 0 : index
    %c0_4 = arith.constant 0 : index
    %3 = vector.load %arg1[%c0_3, %c0_4] : memref<32x32xf32, #tpu.memory_space<vmem>>, vector<32x32xf32>
    %cst_5 = arith.constant dense<0.000000e+00> : vector<24x32xf32>
    %4 = tpu.matmul %2, %3, %cst_5 {dimension_numbers = #tpu.dot_dimension_numbers<[1], [0], [0], [1], [0, 0, 1, 1], [], []>} : vector<24x32xf32>, vector<32x32xf32>, vector<24x32xf32> -> vector<24x32xf32>
    %c0_6 = arith.constant 0 : index
    %c0_7 = arith.constant 0 : index
    %5 = vector.load %arg2[%c0_6, %c0_7] : memref<1x32xf32, #tpu.memory_space<vmem>>, vector<1x32xf32>
    %6 = vector.broadcast %5 : vector<1x32xf32> to vector<24x32xf32>
    %7 = arith.addf %4, %6 : vector<24x32xf32>
    %cst_8 = arith.constant 0.000000e+00 : f32
    %8 = vector.broadcast %cst_8 : f32 to vector<24x32xf32>
    %9 = arith.cmpf oge, %7, %8 : vector<24x32xf32>
    %cst_9 = arith.constant 2.500000e-01 : f32
    %10 = vector.broadcast %cst_9 : f32 to vector<24x32xf32>
    %11 = arith.mulf %10, %7 : vector<24x32xf32>
    %12 = arith.select %9, %7, %11 : vector<24x32xi1>, vector<24x32xf32>
    %cst_10 = arith.constant 0.000000e+00 : f32
    %13 = vector.broadcast %cst_10 : f32 to vector<24x32xf32>
    %c0_11 = arith.constant 0 : index
    %c0_12 = arith.constant 0 : index
    %c0_13 = arith.constant 0 : index
    %14 = vector.load %arg3[%c0_11, %c0_12, %c0_13] : memref<2x32x8xf32, #tpu.memory_space<vmem>>, vector<1x32x8xf32>
    %15 = vector.shape_cast %14 : vector<1x32x8xf32> to vector<32x8xf32>
    %cst_14 = arith.constant dense<0.000000e+00> : vector<24x8xf32>
    %16 = tpu.matmul %12, %15, %cst_14 {dimension_numbers = #tpu.dot_dimension_numbers<[1], [0], [0], [1], [0, 0, 1, 1], [], []>} : vector<24x32xf32>, vector<32x8xf32>, vector<24x8xf32> -> vector<24x8xf32>
    %c0_15 = arith.constant 0 : index
    %c0_16 = arith.constant 0 : index
    %c0_17 = arith.constant 0 : index
    %17 = vector.load %arg4[%c0_15, %c0_16, %c0_17] : memref<2x1x8xf32, #tpu.memory_space<vmem>>, vector<1x1x8xf32>
    %18 = vector.shape_cast %17 : vector<1x1x8xf32> to vector<1x8xf32>
    %19 = vector.broadcast %18 : vector<1x8xf32> to vector<24x8xf32>
    %20 = arith.addf %16, %19 : vector<24x8xf32>
    %cst_18 = arith.constant 0.000000e+00 : f32
    %21 = vector.broadcast %cst_18 : f32 to vector<24x8xf32>
    %22 = arith.cmpf oge, %20, %21 : vector<24x8xf32>
    %cst_19 = arith.constant 2.500000e-01 : f32
    %23 = vector.broadcast %cst_19 : f32 to vector<24x8xf32>
    %24 = arith.mulf %23, %20 : vector<24x8xf32>
    %25 = arith.select %22, %20, %24 : vector<24x8xi1>, vector<24x8xf32>
    %c0_20 = arith.constant 0 : index
    %c0_21 = arith.constant 0 : index
    %c0_22 = arith.constant 0 : index
    %26 = vector.load %arg5[%c0_20, %c0_21, %c0_22] : memref<2x1x8xf32, #tpu.memory_space<vmem>>, vector<1x1x8xf32>
    %27 = vector.shape_cast %26 : vector<1x1x8xf32> to vector<1x8xf32>
    %c0_23 = arith.constant 0 : index
    %c0_24 = arith.constant 0 : index
    %c0_25 = arith.constant 0 : index
    %28 = vector.load %arg6[%c0_23, %c0_24, %c0_25] : memref<2x1x8xf32, #tpu.memory_space<vmem>>, vector<1x1x8xf32>
    %29 = vector.shape_cast %28 : vector<1x1x8xf32> to vector<1x8xf32>
    %cst_26 = arith.constant dense<0.000000e+00> : vector<24xf32>
    %30 = vector.multi_reduction <add>, %25, %cst_26 [1] : vector<24x8xf32> to vector<24xf32>
    %31 = vector.shape_cast %30 : vector<24xf32> to vector<24x1xf32>
    %cst_27 = arith.constant 8.000000e+00 : f32
    %32 = vector.broadcast %cst_27 : f32 to vector<24x1xf32>
    %33 = arith.divf %31, %32 : vector<24x1xf32>
    %34 = vector.broadcast %33 : vector<24x1xf32> to vector<24x8xf32>
    %35 = arith.subf %25, %34 : vector<24x8xf32>
    %36 = arith.mulf %35, %35 : vector<24x8xf32>
    %cst_28 = arith.constant dense<0.000000e+00> : vector<24xf32>
    %37 = vector.multi_reduction <add>, %36, %cst_28 [1] : vector<24x8xf32> to vector<24xf32>
    %38 = vector.shape_cast %37 : vector<24xf32> to vector<24x1xf32>
    %cst_29 = arith.constant 8.000000e+00 : f32
    %39 = vector.broadcast %cst_29 : f32 to vector<24x1xf32>
    %40 = arith.divf %38, %39 : vector<24x1xf32>
    %41 = vector.broadcast %27 : vector<1x8xf32> to vector<24x8xf32>
    %42 = arith.mulf %41, %35 : vector<24x8xf32>
    %cst_30 = arith.constant 9.99999974E-6 : f32
    %43 = vector.broadcast %cst_30 : f32 to vector<24x1xf32>
    %44 = arith.addf %40, %43 : vector<24x1xf32>
    %45 = math.rsqrt %44 : vector<24x1xf32>
    %46 = vector.broadcast %45 : vector<24x1xf32> to vector<24x8xf32>
    %47 = arith.mulf %42, %46 : vector<24x8xf32>
    %48 = vector.broadcast %29 : vector<1x8xf32> to vector<24x8xf32>
    %49 = arith.addf %47, %48 : vector<24x8xf32>
    %c16 = arith.constant 16 : index
    %c0_31 = arith.constant 0 : index
    %50 = vector.load %arg16[%c16, %c0_31] : memref<40x8xf32, #tpu.memory_space<vmem>>, vector<24x8xf32>
    tpu.vector_store %arg16[%c16, %c0_31], %49 {strides = array<i32>} : memref<40x8xf32, #tpu.memory_space<vmem>>, vector<24x8xf32>,
    %c8 = arith.constant 8 : index
    %c0_32 = arith.constant 0 : index
    %51 = vector.load %arg16[%c8, %c0_32] : memref<40x8xf32, #tpu.memory_space<vmem>>, vector<24x8xf32>
    %c10 = arith.constant 10 : index
    %c0_33 = arith.constant 0 : index
    %52 = vector.load %arg16[%c10, %c0_33] : memref<40x8xf32, #tpu.memory_space<vmem>>, vector<24x8xf32>
    %c12 = arith.constant 12 : index
    %c0_34 = arith.constant 0 : index
    %53 = vector.load %arg16[%c12, %c0_34] : memref<40x8xf32, #tpu.memory_space<vmem>>, vector<24x8xf32>
    %c14 = arith.constant 14 : index
    %c0_35 = arith.constant 0 : index
    %54 = vector.load %arg16[%c14, %c0_35] : memref<40x8xf32, #tpu.memory_space<vmem>>, vector<24x8xf32>
    %c16_36 = arith.constant 16 : index
    %c0_37 = arith.constant 0 : index
    %55 = vector.load %arg16[%c16_36, %c0_37] : memref<40x8xf32, #tpu.memory_space<vmem>>, vector<24x8xf32>
    %56 = tpu.concatenate %51, %52, %53, %54, %55 in 1 : vector<24x8xf32>, vector<24x8xf32>, vector<24x8xf32>, vector<24x8xf32>, vector<24x8xf32> -> vector<24x40xf32>
    %c0_38 = arith.constant 0 : index
    %c0_39 = arith.constant 0 : index
    %c0_40 = arith.constant 0 : index
    %57 = vector.load %arg7[%c0_38, %c0_39, %c0_40] : memref<2x40x8xf32, #tpu.memory_space<vmem>>, vector<1x40x8xf32>
    %58 = vector.shape_cast %57 : vector<1x40x8xf32> to vector<40x8xf32>
    %cst_41 = arith.constant dense<0.000000e+00> : vector<24x8xf32>
    %59 = tpu.matmul %56, %58, %cst_41 {dimension_numbers = #tpu.dot_dimension_numbers<[1], [0], [0], [1], [0, 0, 1, 1], [], []>} : vector<24x40xf32>, vector<40x8xf32>, vector<24x8xf32> -> vector<24x8xf32>
    %c0_42 = arith.constant 0 : index
    %c0_43 = arith.constant 0 : index
    %c0_44 = arith.constant 0 : index
    %60 = vector.load %arg8[%c0_42, %c0_43, %c0_44] : memref<2x1x8xf32, #tpu.memory_space<vmem>>, vector<1x1x8xf32>
    %61 = vector.shape_cast %60 : vector<1x1x8xf32> to vector<1x8xf32>
    %62 = vector.broadcast %61 : vector<1x8xf32> to vector<24x8xf32>
    %63 = arith.addf %59, %62 : vector<24x8xf32>
    %cst_45 = arith.constant 0.000000e+00 : f32
    %64 = vector.broadcast %cst_45 : f32 to vector<24x8xf32>
    %65 = arith.cmpf oge, %63, %64 : vector<24x8xf32>
    %cst_46 = arith.constant 2.500000e-01 : f32
    %66 = vector.broadcast %cst_46 : f32 to vector<24x8xf32>
    %67 = arith.mulf %66, %63 : vector<24x8xf32>
    %68 = arith.select %65, %63, %67 : vector<24x8xi1>, vector<24x8xf32>
    %c0_47 = arith.constant 0 : index
    %c0_48 = arith.constant 0 : index
    %c0_49 = arith.constant 0 : index
    %69 = vector.load %arg9[%c0_47, %c0_48, %c0_49] : memref<2x1x8xf32, #tpu.memory_space<vmem>>, vector<1x1x8xf32>
    %70 = vector.shape_cast %69 : vector<1x1x8xf32> to vector<1x8xf32>
    %c0_50 = arith.constant 0 : index
    %c0_51 = arith.constant 0 : index
    %c0_52 = arith.constant 0 : index
    %71 = vector.load %arg10[%c0_50, %c0_51, %c0_52] : memref<2x1x8xf32, #tpu.memory_space<vmem>>, vector<1x1x8xf32>
    %72 = vector.shape_cast %71 : vector<1x1x8xf32> to vector<1x8xf32>
    %cst_53 = arith.constant dense<0.000000e+00> : vector<24xf32>
    %73 = vector.multi_reduction <add>, %68, %cst_53 [1] : vector<24x8xf32> to vector<24xf32>
    %74 = vector.shape_cast %73 : vector<24xf32> to vector<24x1xf32>
    %cst_54 = arith.constant 8.000000e+00 : f32
    %75 = vector.broadcast %cst_54 : f32 to vector<24x1xf32>
    %76 = arith.divf %74, %75 : vector<24x1xf32>
    %77 = vector.broadcast %76 : vector<24x1xf32> to vector<24x8xf32>
    %78 = arith.subf %68, %77 : vector<24x8xf32>
    %79 = arith.mulf %78, %78 : vector<24x8xf32>
    %cst_55 = arith.constant dense<0.000000e+00> : vector<24xf32>
    %80 = vector.multi_reduction <add>, %79, %cst_55 [1] : vector<24x8xf32> to vector<24xf32>
    %81 = vector.shape_cast %80 : vector<24xf32> to vector<24x1xf32>
    %cst_56 = arith.constant 8.000000e+00 : f32
    %82 = vector.broadcast %cst_56 : f32 to vector<24x1xf32>
    %83 = arith.divf %81, %82 : vector<24x1xf32>
    %84 = vector.broadcast %70 : vector<1x8xf32> to vector<24x8xf32>
    %85 = arith.mulf %84, %78 : vector<24x8xf32>
    %cst_57 = arith.constant 9.99999974E-6 : f32
    %86 = vector.broadcast %cst_57 : f32 to vector<24x1xf32>
    %87 = arith.addf %83, %86 : vector<24x1xf32>
    %88 = math.rsqrt %87 : vector<24x1xf32>
    %89 = vector.broadcast %88 : vector<24x1xf32> to vector<24x8xf32>
    %90 = arith.mulf %85, %89 : vector<24x8xf32>
    %91 = vector.broadcast %72 : vector<1x8xf32> to vector<24x8xf32>
    %92 = arith.addf %90, %91 : vector<24x8xf32>
    %c0_58 = arith.constant 0 : index
    %c0_59 = arith.constant 0 : index
    %c0_60 = arith.constant 0 : index
    %93 = vector.load %arg11[%c0_58, %c0_59, %c0_60] : memref<2x8x32xf32, #tpu.memory_space<vmem>>, vector<1x8x32xf32>
    %94 = vector.shape_cast %93 : vector<1x8x32xf32> to vector<8x32xf32>
    %cst_61 = arith.constant dense<0.000000e+00> : vector<24x32xf32>
    %95 = tpu.matmul %92, %94, %cst_61 {dimension_numbers = #tpu.dot_dimension_numbers<[1], [0], [0], [1], [0, 0, 1, 1], [], []>} : vector<24x8xf32>, vector<8x32xf32>, vector<24x32xf32> -> vector<24x32xf32>
    %96 = arith.addf %12, %95 : vector<24x32xf32>
    %c0_62 = arith.constant 0 : index
    %c0_63 = arith.constant 0 : index
    %c0_64 = arith.constant 0 : index
    %97 = vector.load %arg12[%c0_62, %c0_63, %c0_64] : memref<2x1x32xf32, #tpu.memory_space<vmem>>, vector<1x1x32xf32>
    %98 = vector.shape_cast %97 : vector<1x1x32xf32> to vector<1x32xf32>
    %99 = vector.broadcast %98 : vector<1x32xf32> to vector<24x32xf32>
    %100 = arith.addf %96, %99 : vector<24x32xf32>
    %c1 = arith.constant 1 : index
    %c0_65 = arith.constant 0 : index
    %c0_66 = arith.constant 0 : index
    %101 = vector.load %arg3[%c1, %c0_65, %c0_66] : memref<2x32x8xf32, #tpu.memory_space<vmem>>, vector<1x32x8xf32>
    %102 = vector.shape_cast %101 : vector<1x32x8xf32> to vector<32x8xf32>
    %cst_67 = arith.constant dense<0.000000e+00> : vector<24x8xf32>
    %103 = tpu.matmul %100, %102, %cst_67 {dimension_numbers = #tpu.dot_dimension_numbers<[1], [0], [0], [1], [0, 0, 1, 1], [], []>} : vector<24x32xf32>, vector<32x8xf32>, vector<24x8xf32> -> vector<24x8xf32>
    %c1_68 = arith.constant 1 : index
    %c0_69 = arith.constant 0 : index
    %c0_70 = arith.constant 0 : index
    %104 = vector.load %arg4[%c1_68, %c0_69, %c0_70] : memref<2x1x8xf32, #tpu.memory_space<vmem>>, vector<1x1x8xf32>
    %105 = vector.shape_cast %104 : vector<1x1x8xf32> to vector<1x8xf32>
    %106 = vector.broadcast %105 : vector<1x8xf32> to vector<24x8xf32>
    %107 = arith.addf %103, %106 : vector<24x8xf32>
    %cst_71 = arith.constant 0.000000e+00 : f32
    %108 = vector.broadcast %cst_71 : f32 to vector<24x8xf32>
    %109 = arith.cmpf oge, %107, %108 : vector<24x8xf32>
    %cst_72 = arith.constant 2.500000e-01 : f32
    %110 = vector.broadcast %cst_72 : f32 to vector<24x8xf32>
    %111 = arith.mulf %110, %107 : vector<24x8xf32>
    %112 = arith.select %109, %107, %111 : vector<24x8xi1>, vector<24x8xf32>
    %c1_73 = arith.constant 1 : index
    %c0_74 = arith.constant 0 : index
    %c0_75 = arith.constant 0 : index
    %113 = vector.load %arg5[%c1_73, %c0_74, %c0_75] : memref<2x1x8xf32, #tpu.memory_space<vmem>>, vector<1x1x8xf32>
    %114 = vector.shape_cast %113 : vector<1x1x8xf32> to vector<1x8xf32>
    %c1_76 = arith.constant 1 : index
    %c0_77 = arith.constant 0 : index
    %c0_78 = arith.constant 0 : index
    %115 = vector.load %arg6[%c1_76, %c0_77, %c0_78] : memref<2x1x8xf32, #tpu.memory_space<vmem>>, vector<1x1x8xf32>
    %116 = vector.shape_cast %115 : vector<1x1x8xf32> to vector<1x8xf32>
    %cst_79 = arith.constant dense<0.000000e+00> : vector<24xf32>
    %117 = vector.multi_reduction <add>, %112, %cst_79 [1] : vector<24x8xf32> to vector<24xf32>
    %118 = vector.shape_cast %117 : vector<24xf32> to vector<24x1xf32>
    %cst_80 = arith.constant 8.000000e+00 : f32
    %119 = vector.broadcast %cst_80 : f32 to vector<24x1xf32>
    %120 = arith.divf %118, %119 : vector<24x1xf32>
    %121 = vector.broadcast %120 : vector<24x1xf32> to vector<24x8xf32>
    %122 = arith.subf %112, %121 : vector<24x8xf32>
    %123 = arith.mulf %122, %122 : vector<24x8xf32>
    %cst_81 = arith.constant dense<0.000000e+00> : vector<24xf32>
    %124 = vector.multi_reduction <add>, %123, %cst_81 [1] : vector<24x8xf32> to vector<24xf32>
    %125 = vector.shape_cast %124 : vector<24xf32> to vector<24x1xf32>
    %cst_82 = arith.constant 8.000000e+00 : f32
    %126 = vector.broadcast %cst_82 : f32 to vector<24x1xf32>
    %127 = arith.divf %125, %126 : vector<24x1xf32>
    %128 = vector.broadcast %114 : vector<1x8xf32> to vector<24x8xf32>
    %129 = arith.mulf %128, %122 : vector<24x8xf32>
    %cst_83 = arith.constant 9.99999974E-6 : f32
    %130 = vector.broadcast %cst_83 : f32 to vector<24x1xf32>
    %131 = arith.addf %127, %130 : vector<24x1xf32>
    %132 = math.rsqrt %131 : vector<24x1xf32>
    %133 = vector.broadcast %132 : vector<24x1xf32> to vector<24x8xf32>
    %134 = arith.mulf %129, %133 : vector<24x8xf32>
    %135 = vector.broadcast %116 : vector<1x8xf32> to vector<24x8xf32>
    %136 = arith.addf %134, %135 : vector<24x8xf32>
    %c16_84 = arith.constant 16 : index
    %c0_85 = arith.constant 0 : index
    %137 = vector.load %arg16[%c16_84, %c0_85] : memref<40x8xf32, #tpu.memory_space<vmem>>, vector<24x8xf32>
    tpu.vector_store %arg16[%c16_84, %c0_85], %136 {strides = array<i32>} : memref<40x8xf32, #tpu.memory_space<vmem>>, vector<24x8xf32>,
    %c0_86 = arith.constant 0 : index
    %c0_87 = arith.constant 0 : index
    %138 = vector.load %arg16[%c0_86, %c0_87] : memref<40x8xf32, #tpu.memory_space<vmem>>, vector<24x8xf32>
    %c4 = arith.constant 4 : index
    %c0_88 = arith.constant 0 : index
    %139 = vector.load %arg16[%c4, %c0_88] : memref<40x8xf32, #tpu.memory_space<vmem>>, vector<24x8xf32>
    %c8_89 = arith.constant 8 : index
    %c0_90 = arith.constant 0 : index
    %140 = vector.load %arg16[%c8_89, %c0_90] : memref<40x8xf32, #tpu.memory_space<vmem>>, vector<24x8xf32>
    %c12_91 = arith.constant 12 : index
    %c0_92 = arith.constant 0 : index
    %141 = vector.load %arg16[%c12_91, %c0_92] : memref<40x8xf32, #tpu.memory_space<vmem>>, vector<24x8xf32>
    %c16_93 = arith.constant 16 : index
    %c0_94 = arith.constant 0 : index
    %142 = vector.load %arg16[%c16_93, %c0_94] : memref<40x8xf32, #tpu.memory_space<vmem>>, vector<24x8xf32>
    %143 = tpu.concatenate %138, %139, %140, %141, %142 in 1 : vector<24x8xf32>, vector<24x8xf32>, vector<24x8xf32>, vector<24x8xf32>, vector<24x8xf32> -> vector<24x40xf32>
    %c1_95 = arith.constant 1 : index
    %c0_96 = arith.constant 0 : index
    %c0_97 = arith.constant 0 : index
    %144 = vector.load %arg7[%c1_95, %c0_96, %c0_97] : memref<2x40x8xf32, #tpu.memory_space<vmem>>, vector<1x40x8xf32>
    %145 = vector.shape_cast %144 : vector<1x40x8xf32> to vector<40x8xf32>
    %cst_98 = arith.constant dense<0.000000e+00> : vector<24x8xf32>
    %146 = tpu.matmul %143, %145, %cst_98 {dimension_numbers = #tpu.dot_dimension_numbers<[1], [0], [0], [1], [0, 0, 1, 1], [], []>} : vector<24x40xf32>, vector<40x8xf32>, vector<24x8xf32> -> vector<24x8xf32>
    %c1_99 = arith.constant 1 : index
    %c0_100 = arith.constant 0 : index
    %c0_101 = arith.constant 0 : index
    %147 = vector.load %arg8[%c1_99, %c0_100, %c0_101] : memref<2x1x8xf32, #tpu.memory_space<vmem>>, vector<1x1x8xf32>
    %148 = vector.shape_cast %147 : vector<1x1x8xf32> to vector<1x8xf32>
    %149 = vector.broadcast %148 : vector<1x8xf32> to vector<24x8xf32>
    %150 = arith.addf %146, %149 : vector<24x8xf32>
    %cst_102 = arith.constant 0.000000e+00 : f32
    %151 = vector.broadcast %cst_102 : f32 to vector<24x8xf32>
    %152 = arith.cmpf oge, %150, %151 : vector<24x8xf32>
    %cst_103 = arith.constant 2.500000e-01 : f32
    %153 = vector.broadcast %cst_103 : f32 to vector<24x8xf32>
    %154 = arith.mulf %153, %150 : vector<24x8xf32>
    %155 = arith.select %152, %150, %154 : vector<24x8xi1>, vector<24x8xf32>
    %c1_104 = arith.constant 1 : index
    %c0_105 = arith.constant 0 : index
    %c0_106 = arith.constant 0 : index
    %156 = vector.load %arg9[%c1_104, %c0_105, %c0_106] : memref<2x1x8xf32, #tpu.memory_space<vmem>>, vector<1x1x8xf32>
    %157 = vector.shape_cast %156 : vector<1x1x8xf32> to vector<1x8xf32>
    %c1_107 = arith.constant 1 : index
    %c0_108 = arith.constant 0 : index
    %c0_109 = arith.constant 0 : index
    %158 = vector.load %arg10[%c1_107, %c0_108, %c0_109] : memref<2x1x8xf32, #tpu.memory_space<vmem>>, vector<1x1x8xf32>
    %159 = vector.shape_cast %158 : vector<1x1x8xf32> to vector<1x8xf32>
    %cst_110 = arith.constant dense<0.000000e+00> : vector<24xf32>
    %160 = vector.multi_reduction <add>, %155, %cst_110 [1] : vector<24x8xf32> to vector<24xf32>
    %161 = vector.shape_cast %160 : vector<24xf32> to vector<24x1xf32>
    %cst_111 = arith.constant 8.000000e+00 : f32
    %162 = vector.broadcast %cst_111 : f32 to vector<24x1xf32>
    %163 = arith.divf %161, %162 : vector<24x1xf32>
    %164 = vector.broadcast %163 : vector<24x1xf32> to vector<24x8xf32>
    %165 = arith.subf %155, %164 : vector<24x8xf32>
    %166 = arith.mulf %165, %165 : vector<24x8xf32>
    %cst_112 = arith.constant dense<0.000000e+00> : vector<24xf32>
    %167 = vector.multi_reduction <add>, %166, %cst_112 [1] : vector<24x8xf32> to vector<24xf32>
    %168 = vector.shape_cast %167 : vector<24xf32> to vector<24x1xf32>
    %cst_113 = arith.constant 8.000000e+00 : f32
    %169 = vector.broadcast %cst_113 : f32 to vector<24x1xf32>
    %170 = arith.divf %168, %169 : vector<24x1xf32>
    %171 = vector.broadcast %157 : vector<1x8xf32> to vector<24x8xf32>
    %172 = arith.mulf %171, %165 : vector<24x8xf32>
    %cst_114 = arith.constant 9.99999974E-6 : f32
    %173 = vector.broadcast %cst_114 : f32 to vector<24x1xf32>
    %174 = arith.addf %170, %173 : vector<24x1xf32>
    %175 = math.rsqrt %174 : vector<24x1xf32>
    %176 = vector.broadcast %175 : vector<24x1xf32> to vector<24x8xf32>
    %177 = arith.mulf %172, %176 : vector<24x8xf32>
    %178 = vector.broadcast %159 : vector<1x8xf32> to vector<24x8xf32>
    %179 = arith.addf %177, %178 : vector<24x8xf32>
    %c1_115 = arith.constant 1 : index
    %c0_116 = arith.constant 0 : index
    %c0_117 = arith.constant 0 : index
    %180 = vector.load %arg11[%c1_115, %c0_116, %c0_117] : memref<2x8x32xf32, #tpu.memory_space<vmem>>, vector<1x8x32xf32>
    %181 = vector.shape_cast %180 : vector<1x8x32xf32> to vector<8x32xf32>
    %cst_118 = arith.constant dense<0.000000e+00> : vector<24x32xf32>
    %182 = tpu.matmul %179, %181, %cst_118 {dimension_numbers = #tpu.dot_dimension_numbers<[1], [0], [0], [1], [0, 0, 1, 1], [], []>} : vector<24x8xf32>, vector<8x32xf32>, vector<24x32xf32> -> vector<24x32xf32>
    %183 = arith.addf %100, %182 : vector<24x32xf32>
    %c1_119 = arith.constant 1 : index
    %c0_120 = arith.constant 0 : index
    %c0_121 = arith.constant 0 : index
    %184 = vector.load %arg12[%c1_119, %c0_120, %c0_121] : memref<2x1x32xf32, #tpu.memory_space<vmem>>, vector<1x1x32xf32>
    %185 = vector.shape_cast %184 : vector<1x1x32xf32> to vector<1x32xf32>
    %186 = vector.broadcast %185 : vector<1x32xf32> to vector<24x32xf32>
    %187 = arith.addf %183, %186 : vector<24x32xf32>
    %188 = arith.addf %13, %187 : vector<24x32xf32>
    %c0_122 = arith.constant 0 : index
    %c0_123 = arith.constant 0 : index
    %189 = vector.load %arg13[%c0_122, %c0_123] : memref<32x32xf32, #tpu.memory_space<vmem>>, vector<32x32xf32>
    %cst_124 = arith.constant dense<0.000000e+00> : vector<24x32xf32>
    %190 = tpu.matmul %188, %189, %cst_124 {dimension_numbers = #tpu.dot_dimension_numbers<[1], [0], [0], [1], [0, 0, 1, 1], [], []>} : vector<24x32xf32>, vector<32x32xf32>, vector<24x32xf32> -> vector<24x32xf32>
    %c0_125 = arith.constant 0 : index
    %c0_126 = arith.constant 0 : index
    %191 = vector.load %arg14[%c0_125, %c0_126] : memref<1x32xf32, #tpu.memory_space<vmem>>, vector<1x32xf32>
    %192 = vector.broadcast %191 : vector<1x32xf32> to vector<24x32xf32>
    %193 = arith.addf %190, %192 : vector<24x32xf32>
    %c0_127 = arith.constant 0 : index
    %c0_128 = arith.constant 0 : index
    %194 = vector.load %arg15[%c0_127, %c0_128] : memref<24x32xf32, #tpu.memory_space<vmem>>, vector<24x32xf32>
    tpu.vector_store %arg15[%c0_127, %c0_128], %193 {strides = array<i32>} : memref<24x32xf32, #tpu.memory_space<vmem>>, vector<24x32xf32>,
    return
  }
}

module attributes {stable_mosaic.version = 11 : i64} {
  func.func @_post_kernel(%arg0: memref<24x32xf32, #tpu.memory_space<vmem>>, %arg1: memref<24x32xf32, #tpu.memory_space<vmem>>, %arg2: memref<32x34xf32, #tpu.memory_space<vmem>>, %arg3: memref<68x32xf32, #tpu.memory_space<vmem>>, %arg4: memref<1x32xf32, #tpu.memory_space<vmem>>, %arg5: memref<49x32xf32, #tpu.memory_space<vmem>>, %arg6: memref<1x32xf32, #tpu.memory_space<vmem>>, %arg7: memref<66x32xf32, #tpu.memory_space<vmem>>, %arg8: memref<1x32xf32, #tpu.memory_space<vmem>>, %arg9: memref<4x32x8xf32, #tpu.memory_space<vmem>>, %arg10: memref<4x1x8xf32, #tpu.memory_space<vmem>>, %arg11: memref<4x1x8xf32, #tpu.memory_space<vmem>>, %arg12: memref<4x1x8xf32, #tpu.memory_space<vmem>>, %arg13: memref<4x40x8xf32, #tpu.memory_space<vmem>>, %arg14: memref<4x1x8xf32, #tpu.memory_space<vmem>>, %arg15: memref<4x1x8xf32, #tpu.memory_space<vmem>>, %arg16: memref<4x1x8xf32, #tpu.memory_space<vmem>>, %arg17: memref<4x8x32xf32, #tpu.memory_space<vmem>>, %arg18: memref<4x1x32xf32, #tpu.memory_space<vmem>>, %arg19: memref<32x17xf32, #tpu.memory_space<vmem>>, %arg20: memref<1x17xf32, #tpu.memory_space<vmem>>, %arg21: memref<32x34xf32, #tpu.memory_space<vmem>>, %arg22: memref<1x34xf32, #tpu.memory_space<vmem>>, %arg23: memref<68x384xf32, #tpu.memory_space<vmem>>, %arg24: memref<1x384xf32, #tpu.memory_space<vmem>>, %arg25: memref<128x384xf32, #tpu.memory_space<vmem>>, %arg26: memref<1x384xf32, #tpu.memory_space<vmem>>, %arg27: memref<128x128xf32, #tpu.memory_space<vmem>>, %arg28: memref<24x128xf32, #tpu.memory_space<vmem>>, %arg29: memref<24x128xf32, #tpu.memory_space<vmem>>, %arg30: memref<40x8xf32, #tpu.memory_space<vmem>>, %arg31: memref<24x128xf32, #tpu.memory_space<vmem>>) attributes {dimension_semantics = [], scalar_prefetch = 0 : i64, scratch_operands = 2 : i64, tpu.core_type = #tpu.core_type<tc>} {
    %cst = arith.constant 0.000000e+00 : f32
    %0 = vector.broadcast %cst : f32 to vector<16x8xf32>
    %c0 = arith.constant 0 : index
    %c0_0 = arith.constant 0 : index
    %1 = vector.load %arg30[%c0, %c0_0] : memref<40x8xf32, #tpu.memory_space<vmem>>, vector<16x8xf32>
    tpu.vector_store %arg30[%c0, %c0_0], %0 {strides = array<i32>} : memref<40x8xf32, #tpu.memory_space<vmem>>, vector<16x8xf32>,
    %c0_1 = arith.constant 0 : index
    %c0_2 = arith.constant 0 : index
    %2 = vector.load %arg0[%c0_1, %c0_2] : memref<24x32xf32, #tpu.memory_space<vmem>>, vector<24x32xf32>
    %c0_3 = arith.constant 0 : index
    %c0_4 = arith.constant 0 : index
    %3 = vector.load %arg2[%c0_3, %c0_4] : memref<32x34xf32, #tpu.memory_space<vmem>>, vector<32x34xf32>
    %cst_5 = arith.constant dense<0.000000e+00> : vector<24x34xf32>
    %4 = tpu.matmul %2, %3, %cst_5 {dimension_numbers = #tpu.dot_dimension_numbers<[1], [0], [0], [1], [0, 0, 1, 1], [], []>} : vector<24x32xf32>, vector<32x34xf32>, vector<24x34xf32> -> vector<24x34xf32>
    %c0_6 = arith.constant 0 : index
    %c0_7 = arith.constant 0 : index
    %5 = vector.load %arg1[%c0_6, %c0_7] : memref<24x32xf32, #tpu.memory_space<vmem>>, vector<24x32xf32>
    %c0_8 = arith.constant 0 : index
    %c0_9 = arith.constant 0 : index
    %6 = vector.load %arg2[%c0_8, %c0_9] : memref<32x34xf32, #tpu.memory_space<vmem>>, vector<32x34xf32>
    %cst_10 = arith.constant dense<0.000000e+00> : vector<24x34xf32>
    %7 = tpu.matmul %5, %6, %cst_10 {dimension_numbers = #tpu.dot_dimension_numbers<[1], [0], [0], [1], [0, 0, 1, 1], [], []>} : vector<24x32xf32>, vector<32x34xf32>, vector<24x34xf32> -> vector<24x34xf32>
    %8 = vector.extract_strided_slice %4 {offsets = [0, 0], sizes = [24, 17], strides = [1, 1]} : vector<24x34xf32> to vector<24x17xf32>
    %9 = vector.extract_strided_slice %4 {offsets = [0, 17], sizes = [24, 17], strides = [1, 1]} : vector<24x34xf32> to vector<24x17xf32>
    %10 = vector.extract_strided_slice %7 {offsets = [0, 0], sizes = [24, 17], strides = [1, 1]} : vector<24x34xf32> to vector<24x17xf32>
    %11 = vector.extract_strided_slice %7 {offsets = [0, 17], sizes = [24, 17], strides = [1, 1]} : vector<24x34xf32> to vector<24x17xf32>
    %12 = arith.mulf %10, %10 : vector<24x17xf32>
    %13 = arith.mulf %11, %11 : vector<24x17xf32>
    %14 = arith.addf %12, %13 : vector<24x17xf32>
    %15 = arith.mulf %8, %8 : vector<24x17xf32>
    %16 = arith.mulf %9, %9 : vector<24x17xf32>
    %17 = arith.addf %15, %16 : vector<24x17xf32>
    %cst_11 = arith.constant 1.000000e-24 : f32
    %18 = vector.broadcast %cst_11 : f32 to vector<24x17xf32>
    %19 = arith.addf %14, %18 : vector<24x17xf32>
    %20 = math.rsqrt %19 : vector<24x17xf32>
    %cst_12 = arith.constant 1.000000e-24 : f32
    %21 = vector.broadcast %cst_12 : f32 to vector<24x17xf32>
    %22 = arith.addf %17, %21 : vector<24x17xf32>
    %23 = math.rsqrt %22 : vector<24x17xf32>
    %24 = arith.mulf %14, %20 : vector<24x17xf32>
    %25 = arith.mulf %17, %23 : vector<24x17xf32>
    %cst_13 = arith.constant 1.1920929E-7 : f32
    %26 = vector.broadcast %cst_13 : f32 to vector<24x17xf32>
    %27 = arith.addf %24, %26 : vector<24x17xf32>
    %28 = math.sqrt %27 : vector<24x17xf32>
    %cst_14 = arith.constant 1.1920929E-7 : f32
    %29 = vector.broadcast %cst_14 : f32 to vector<24x17xf32>
    %30 = arith.addf %25, %29 : vector<24x17xf32>
    %31 = math.sqrt %30 : vector<24x17xf32>
    %cst_15 = arith.constant 0.000000e+00 : f32
    %32 = vector.broadcast %cst_15 : f32 to vector<24x17xf32>
    %33 = arith.cmpf ogt, %24, %32 : vector<24x17xf32>
    %34 = arith.mulf %10, %20 : vector<24x17xf32>
    %cst_16 = arith.constant 1.000000e+00 : f32
    %35 = vector.broadcast %cst_16 : f32 to vector<24x17xf32>
    %36 = arith.select %33, %34, %35 : vector<24x17xi1>, vector<24x17xf32>
    %cst_17 = arith.constant 0.000000e+00 : f32
    %37 = vector.broadcast %cst_17 : f32 to vector<24x17xf32>
    %38 = arith.cmpf ogt, %24, %37 : vector<24x17xf32>
    %39 = arith.mulf %11, %20 : vector<24x17xf32>
    %cst_18 = arith.constant 0.000000e+00 : f32
    %40 = vector.broadcast %cst_18 : f32 to vector<24x17xf32>
    %41 = arith.select %38, %39, %40 : vector<24x17xi1>, vector<24x17xf32>
    %cst_19 = arith.constant 0.000000e+00 : f32
    %42 = vector.broadcast %cst_19 : f32 to vector<24x17xf32>
    %43 = arith.cmpf ogt, %25, %42 : vector<24x17xf32>
    %44 = arith.mulf %8, %23 : vector<24x17xf32>
    %cst_20 = arith.constant 1.000000e+00 : f32
    %45 = vector.broadcast %cst_20 : f32 to vector<24x17xf32>
    %46 = arith.select %43, %44, %45 : vector<24x17xi1>, vector<24x17xf32>
    %cst_21 = arith.constant 0.000000e+00 : f32
    %47 = vector.broadcast %cst_21 : f32 to vector<24x17xf32>
    %48 = arith.cmpf ogt, %25, %47 : vector<24x17xf32>
    %49 = arith.mulf %9, %23 : vector<24x17xf32>
    %cst_22 = arith.constant 0.000000e+00 : f32
    %50 = vector.broadcast %cst_22 : f32 to vector<24x17xf32>
    %51 = arith.select %48, %49, %50 : vector<24x17xi1>, vector<24x17xf32>
    %52 = arith.mulf %31, %36 : vector<24x17xf32>
    %53 = arith.mulf %31, %41 : vector<24x17xf32>
    %54 = arith.mulf %28, %46 : vector<24x17xf32>
    %55 = arith.mulf %28, %51 : vector<24x17xf32>
    %cst_23 = arith.constant 0.000000e+00 : f32
    %56 = vector.broadcast %cst_23 : f32 to vector<24x111xf32>
    %57 = tpu.concatenate %28, %56 in 1 : vector<24x17xf32>, vector<24x111xf32> -> vector<24x128xf32>
    %c0_24 = arith.constant 0 : index
    %c0_25 = arith.constant 0 : index
    %58 = vector.load %arg28[%c0_24, %c0_25] : memref<24x128xf32, #tpu.memory_space<vmem>>, vector<24x128xf32>
    tpu.vector_store %arg28[%c0_24, %c0_25], %57 {strides = array<i32>} : memref<24x128xf32, #tpu.memory_space<vmem>>, vector<24x128xf32>,
    %59 = tpu.concatenate %54, %55, %52, %53 in 1 : vector<24x17xf32>, vector<24x17xf32>, vector<24x17xf32>, vector<24x17xf32> -> vector<24x68xf32>
    %c0_26 = arith.constant 0 : index
    %c0_27 = arith.constant 0 : index
    %60 = vector.load %arg3[%c0_26, %c0_27] : memref<68x32xf32, #tpu.memory_space<vmem>>, vector<68x32xf32>
    %cst_28 = arith.constant dense<0.000000e+00> : vector<24x32xf32>
    %61 = tpu.matmul %59, %60, %cst_28 {dimension_numbers = #tpu.dot_dimension_numbers<[1], [0], [0], [1], [0, 0, 1, 1], [], []>} : vector<24x68xf32>, vector<68x32xf32>, vector<24x32xf32> -> vector<24x32xf32>
    %c0_29 = arith.constant 0 : index
    %c0_30 = arith.constant 0 : index
    %62 = vector.load %arg4[%c0_29, %c0_30] : memref<1x32xf32, #tpu.memory_space<vmem>>, vector<1x32xf32>
    %63 = vector.broadcast %62 : vector<1x32xf32> to vector<24x32xf32>
    %64 = arith.addf %61, %63 : vector<24x32xf32>
    %cst_31 = arith.constant 0.000000e+00 : f32
    %65 = vector.broadcast %cst_31 : f32 to vector<24x32xf32>
    %66 = arith.cmpf oge, %64, %65 : vector<24x32xf32>
    %cst_32 = arith.constant 2.500000e-01 : f32
    %67 = vector.broadcast %cst_32 : f32 to vector<24x32xf32>
    %68 = arith.mulf %67, %64 : vector<24x32xf32>
    %69 = arith.select %66, %64, %68 : vector<24x32xi1>, vector<24x32xf32>
    %70 = tpu.concatenate %69, %28 in 1 : vector<24x32xf32>, vector<24x17xf32> -> vector<24x49xf32>
    %c0_33 = arith.constant 0 : index
    %c0_34 = arith.constant 0 : index
    %71 = vector.load %arg5[%c0_33, %c0_34] : memref<49x32xf32, #tpu.memory_space<vmem>>, vector<49x32xf32>
    %cst_35 = arith.constant dense<0.000000e+00> : vector<24x32xf32>
    %72 = tpu.matmul %70, %71, %cst_35 {dimension_numbers = #tpu.dot_dimension_numbers<[1], [0], [0], [1], [0, 0, 1, 1], [], []>} : vector<24x49xf32>, vector<49x32xf32>, vector<24x32xf32> -> vector<24x32xf32>
    %c0_36 = arith.constant 0 : index
    %c0_37 = arith.constant 0 : index
    %73 = vector.load %arg6[%c0_36, %c0_37] : memref<1x32xf32, #tpu.memory_space<vmem>>, vector<1x32xf32>
    %74 = vector.broadcast %73 : vector<1x32xf32> to vector<24x32xf32>
    %75 = arith.addf %72, %74 : vector<24x32xf32>
    %76 = tpu.concatenate %69, %52, %53 in 1 : vector<24x32xf32>, vector<24x17xf32>, vector<24x17xf32> -> vector<24x66xf32>
    %c0_38 = arith.constant 0 : index
    %c0_39 = arith.constant 0 : index
    %77 = vector.load %arg7[%c0_38, %c0_39] : memref<66x32xf32, #tpu.memory_space<vmem>>, vector<66x32xf32>
    %cst_40 = arith.constant dense<0.000000e+00> : vector<24x32xf32>
    %78 = tpu.matmul %76, %77, %cst_40 {dimension_numbers = #tpu.dot_dimension_numbers<[1], [0], [0], [1], [0, 0, 1, 1], [], []>} : vector<24x66xf32>, vector<66x32xf32>, vector<24x32xf32> -> vector<24x32xf32>
    %c0_41 = arith.constant 0 : index
    %c0_42 = arith.constant 0 : index
    %79 = vector.load %arg8[%c0_41, %c0_42] : memref<1x32xf32, #tpu.memory_space<vmem>>, vector<1x32xf32>
    %80 = vector.broadcast %79 : vector<1x32xf32> to vector<24x32xf32>
    %81 = arith.addf %78, %80 : vector<24x32xf32>
    %c0_43 = arith.constant 0 : index
    %c0_44 = arith.constant 0 : index
    %c0_45 = arith.constant 0 : index
    %82 = vector.load %arg9[%c0_43, %c0_44, %c0_45] : memref<4x32x8xf32, #tpu.memory_space<vmem>>, vector<1x32x8xf32>
    %83 = vector.shape_cast %82 : vector<1x32x8xf32> to vector<32x8xf32>
    %cst_46 = arith.constant dense<0.000000e+00> : vector<24x8xf32>
    %84 = tpu.matmul %75, %83, %cst_46 {dimension_numbers = #tpu.dot_dimension_numbers<[1], [0], [0], [1], [0, 0, 1, 1], [], []>} : vector<24x32xf32>, vector<32x8xf32>, vector<24x8xf32> -> vector<24x8xf32>
    %c0_47 = arith.constant 0 : index
    %c0_48 = arith.constant 0 : index
    %c0_49 = arith.constant 0 : index
    %85 = vector.load %arg10[%c0_47, %c0_48, %c0_49] : memref<4x1x8xf32, #tpu.memory_space<vmem>>, vector<1x1x8xf32>
    %86 = vector.shape_cast %85 : vector<1x1x8xf32> to vector<1x8xf32>
    %87 = vector.broadcast %86 : vector<1x8xf32> to vector<24x8xf32>
    %88 = arith.addf %84, %87 : vector<24x8xf32>
    %cst_50 = arith.constant 0.000000e+00 : f32
    %89 = vector.broadcast %cst_50 : f32 to vector<24x8xf32>
    %90 = arith.cmpf oge, %88, %89 : vector<24x8xf32>
    %cst_51 = arith.constant 2.500000e-01 : f32
    %91 = vector.broadcast %cst_51 : f32 to vector<24x8xf32>
    %92 = arith.mulf %91, %88 : vector<24x8xf32>
    %93 = arith.select %90, %88, %92 : vector<24x8xi1>, vector<24x8xf32>
    %c0_52 = arith.constant 0 : index
    %c0_53 = arith.constant 0 : index
    %c0_54 = arith.constant 0 : index
    %94 = vector.load %arg11[%c0_52, %c0_53, %c0_54] : memref<4x1x8xf32, #tpu.memory_space<vmem>>, vector<1x1x8xf32>
    %95 = vector.shape_cast %94 : vector<1x1x8xf32> to vector<1x8xf32>
    %c0_55 = arith.constant 0 : index
    %c0_56 = arith.constant 0 : index
    %c0_57 = arith.constant 0 : index
    %96 = vector.load %arg12[%c0_55, %c0_56, %c0_57] : memref<4x1x8xf32, #tpu.memory_space<vmem>>, vector<1x1x8xf32>
    %97 = vector.shape_cast %96 : vector<1x1x8xf32> to vector<1x8xf32>
    %cst_58 = arith.constant dense<0.000000e+00> : vector<24xf32>
    %98 = vector.multi_reduction <add>, %93, %cst_58 [1] : vector<24x8xf32> to vector<24xf32>
    %99 = vector.shape_cast %98 : vector<24xf32> to vector<24x1xf32>
    %cst_59 = arith.constant 8.000000e+00 : f32
    %100 = vector.broadcast %cst_59 : f32 to vector<24x1xf32>
    %101 = arith.divf %99, %100 : vector<24x1xf32>
    %102 = vector.broadcast %101 : vector<24x1xf32> to vector<24x8xf32>
    %103 = arith.subf %93, %102 : vector<24x8xf32>
    %104 = arith.mulf %103, %103 : vector<24x8xf32>
    %cst_60 = arith.constant dense<0.000000e+00> : vector<24xf32>
    %105 = vector.multi_reduction <add>, %104, %cst_60 [1] : vector<24x8xf32> to vector<24xf32>
    %106 = vector.shape_cast %105 : vector<24xf32> to vector<24x1xf32>
    %cst_61 = arith.constant 8.000000e+00 : f32
    %107 = vector.broadcast %cst_61 : f32 to vector<24x1xf32>
    %108 = arith.divf %106, %107 : vector<24x1xf32>
    %109 = vector.broadcast %95 : vector<1x8xf32> to vector<24x8xf32>
    %110 = arith.mulf %109, %103 : vector<24x8xf32>
    %cst_62 = arith.constant 9.99999974E-6 : f32
    %111 = vector.broadcast %cst_62 : f32 to vector<24x1xf32>
    %112 = arith.addf %108, %111 : vector<24x1xf32>
    %113 = math.rsqrt %112 : vector<24x1xf32>
    %114 = vector.broadcast %113 : vector<24x1xf32> to vector<24x8xf32>
    %115 = arith.mulf %110, %114 : vector<24x8xf32>
    %116 = vector.broadcast %97 : vector<1x8xf32> to vector<24x8xf32>
    %117 = arith.addf %115, %116 : vector<24x8xf32>
    %c16 = arith.constant 16 : index
    %c0_63 = arith.constant 0 : index
    %118 = vector.load %arg30[%c16, %c0_63] : memref<40x8xf32, #tpu.memory_space<vmem>>, vector<24x8xf32>
    tpu.vector_store %arg30[%c16, %c0_63], %117 {strides = array<i32>} : memref<40x8xf32, #tpu.memory_space<vmem>>, vector<24x8xf32>,
    %c8 = arith.constant 8 : index
    %c0_64 = arith.constant 0 : index
    %119 = vector.load %arg30[%c8, %c0_64] : memref<40x8xf32, #tpu.memory_space<vmem>>, vector<24x8xf32>
    %c10 = arith.constant 10 : index
    %c0_65 = arith.constant 0 : index
    %120 = vector.load %arg30[%c10, %c0_65] : memref<40x8xf32, #tpu.memory_space<vmem>>, vector<24x8xf32>
    %c12 = arith.constant 12 : index
    %c0_66 = arith.constant 0 : index
    %121 = vector.load %arg30[%c12, %c0_66] : memref<40x8xf32, #tpu.memory_space<vmem>>, vector<24x8xf32>
    %c14 = arith.constant 14 : index
    %c0_67 = arith.constant 0 : index
    %122 = vector.load %arg30[%c14, %c0_67] : memref<40x8xf32, #tpu.memory_space<vmem>>, vector<24x8xf32>
    %c16_68 = arith.constant 16 : index
    %c0_69 = arith.constant 0 : index
    %123 = vector.load %arg30[%c16_68, %c0_69] : memref<40x8xf32, #tpu.memory_space<vmem>>, vector<24x8xf32>
    %124 = tpu.concatenate %119, %120, %121, %122, %123 in 1 : vector<24x8xf32>, vector<24x8xf32>, vector<24x8xf32>, vector<24x8xf32>, vector<24x8xf32> -> vector<24x40xf32>
    %c0_70 = arith.constant 0 : index
    %c0_71 = arith.constant 0 : index
    %c0_72 = arith.constant 0 : index
    %125 = vector.load %arg13[%c0_70, %c0_71, %c0_72] : memref<4x40x8xf32, #tpu.memory_space<vmem>>, vector<1x40x8xf32>
    %126 = vector.shape_cast %125 : vector<1x40x8xf32> to vector<40x8xf32>
    %cst_73 = arith.constant dense<0.000000e+00> : vector<24x8xf32>
    %127 = tpu.matmul %124, %126, %cst_73 {dimension_numbers = #tpu.dot_dimension_numbers<[1], [0], [0], [1], [0, 0, 1, 1], [], []>} : vector<24x40xf32>, vector<40x8xf32>, vector<24x8xf32> -> vector<24x8xf32>
    %c0_74 = arith.constant 0 : index
    %c0_75 = arith.constant 0 : index
    %c0_76 = arith.constant 0 : index
    %128 = vector.load %arg14[%c0_74, %c0_75, %c0_76] : memref<4x1x8xf32, #tpu.memory_space<vmem>>, vector<1x1x8xf32>
    %129 = vector.shape_cast %128 : vector<1x1x8xf32> to vector<1x8xf32>
    %130 = vector.broadcast %129 : vector<1x8xf32> to vector<24x8xf32>
    %131 = arith.addf %127, %130 : vector<24x8xf32>
    %cst_77 = arith.constant 0.000000e+00 : f32
    %132 = vector.broadcast %cst_77 : f32 to vector<24x8xf32>
    %133 = arith.cmpf oge, %131, %132 : vector<24x8xf32>
    %cst_78 = arith.constant 2.500000e-01 : f32
    %134 = vector.broadcast %cst_78 : f32 to vector<24x8xf32>
    %135 = arith.mulf %134, %131 : vector<24x8xf32>
    %136 = arith.select %133, %131, %135 : vector<24x8xi1>, vector<24x8xf32>
    %c0_79 = arith.constant 0 : index
    %c0_80 = arith.constant 0 : index
    %c0_81 = arith.constant 0 : index
    %137 = vector.load %arg15[%c0_79, %c0_80, %c0_81] : memref<4x1x8xf32, #tpu.memory_space<vmem>>, vector<1x1x8xf32>
    %138 = vector.shape_cast %137 : vector<1x1x8xf32> to vector<1x8xf32>
    %c0_82 = arith.constant 0 : index
    %c0_83 = arith.constant 0 : index
    %c0_84 = arith.constant 0 : index
    %139 = vector.load %arg16[%c0_82, %c0_83, %c0_84] : memref<4x1x8xf32, #tpu.memory_space<vmem>>, vector<1x1x8xf32>
    %140 = vector.shape_cast %139 : vector<1x1x8xf32> to vector<1x8xf32>
    %cst_85 = arith.constant dense<0.000000e+00> : vector<24xf32>
    %141 = vector.multi_reduction <add>, %136, %cst_85 [1] : vector<24x8xf32> to vector<24xf32>
    %142 = vector.shape_cast %141 : vector<24xf32> to vector<24x1xf32>
    %cst_86 = arith.constant 8.000000e+00 : f32
    %143 = vector.broadcast %cst_86 : f32 to vector<24x1xf32>
    %144 = arith.divf %142, %143 : vector<24x1xf32>
    %145 = vector.broadcast %144 : vector<24x1xf32> to vector<24x8xf32>
    %146 = arith.subf %136, %145 : vector<24x8xf32>
    %147 = arith.mulf %146, %146 : vector<24x8xf32>
    %cst_87 = arith.constant dense<0.000000e+00> : vector<24xf32>
    %148 = vector.multi_reduction <add>, %147, %cst_87 [1] : vector<24x8xf32> to vector<24xf32>
    %149 = vector.shape_cast %148 : vector<24xf32> to vector<24x1xf32>
    %cst_88 = arith.constant 8.000000e+00 : f32
    %150 = vector.broadcast %cst_88 : f32 to vector<24x1xf32>
    %151 = arith.divf %149, %150 : vector<24x1xf32>
    %152 = vector.broadcast %138 : vector<1x8xf32> to vector<24x8xf32>
    %153 = arith.mulf %152, %146 : vector<24x8xf32>
    %cst_89 = arith.constant 9.99999974E-6 : f32
    %154 = vector.broadcast %cst_89 : f32 to vector<24x1xf32>
    %155 = arith.addf %151, %154 : vector<24x1xf32>
    %156 = math.rsqrt %155 : vector<24x1xf32>
    %157 = vector.broadcast %156 : vector<24x1xf32> to vector<24x8xf32>
    %158 = arith.mulf %153, %157 : vector<24x8xf32>
    %159 = vector.broadcast %140 : vector<1x8xf32> to vector<24x8xf32>
    %160 = arith.addf %158, %159 : vector<24x8xf32>
    %c0_90 = arith.constant 0 : index
    %c0_91 = arith.constant 0 : index
    %c0_92 = arith.constant 0 : index
    %161 = vector.load %arg17[%c0_90, %c0_91, %c0_92] : memref<4x8x32xf32, #tpu.memory_space<vmem>>, vector<1x8x32xf32>
    %162 = vector.shape_cast %161 : vector<1x8x32xf32> to vector<8x32xf32>
    %cst_93 = arith.constant dense<0.000000e+00> : vector<24x32xf32>
    %163 = tpu.matmul %160, %162, %cst_93 {dimension_numbers = #tpu.dot_dimension_numbers<[1], [0], [0], [1], [0, 0, 1, 1], [], []>} : vector<24x8xf32>, vector<8x32xf32>, vector<24x32xf32> -> vector<24x32xf32>
    %164 = arith.addf %75, %163 : vector<24x32xf32>
    %c0_94 = arith.constant 0 : index
    %c0_95 = arith.constant 0 : index
    %c0_96 = arith.constant 0 : index
    %165 = vector.load %arg18[%c0_94, %c0_95, %c0_96] : memref<4x1x32xf32, #tpu.memory_space<vmem>>, vector<1x1x32xf32>
    %166 = vector.shape_cast %165 : vector<1x1x32xf32> to vector<1x32xf32>
    %167 = vector.broadcast %166 : vector<1x32xf32> to vector<24x32xf32>
    %168 = arith.addf %164, %167 : vector<24x32xf32>
    %c1 = arith.constant 1 : index
    %c0_97 = arith.constant 0 : index
    %c0_98 = arith.constant 0 : index
    %169 = vector.load %arg9[%c1, %c0_97, %c0_98] : memref<4x32x8xf32, #tpu.memory_space<vmem>>, vector<1x32x8xf32>
    %170 = vector.shape_cast %169 : vector<1x32x8xf32> to vector<32x8xf32>
    %cst_99 = arith.constant dense<0.000000e+00> : vector<24x8xf32>
    %171 = tpu.matmul %168, %170, %cst_99 {dimension_numbers = #tpu.dot_dimension_numbers<[1], [0], [0], [1], [0, 0, 1, 1], [], []>} : vector<24x32xf32>, vector<32x8xf32>, vector<24x8xf32> -> vector<24x8xf32>
    %c1_100 = arith.constant 1 : index
    %c0_101 = arith.constant 0 : index
    %c0_102 = arith.constant 0 : index
    %172 = vector.load %arg10[%c1_100, %c0_101, %c0_102] : memref<4x1x8xf32, #tpu.memory_space<vmem>>, vector<1x1x8xf32>
    %173 = vector.shape_cast %172 : vector<1x1x8xf32> to vector<1x8xf32>
    %174 = vector.broadcast %173 : vector<1x8xf32> to vector<24x8xf32>
    %175 = arith.addf %171, %174 : vector<24x8xf32>
    %cst_103 = arith.constant 0.000000e+00 : f32
    %176 = vector.broadcast %cst_103 : f32 to vector<24x8xf32>
    %177 = arith.cmpf oge, %175, %176 : vector<24x8xf32>
    %cst_104 = arith.constant 2.500000e-01 : f32
    %178 = vector.broadcast %cst_104 : f32 to vector<24x8xf32>
    %179 = arith.mulf %178, %175 : vector<24x8xf32>
    %180 = arith.select %177, %175, %179 : vector<24x8xi1>, vector<24x8xf32>
    %c1_105 = arith.constant 1 : index
    %c0_106 = arith.constant 0 : index
    %c0_107 = arith.constant 0 : index
    %181 = vector.load %arg11[%c1_105, %c0_106, %c0_107] : memref<4x1x8xf32, #tpu.memory_space<vmem>>, vector<1x1x8xf32>
    %182 = vector.shape_cast %181 : vector<1x1x8xf32> to vector<1x8xf32>
    %c1_108 = arith.constant 1 : index
    %c0_109 = arith.constant 0 : index
    %c0_110 = arith.constant 0 : index
    %183 = vector.load %arg12[%c1_108, %c0_109, %c0_110] : memref<4x1x8xf32, #tpu.memory_space<vmem>>, vector<1x1x8xf32>
    %184 = vector.shape_cast %183 : vector<1x1x8xf32> to vector<1x8xf32>
    %cst_111 = arith.constant dense<0.000000e+00> : vector<24xf32>
    %185 = vector.multi_reduction <add>, %180, %cst_111 [1] : vector<24x8xf32> to vector<24xf32>
    %186 = vector.shape_cast %185 : vector<24xf32> to vector<24x1xf32>
    %cst_112 = arith.constant 8.000000e+00 : f32
    %187 = vector.broadcast %cst_112 : f32 to vector<24x1xf32>
    %188 = arith.divf %186, %187 : vector<24x1xf32>
    %189 = vector.broadcast %188 : vector<24x1xf32> to vector<24x8xf32>
    %190 = arith.subf %180, %189 : vector<24x8xf32>
    %191 = arith.mulf %190, %190 : vector<24x8xf32>
    %cst_113 = arith.constant dense<0.000000e+00> : vector<24xf32>
    %192 = vector.multi_reduction <add>, %191, %cst_113 [1] : vector<24x8xf32> to vector<24xf32>
    %193 = vector.shape_cast %192 : vector<24xf32> to vector<24x1xf32>
    %cst_114 = arith.constant 8.000000e+00 : f32
    %194 = vector.broadcast %cst_114 : f32 to vector<24x1xf32>
    %195 = arith.divf %193, %194 : vector<24x1xf32>
    %196 = vector.broadcast %182 : vector<1x8xf32> to vector<24x8xf32>
    %197 = arith.mulf %196, %190 : vector<24x8xf32>
    %cst_115 = arith.constant 9.99999974E-6 : f32
    %198 = vector.broadcast %cst_115 : f32 to vector<24x1xf32>
    %199 = arith.addf %195, %198 : vector<24x1xf32>
    %200 = math.rsqrt %199 : vector<24x1xf32>
    %201 = vector.broadcast %200 : vector<24x1xf32> to vector<24x8xf32>
    %202 = arith.mulf %197, %201 : vector<24x8xf32>
    %203 = vector.broadcast %184 : vector<1x8xf32> to vector<24x8xf32>
    %204 = arith.addf %202, %203 : vector<24x8xf32>
    %c16_116 = arith.constant 16 : index
    %c0_117 = arith.constant 0 : index
    %205 = vector.load %arg30[%c16_116, %c0_117] : memref<40x8xf32, #tpu.memory_space<vmem>>, vector<24x8xf32>
    tpu.vector_store %arg30[%c16_116, %c0_117], %204 {strides = array<i32>} : memref<40x8xf32, #tpu.memory_space<vmem>>, vector<24x8xf32>,
    %c0_118 = arith.constant 0 : index
    %c0_119 = arith.constant 0 : index
    %206 = vector.load %arg30[%c0_118, %c0_119] : memref<40x8xf32, #tpu.memory_space<vmem>>, vector<24x8xf32>
    %c4 = arith.constant 4 : index
    %c0_120 = arith.constant 0 : index
    %207 = vector.load %arg30[%c4, %c0_120] : memref<40x8xf32, #tpu.memory_space<vmem>>, vector<24x8xf32>
    %c8_121 = arith.constant 8 : index
    %c0_122 = arith.constant 0 : index
    %208 = vector.load %arg30[%c8_121, %c0_122] : memref<40x8xf32, #tpu.memory_space<vmem>>, vector<24x8xf32>
    %c12_123 = arith.constant 12 : index
    %c0_124 = arith.constant 0 : index
    %209 = vector.load %arg30[%c12_123, %c0_124] : memref<40x8xf32, #tpu.memory_space<vmem>>, vector<24x8xf32>
    %c16_125 = arith.constant 16 : index
    %c0_126 = arith.constant 0 : index
    %210 = vector.load %arg30[%c16_125, %c0_126] : memref<40x8xf32, #tpu.memory_space<vmem>>, vector<24x8xf32>
    %211 = tpu.concatenate %206, %207, %208, %209, %210 in 1 : vector<24x8xf32>, vector<24x8xf32>, vector<24x8xf32>, vector<24x8xf32>, vector<24x8xf32> -> vector<24x40xf32>
    %c1_127 = arith.constant 1 : index
    %c0_128 = arith.constant 0 : index
    %c0_129 = arith.constant 0 : index
    %212 = vector.load %arg13[%c1_127, %c0_128, %c0_129] : memref<4x40x8xf32, #tpu.memory_space<vmem>>, vector<1x40x8xf32>
    %213 = vector.shape_cast %212 : vector<1x40x8xf32> to vector<40x8xf32>
    %cst_130 = arith.constant dense<0.000000e+00> : vector<24x8xf32>
    %214 = tpu.matmul %211, %213, %cst_130 {dimension_numbers = #tpu.dot_dimension_numbers<[1], [0], [0], [1], [0, 0, 1, 1], [], []>} : vector<24x40xf32>, vector<40x8xf32>, vector<24x8xf32> -> vector<24x8xf32>
    %c1_131 = arith.constant 1 : index
    %c0_132 = arith.constant 0 : index
    %c0_133 = arith.constant 0 : index
    %215 = vector.load %arg14[%c1_131, %c0_132, %c0_133] : memref<4x1x8xf32, #tpu.memory_space<vmem>>, vector<1x1x8xf32>
    %216 = vector.shape_cast %215 : vector<1x1x8xf32> to vector<1x8xf32>
    %217 = vector.broadcast %216 : vector<1x8xf32> to vector<24x8xf32>
    %218 = arith.addf %214, %217 : vector<24x8xf32>
    %cst_134 = arith.constant 0.000000e+00 : f32
    %219 = vector.broadcast %cst_134 : f32 to vector<24x8xf32>
    %220 = arith.cmpf oge, %218, %219 : vector<24x8xf32>
    %cst_135 = arith.constant 2.500000e-01 : f32
    %221 = vector.broadcast %cst_135 : f32 to vector<24x8xf32>
    %222 = arith.mulf %221, %218 : vector<24x8xf32>
    %223 = arith.select %220, %218, %222 : vector<24x8xi1>, vector<24x8xf32>
    %c1_136 = arith.constant 1 : index
    %c0_137 = arith.constant 0 : index
    %c0_138 = arith.constant 0 : index
    %224 = vector.load %arg15[%c1_136, %c0_137, %c0_138] : memref<4x1x8xf32, #tpu.memory_space<vmem>>, vector<1x1x8xf32>
    %225 = vector.shape_cast %224 : vector<1x1x8xf32> to vector<1x8xf32>
    %c1_139 = arith.constant 1 : index
    %c0_140 = arith.constant 0 : index
    %c0_141 = arith.constant 0 : index
    %226 = vector.load %arg16[%c1_139, %c0_140, %c0_141] : memref<4x1x8xf32, #tpu.memory_space<vmem>>, vector<1x1x8xf32>
    %227 = vector.shape_cast %226 : vector<1x1x8xf32> to vector<1x8xf32>
    %cst_142 = arith.constant dense<0.000000e+00> : vector<24xf32>
    %228 = vector.multi_reduction <add>, %223, %cst_142 [1] : vector<24x8xf32> to vector<24xf32>
    %229 = vector.shape_cast %228 : vector<24xf32> to vector<24x1xf32>
    %cst_143 = arith.constant 8.000000e+00 : f32
    %230 = vector.broadcast %cst_143 : f32 to vector<24x1xf32>
    %231 = arith.divf %229, %230 : vector<24x1xf32>
    %232 = vector.broadcast %231 : vector<24x1xf32> to vector<24x8xf32>
    %233 = arith.subf %223, %232 : vector<24x8xf32>
    %234 = arith.mulf %233, %233 : vector<24x8xf32>
    %cst_144 = arith.constant dense<0.000000e+00> : vector<24xf32>
    %235 = vector.multi_reduction <add>, %234, %cst_144 [1] : vector<24x8xf32> to vector<24xf32>
    %236 = vector.shape_cast %235 : vector<24xf32> to vector<24x1xf32>
    %cst_145 = arith.constant 8.000000e+00 : f32
    %237 = vector.broadcast %cst_145 : f32 to vector<24x1xf32>
    %238 = arith.divf %236, %237 : vector<24x1xf32>
    %239 = vector.broadcast %225 : vector<1x8xf32> to vector<24x8xf32>
    %240 = arith.mulf %239, %233 : vector<24x8xf32>
    %cst_146 = arith.constant 9.99999974E-6 : f32
    %241 = vector.broadcast %cst_146 : f32 to vector<24x1xf32>
    %242 = arith.addf %238, %241 : vector<24x1xf32>
    %243 = math.rsqrt %242 : vector<24x1xf32>
    %244 = vector.broadcast %243 : vector<24x1xf32> to vector<24x8xf32>
    %245 = arith.mulf %240, %244 : vector<24x8xf32>
    %246 = vector.broadcast %227 : vector<1x8xf32> to vector<24x8xf32>
    %247 = arith.addf %245, %246 : vector<24x8xf32>
    %c1_147 = arith.constant 1 : index
    %c0_148 = arith.constant 0 : index
    %c0_149 = arith.constant 0 : index
    %248 = vector.load %arg17[%c1_147, %c0_148, %c0_149] : memref<4x8x32xf32, #tpu.memory_space<vmem>>, vector<1x8x32xf32>
    %249 = vector.shape_cast %248 : vector<1x8x32xf32> to vector<8x32xf32>
    %cst_150 = arith.constant dense<0.000000e+00> : vector<24x32xf32>
    %250 = tpu.matmul %247, %249, %cst_150 {dimension_numbers = #tpu.dot_dimension_numbers<[1], [0], [0], [1], [0, 0, 1, 1], [], []>} : vector<24x8xf32>, vector<8x32xf32>, vector<24x32xf32> -> vector<24x32xf32>
    %251 = arith.addf %168, %250 : vector<24x32xf32>
    %c1_151 = arith.constant 1 : index
    %c0_152 = arith.constant 0 : index
    %c0_153 = arith.constant 0 : index
    %252 = vector.load %arg18[%c1_151, %c0_152, %c0_153] : memref<4x1x32xf32, #tpu.memory_space<vmem>>, vector<1x1x32xf32>
    %253 = vector.shape_cast %252 : vector<1x1x32xf32> to vector<1x32xf32>
    %254 = vector.broadcast %253 : vector<1x32xf32> to vector<24x32xf32>
    %255 = arith.addf %251, %254 : vector<24x32xf32>
    %c2 = arith.constant 2 : index
    %c0_154 = arith.constant 0 : index
    %c0_155 = arith.constant 0 : index
    %256 = vector.load %arg9[%c2, %c0_154, %c0_155] : memref<4x32x8xf32, #tpu.memory_space<vmem>>, vector<1x32x8xf32>
    %257 = vector.shape_cast %256 : vector<1x32x8xf32> to vector<32x8xf32>
    %cst_156 = arith.constant dense<0.000000e+00> : vector<24x8xf32>
    %258 = tpu.matmul %81, %257, %cst_156 {dimension_numbers = #tpu.dot_dimension_numbers<[1], [0], [0], [1], [0, 0, 1, 1], [], []>} : vector<24x32xf32>, vector<32x8xf32>, vector<24x8xf32> -> vector<24x8xf32>
    %c2_157 = arith.constant 2 : index
    %c0_158 = arith.constant 0 : index
    %c0_159 = arith.constant 0 : index
    %259 = vector.load %arg10[%c2_157, %c0_158, %c0_159] : memref<4x1x8xf32, #tpu.memory_space<vmem>>, vector<1x1x8xf32>
    %260 = vector.shape_cast %259 : vector<1x1x8xf32> to vector<1x8xf32>
    %261 = vector.broadcast %260 : vector<1x8xf32> to vector<24x8xf32>
    %262 = arith.addf %258, %261 : vector<24x8xf32>
    %cst_160 = arith.constant 0.000000e+00 : f32
    %263 = vector.broadcast %cst_160 : f32 to vector<24x8xf32>
    %264 = arith.cmpf oge, %262, %263 : vector<24x8xf32>
    %cst_161 = arith.constant 2.500000e-01 : f32
    %265 = vector.broadcast %cst_161 : f32 to vector<24x8xf32>
    %266 = arith.mulf %265, %262 : vector<24x8xf32>
    %267 = arith.select %264, %262, %266 : vector<24x8xi1>, vector<24x8xf32>
    %c2_162 = arith.constant 2 : index
    %c0_163 = arith.constant 0 : index
    %c0_164 = arith.constant 0 : index
    %268 = vector.load %arg11[%c2_162, %c0_163, %c0_164] : memref<4x1x8xf32, #tpu.memory_space<vmem>>, vector<1x1x8xf32>
    %269 = vector.shape_cast %268 : vector<1x1x8xf32> to vector<1x8xf32>
    %c2_165 = arith.constant 2 : index
    %c0_166 = arith.constant 0 : index
    %c0_167 = arith.constant 0 : index
    %270 = vector.load %arg12[%c2_165, %c0_166, %c0_167] : memref<4x1x8xf32, #tpu.memory_space<vmem>>, vector<1x1x8xf32>
    %271 = vector.shape_cast %270 : vector<1x1x8xf32> to vector<1x8xf32>
    %cst_168 = arith.constant dense<0.000000e+00> : vector<24xf32>
    %272 = vector.multi_reduction <add>, %267, %cst_168 [1] : vector<24x8xf32> to vector<24xf32>
    %273 = vector.shape_cast %272 : vector<24xf32> to vector<24x1xf32>
    %cst_169 = arith.constant 8.000000e+00 : f32
    %274 = vector.broadcast %cst_169 : f32 to vector<24x1xf32>
    %275 = arith.divf %273, %274 : vector<24x1xf32>
    %276 = vector.broadcast %275 : vector<24x1xf32> to vector<24x8xf32>
    %277 = arith.subf %267, %276 : vector<24x8xf32>
    %278 = arith.mulf %277, %277 : vector<24x8xf32>
    %cst_170 = arith.constant dense<0.000000e+00> : vector<24xf32>
    %279 = vector.multi_reduction <add>, %278, %cst_170 [1] : vector<24x8xf32> to vector<24xf32>
    %280 = vector.shape_cast %279 : vector<24xf32> to vector<24x1xf32>
    %cst_171 = arith.constant 8.000000e+00 : f32
    %281 = vector.broadcast %cst_171 : f32 to vector<24x1xf32>
    %282 = arith.divf %280, %281 : vector<24x1xf32>
    %283 = vector.broadcast %269 : vector<1x8xf32> to vector<24x8xf32>
    %284 = arith.mulf %283, %277 : vector<24x8xf32>
    %cst_172 = arith.constant 9.99999974E-6 : f32
    %285 = vector.broadcast %cst_172 : f32 to vector<24x1xf32>
    %286 = arith.addf %282, %285 : vector<24x1xf32>
    %287 = math.rsqrt %286 : vector<24x1xf32>
    %288 = vector.broadcast %287 : vector<24x1xf32> to vector<24x8xf32>
    %289 = arith.mulf %284, %288 : vector<24x8xf32>
    %290 = vector.broadcast %271 : vector<1x8xf32> to vector<24x8xf32>
    %291 = arith.addf %289, %290 : vector<24x8xf32>
    %c16_173 = arith.constant 16 : index
    %c0_174 = arith.constant 0 : index
    %292 = vector.load %arg30[%c16_173, %c0_174] : memref<40x8xf32, #tpu.memory_space<vmem>>, vector<24x8xf32>
    tpu.vector_store %arg30[%c16_173, %c0_174], %291 {strides = array<i32>} : memref<40x8xf32, #tpu.memory_space<vmem>>, vector<24x8xf32>,
    %c8_175 = arith.constant 8 : index
    %c0_176 = arith.constant 0 : index
    %293 = vector.load %arg30[%c8_175, %c0_176] : memref<40x8xf32, #tpu.memory_space<vmem>>, vector<24x8xf32>
    %c10_177 = arith.constant 10 : index
    %c0_178 = arith.constant 0 : index
    %294 = vector.load %arg30[%c10_177, %c0_178] : memref<40x8xf32, #tpu.memory_space<vmem>>, vector<24x8xf32>
    %c12_179 = arith.constant 12 : index
    %c0_180 = arith.constant 0 : index
    %295 = vector.load %arg30[%c12_179, %c0_180] : memref<40x8xf32, #tpu.memory_space<vmem>>, vector<24x8xf32>
    %c14_181 = arith.constant 14 : index
    %c0_182 = arith.constant 0 : index
    %296 = vector.load %arg30[%c14_181, %c0_182] : memref<40x8xf32, #tpu.memory_space<vmem>>, vector<24x8xf32>
    %c16_183 = arith.constant 16 : index
    %c0_184 = arith.constant 0 : index
    %297 = vector.load %arg30[%c16_183, %c0_184] : memref<40x8xf32, #tpu.memory_space<vmem>>, vector<24x8xf32>
    %298 = tpu.concatenate %293, %294, %295, %296, %297 in 1 : vector<24x8xf32>, vector<24x8xf32>, vector<24x8xf32>, vector<24x8xf32>, vector<24x8xf32> -> vector<24x40xf32>
    %c2_185 = arith.constant 2 : index
    %c0_186 = arith.constant 0 : index
    %c0_187 = arith.constant 0 : index
    %299 = vector.load %arg13[%c2_185, %c0_186, %c0_187] : memref<4x40x8xf32, #tpu.memory_space<vmem>>, vector<1x40x8xf32>
    %300 = vector.shape_cast %299 : vector<1x40x8xf32> to vector<40x8xf32>
    %cst_188 = arith.constant dense<0.000000e+00> : vector<24x8xf32>
    %301 = tpu.matmul %298, %300, %cst_188 {dimension_numbers = #tpu.dot_dimension_numbers<[1], [0], [0], [1], [0, 0, 1, 1], [], []>} : vector<24x40xf32>, vector<40x8xf32>, vector<24x8xf32> -> vector<24x8xf32>
    %c2_189 = arith.constant 2 : index
    %c0_190 = arith.constant 0 : index
    %c0_191 = arith.constant 0 : index
    %302 = vector.load %arg14[%c2_189, %c0_190, %c0_191] : memref<4x1x8xf32, #tpu.memory_space<vmem>>, vector<1x1x8xf32>
    %303 = vector.shape_cast %302 : vector<1x1x8xf32> to vector<1x8xf32>
    %304 = vector.broadcast %303 : vector<1x8xf32> to vector<24x8xf32>
    %305 = arith.addf %301, %304 : vector<24x8xf32>
    %cst_192 = arith.constant 0.000000e+00 : f32
    %306 = vector.broadcast %cst_192 : f32 to vector<24x8xf32>
    %307 = arith.cmpf oge, %305, %306 : vector<24x8xf32>
    %cst_193 = arith.constant 2.500000e-01 : f32
    %308 = vector.broadcast %cst_193 : f32 to vector<24x8xf32>
    %309 = arith.mulf %308, %305 : vector<24x8xf32>
    %310 = arith.select %307, %305, %309 : vector<24x8xi1>, vector<24x8xf32>
    %c2_194 = arith.constant 2 : index
    %c0_195 = arith.constant 0 : index
    %c0_196 = arith.constant 0 : index
    %311 = vector.load %arg15[%c2_194, %c0_195, %c0_196] : memref<4x1x8xf32, #tpu.memory_space<vmem>>, vector<1x1x8xf32>
    %312 = vector.shape_cast %311 : vector<1x1x8xf32> to vector<1x8xf32>
    %c2_197 = arith.constant 2 : index
    %c0_198 = arith.constant 0 : index
    %c0_199 = arith.constant 0 : index
    %313 = vector.load %arg16[%c2_197, %c0_198, %c0_199] : memref<4x1x8xf32, #tpu.memory_space<vmem>>, vector<1x1x8xf32>
    %314 = vector.shape_cast %313 : vector<1x1x8xf32> to vector<1x8xf32>
    %cst_200 = arith.constant dense<0.000000e+00> : vector<24xf32>
    %315 = vector.multi_reduction <add>, %310, %cst_200 [1] : vector<24x8xf32> to vector<24xf32>
    %316 = vector.shape_cast %315 : vector<24xf32> to vector<24x1xf32>
    %cst_201 = arith.constant 8.000000e+00 : f32
    %317 = vector.broadcast %cst_201 : f32 to vector<24x1xf32>
    %318 = arith.divf %316, %317 : vector<24x1xf32>
    %319 = vector.broadcast %318 : vector<24x1xf32> to vector<24x8xf32>
    %320 = arith.subf %310, %319 : vector<24x8xf32>
    %321 = arith.mulf %320, %320 : vector<24x8xf32>
    %cst_202 = arith.constant dense<0.000000e+00> : vector<24xf32>
    %322 = vector.multi_reduction <add>, %321, %cst_202 [1] : vector<24x8xf32> to vector<24xf32>
    %323 = vector.shape_cast %322 : vector<24xf32> to vector<24x1xf32>
    %cst_203 = arith.constant 8.000000e+00 : f32
    %324 = vector.broadcast %cst_203 : f32 to vector<24x1xf32>
    %325 = arith.divf %323, %324 : vector<24x1xf32>
    %326 = vector.broadcast %312 : vector<1x8xf32> to vector<24x8xf32>
    %327 = arith.mulf %326, %320 : vector<24x8xf32>
    %cst_204 = arith.constant 9.99999974E-6 : f32
    %328 = vector.broadcast %cst_204 : f32 to vector<24x1xf32>
    %329 = arith.addf %325, %328 : vector<24x1xf32>
    %330 = math.rsqrt %329 : vector<24x1xf32>
    %331 = vector.broadcast %330 : vector<24x1xf32> to vector<24x8xf32>
    %332 = arith.mulf %327, %331 : vector<24x8xf32>
    %333 = vector.broadcast %314 : vector<1x8xf32> to vector<24x8xf32>
    %334 = arith.addf %332, %333 : vector<24x8xf32>
    %c2_205 = arith.constant 2 : index
    %c0_206 = arith.constant 0 : index
    %c0_207 = arith.constant 0 : index
    %335 = vector.load %arg17[%c2_205, %c0_206, %c0_207] : memref<4x8x32xf32, #tpu.memory_space<vmem>>, vector<1x8x32xf32>
    %336 = vector.shape_cast %335 : vector<1x8x32xf32> to vector<8x32xf32>
    %cst_208 = arith.constant dense<0.000000e+00> : vector<24x32xf32>
    %337 = tpu.matmul %334, %336, %cst_208 {dimension_numbers = #tpu.dot_dimension_numbers<[1], [0], [0], [1], [0, 0, 1, 1], [], []>} : vector<24x8xf32>, vector<8x32xf32>, vector<24x32xf32> -> vector<24x32xf32>
    %338 = arith.addf %81, %337 : vector<24x32xf32>
    %c2_209 = arith.constant 2 : index
    %c0_210 = arith.constant 0 : index
    %c0_211 = arith.constant 0 : index
    %339 = vector.load %arg18[%c2_209, %c0_210, %c0_211] : memref<4x1x32xf32, #tpu.memory_space<vmem>>, vector<1x1x32xf32>
    %340 = vector.shape_cast %339 : vector<1x1x32xf32> to vector<1x32xf32>
    %341 = vector.broadcast %340 : vector<1x32xf32> to vector<24x32xf32>
    %342 = arith.addf %338, %341 : vector<24x32xf32>
    %c3 = arith.constant 3 : index
    %c0_212 = arith.constant 0 : index
    %c0_213 = arith.constant 0 : index
    %343 = vector.load %arg9[%c3, %c0_212, %c0_213] : memref<4x32x8xf32, #tpu.memory_space<vmem>>, vector<1x32x8xf32>
    %344 = vector.shape_cast %343 : vector<1x32x8xf32> to vector<32x8xf32>
    %cst_214 = arith.constant dense<0.000000e+00> : vector<24x8xf32>
    %345 = tpu.matmul %342, %344, %cst_214 {dimension_numbers = #tpu.dot_dimension_numbers<[1], [0], [0], [1], [0, 0, 1, 1], [], []>} : vector<24x32xf32>, vector<32x8xf32>, vector<24x8xf32> -> vector<24x8xf32>
    %c3_215 = arith.constant 3 : index
    %c0_216 = arith.constant 0 : index
    %c0_217 = arith.constant 0 : index
    %346 = vector.load %arg10[%c3_215, %c0_216, %c0_217] : memref<4x1x8xf32, #tpu.memory_space<vmem>>, vector<1x1x8xf32>
    %347 = vector.shape_cast %346 : vector<1x1x8xf32> to vector<1x8xf32>
    %348 = vector.broadcast %347 : vector<1x8xf32> to vector<24x8xf32>
    %349 = arith.addf %345, %348 : vector<24x8xf32>
    %cst_218 = arith.constant 0.000000e+00 : f32
    %350 = vector.broadcast %cst_218 : f32 to vector<24x8xf32>
    %351 = arith.cmpf oge, %349, %350 : vector<24x8xf32>
    %cst_219 = arith.constant 2.500000e-01 : f32
    %352 = vector.broadcast %cst_219 : f32 to vector<24x8xf32>
    %353 = arith.mulf %352, %349 : vector<24x8xf32>
    %354 = arith.select %351, %349, %353 : vector<24x8xi1>, vector<24x8xf32>
    %c3_220 = arith.constant 3 : index
    %c0_221 = arith.constant 0 : index
    %c0_222 = arith.constant 0 : index
    %355 = vector.load %arg11[%c3_220, %c0_221, %c0_222] : memref<4x1x8xf32, #tpu.memory_space<vmem>>, vector<1x1x8xf32>
    %356 = vector.shape_cast %355 : vector<1x1x8xf32> to vector<1x8xf32>
    %c3_223 = arith.constant 3 : index
    %c0_224 = arith.constant 0 : index
    %c0_225 = arith.constant 0 : index
    %357 = vector.load %arg12[%c3_223, %c0_224, %c0_225] : memref<4x1x8xf32, #tpu.memory_space<vmem>>, vector<1x1x8xf32>
    %358 = vector.shape_cast %357 : vector<1x1x8xf32> to vector<1x8xf32>
    %cst_226 = arith.constant dense<0.000000e+00> : vector<24xf32>
    %359 = vector.multi_reduction <add>, %354, %cst_226 [1] : vector<24x8xf32> to vector<24xf32>
    %360 = vector.shape_cast %359 : vector<24xf32> to vector<24x1xf32>
    %cst_227 = arith.constant 8.000000e+00 : f32
    %361 = vector.broadcast %cst_227 : f32 to vector<24x1xf32>
    %362 = arith.divf %360, %361 : vector<24x1xf32>
    %363 = vector.broadcast %362 : vector<24x1xf32> to vector<24x8xf32>
    %364 = arith.subf %354, %363 : vector<24x8xf32>
    %365 = arith.mulf %364, %364 : vector<24x8xf32>
    %cst_228 = arith.constant dense<0.000000e+00> : vector<24xf32>
    %366 = vector.multi_reduction <add>, %365, %cst_228 [1] : vector<24x8xf32> to vector<24xf32>
    %367 = vector.shape_cast %366 : vector<24xf32> to vector<24x1xf32>
    %cst_229 = arith.constant 8.000000e+00 : f32
    %368 = vector.broadcast %cst_229 : f32 to vector<24x1xf32>
    %369 = arith.divf %367, %368 : vector<24x1xf32>
    %370 = vector.broadcast %356 : vector<1x8xf32> to vector<24x8xf32>
    %371 = arith.mulf %370, %364 : vector<24x8xf32>
    %cst_230 = arith.constant 9.99999974E-6 : f32
    %372 = vector.broadcast %cst_230 : f32 to vector<24x1xf32>
    %373 = arith.addf %369, %372 : vector<24x1xf32>
    %374 = math.rsqrt %373 : vector<24x1xf32>
    %375 = vector.broadcast %374 : vector<24x1xf32> to vector<24x8xf32>
    %376 = arith.mulf %371, %375 : vector<24x8xf32>
    %377 = vector.broadcast %358 : vector<1x8xf32> to vector<24x8xf32>
    %378 = arith.addf %376, %377 : vector<24x8xf32>
    %c16_231 = arith.constant 16 : index
    %c0_232 = arith.constant 0 : index
    %379 = vector.load %arg30[%c16_231, %c0_232] : memref<40x8xf32, #tpu.memory_space<vmem>>, vector<24x8xf32>
    tpu.vector_store %arg30[%c16_231, %c0_232], %378 {strides = array<i32>} : memref<40x8xf32, #tpu.memory_space<vmem>>, vector<24x8xf32>,
    %c0_233 = arith.constant 0 : index
    %c0_234 = arith.constant 0 : index
    %380 = vector.load %arg30[%c0_233, %c0_234] : memref<40x8xf32, #tpu.memory_space<vmem>>, vector<24x8xf32>
    %c4_235 = arith.constant 4 : index
    %c0_236 = arith.constant 0 : index
    %381 = vector.load %arg30[%c4_235, %c0_236] : memref<40x8xf32, #tpu.memory_space<vmem>>, vector<24x8xf32>
    %c8_237 = arith.constant 8 : index
    %c0_238 = arith.constant 0 : index
    %382 = vector.load %arg30[%c8_237, %c0_238] : memref<40x8xf32, #tpu.memory_space<vmem>>, vector<24x8xf32>
    %c12_239 = arith.constant 12 : index
    %c0_240 = arith.constant 0 : index
    %383 = vector.load %arg30[%c12_239, %c0_240] : memref<40x8xf32, #tpu.memory_space<vmem>>, vector<24x8xf32>
    %c16_241 = arith.constant 16 : index
    %c0_242 = arith.constant 0 : index
    %384 = vector.load %arg30[%c16_241, %c0_242] : memref<40x8xf32, #tpu.memory_space<vmem>>, vector<24x8xf32>
    %385 = tpu.concatenate %380, %381, %382, %383, %384 in 1 : vector<24x8xf32>, vector<24x8xf32>, vector<24x8xf32>, vector<24x8xf32>, vector<24x8xf32> -> vector<24x40xf32>
    %c3_243 = arith.constant 3 : index
    %c0_244 = arith.constant 0 : index
    %c0_245 = arith.constant 0 : index
    %386 = vector.load %arg13[%c3_243, %c0_244, %c0_245] : memref<4x40x8xf32, #tpu.memory_space<vmem>>, vector<1x40x8xf32>
    %387 = vector.shape_cast %386 : vector<1x40x8xf32> to vector<40x8xf32>
    %cst_246 = arith.constant dense<0.000000e+00> : vector<24x8xf32>
    %388 = tpu.matmul %385, %387, %cst_246 {dimension_numbers = #tpu.dot_dimension_numbers<[1], [0], [0], [1], [0, 0, 1, 1], [], []>} : vector<24x40xf32>, vector<40x8xf32>, vector<24x8xf32> -> vector<24x8xf32>
    %c3_247 = arith.constant 3 : index
    %c0_248 = arith.constant 0 : index
    %c0_249 = arith.constant 0 : index
    %389 = vector.load %arg14[%c3_247, %c0_248, %c0_249] : memref<4x1x8xf32, #tpu.memory_space<vmem>>, vector<1x1x8xf32>
    %390 = vector.shape_cast %389 : vector<1x1x8xf32> to vector<1x8xf32>
    %391 = vector.broadcast %390 : vector<1x8xf32> to vector<24x8xf32>
    %392 = arith.addf %388, %391 : vector<24x8xf32>
    %cst_250 = arith.constant 0.000000e+00 : f32
    %393 = vector.broadcast %cst_250 : f32 to vector<24x8xf32>
    %394 = arith.cmpf oge, %392, %393 : vector<24x8xf32>
    %cst_251 = arith.constant 2.500000e-01 : f32
    %395 = vector.broadcast %cst_251 : f32 to vector<24x8xf32>
    %396 = arith.mulf %395, %392 : vector<24x8xf32>
    %397 = arith.select %394, %392, %396 : vector<24x8xi1>, vector<24x8xf32>
    %c3_252 = arith.constant 3 : index
    %c0_253 = arith.constant 0 : index
    %c0_254 = arith.constant 0 : index
    %398 = vector.load %arg15[%c3_252, %c0_253, %c0_254] : memref<4x1x8xf32, #tpu.memory_space<vmem>>, vector<1x1x8xf32>
    %399 = vector.shape_cast %398 : vector<1x1x8xf32> to vector<1x8xf32>
    %c3_255 = arith.constant 3 : index
    %c0_256 = arith.constant 0 : index
    %c0_257 = arith.constant 0 : index
    %400 = vector.load %arg16[%c3_255, %c0_256, %c0_257] : memref<4x1x8xf32, #tpu.memory_space<vmem>>, vector<1x1x8xf32>
    %401 = vector.shape_cast %400 : vector<1x1x8xf32> to vector<1x8xf32>
    %cst_258 = arith.constant dense<0.000000e+00> : vector<24xf32>
    %402 = vector.multi_reduction <add>, %397, %cst_258 [1] : vector<24x8xf32> to vector<24xf32>
    %403 = vector.shape_cast %402 : vector<24xf32> to vector<24x1xf32>
    %cst_259 = arith.constant 8.000000e+00 : f32
    %404 = vector.broadcast %cst_259 : f32 to vector<24x1xf32>
    %405 = arith.divf %403, %404 : vector<24x1xf32>
    %406 = vector.broadcast %405 : vector<24x1xf32> to vector<24x8xf32>
    %407 = arith.subf %397, %406 : vector<24x8xf32>
    %408 = arith.mulf %407, %407 : vector<24x8xf32>
    %cst_260 = arith.constant dense<0.000000e+00> : vector<24xf32>
    %409 = vector.multi_reduction <add>, %408, %cst_260 [1] : vector<24x8xf32> to vector<24xf32>
    %410 = vector.shape_cast %409 : vector<24xf32> to vector<24x1xf32>
    %cst_261 = arith.constant 8.000000e+00 : f32
    %411 = vector.broadcast %cst_261 : f32 to vector<24x1xf32>
    %412 = arith.divf %410, %411 : vector<24x1xf32>
    %413 = vector.broadcast %399 : vector<1x8xf32> to vector<24x8xf32>
    %414 = arith.mulf %413, %407 : vector<24x8xf32>
    %cst_262 = arith.constant 9.99999974E-6 : f32
    %415 = vector.broadcast %cst_262 : f32 to vector<24x1xf32>
    %416 = arith.addf %412, %415 : vector<24x1xf32>
    %417 = math.rsqrt %416 : vector<24x1xf32>
    %418 = vector.broadcast %417 : vector<24x1xf32> to vector<24x8xf32>
    %419 = arith.mulf %414, %418 : vector<24x8xf32>
    %420 = vector.broadcast %401 : vector<1x8xf32> to vector<24x8xf32>
    %421 = arith.addf %419, %420 : vector<24x8xf32>
    %c3_263 = arith.constant 3 : index
    %c0_264 = arith.constant 0 : index
    %c0_265 = arith.constant 0 : index
    %422 = vector.load %arg17[%c3_263, %c0_264, %c0_265] : memref<4x8x32xf32, #tpu.memory_space<vmem>>, vector<1x8x32xf32>
    %423 = vector.shape_cast %422 : vector<1x8x32xf32> to vector<8x32xf32>
    %cst_266 = arith.constant dense<0.000000e+00> : vector<24x32xf32>
    %424 = tpu.matmul %421, %423, %cst_266 {dimension_numbers = #tpu.dot_dimension_numbers<[1], [0], [0], [1], [0, 0, 1, 1], [], []>} : vector<24x8xf32>, vector<8x32xf32>, vector<24x32xf32> -> vector<24x32xf32>
    %425 = arith.addf %342, %424 : vector<24x32xf32>
    %c3_267 = arith.constant 3 : index
    %c0_268 = arith.constant 0 : index
    %c0_269 = arith.constant 0 : index
    %426 = vector.load %arg18[%c3_267, %c0_268, %c0_269] : memref<4x1x32xf32, #tpu.memory_space<vmem>>, vector<1x1x32xf32>
    %427 = vector.shape_cast %426 : vector<1x1x32xf32> to vector<1x32xf32>
    %428 = vector.broadcast %427 : vector<1x32xf32> to vector<24x32xf32>
    %429 = arith.addf %425, %428 : vector<24x32xf32>
    %c0_270 = arith.constant 0 : index
    %c0_271 = arith.constant 0 : index
    %430 = vector.load %arg19[%c0_270, %c0_271] : memref<32x17xf32, #tpu.memory_space<vmem>>, vector<32x17xf32>
    %cst_272 = arith.constant dense<0.000000e+00> : vector<24x17xf32>
    %431 = tpu.matmul %255, %430, %cst_272 {dimension_numbers = #tpu.dot_dimension_numbers<[1], [0], [0], [1], [0, 0, 1, 1], [], []>} : vector<24x32xf32>, vector<32x17xf32>, vector<24x17xf32> -> vector<24x17xf32>
    %c0_273 = arith.constant 0 : index
    %c0_274 = arith.constant 0 : index
    %432 = vector.load %arg20[%c0_273, %c0_274] : memref<1x17xf32, #tpu.memory_space<vmem>>, vector<1x17xf32>
    %433 = vector.broadcast %432 : vector<1x17xf32> to vector<24x17xf32>
    %434 = arith.addf %431, %433 : vector<24x17xf32>
    %435 = arith.negf %434 : vector<24x17xf32>
    %436 = math.exp %435 : vector<24x17xf32>
    %cst_275 = arith.constant 1.000000e+00 : f32
    %437 = vector.broadcast %cst_275 : f32 to vector<24x17xf32>
    %438 = arith.addf %437, %436 : vector<24x17xf32>
    %439 = arith.divf %437, %438 : vector<24x17xf32>
    %c0_276 = arith.constant 0 : index
    %c0_277 = arith.constant 0 : index
    %440 = vector.load %arg21[%c0_276, %c0_277] : memref<32x34xf32, #tpu.memory_space<vmem>>, vector<32x34xf32>
    %cst_278 = arith.constant dense<0.000000e+00> : vector<24x34xf32>
    %441 = tpu.matmul %429, %440, %cst_278 {dimension_numbers = #tpu.dot_dimension_numbers<[1], [0], [0], [1], [0, 0, 1, 1], [], []>} : vector<24x32xf32>, vector<32x34xf32>, vector<24x34xf32> -> vector<24x34xf32>
    %c0_279 = arith.constant 0 : index
    %c0_280 = arith.constant 0 : index
    %442 = vector.load %arg22[%c0_279, %c0_280] : memref<1x34xf32, #tpu.memory_space<vmem>>, vector<1x34xf32>
    %443 = vector.broadcast %442 : vector<1x34xf32> to vector<24x34xf32>
    %444 = arith.addf %441, %443 : vector<24x34xf32>
    %445 = vector.extract_strided_slice %444 {offsets = [0, 0], sizes = [24, 17], strides = [1, 1]} : vector<24x34xf32> to vector<24x17xf32>
    %446 = vector.extract_strided_slice %444 {offsets = [0, 17], sizes = [24, 17], strides = [1, 1]} : vector<24x34xf32> to vector<24x17xf32>
    %447 = arith.mulf %52, %439 : vector<24x17xf32>
    %448 = arith.mulf %53, %439 : vector<24x17xf32>
    %449 = arith.addf %54, %445 : vector<24x17xf32>
    %450 = arith.addf %55, %446 : vector<24x17xf32>
    %451 = tpu.concatenate %447, %449, %448, %450 in 1 : vector<24x17xf32>, vector<24x17xf32>, vector<24x17xf32>, vector<24x17xf32> -> vector<24x68xf32>
    %c0_281 = arith.constant 0 : index
    %c0_282 = arith.constant 0 : index
    %452 = vector.load %arg23[%c0_281, %c0_282] : memref<68x384xf32, #tpu.memory_space<vmem>>, vector<68x384xf32>
    %cst_283 = arith.constant dense<0.000000e+00> : vector<24x384xf32>
    %453 = tpu.matmul %451, %452, %cst_283 {dimension_numbers = #tpu.dot_dimension_numbers<[1], [0], [0], [1], [0, 0, 1, 1], [], []>} : vector<24x68xf32>, vector<68x384xf32>, vector<24x384xf32> -> vector<24x384xf32>
    %c0_284 = arith.constant 0 : index
    %c0_285 = arith.constant 0 : index
    %454 = vector.load %arg24[%c0_284, %c0_285] : memref<1x384xf32, #tpu.memory_space<vmem>>, vector<1x384xf32>
    %455 = vector.broadcast %454 : vector<1x384xf32> to vector<24x384xf32>
    %456 = arith.addf %453, %455 : vector<24x384xf32>
    %cst_286 = arith.constant 0.000000e+00 : f32
    %457 = vector.broadcast %cst_286 : f32 to vector<24x128xf32>
    %c0_287 = arith.constant 0 : index
    %c0_288 = arith.constant 0 : index
    %458 = vector.load %arg31[%c0_287, %c0_288] : memref<24x128xf32, #tpu.memory_space<vmem>>, vector<24x128xf32>
    tpu.vector_store %arg31[%c0_287, %c0_288], %457 {strides = array<i32>} : memref<24x128xf32, #tpu.memory_space<vmem>>, vector<24x128xf32>,
    %c0_289 = arith.constant 0 : index
    %c0_290 = arith.constant 0 : index
    %459 = vector.load %arg25[%c0_289, %c0_290] : memref<128x384xf32, #tpu.memory_space<vmem>>, vector<128x384xf32>
    %c0_291 = arith.constant 0 : index
    %c0_292 = arith.constant 0 : index
    %460 = vector.load %arg26[%c0_291, %c0_292] : memref<1x384xf32, #tpu.memory_space<vmem>>, vector<1x384xf32>
    %cst_293 = arith.constant 0.000000e+00 : f32
    %461 = vector.broadcast %cst_293 : f32 to vector<2x128xf32>
    %462 = vector.extract_strided_slice %456 {offsets = [0, 0], sizes = [2, 384], strides = [1, 1]} : vector<24x384xf32> to vector<2x384xf32>
    %cst_294 = arith.constant dense<0.000000e+00> : vector<2x384xf32>
    %463 = tpu.matmul %461, %459, %cst_294 {dimension_numbers = #tpu.dot_dimension_numbers<[1], [0], [0], [1], [0, 0, 1, 1], [], []>} : vector<2x128xf32>, vector<128x384xf32>, vector<2x384xf32> -> vector<2x384xf32>
    %464 = vector.broadcast %460 : vector<1x384xf32> to vector<2x384xf32>
    %465 = arith.addf %463, %464 : vector<2x384xf32>
    %466 = vector.extract_strided_slice %462 {offsets = [0, 0], sizes = [2, 128], strides = [1, 1]} : vector<2x384xf32> to vector<2x128xf32>
    %467 = vector.extract_strided_slice %465 {offsets = [0, 0], sizes = [2, 128], strides = [1, 1]} : vector<2x384xf32> to vector<2x128xf32>
    %468 = arith.addf %466, %467 : vector<2x128xf32>
    %469 = arith.negf %468 : vector<2x128xf32>
    %470 = math.exp %469 : vector<2x128xf32>
    %cst_295 = arith.constant 1.000000e+00 : f32
    %471 = vector.broadcast %cst_295 : f32 to vector<2x128xf32>
    %472 = arith.addf %471, %470 : vector<2x128xf32>
    %473 = arith.divf %471, %472 : vector<2x128xf32>
    %474 = vector.extract_strided_slice %462 {offsets = [0, 128], sizes = [2, 128], strides = [1, 1]} : vector<2x384xf32> to vector<2x128xf32>
    %475 = vector.extract_strided_slice %465 {offsets = [0, 128], sizes = [2, 128], strides = [1, 1]} : vector<2x384xf32> to vector<2x128xf32>
    %476 = arith.addf %474, %475 : vector<2x128xf32>
    %477 = arith.negf %476 : vector<2x128xf32>
    %478 = math.exp %477 : vector<2x128xf32>
    %cst_296 = arith.constant 1.000000e+00 : f32
    %479 = vector.broadcast %cst_296 : f32 to vector<2x128xf32>
    %480 = arith.addf %479, %478 : vector<2x128xf32>
    %481 = arith.divf %479, %480 : vector<2x128xf32>
    %482 = vector.extract_strided_slice %462 {offsets = [0, 256], sizes = [2, 128], strides = [1, 1]} : vector<2x384xf32> to vector<2x128xf32>
    %483 = vector.extract_strided_slice %465 {offsets = [0, 256], sizes = [2, 128], strides = [1, 1]} : vector<2x384xf32> to vector<2x128xf32>
    %484 = arith.mulf %473, %483 : vector<2x128xf32>
    %485 = arith.addf %482, %484 : vector<2x128xf32>
    %486 = math.tanh %485 : vector<2x128xf32>
    %cst_297 = arith.constant 1.000000e+00 : f32
    %487 = vector.broadcast %cst_297 : f32 to vector<2x128xf32>
    %488 = arith.subf %487, %481 : vector<2x128xf32>
    %489 = arith.mulf %488, %486 : vector<2x128xf32>
    %490 = arith.mulf %481, %461 : vector<2x128xf32>
    %491 = arith.addf %489, %490 : vector<2x128xf32>
    %c0_298 = arith.constant 0 : index
    %c0_299 = arith.constant 0 : index
    %492 = vector.load %arg31[%c0_298, %c0_299] : memref<24x128xf32, #tpu.memory_space<vmem>>, vector<2x128xf32>
    tpu.vector_store %arg31[%c0_298, %c0_299], %491 {strides = array<i32>} : memref<24x128xf32, #tpu.memory_space<vmem>>, vector<2x128xf32>,
    %493 = vector.extract_strided_slice %456 {offsets = [2, 0], sizes = [2, 384], strides = [1, 1]} : vector<24x384xf32> to vector<2x384xf32>
    %cst_300 = arith.constant dense<0.000000e+00> : vector<2x384xf32>
    %494 = tpu.matmul %491, %459, %cst_300 {dimension_numbers = #tpu.dot_dimension_numbers<[1], [0], [0], [1], [0, 0, 1, 1], [], []>} : vector<2x128xf32>, vector<128x384xf32>, vector<2x384xf32> -> vector<2x384xf32>
    %495 = vector.broadcast %460 : vector<1x384xf32> to vector<2x384xf32>
    %496 = arith.addf %494, %495 : vector<2x384xf32>
    %497 = vector.extract_strided_slice %493 {offsets = [0, 0], sizes = [2, 128], strides = [1, 1]} : vector<2x384xf32> to vector<2x128xf32>
    %498 = vector.extract_strided_slice %496 {offsets = [0, 0], sizes = [2, 128], strides = [1, 1]} : vector<2x384xf32> to vector<2x128xf32>
    %499 = arith.addf %497, %498 : vector<2x128xf32>
    %500 = arith.negf %499 : vector<2x128xf32>
    %501 = math.exp %500 : vector<2x128xf32>
    %cst_301 = arith.constant 1.000000e+00 : f32
    %502 = vector.broadcast %cst_301 : f32 to vector<2x128xf32>
    %503 = arith.addf %502, %501 : vector<2x128xf32>
    %504 = arith.divf %502, %503 : vector<2x128xf32>
    %505 = vector.extract_strided_slice %493 {offsets = [0, 128], sizes = [2, 128], strides = [1, 1]} : vector<2x384xf32> to vector<2x128xf32>
    %506 = vector.extract_strided_slice %496 {offsets = [0, 128], sizes = [2, 128], strides = [1, 1]} : vector<2x384xf32> to vector<2x128xf32>
    %507 = arith.addf %505, %506 : vector<2x128xf32>
    %508 = arith.negf %507 : vector<2x128xf32>
    %509 = math.exp %508 : vector<2x128xf32>
    %cst_302 = arith.constant 1.000000e+00 : f32
    %510 = vector.broadcast %cst_302 : f32 to vector<2x128xf32>
    %511 = arith.addf %510, %509 : vector<2x128xf32>
    %512 = arith.divf %510, %511 : vector<2x128xf32>
    %513 = vector.extract_strided_slice %493 {offsets = [0, 256], sizes = [2, 128], strides = [1, 1]} : vector<2x384xf32> to vector<2x128xf32>
    %514 = vector.extract_strided_slice %496 {offsets = [0, 256], sizes = [2, 128], strides = [1, 1]} : vector<2x384xf32> to vector<2x128xf32>
    %515 = arith.mulf %504, %514 : vector<2x128xf32>
    %516 = arith.addf %513, %515 : vector<2x128xf32>
    %517 = math.tanh %516 : vector<2x128xf32>
    %cst_303 = arith.constant 1.000000e+00 : f32
    %518 = vector.broadcast %cst_303 : f32 to vector<2x128xf32>
    %519 = arith.subf %518, %512 : vector<2x128xf32>
    %520 = arith.mulf %519, %517 : vector<2x128xf32>
    %521 = arith.mulf %512, %491 : vector<2x128xf32>
    %522 = arith.addf %520, %521 : vector<2x128xf32>
    %c2_304 = arith.constant 2 : index
    %c0_305 = arith.constant 0 : index
    %523 = vector.load %arg31[%c2_304, %c0_305] : memref<24x128xf32, #tpu.memory_space<vmem>>, vector<2x128xf32>
    tpu.vector_store %arg31[%c2_304, %c0_305], %522 {strides = array<i32>} : memref<24x128xf32, #tpu.memory_space<vmem>>, vector<2x128xf32>,
    %524 = vector.extract_strided_slice %456 {offsets = [4, 0], sizes = [2, 384], strides = [1, 1]} : vector<24x384xf32> to vector<2x384xf32>
    %cst_306 = arith.constant dense<0.000000e+00> : vector<2x384xf32>
    %525 = tpu.matmul %522, %459, %cst_306 {dimension_numbers = #tpu.dot_dimension_numbers<[1], [0], [0], [1], [0, 0, 1, 1], [], []>} : vector<2x128xf32>, vector<128x384xf32>, vector<2x384xf32> -> vector<2x384xf32>
    %526 = vector.broadcast %460 : vector<1x384xf32> to vector<2x384xf32>
    %527 = arith.addf %525, %526 : vector<2x384xf32>
    %528 = vector.extract_strided_slice %524 {offsets = [0, 0], sizes = [2, 128], strides = [1, 1]} : vector<2x384xf32> to vector<2x128xf32>
    %529 = vector.extract_strided_slice %527 {offsets = [0, 0], sizes = [2, 128], strides = [1, 1]} : vector<2x384xf32> to vector<2x128xf32>
    %530 = arith.addf %528, %529 : vector<2x128xf32>
    %531 = arith.negf %530 : vector<2x128xf32>
    %532 = math.exp %531 : vector<2x128xf32>
    %cst_307 = arith.constant 1.000000e+00 : f32
    %533 = vector.broadcast %cst_307 : f32 to vector<2x128xf32>
    %534 = arith.addf %533, %532 : vector<2x128xf32>
    %535 = arith.divf %533, %534 : vector<2x128xf32>
    %536 = vector.extract_strided_slice %524 {offsets = [0, 128], sizes = [2, 128], strides = [1, 1]} : vector<2x384xf32> to vector<2x128xf32>
    %537 = vector.extract_strided_slice %527 {offsets = [0, 128], sizes = [2, 128], strides = [1, 1]} : vector<2x384xf32> to vector<2x128xf32>
    %538 = arith.addf %536, %537 : vector<2x128xf32>
    %539 = arith.negf %538 : vector<2x128xf32>
    %540 = math.exp %539 : vector<2x128xf32>
    %cst_308 = arith.constant 1.000000e+00 : f32
    %541 = vector.broadcast %cst_308 : f32 to vector<2x128xf32>
    %542 = arith.addf %541, %540 : vector<2x128xf32>
    %543 = arith.divf %541, %542 : vector<2x128xf32>
    %544 = vector.extract_strided_slice %524 {offsets = [0, 256], sizes = [2, 128], strides = [1, 1]} : vector<2x384xf32> to vector<2x128xf32>
    %545 = vector.extract_strided_slice %527 {offsets = [0, 256], sizes = [2, 128], strides = [1, 1]} : vector<2x384xf32> to vector<2x128xf32>
    %546 = arith.mulf %535, %545 : vector<2x128xf32>
    %547 = arith.addf %544, %546 : vector<2x128xf32>
    %548 = math.tanh %547 : vector<2x128xf32>
    %cst_309 = arith.constant 1.000000e+00 : f32
    %549 = vector.broadcast %cst_309 : f32 to vector<2x128xf32>
    %550 = arith.subf %549, %543 : vector<2x128xf32>
    %551 = arith.mulf %550, %548 : vector<2x128xf32>
    %552 = arith.mulf %543, %522 : vector<2x128xf32>
    %553 = arith.addf %551, %552 : vector<2x128xf32>
    %c4_310 = arith.constant 4 : index
    %c0_311 = arith.constant 0 : index
    %554 = vector.load %arg31[%c4_310, %c0_311] : memref<24x128xf32, #tpu.memory_space<vmem>>, vector<2x128xf32>
    tpu.vector_store %arg31[%c4_310, %c0_311], %553 {strides = array<i32>} : memref<24x128xf32, #tpu.memory_space<vmem>>, vector<2x128xf32>,
    %555 = vector.extract_strided_slice %456 {offsets = [6, 0], sizes = [2, 384], strides = [1, 1]} : vector<24x384xf32> to vector<2x384xf32>
    %cst_312 = arith.constant dense<0.000000e+00> : vector<2x384xf32>
    %556 = tpu.matmul %553, %459, %cst_312 {dimension_numbers = #tpu.dot_dimension_numbers<[1], [0], [0], [1], [0, 0, 1, 1], [], []>} : vector<2x128xf32>, vector<128x384xf32>, vector<2x384xf32> -> vector<2x384xf32>
    %557 = vector.broadcast %460 : vector<1x384xf32> to vector<2x384xf32>
    %558 = arith.addf %556, %557 : vector<2x384xf32>
    %559 = vector.extract_strided_slice %555 {offsets = [0, 0], sizes = [2, 128], strides = [1, 1]} : vector<2x384xf32> to vector<2x128xf32>
    %560 = vector.extract_strided_slice %558 {offsets = [0, 0], sizes = [2, 128], strides = [1, 1]} : vector<2x384xf32> to vector<2x128xf32>
    %561 = arith.addf %559, %560 : vector<2x128xf32>
    %562 = arith.negf %561 : vector<2x128xf32>
    %563 = math.exp %562 : vector<2x128xf32>
    %cst_313 = arith.constant 1.000000e+00 : f32
    %564 = vector.broadcast %cst_313 : f32 to vector<2x128xf32>
    %565 = arith.addf %564, %563 : vector<2x128xf32>
    %566 = arith.divf %564, %565 : vector<2x128xf32>
    %567 = vector.extract_strided_slice %555 {offsets = [0, 128], sizes = [2, 128], strides = [1, 1]} : vector<2x384xf32> to vector<2x128xf32>
    %568 = vector.extract_strided_slice %558 {offsets = [0, 128], sizes = [2, 128], strides = [1, 1]} : vector<2x384xf32> to vector<2x128xf32>
    %569 = arith.addf %567, %568 : vector<2x128xf32>
    %570 = arith.negf %569 : vector<2x128xf32>
    %571 = math.exp %570 : vector<2x128xf32>
    %cst_314 = arith.constant 1.000000e+00 : f32
    %572 = vector.broadcast %cst_314 : f32 to vector<2x128xf32>
    %573 = arith.addf %572, %571 : vector<2x128xf32>
    %574 = arith.divf %572, %573 : vector<2x128xf32>
    %575 = vector.extract_strided_slice %555 {offsets = [0, 256], sizes = [2, 128], strides = [1, 1]} : vector<2x384xf32> to vector<2x128xf32>
    %576 = vector.extract_strided_slice %558 {offsets = [0, 256], sizes = [2, 128], strides = [1, 1]} : vector<2x384xf32> to vector<2x128xf32>
    %577 = arith.mulf %566, %576 : vector<2x128xf32>
    %578 = arith.addf %575, %577 : vector<2x128xf32>
    %579 = math.tanh %578 : vector<2x128xf32>
    %cst_315 = arith.constant 1.000000e+00 : f32
    %580 = vector.broadcast %cst_315 : f32 to vector<2x128xf32>
    %581 = arith.subf %580, %574 : vector<2x128xf32>
    %582 = arith.mulf %581, %579 : vector<2x128xf32>
    %583 = arith.mulf %574, %553 : vector<2x128xf32>
    %584 = arith.addf %582, %583 : vector<2x128xf32>
    %c6 = arith.constant 6 : index
    %c0_316 = arith.constant 0 : index
    %585 = vector.load %arg31[%c6, %c0_316] : memref<24x128xf32, #tpu.memory_space<vmem>>, vector<2x128xf32>
    tpu.vector_store %arg31[%c6, %c0_316], %584 {strides = array<i32>} : memref<24x128xf32, #tpu.memory_space<vmem>>, vector<2x128xf32>,
    %586 = vector.extract_strided_slice %456 {offsets = [8, 0], sizes = [2, 384], strides = [1, 1]} : vector<24x384xf32> to vector<2x384xf32>
    %cst_317 = arith.constant dense<0.000000e+00> : vector<2x384xf32>
    %587 = tpu.matmul %584, %459, %cst_317 {dimension_numbers = #tpu.dot_dimension_numbers<[1], [0], [0], [1], [0, 0, 1, 1], [], []>} : vector<2x128xf32>, vector<128x384xf32>, vector<2x384xf32> -> vector<2x384xf32>
    %588 = vector.broadcast %460 : vector<1x384xf32> to vector<2x384xf32>
    %589 = arith.addf %587, %588 : vector<2x384xf32>
    %590 = vector.extract_strided_slice %586 {offsets = [0, 0], sizes = [2, 128], strides = [1, 1]} : vector<2x384xf32> to vector<2x128xf32>
    %591 = vector.extract_strided_slice %589 {offsets = [0, 0], sizes = [2, 128], strides = [1, 1]} : vector<2x384xf32> to vector<2x128xf32>
    %592 = arith.addf %590, %591 : vector<2x128xf32>
    %593 = arith.negf %592 : vector<2x128xf32>
    %594 = math.exp %593 : vector<2x128xf32>
    %cst_318 = arith.constant 1.000000e+00 : f32
    %595 = vector.broadcast %cst_318 : f32 to vector<2x128xf32>
    %596 = arith.addf %595, %594 : vector<2x128xf32>
    %597 = arith.divf %595, %596 : vector<2x128xf32>
    %598 = vector.extract_strided_slice %586 {offsets = [0, 128], sizes = [2, 128], strides = [1, 1]} : vector<2x384xf32> to vector<2x128xf32>
    %599 = vector.extract_strided_slice %589 {offsets = [0, 128], sizes = [2, 128], strides = [1, 1]} : vector<2x384xf32> to vector<2x128xf32>
    %600 = arith.addf %598, %599 : vector<2x128xf32>
    %601 = arith.negf %600 : vector<2x128xf32>
    %602 = math.exp %601 : vector<2x128xf32>
    %cst_319 = arith.constant 1.000000e+00 : f32
    %603 = vector.broadcast %cst_319 : f32 to vector<2x128xf32>
    %604 = arith.addf %603, %602 : vector<2x128xf32>
    %605 = arith.divf %603, %604 : vector<2x128xf32>
    %606 = vector.extract_strided_slice %586 {offsets = [0, 256], sizes = [2, 128], strides = [1, 1]} : vector<2x384xf32> to vector<2x128xf32>
    %607 = vector.extract_strided_slice %589 {offsets = [0, 256], sizes = [2, 128], strides = [1, 1]} : vector<2x384xf32> to vector<2x128xf32>
    %608 = arith.mulf %597, %607 : vector<2x128xf32>
    %609 = arith.addf %606, %608 : vector<2x128xf32>
    %610 = math.tanh %609 : vector<2x128xf32>
    %cst_320 = arith.constant 1.000000e+00 : f32
    %611 = vector.broadcast %cst_320 : f32 to vector<2x128xf32>
    %612 = arith.subf %611, %605 : vector<2x128xf32>
    %613 = arith.mulf %612, %610 : vector<2x128xf32>
    %614 = arith.mulf %605, %584 : vector<2x128xf32>
    %615 = arith.addf %613, %614 : vector<2x128xf32>
    %c8_321 = arith.constant 8 : index
    %c0_322 = arith.constant 0 : index
    %616 = vector.load %arg31[%c8_321, %c0_322] : memref<24x128xf32, #tpu.memory_space<vmem>>, vector<2x128xf32>
    tpu.vector_store %arg31[%c8_321, %c0_322], %615 {strides = array<i32>} : memref<24x128xf32, #tpu.memory_space<vmem>>, vector<2x128xf32>,
    %617 = vector.extract_strided_slice %456 {offsets = [10, 0], sizes = [2, 384], strides = [1, 1]} : vector<24x384xf32> to vector<2x384xf32>
    %cst_323 = arith.constant dense<0.000000e+00> : vector<2x384xf32>
    %618 = tpu.matmul %615, %459, %cst_323 {dimension_numbers = #tpu.dot_dimension_numbers<[1], [0], [0], [1], [0, 0, 1, 1], [], []>} : vector<2x128xf32>, vector<128x384xf32>, vector<2x384xf32> -> vector<2x384xf32>
    %619 = vector.broadcast %460 : vector<1x384xf32> to vector<2x384xf32>
    %620 = arith.addf %618, %619 : vector<2x384xf32>
    %621 = vector.extract_strided_slice %617 {offsets = [0, 0], sizes = [2, 128], strides = [1, 1]} : vector<2x384xf32> to vector<2x128xf32>
    %622 = vector.extract_strided_slice %620 {offsets = [0, 0], sizes = [2, 128], strides = [1, 1]} : vector<2x384xf32> to vector<2x128xf32>
    %623 = arith.addf %621, %622 : vector<2x128xf32>
    %624 = arith.negf %623 : vector<2x128xf32>
    %625 = math.exp %624 : vector<2x128xf32>
    %cst_324 = arith.constant 1.000000e+00 : f32
    %626 = vector.broadcast %cst_324 : f32 to vector<2x128xf32>
    %627 = arith.addf %626, %625 : vector<2x128xf32>
    %628 = arith.divf %626, %627 : vector<2x128xf32>
    %629 = vector.extract_strided_slice %617 {offsets = [0, 128], sizes = [2, 128], strides = [1, 1]} : vector<2x384xf32> to vector<2x128xf32>
    %630 = vector.extract_strided_slice %620 {offsets = [0, 128], sizes = [2, 128], strides = [1, 1]} : vector<2x384xf32> to vector<2x128xf32>
    %631 = arith.addf %629, %630 : vector<2x128xf32>
    %632 = arith.negf %631 : vector<2x128xf32>
    %633 = math.exp %632 : vector<2x128xf32>
    %cst_325 = arith.constant 1.000000e+00 : f32
    %634 = vector.broadcast %cst_325 : f32 to vector<2x128xf32>
    %635 = arith.addf %634, %633 : vector<2x128xf32>
    %636 = arith.divf %634, %635 : vector<2x128xf32>
    %637 = vector.extract_strided_slice %617 {offsets = [0, 256], sizes = [2, 128], strides = [1, 1]} : vector<2x384xf32> to vector<2x128xf32>
    %638 = vector.extract_strided_slice %620 {offsets = [0, 256], sizes = [2, 128], strides = [1, 1]} : vector<2x384xf32> to vector<2x128xf32>
    %639 = arith.mulf %628, %638 : vector<2x128xf32>
    %640 = arith.addf %637, %639 : vector<2x128xf32>
    %641 = math.tanh %640 : vector<2x128xf32>
    %cst_326 = arith.constant 1.000000e+00 : f32
    %642 = vector.broadcast %cst_326 : f32 to vector<2x128xf32>
    %643 = arith.subf %642, %636 : vector<2x128xf32>
    %644 = arith.mulf %643, %641 : vector<2x128xf32>
    %645 = arith.mulf %636, %615 : vector<2x128xf32>
    %646 = arith.addf %644, %645 : vector<2x128xf32>
    %c10_327 = arith.constant 10 : index
    %c0_328 = arith.constant 0 : index
    %647 = vector.load %arg31[%c10_327, %c0_328] : memref<24x128xf32, #tpu.memory_space<vmem>>, vector<2x128xf32>
    tpu.vector_store %arg31[%c10_327, %c0_328], %646 {strides = array<i32>} : memref<24x128xf32, #tpu.memory_space<vmem>>, vector<2x128xf32>,
    %648 = vector.extract_strided_slice %456 {offsets = [12, 0], sizes = [2, 384], strides = [1, 1]} : vector<24x384xf32> to vector<2x384xf32>
    %cst_329 = arith.constant dense<0.000000e+00> : vector<2x384xf32>
    %649 = tpu.matmul %646, %459, %cst_329 {dimension_numbers = #tpu.dot_dimension_numbers<[1], [0], [0], [1], [0, 0, 1, 1], [], []>} : vector<2x128xf32>, vector<128x384xf32>, vector<2x384xf32> -> vector<2x384xf32>
    %650 = vector.broadcast %460 : vector<1x384xf32> to vector<2x384xf32>
    %651 = arith.addf %649, %650 : vector<2x384xf32>
    %652 = vector.extract_strided_slice %648 {offsets = [0, 0], sizes = [2, 128], strides = [1, 1]} : vector<2x384xf32> to vector<2x128xf32>
    %653 = vector.extract_strided_slice %651 {offsets = [0, 0], sizes = [2, 128], strides = [1, 1]} : vector<2x384xf32> to vector<2x128xf32>
    %654 = arith.addf %652, %653 : vector<2x128xf32>
    %655 = arith.negf %654 : vector<2x128xf32>
    %656 = math.exp %655 : vector<2x128xf32>
    %cst_330 = arith.constant 1.000000e+00 : f32
    %657 = vector.broadcast %cst_330 : f32 to vector<2x128xf32>
    %658 = arith.addf %657, %656 : vector<2x128xf32>
    %659 = arith.divf %657, %658 : vector<2x128xf32>
    %660 = vector.extract_strided_slice %648 {offsets = [0, 128], sizes = [2, 128], strides = [1, 1]} : vector<2x384xf32> to vector<2x128xf32>
    %661 = vector.extract_strided_slice %651 {offsets = [0, 128], sizes = [2, 128], strides = [1, 1]} : vector<2x384xf32> to vector<2x128xf32>
    %662 = arith.addf %660, %661 : vector<2x128xf32>
    %663 = arith.negf %662 : vector<2x128xf32>
    %664 = math.exp %663 : vector<2x128xf32>
    %cst_331 = arith.constant 1.000000e+00 : f32
    %665 = vector.broadcast %cst_331 : f32 to vector<2x128xf32>
    %666 = arith.addf %665, %664 : vector<2x128xf32>
    %667 = arith.divf %665, %666 : vector<2x128xf32>
    %668 = vector.extract_strided_slice %648 {offsets = [0, 256], sizes = [2, 128], strides = [1, 1]} : vector<2x384xf32> to vector<2x128xf32>
    %669 = vector.extract_strided_slice %651 {offsets = [0, 256], sizes = [2, 128], strides = [1, 1]} : vector<2x384xf32> to vector<2x128xf32>
    %670 = arith.mulf %659, %669 : vector<2x128xf32>
    %671 = arith.addf %668, %670 : vector<2x128xf32>
    %672 = math.tanh %671 : vector<2x128xf32>
    %cst_332 = arith.constant 1.000000e+00 : f32
    %673 = vector.broadcast %cst_332 : f32 to vector<2x128xf32>
    %674 = arith.subf %673, %667 : vector<2x128xf32>
    %675 = arith.mulf %674, %672 : vector<2x128xf32>
    %676 = arith.mulf %667, %646 : vector<2x128xf32>
    %677 = arith.addf %675, %676 : vector<2x128xf32>
    %c12_333 = arith.constant 12 : index
    %c0_334 = arith.constant 0 : index
    %678 = vector.load %arg31[%c12_333, %c0_334] : memref<24x128xf32, #tpu.memory_space<vmem>>, vector<2x128xf32>
    tpu.vector_store %arg31[%c12_333, %c0_334], %677 {strides = array<i32>} : memref<24x128xf32, #tpu.memory_space<vmem>>, vector<2x128xf32>,
    %679 = vector.extract_strided_slice %456 {offsets = [14, 0], sizes = [2, 384], strides = [1, 1]} : vector<24x384xf32> to vector<2x384xf32>
    %cst_335 = arith.constant dense<0.000000e+00> : vector<2x384xf32>
    %680 = tpu.matmul %677, %459, %cst_335 {dimension_numbers = #tpu.dot_dimension_numbers<[1], [0], [0], [1], [0, 0, 1, 1], [], []>} : vector<2x128xf32>, vector<128x384xf32>, vector<2x384xf32> -> vector<2x384xf32>
    %681 = vector.broadcast %460 : vector<1x384xf32> to vector<2x384xf32>
    %682 = arith.addf %680, %681 : vector<2x384xf32>
    %683 = vector.extract_strided_slice %679 {offsets = [0, 0], sizes = [2, 128], strides = [1, 1]} : vector<2x384xf32> to vector<2x128xf32>
    %684 = vector.extract_strided_slice %682 {offsets = [0, 0], sizes = [2, 128], strides = [1, 1]} : vector<2x384xf32> to vector<2x128xf32>
    %685 = arith.addf %683, %684 : vector<2x128xf32>
    %686 = arith.negf %685 : vector<2x128xf32>
    %687 = math.exp %686 : vector<2x128xf32>
    %cst_336 = arith.constant 1.000000e+00 : f32
    %688 = vector.broadcast %cst_336 : f32 to vector<2x128xf32>
    %689 = arith.addf %688, %687 : vector<2x128xf32>
    %690 = arith.divf %688, %689 : vector<2x128xf32>
    %691 = vector.extract_strided_slice %679 {offsets = [0, 128], sizes = [2, 128], strides = [1, 1]} : vector<2x384xf32> to vector<2x128xf32>
    %692 = vector.extract_strided_slice %682 {offsets = [0, 128], sizes = [2, 128], strides = [1, 1]} : vector<2x384xf32> to vector<2x128xf32>
    %693 = arith.addf %691, %692 : vector<2x128xf32>
    %694 = arith.negf %693 : vector<2x128xf32>
    %695 = math.exp %694 : vector<2x128xf32>
    %cst_337 = arith.constant 1.000000e+00 : f32
    %696 = vector.broadcast %cst_337 : f32 to vector<2x128xf32>
    %697 = arith.addf %696, %695 : vector<2x128xf32>
    %698 = arith.divf %696, %697 : vector<2x128xf32>
    %699 = vector.extract_strided_slice %679 {offsets = [0, 256], sizes = [2, 128], strides = [1, 1]} : vector<2x384xf32> to vector<2x128xf32>
    %700 = vector.extract_strided_slice %682 {offsets = [0, 256], sizes = [2, 128], strides = [1, 1]} : vector<2x384xf32> to vector<2x128xf32>
    %701 = arith.mulf %690, %700 : vector<2x128xf32>
    %702 = arith.addf %699, %701 : vector<2x128xf32>
    %703 = math.tanh %702 : vector<2x128xf32>
    %cst_338 = arith.constant 1.000000e+00 : f32
    %704 = vector.broadcast %cst_338 : f32 to vector<2x128xf32>
    %705 = arith.subf %704, %698 : vector<2x128xf32>
    %706 = arith.mulf %705, %703 : vector<2x128xf32>
    %707 = arith.mulf %698, %677 : vector<2x128xf32>
    %708 = arith.addf %706, %707 : vector<2x128xf32>
    %c14_339 = arith.constant 14 : index
    %c0_340 = arith.constant 0 : index
    %709 = vector.load %arg31[%c14_339, %c0_340] : memref<24x128xf32, #tpu.memory_space<vmem>>, vector<2x128xf32>
    tpu.vector_store %arg31[%c14_339, %c0_340], %708 {strides = array<i32>} : memref<24x128xf32, #tpu.memory_space<vmem>>, vector<2x128xf32>,
    %710 = vector.extract_strided_slice %456 {offsets = [16, 0], sizes = [2, 384], strides = [1, 1]} : vector<24x384xf32> to vector<2x384xf32>
    %cst_341 = arith.constant dense<0.000000e+00> : vector<2x384xf32>
    %711 = tpu.matmul %708, %459, %cst_341 {dimension_numbers = #tpu.dot_dimension_numbers<[1], [0], [0], [1], [0, 0, 1, 1], [], []>} : vector<2x128xf32>, vector<128x384xf32>, vector<2x384xf32> -> vector<2x384xf32>
    %712 = vector.broadcast %460 : vector<1x384xf32> to vector<2x384xf32>
    %713 = arith.addf %711, %712 : vector<2x384xf32>
    %714 = vector.extract_strided_slice %710 {offsets = [0, 0], sizes = [2, 128], strides = [1, 1]} : vector<2x384xf32> to vector<2x128xf32>
    %715 = vector.extract_strided_slice %713 {offsets = [0, 0], sizes = [2, 128], strides = [1, 1]} : vector<2x384xf32> to vector<2x128xf32>
    %716 = arith.addf %714, %715 : vector<2x128xf32>
    %717 = arith.negf %716 : vector<2x128xf32>
    %718 = math.exp %717 : vector<2x128xf32>
    %cst_342 = arith.constant 1.000000e+00 : f32
    %719 = vector.broadcast %cst_342 : f32 to vector<2x128xf32>
    %720 = arith.addf %719, %718 : vector<2x128xf32>
    %721 = arith.divf %719, %720 : vector<2x128xf32>
    %722 = vector.extract_strided_slice %710 {offsets = [0, 128], sizes = [2, 128], strides = [1, 1]} : vector<2x384xf32> to vector<2x128xf32>
    %723 = vector.extract_strided_slice %713 {offsets = [0, 128], sizes = [2, 128], strides = [1, 1]} : vector<2x384xf32> to vector<2x128xf32>
    %724 = arith.addf %722, %723 : vector<2x128xf32>
    %725 = arith.negf %724 : vector<2x128xf32>
    %726 = math.exp %725 : vector<2x128xf32>
    %cst_343 = arith.constant 1.000000e+00 : f32
    %727 = vector.broadcast %cst_343 : f32 to vector<2x128xf32>
    %728 = arith.addf %727, %726 : vector<2x128xf32>
    %729 = arith.divf %727, %728 : vector<2x128xf32>
    %730 = vector.extract_strided_slice %710 {offsets = [0, 256], sizes = [2, 128], strides = [1, 1]} : vector<2x384xf32> to vector<2x128xf32>
    %731 = vector.extract_strided_slice %713 {offsets = [0, 256], sizes = [2, 128], strides = [1, 1]} : vector<2x384xf32> to vector<2x128xf32>
    %732 = arith.mulf %721, %731 : vector<2x128xf32>
    %733 = arith.addf %730, %732 : vector<2x128xf32>
    %734 = math.tanh %733 : vector<2x128xf32>
    %cst_344 = arith.constant 1.000000e+00 : f32
    %735 = vector.broadcast %cst_344 : f32 to vector<2x128xf32>
    %736 = arith.subf %735, %729 : vector<2x128xf32>
    %737 = arith.mulf %736, %734 : vector<2x128xf32>
    %738 = arith.mulf %729, %708 : vector<2x128xf32>
    %739 = arith.addf %737, %738 : vector<2x128xf32>
    %c16_345 = arith.constant 16 : index
    %c0_346 = arith.constant 0 : index
    %740 = vector.load %arg31[%c16_345, %c0_346] : memref<24x128xf32, #tpu.memory_space<vmem>>, vector<2x128xf32>
    tpu.vector_store %arg31[%c16_345, %c0_346], %739 {strides = array<i32>} : memref<24x128xf32, #tpu.memory_space<vmem>>, vector<2x128xf32>,
    %741 = vector.extract_strided_slice %456 {offsets = [18, 0], sizes = [2, 384], strides = [1, 1]} : vector<24x384xf32> to vector<2x384xf32>
    %cst_347 = arith.constant dense<0.000000e+00> : vector<2x384xf32>
    %742 = tpu.matmul %739, %459, %cst_347 {dimension_numbers = #tpu.dot_dimension_numbers<[1], [0], [0], [1], [0, 0, 1, 1], [], []>} : vector<2x128xf32>, vector<128x384xf32>, vector<2x384xf32> -> vector<2x384xf32>
    %743 = vector.broadcast %460 : vector<1x384xf32> to vector<2x384xf32>
    %744 = arith.addf %742, %743 : vector<2x384xf32>
    %745 = vector.extract_strided_slice %741 {offsets = [0, 0], sizes = [2, 128], strides = [1, 1]} : vector<2x384xf32> to vector<2x128xf32>
    %746 = vector.extract_strided_slice %744 {offsets = [0, 0], sizes = [2, 128], strides = [1, 1]} : vector<2x384xf32> to vector<2x128xf32>
    %747 = arith.addf %745, %746 : vector<2x128xf32>
    %748 = arith.negf %747 : vector<2x128xf32>
    %749 = math.exp %748 : vector<2x128xf32>
    %cst_348 = arith.constant 1.000000e+00 : f32
    %750 = vector.broadcast %cst_348 : f32 to vector<2x128xf32>
    %751 = arith.addf %750, %749 : vector<2x128xf32>
    %752 = arith.divf %750, %751 : vector<2x128xf32>
    %753 = vector.extract_strided_slice %741 {offsets = [0, 128], sizes = [2, 128], strides = [1, 1]} : vector<2x384xf32> to vector<2x128xf32>
    %754 = vector.extract_strided_slice %744 {offsets = [0, 128], sizes = [2, 128], strides = [1, 1]} : vector<2x384xf32> to vector<2x128xf32>
    %755 = arith.addf %753, %754 : vector<2x128xf32>
    %756 = arith.negf %755 : vector<2x128xf32>
    %757 = math.exp %756 : vector<2x128xf32>
    %cst_349 = arith.constant 1.000000e+00 : f32
    %758 = vector.broadcast %cst_349 : f32 to vector<2x128xf32>
    %759 = arith.addf %758, %757 : vector<2x128xf32>
    %760 = arith.divf %758, %759 : vector<2x128xf32>
    %761 = vector.extract_strided_slice %741 {offsets = [0, 256], sizes = [2, 128], strides = [1, 1]} : vector<2x384xf32> to vector<2x128xf32>
    %762 = vector.extract_strided_slice %744 {offsets = [0, 256], sizes = [2, 128], strides = [1, 1]} : vector<2x384xf32> to vector<2x128xf32>
    %763 = arith.mulf %752, %762 : vector<2x128xf32>
    %764 = arith.addf %761, %763 : vector<2x128xf32>
    %765 = math.tanh %764 : vector<2x128xf32>
    %cst_350 = arith.constant 1.000000e+00 : f32
    %766 = vector.broadcast %cst_350 : f32 to vector<2x128xf32>
    %767 = arith.subf %766, %760 : vector<2x128xf32>
    %768 = arith.mulf %767, %765 : vector<2x128xf32>
    %769 = arith.mulf %760, %739 : vector<2x128xf32>
    %770 = arith.addf %768, %769 : vector<2x128xf32>
    %c18 = arith.constant 18 : index
    %c0_351 = arith.constant 0 : index
    %771 = vector.load %arg31[%c18, %c0_351] : memref<24x128xf32, #tpu.memory_space<vmem>>, vector<2x128xf32>
    tpu.vector_store %arg31[%c18, %c0_351], %770 {strides = array<i32>} : memref<24x128xf32, #tpu.memory_space<vmem>>, vector<2x128xf32>,
    %772 = vector.extract_strided_slice %456 {offsets = [20, 0], sizes = [2, 384], strides = [1, 1]} : vector<24x384xf32> to vector<2x384xf32>
    %cst_352 = arith.constant dense<0.000000e+00> : vector<2x384xf32>
    %773 = tpu.matmul %770, %459, %cst_352 {dimension_numbers = #tpu.dot_dimension_numbers<[1], [0], [0], [1], [0, 0, 1, 1], [], []>} : vector<2x128xf32>, vector<128x384xf32>, vector<2x384xf32> -> vector<2x384xf32>
    %774 = vector.broadcast %460 : vector<1x384xf32> to vector<2x384xf32>
    %775 = arith.addf %773, %774 : vector<2x384xf32>
    %776 = vector.extract_strided_slice %772 {offsets = [0, 0], sizes = [2, 128], strides = [1, 1]} : vector<2x384xf32> to vector<2x128xf32>
    %777 = vector.extract_strided_slice %775 {offsets = [0, 0], sizes = [2, 128], strides = [1, 1]} : vector<2x384xf32> to vector<2x128xf32>
    %778 = arith.addf %776, %777 : vector<2x128xf32>
    %779 = arith.negf %778 : vector<2x128xf32>
    %780 = math.exp %779 : vector<2x128xf32>
    %cst_353 = arith.constant 1.000000e+00 : f32
    %781 = vector.broadcast %cst_353 : f32 to vector<2x128xf32>
    %782 = arith.addf %781, %780 : vector<2x128xf32>
    %783 = arith.divf %781, %782 : vector<2x128xf32>
    %784 = vector.extract_strided_slice %772 {offsets = [0, 128], sizes = [2, 128], strides = [1, 1]} : vector<2x384xf32> to vector<2x128xf32>
    %785 = vector.extract_strided_slice %775 {offsets = [0, 128], sizes = [2, 128], strides = [1, 1]} : vector<2x384xf32> to vector<2x128xf32>
    %786 = arith.addf %784, %785 : vector<2x128xf32>
    %787 = arith.negf %786 : vector<2x128xf32>
    %788 = math.exp %787 : vector<2x128xf32>
    %cst_354 = arith.constant 1.000000e+00 : f32
    %789 = vector.broadcast %cst_354 : f32 to vector<2x128xf32>
    %790 = arith.addf %789, %788 : vector<2x128xf32>
    %791 = arith.divf %789, %790 : vector<2x128xf32>
    %792 = vector.extract_strided_slice %772 {offsets = [0, 256], sizes = [2, 128], strides = [1, 1]} : vector<2x384xf32> to vector<2x128xf32>
    %793 = vector.extract_strided_slice %775 {offsets = [0, 256], sizes = [2, 128], strides = [1, 1]} : vector<2x384xf32> to vector<2x128xf32>
    %794 = arith.mulf %783, %793 : vector<2x128xf32>
    %795 = arith.addf %792, %794 : vector<2x128xf32>
    %796 = math.tanh %795 : vector<2x128xf32>
    %cst_355 = arith.constant 1.000000e+00 : f32
    %797 = vector.broadcast %cst_355 : f32 to vector<2x128xf32>
    %798 = arith.subf %797, %791 : vector<2x128xf32>
    %799 = arith.mulf %798, %796 : vector<2x128xf32>
    %800 = arith.mulf %791, %770 : vector<2x128xf32>
    %801 = arith.addf %799, %800 : vector<2x128xf32>
    %c20 = arith.constant 20 : index
    %c0_356 = arith.constant 0 : index
    %802 = vector.load %arg31[%c20, %c0_356] : memref<24x128xf32, #tpu.memory_space<vmem>>, vector<2x128xf32>
    tpu.vector_store %arg31[%c20, %c0_356], %801 {strides = array<i32>} : memref<24x128xf32, #tpu.memory_space<vmem>>, vector<2x128xf32>,
    %c0_357 = arith.constant 0 : index
    %c0_358 = arith.constant 0 : index
    %803 = vector.load %arg31[%c0_357, %c0_358] : memref<24x128xf32, #tpu.memory_space<vmem>>, vector<24x128xf32>
    %c0_359 = arith.constant 0 : index
    %c0_360 = arith.constant 0 : index
    %804 = vector.load %arg27[%c0_359, %c0_360] : memref<128x128xf32, #tpu.memory_space<vmem>>, vector<128x128xf32>
    %cst_361 = arith.constant dense<0.000000e+00> : vector<24x128xf32>
    %805 = tpu.matmul %803, %804, %cst_361 {dimension_numbers = #tpu.dot_dimension_numbers<[1], [0], [0], [1], [0, 0, 1, 1], [], []>} : vector<24x128xf32>, vector<128x128xf32>, vector<24x128xf32> -> vector<24x128xf32>
    %c0_362 = arith.constant 0 : index
    %c0_363 = arith.constant 0 : index
    %806 = vector.load %arg29[%c0_362, %c0_363] : memref<24x128xf32, #tpu.memory_space<vmem>>, vector<24x128xf32>
    tpu.vector_store %arg29[%c0_362, %c0_363], %805 {strides = array<i32>} : memref<24x128xf32, #tpu.memory_space<vmem>>, vector<24x128xf32>,
    return
  }
}

</mosaic_0001>

<llo_original>
// kernel: compnet_forward.2
$region0: #{compnet_forward.2}
  #allocation0 [shape = 'u32[]', space=smem, size = 0x4, offset = 0x4, fixed_abs, tag = 'smem constant byte address 0x4 - core index']
  #allocation1 [shape = 'u32[144,128]{1,0:T(1,128)}', space=vmem, size = 0x12000, scoped, tag = 'internal scratch']
  #allocation2 [shape = 'f32[40,8]{1,0:T(8,128)}', space=vmem, size = 0x5000, scoped, tag = 'scratch operand']
  %s0 = inlined_call_operand.vmem [shape: f32[24,32], index: 0, kind: input, shape index: {}]
  %s1 = inlined_call_operand.vmem [shape: f32[32,32], index: 1, kind: input, shape index: {}]
  %s2 = inlined_call_operand.vmem [shape: f32[1,32], index: 2, kind: input, shape index: {}]
  %s3 = inlined_call_operand.vmem [shape: f32[2,32,8], index: 3, kind: input, shape index: {}]
  %s4 = inlined_call_operand.vmem [shape: f32[2,1,8], index: 4, kind: input, shape index: {}]
  %s5 = inlined_call_operand.vmem [shape: f32[2,1,8], index: 5, kind: input, shape index: {}]
  %s6 = inlined_call_operand.vmem [shape: f32[2,1,8], index: 6, kind: input, shape index: {}]
  %s7 = inlined_call_operand.vmem [shape: f32[2,40,8], index: 7, kind: input, shape index: {}]
  %s8 = inlined_call_operand.vmem [shape: f32[2,1,8], index: 8, kind: input, shape index: {}]
  %s9 = inlined_call_operand.vmem [shape: f32[2,1,8], index: 9, kind: input, shape index: {}]
  %s10 = inlined_call_operand.vmem [shape: f32[2,1,8], index: 10, kind: input, shape index: {}]
  %s11 = inlined_call_operand.vmem [shape: f32[2,8,32], index: 11, kind: input, shape index: {}]
  %s12 = inlined_call_operand.vmem [shape: f32[2,1,32], index: 12, kind: input, shape index: {}]
  %s13 = inlined_call_operand.vmem [shape: f32[32,32], index: 13, kind: input, shape index: {}]
  %s14 = inlined_call_operand.vmem [shape: f32[1,32], index: 14, kind: input, shape index: {}]
  %s15 = inlined_call_operand.vmem [shape: f32[24,32], index: 15, kind: output, shape index: {}]
  %s16 = sld [smem:[#allocation0]]
  $region70: #{compnet_forward.2} parent=0
    _
  %s18 = ssub.s32 1, %s16
  %s19 = scalar_select 0, %s18, %s16
  // Predicated region
  $region2: #{compnet_forward.2} parent=0 // pred_check
    _
  $region3: #{compnet_forward.2} parent=0 // pred_check_branch
    %21 = sbr.rel (0) target = $region5
  $region4: #{compnet_forward.2} parent=0 // pred_region
    _
  $region5: #{compnet_forward.2} parent=0 // pred_fallthru
    _
  // Predicated region
  $region6: #{compnet_forward.2} parent=0 // pred_check
    _
  $region7: #{compnet_forward.2} parent=0 // pred_check_branch
    %23 = sbr.rel (0) target = $region9
  $region8: #{compnet_forward.2} parent=0 // pred_region
    _
  $region9: #{compnet_forward.2} parent=0 // pred_fallthru
    _
  // Predicated region
  $region10: #{compnet_forward.2} parent=0 // pred_check
    _
  $region11: #{compnet_forward.2} parent=0 // pred_check_branch
    %25 = sbr.rel (0) target = $region13
  $region12: #{compnet_forward.2} parent=0 // pred_region
    _
  $region13: #{compnet_forward.2} parent=0 // pred_fallthru
    _
  // Predicated region
  $region14: #{compnet_forward.2} parent=0 // pred_check
    _
  $region15: #{compnet_forward.2} parent=0 // pred_check_branch
    %27 = sbr.rel (0) target = $region17
  $region16: #{compnet_forward.2} parent=0 // pred_region
    _
  $region17: #{compnet_forward.2} parent=0 // pred_fallthru
    _
  // Predicated region
  $region18: #{compnet_forward.2} parent=0 // pred_check
    _
  $region19: #{compnet_forward.2} parent=0 // pred_check_branch
    %29 = sbr.rel (0) target = $region21
  $region20: #{compnet_forward.2} parent=0 // pred_region
    _
  $region21: #{compnet_forward.2} parent=0 // pred_fallthru
    _
  // Predicated region
  $region22: #{compnet_forward.2} parent=0 // pred_check
    _
  $region23: #{compnet_forward.2} parent=0 // pred_check_branch
    %31 = sbr.rel (0) target = $region25
  $region24: #{compnet_forward.2} parent=0 // pred_region
    _
  $region25: #{compnet_forward.2} parent=0 // pred_fallthru
    _
  // Predicated region
  $region26: #{compnet_forward.2} parent=0 // pred_check
    _
  $region27: #{compnet_forward.2} parent=0 // pred_check_branch
    %33 = sbr.rel (0) target = $region29
  $region28: #{compnet_forward.2} parent=0 // pred_region
    _
  $region29: #{compnet_forward.2} parent=0 // pred_fallthru
    _
  // Predicated region
  $region30: #{compnet_forward.2} parent=0 // pred_check
    _
  $region31: #{compnet_forward.2} parent=0 // pred_check_branch
    %35 = sbr.rel (0) target = $region33
  $region32: #{compnet_forward.2} parent=0 // pred_region
    _
  $region33: #{compnet_forward.2} parent=0 // pred_fallthru
    _
  // Predicated region
  $region34: #{compnet_forward.2} parent=0 // pred_check
    _
  $region35: #{compnet_forward.2} parent=0 // pred_check_branch
    %37 = sbr.rel (0) target = $region37
  $region36: #{compnet_forward.2} parent=0 // pred_region
    _
  $region37: #{compnet_forward.2} parent=0 // pred_fallthru
    _
  // Predicated region
  $region38: #{compnet_forward.2} parent=0 // pred_check
    _
  $region39: #{compnet_forward.2} parent=0 // pred_check_branch
    %39 = sbr.rel (0) target = $region41
  $region40: #{compnet_forward.2} parent=0 // pred_region
    _
  $region41: #{compnet_forward.2} parent=0 // pred_fallthru
    _
  // Predicated region
  $region42: #{compnet_forward.2} parent=0 // pred_check
    _
  $region43: #{compnet_forward.2} parent=0 // pred_check_branch
    %41 = sbr.rel (0) target = $region45
  $region44: #{compnet_forward.2} parent=0 // pred_region
    _
  $region45: #{compnet_forward.2} parent=0 // pred_fallthru
    _
  // Predicated region
  $region46: #{compnet_forward.2} parent=0 // pred_check
    _
  $region47: #{compnet_forward.2} parent=0 // pred_check_branch
    %43 = sbr.rel (0) target = $region49
  $region48: #{compnet_forward.2} parent=0 // pred_region
    _
  $region49: #{compnet_forward.2} parent=0 // pred_fallthru
    _
  // Predicated region
  $region50: #{compnet_forward.2} parent=0 // pred_check
    _
  $region51: #{compnet_forward.2} parent=0 // pred_check_branch
    %45 = sbr.rel (0) target = $region53
  $region52: #{compnet_forward.2} parent=0 // pred_region
    _
  $region53: #{compnet_forward.2} parent=0 // pred_fallthru
    _
  // Predicated region
  $region54: #{compnet_forward.2} parent=0 // pred_check
    _
  $region55: #{compnet_forward.2} parent=0 // pred_check_branch
    %47 = sbr.rel (0) target = $region57
  $region56: #{compnet_forward.2} parent=0 // pred_region
    _
  $region57: #{compnet_forward.2} parent=0 // pred_fallthru
    _
  // Predicated region
  $region58: #{compnet_forward.2} parent=0 // pred_check
    _
  $region59: #{compnet_forward.2} parent=0 // pred_check_branch
    %49 = sbr.rel (0) target = $region61
  $region60: #{compnet_forward.2} parent=0 // pred_region
    _
  $region61: #{compnet_forward.2} parent=0 // pred_fallthru
    _
  %vm50 = vcmask 64512
  %51 = vst.msk [vmem:[#allocation2] sm:$0xff] %vm50, 0.0
  %52 = vst.msk [vmem:[#allocation2 + $0x8] sm:$0xff] %vm50, 0.0
  %v53 = vld [vmem:[%s0] sm:$0xff]
  %v54 = vld [vmem:[%s0 + $0x8] sm:$0xff]
  %v55 = vld [vmem:[%s0 + $0x10] sm:$0xff]
  %v56 = vld [vmem:[%s1] sm:$0xff]
  %v57 = vld [vmem:[%s1 + $0x8] sm:$0xff]
  %v58 = vld [vmem:[%s1 + $0x10] sm:$0xff]
  %v59 = vld [vmem:[%s1 + $0x18] sm:$0xff]
  %v60 = vld [vmem:[%s2] sm:$0x1]
  %v62 = vlaneseq
  %v63 = vshrl.u32 %v62, 7
  %v64 = vsub.s32 0, %v63
  %v65 = vrot.slane %v60, %v64
  %vm67 = vcmask 261120
  %v69 = vsel %vm67, %v53, 0
  %v72 = vsel %vm67, %v54, 0
  %v75 = vsel %vm67, %v55, 0
  %77 = vmatprep.subr.mxu0 0.0
  %78 = vmatpush1.msra.mxu0 %v56
  %79 = vmatprep.subr.mxu0 0.0
  %80 = vmatpush1.msra.mxu0 %v57
  %81 = vmatprep.subr.mxu0 0.0
  %82 = vmatpush1.msra.mxu0 %v58
  %83 = vmatprep.subr.mxu0 0.0
  %84 = vmatpush1.msra.mxu0 %v59
  %85 = vmatprep.subr.mxu0 0.0
  %86 = vmatpush1.msra.mxu0 0.0
  %87 = vmatprep.subr.mxu0 0.0
  %88 = vmatpush1.msra.mxu0 0.0
  %89 = vmatprep.subr.mxu0 0.0
  %90 = vmatpush1.msra.mxu0 0.0
  %91 = vmatprep.subr.mxu0 0.0
  %92 = vmatpush1.msra.mxu0 0.0
  %93 = vmatprep.subr.mxu0 0.0
  %94 = vmatpush1.msra.mxu0 0.0
  %95 = vmatprep.subr.mxu0 0.0
  %96 = vmatpush1.msra.mxu0 0.0
  %97 = vmatprep.subr.mxu0 0.0
  %98 = vmatpush1.msra.mxu0 0.0
  %99 = vmatprep.subr.mxu0 0.0
  %100 = vmatpush1.msra.mxu0 0.0
  %101 = vmatprep.subr.mxu0 0.0
  %102 = vmatpush1.msra.mxu0 0.0
  %103 = vmatprep.subr.mxu0 0.0
  %104 = vmatpush1.msra.mxu0 0.0
  %105 = vmatprep.subr.mxu0 0.0
  %106 = vmatpush1.msra.mxu0 0.0
  %107 = vmatprep.subr.mxu0 0.0
  %108 = vmatpush1.msra.mxu0 0.0
  %109 = vmatprep.subr.mxu0 0.0
  %110 = vmatpush1.msra.mxu0 0.0
  %111 = vmatprep.subr.mxu0 0.0
  %112 = vmatpush1.msra.mxu0 0.0
  %113 = vmatprep.subr.mxu0 0.0
  %114 = vmatpush1.msra.mxu0 0.0
  %115 = vmatprep.subr.mxu0 0.0
  %116 = vmatpush1.msra.mxu0 0.0
  %117 = vmatprep.subr.mxu0 0.0
  %118 = vmatpush1.msra.mxu0 0.0
  %119 = vmatprep.subr.mxu0 0.0
  %120 = vmatpush1.msra.mxu0 0.0
  %121 = vmatprep.subr.mxu0 0.0
  %122 = vmatpush1.msra.mxu0 0.0
  %123 = vmatprep.subr.mxu0 0.0
  %124 = vmatpush1.msra.mxu0 0.0
  %125 = vmatprep.subr.mxu0 0.0
  %126 = vmatpush1.msra.mxu0 0.0
  %127 = vmatprep.subr.mxu0 0.0
  %128 = vmatpush1.msra.mxu0 0.0
  %129 = vmatprep.subr.mxu0 0.0
  %130 = vmatpush1.msra.mxu0 0.0
  %131 = vmatprep.subr.mxu0 0.0
  %132 = vmatpush1.msra.mxu0 0.0
  %133 = vmatprep.subr.mxu0 0.0
  %134 = vmatpush1.msra.mxu0 0.0
  %135 = vmatprep.subr.mxu0 0.0
  %136 = vmatpush1.msra.mxu0 0.0
  %137 = vmatprep.subr.mxu0 0.0
  %138 = vmatpush1.msra.mxu0 0.0
  %139 = vmatprep.subr.mxu0 0.0
  %140 = vmatpush1.msra.mxu0 0.0
  %141 = vmatprep.mubr.f32.mxu0 0.0
  %142 = vmatmul.mubr.f32.gmra.mrb[0].mxu0 %v69
  %v143 = vpop.f32.mrb[0].mxu0
  %v144 = vadd.f32 %v65, %v143
  %v145 = vpop.f32.mrb[0].mxu0
  %146 = vmatprep.mubr.f32.mxu0 0.0
  %147 = vmatmul.mubr.f32.gmra.mrb[0].mxu0 %v72
  %v148 = vpop.f32.mrb[0].mxu0
  %v149 = vadd.f32 %v65, %v148
  %v150 = vpop.f32.mrb[0].mxu0
  %151 = vmatprep.mubr.f32.mxu0 0.0
  %152 = vmatmul.mubr.f32.gmra.mrb[0].mxu0 %v75
  %v153 = vpop.f32.mrb[0].mxu0
  %v154 = vadd.f32 %v65, %v153
  %v155 = vpop.f32.mrb[0].mxu0
  %156 = vdwg.mxu0
  %vm157 = vcmp.ge.f32.partialorder %v144, 0.0
  %vm158 = vcmp.ge.f32.partialorder %v149, 0.0
  %vm159 = vcmp.ge.f32.partialorder %v154, 0.0
  %v160 = vmul.f32 %v144, 0.25
  %v161 = vmul.f32 %v149, 0.25
  %v162 = vmul.f32 %v154, 0.25
  %v163 = vsel %vm157, %v144, %v160
  %v164 = vsel %vm158, %v149, %v161
  %v165 = vsel %vm159, %v154, %v162
  %v166 = vld [vmem:[%s3] sm:$0xff]
  %v167 = vld [vmem:[%s3 + $0x8] sm:$0xff]
  %v168 = vld [vmem:[%s3 + $0x10] sm:$0xff]
  %v169 = vld [vmem:[%s3 + $0x18] sm:$0xff]
  %v170 = vld [vmem:[%s4] sm:$0x1]
  %v172 = vlaneseq
  %v173 = vshrl.u32 %v172, 7
  %v174 = vsub.s32 0, %v173
  %v175 = vrot.slane %v170, %v174
  %v178 = vsel %vm67, %v163, 0
  %v181 = vsel %vm67, %v164, 0
  %v184 = vsel %vm67, %v165, 0
  %186 = vmatprep.subr.mxu0 0.0
  %187 = vmatpush1.msra.mxu0 %v166
  %188 = vmatprep.subr.mxu0 0.0
  %189 = vmatpush1.msra.mxu0 %v167
  %190 = vmatprep.subr.mxu0 0.0
  %191 = vmatpush1.msra.mxu0 %v168
  %192 = vmatprep.subr.mxu0 0.0
  %193 = vmatpush1.msra.mxu0 %v169
  %194 = vmatprep.subr.mxu0 0.0
  %195 = vmatpush1.msra.mxu0 0.0
  %196 = vmatprep.subr.mxu0 0.0
  %197 = vmatpush1.msra.mxu0 0.0
  %198 = vmatprep.subr.mxu0 0.0
  %199 = vmatpush1.msra.mxu0 0.0
  %200 = vmatprep.subr.mxu0 0.0
  %201 = vmatpush1.msra.mxu0 0.0
  %202 = vmatprep.subr.mxu0 0.0
  %203 = vmatpush1.msra.mxu0 0.0
  %204 = vmatprep.subr.mxu0 0.0
  %205 = vmatpush1.msra.mxu0 0.0
  %206 = vmatprep.subr.mxu0 0.0
  %207 = vmatpush1.msra.mxu0 0.0
  %208 = vmatprep.subr.mxu0 0.0
  %209 = vmatpush1.msra.mxu0 0.0
  %210 = vmatprep.subr.mxu0 0.0
  %211 = vmatpush1.msra.mxu0 0.0
  %212 = vmatprep.subr.mxu0 0.0
  %213 = vmatpush1.msra.mxu0 0.0
  %214 = vmatprep.subr.mxu0 0.0
  %215 = vmatpush1.msra.mxu0 0.0
  %216 = vmatprep.subr.mxu0 0.0
  %217 = vmatpush1.msra.mxu0 0.0
  %218 = vmatprep.subr.mxu0 0.0
  %219 = vmatpush1.msra.mxu0 0.0
  %220 = vmatprep.subr.mxu0 0.0
  %221 = vmatpush1.msra.mxu0 0.0
  %222 = vmatprep.subr.mxu0 0.0
  %223 = vmatpush1.msra.mxu0 0.0
  %224 = vmatprep.subr.mxu0 0.0
  %225 = vmatpush1.msra.mxu0 0.0
  %226 = vmatprep.subr.mxu0 0.0
  %227 = vmatpush1.msra.mxu0 0.0
  %228 = vmatprep.subr.mxu0 0.0
  %229 = vmatpush1.msra.mxu0 0.0
  %230 = vmatprep.subr.mxu0 0.0
  %231 = vmatpush1.msra.mxu0 0.0
  %232 = vmatprep.subr.mxu0 0.0
  %233 = vmatpush1.msra.mxu0 0.0
  %234 = vmatprep.subr.mxu0 0.0
  %235 = vmatpush1.msra.mxu0 0.0
  %236 = vmatprep.subr.mxu0 0.0
  %237 = vmatpush1.msra.mxu0 0.0
  %238 = vmatprep.subr.mxu0 0.0
  %239 = vmatpush1.msra.mxu0 0.0
  %240 = vmatprep.subr.mxu0 0.0
  %241 = vmatpush1.msra.mxu0 0.0
  %242 = vmatprep.subr.mxu0 0.0
  %243 = vmatpush1.msra.mxu0 0.0
  %244 = vmatprep.subr.mxu0 0.0
  %245 = vmatpush1.msra.mxu0 0.0
  %246 = vmatprep.subr.mxu0 0.0
  %247 = vmatpush1.msra.mxu0 0.0
  %248 = vmatprep.subr.mxu0 0.0
  %249 = vmatpush1.msra.mxu0 0.0
  %250 = vmatprep.mubr.f32.mxu0 0.0
  %251 = vmatmul.mubr.f32.gmra.mrb[0].mxu0 %v178
  %v252 = vpop.f32.mrb[0].mxu0
  %v253 = vadd.f32 %v175, %v252
  %v254 = vpop.f32.mrb[0].mxu0
  %255 = vmatprep.mubr.f32.mxu0 0.0
  %256 = vmatmul.mubr.f32.gmra.mrb[0].mxu0 %v181
  %v257 = vpop.f32.mrb[0].mxu0
  %v258 = vadd.f32 %v175, %v257
  %v259 = vpop.f32.mrb[0].mxu0
  %260 = vmatprep.mubr.f32.mxu0 0.0
  %261 = vmatmul.mubr.f32.gmra.mrb[0].mxu0 %v184
  %v262 = vpop.f32.mrb[0].mxu0
  %v263 = vadd.f32 %v175, %v262
  %v264 = vpop.f32.mrb[0].mxu0
  %265 = vdwg.mxu0
  %vm266 = vcmp.ge.f32.partialorder %v253, 0.0
  %vm267 = vcmp.ge.f32.partialorder %v258, 0.0
  %vm268 = vcmp.ge.f32.partialorder %v263, 0.0
  %v269 = vmul.f32 %v253, 0.25
  %v270 = vmul.f32 %v258, 0.25
  %v271 = vmul.f32 %v263, 0.25
  %v272 = vsel %vm266, %v253, %v269
  %v273 = vsel %vm267, %v258, %v270
  %v274 = vsel %vm268, %v263, %v271
  %v275 = vld [vmem:[%s5] sm:$0x1]
  %v276 = vld [vmem:[%s6] sm:$0x1]
  %v277 = vsel %vm50, %v272, 0.0
  %278 = vadd.xlane.f32.xlu0 %v277
  %v279 = vpop.xlane.xlu0 %278
  %v280 = vsel %vm50, %v273, 0.0
  %281 = vadd.xlane.f32.xlu0 %v280
  %v282 = vpop.xlane.xlu0 %281
  %v283 = vsel %vm50, %v274, 0.0
  %284 = vadd.xlane.f32.xlu0 %v283
  %v285 = vpop.xlane.xlu0 %284
  %v286 = vrcp.pop 8.0
  %v287 = vmul.f32 %v279, %v286
  %v288 = vmul.f32 %v282, %v286
  %v289 = vmul.f32 %v285, %v286
  %v290 = vsub.f32 %v272, %v287
  %v291 = vsub.f32 %v273, %v288
  %v292 = vsub.f32 %v274, %v289
  %v293 = vmul.f32 %v290, %v290
  %v294 = vmul.f32 %v291, %v291
  %v295 = vmul.f32 %v292, %v292
  %v296 = vsel %vm50, %v293, 0.0
  %297 = vadd.xlane.f32.xlu0 %v296
  %v298 = vpop.xlane.xlu0 %297
  %v299 = vsel %vm50, %v294, 0.0
  %300 = vadd.xlane.f32.xlu0 %v299
  %v301 = vpop.xlane.xlu0 %300
  %v302 = vsel %vm50, %v295, 0.0
  %303 = vadd.xlane.f32.xlu0 %v302
  %v304 = vpop.xlane.xlu0 %303
  %v305 = vmul.f32 %v298, %v286
  %v306 = vmul.f32 %v301, %v286
  %v307 = vmul.f32 %v304, %v286
  %v309 = vlaneseq
  %v310 = vshrl.u32 %v309, 7
  %v311 = vsub.s32 0, %v310
  %v312 = vrot.slane %v275, %v311
  %v314 = vmul.f32 %v312, %v290
  %v315 = vmul.f32 %v312, %v291
  %v316 = vmul.f32 %v312, %v292
  %v317 = vadd.f32 %v305, 1e-05
  %v318 = vadd.f32 %v306, 1e-05
  %v319 = vadd.f32 %v307, 1e-05
  %v320 = vrsqrt.pop %v317
  %v321 = vrsqrt.pop %v318
  %v322 = vrsqrt.pop %v319
  %v323 = vmul.f32 %v314, %v320
  %v324 = vmul.f32 %v315, %v321
  %v325 = vmul.f32 %v316, %v322
  %v327 = vlaneseq
  %v328 = vshrl.u32 %v327, 7
  %v329 = vsub.s32 0, %v328
  %v330 = vrot.slane %v276, %v329
  %v332 = vadd.f32 %v323, %v330
  %v333 = vadd.f32 %v324, %v330
  %v334 = vadd.f32 %v325, %v330
  %335 = vst.msk [vmem:[#allocation2 + $0x10] sm:$0xff] %vm50, %v332
  %336 = vst.msk [vmem:[#allocation2 + $0x18] sm:$0xff] %vm50, %v333
  %337 = vst.msk [vmem:[#allocation2 + $0x20] sm:$0xff] %vm50, %v334
  %v338 = vld [vmem:[#allocation2 + $0x8] sm:$0xff]
  %v339 = vld [vmem:[#allocation2 + $0x10] sm:$0xff]
  %v340 = vld [vmem:[#allocation2 + $0x18] sm:$0xff]
  %v341 = vld [vmem:[#allocation2 + $0xa] sm:$0xff]
  %v342 = vld [vmem:[#allocation2 + $0x12] sm:$0xff]
  %v343 = vld [vmem:[#allocation2 + $0x1a] sm:$0xff]
  %v344 = vld [vmem:[#allocation2 + $0xc] sm:$0xff]
  %v345 = vld [vmem:[#allocation2 + $0x14] sm:$0xff]
  %v346 = vld [vmem:[#allocation2 + $0x1c] sm:$0xff]
  %v347 = vld [vmem:[#allocation2 + $0xe] sm:$0xff]
  %v348 = vld [vmem:[#allocation2 + $0x16] sm:$0xff]
  %v349 = vld [vmem:[#allocation2 + $0x1e] sm:$0xff]
  %v350 = vld [vmem:[#allocation2 + $0x20] sm:$0xff]
  %354 = vrot.lane.b32.xlu0 %v341, 8
  %v355 = vpop.permute.xlu0 %354
  %356 = vrot.lane.b32.xlu0 %v342, 8
  %v357 = vpop.permute.xlu0 %356
  %358 = vrot.lane.b32.xlu0 %v343, 8
  %v359 = vpop.permute.xlu0 %358
  %366 = vrot.lane.b32.xlu0 %v344, 16
  %v367 = vpop.permute.xlu0 %366
  %368 = vrot.lane.b32.xlu0 %v345, 16
  %v369 = vpop.permute.xlu0 %368
  %370 = vrot.lane.b32.xlu0 %v346, 16
  %v371 = vpop.permute.xlu0 %370
  %378 = vrot.lane.b32.xlu0 %v347, 24
  %v379 = vpop.permute.xlu0 %378
  %380 = vrot.lane.b32.xlu0 %v348, 24
  %v381 = vpop.permute.xlu0 %380
  %382 = vrot.lane.b32.xlu0 %v349, 24
  %v383 = vpop.permute.xlu0 %382
  %390 = vrot.lane.b32.xlu0 %v339, 32
  %v391 = vpop.permute.xlu0 %390
  %392 = vrot.lane.b32.xlu0 %v340, 32
  %v393 = vpop.permute.xlu0 %392
  %394 = vrot.lane.b32.xlu0 %v350, 32
  %v395 = vpop.permute.xlu0 %394
  %v399 = vsel %vm50, %v338, %v355
  %v400 = vsel %vm50, %v339, %v357
  %v401 = vsel %vm50, %v340, %v359
  %vm402 = vcmask 130048
  %v403 = vsel %vm402, %v399, %v367
  %v404 = vsel %vm402, %v400, %v369
  %v405 = vsel %vm402, %v401, %v371
  %vm406 = vcmask 195584
  %v407 = vsel %vm406, %v403, %v379
  %v408 = vsel %vm406, %v404, %v381
  %v409 = vsel %vm406, %v405, %v383
  %v410 = vsel %vm67, %v407, %v391
  %v411 = vsel %vm67, %v408, %v393
  %v412 = vsel %vm67, %v409, %v395
  %v413 = vld [vmem:[%s7] sm:$0xff]
  %v414 = vld [vmem:[%s7 + $0x8] sm:$0xff]
  %v415 = vld [vmem:[%s7 + $0x10] sm:$0xff]
  %v416 = vld [vmem:[%s7 + $0x18] sm:$0xff]
  %v417 = vld [vmem:[%s7 + $0x20] sm:$0xff]
  %v418 = vld [vmem:[%s8] sm:$0x1]
  %v420 = vlaneseq
  %v421 = vshrl.u32 %v420, 7
  %v422 = vsub.s32 0, %v421
  %v423 = vrot.slane %v418, %v422
  %vm425 = vcmask 326656
  %v427 = vsel %vm425, %v410, 0
  %v430 = vsel %vm425, %v411, 0
  %v433 = vsel %vm425, %v412, 0
  %435 = vmatprep.subr.mxu0 0.0
  %436 = vmatpush1.msra.mxu0 %v413
  %437 = vmatprep.subr.mxu0 0.0
  %438 = vmatpush1.msra.mxu0 %v414
  %439 = vmatprep.subr.mxu0 0.0
  %440 = vmatpush1.msra.mxu0 %v415
  %441 = vmatprep.subr.mxu0 0.0
  %442 = vmatpush1.msra.mxu0 %v416
  %443 = vmatprep.subr.mxu0 0.0
  %444 = vmatpush1.msra.mxu0 %v417
  %445 = vmatprep.subr.mxu0 0.0
  %446 = vmatpush1.msra.mxu0 0.0
  %447 = vmatprep.subr.mxu0 0.0
  %448 = vmatpush1.msra.mxu0 0.0
  %449 = vmatprep.subr.mxu0 0.0
  %450 = vmatpush1.msra.mxu0 0.0
  %451 = vmatprep.subr.mxu0 0.0
  %452 = vmatpush1.msra.mxu0 0.0
  %453 = vmatprep.subr.mxu0 0.0
  %454 = vmatpush1.msra.mxu0 0.0
  %455 = vmatprep.subr.mxu0 0.0
  %456 = vmatpush1.msra.mxu0 0.0
  %457 = vmatprep.subr.mxu0 0.0
  %458 = vmatpush1.msra.mxu0 0.0
  %459 = vmatprep.subr.mxu0 0.0
  %460 = vmatpush1.msra.mxu0 0.0
  %461 = vmatprep.subr.mxu0 0.0
  %462 = vmatpush1.msra.mxu0 0.0
  %463 = vmatprep.subr.mxu0 0.0
  %464 = vmatpush1.msra.mxu0 0.0
  %465 = vmatprep.subr.mxu0 0.0
  %466 = vmatpush1.msra.mxu0 0.0
  %467 = vmatprep.subr.mxu0 0.0
  %468 = vmatpush1.msra.mxu0 0.0
  %469 = vmatprep.subr.mxu0 0.0
  %470 = vmatpush1.msra.mxu0 0.0
  %471 = vmatprep.subr.mxu0 0.0
  %472 = vmatpush1.msra.mxu0 0.0
  %473 = vmatprep.subr.mxu0 0.0
  %474 = vmatpush1.msra.mxu0 0.0
  %475 = vmatprep.subr.mxu0 0.0
  %476 = vmatpush1.msra.mxu0 0.0
  %477 = vmatprep.subr.mxu0 0.0
  %478 = vmatpush1.msra.mxu0 0.0
  %479 = vmatprep.subr.mxu0 0.0
  %480 = vmatpush1.msra.mxu0 0.0
  %481 = vmatprep.subr.mxu0 0.0
  %482 = vmatpush1.msra.mxu0 0.0
  %483 = vmatprep.subr.mxu0 0.0
  %484 = vmatpush1.msra.mxu0 0.0
  %485 = vmatprep.subr.mxu0 0.0
  %486 = vmatpush1.msra.mxu0 0.0
  %487 = vmatprep.subr.mxu0 0.0
  %488 = vmatpush1.msra.mxu0 0.0
  %489 = vmatprep.subr.mxu0 0.0
  %490 = vmatpush1.msra.mxu0 0.0
  %491 = vmatprep.subr.mxu0 0.0
  %492 = vmatpush1.msra.mxu0 0.0
  %493 = vmatprep.subr.mxu0 0.0
  %494 = vmatpush1.msra.mxu0 0.0
  %495 = vmatprep.subr.mxu0 0.0
  %496 = vmatpush1.msra.mxu0 0.0
  %497 = vmatprep.subr.mxu0 0.0
  %498 = vmatpush1.msra.mxu0 0.0
  %499 = vmatprep.mubr.f32.mxu0 0.0
  %500 = vmatmul.mubr.f32.gmra.mrb[0].mxu0 %v427
  %v501 = vpop.f32.mrb[0].mxu0
  %v502 = vadd.f32 %v423, %v501
  %v503 = vpop.f32.mrb[0].mxu0
  %504 = vmatprep.mubr.f32.mxu0 0.0
  %505 = vmatmul.mubr.f32.gmra.mrb[0].mxu0 %v430
  %v506 = vpop.f32.mrb[0].mxu0
  %v507 = vadd.f32 %v423, %v506
  %v508 = vpop.f32.mrb[0].mxu0
  %509 = vmatprep.mubr.f32.mxu0 0.0
  %510 = vmatmul.mubr.f32.gmra.mrb[0].mxu0 %v433
  %v511 = vpop.f32.mrb[0].mxu0
  %v512 = vadd.f32 %v423, %v511
  %v513 = vpop.f32.mrb[0].mxu0
  %514 = vdwg.mxu0
  %vm515 = vcmp.ge.f32.partialorder %v502, 0.0
  %vm516 = vcmp.ge.f32.partialorder %v507, 0.0
  %vm517 = vcmp.ge.f32.partialorder %v512, 0.0
  %v518 = vmul.f32 %v502, 0.25
  %v519 = vmul.f32 %v507, 0.25
  %v520 = vmul.f32 %v512, 0.25
  %v521 = vsel %vm515, %v502, %v518
  %v522 = vsel %vm516, %v507, %v519
  %v523 = vsel %vm517, %v512, %v520
  %v524 = vld [vmem:[%s9] sm:$0x1]
  %v525 = vld [vmem:[%s10] sm:$0x1]
  %v526 = vsel %vm50, %v521, 0.0
  %527 = vadd.xlane.f32.xlu0 %v526
  %v528 = vpop.xlane.xlu0 %527
  %v529 = vsel %vm50, %v522, 0.0
  %530 = vadd.xlane.f32.xlu0 %v529
  %v531 = vpop.xlane.xlu0 %530
  %v532 = vsel %vm50, %v523, 0.0
  %533 = vadd.xlane.f32.xlu0 %v532
  %v534 = vpop.xlane.xlu0 %533
  %v535 = vmul.f32 %v528, %v286
  %v536 = vmul.f32 %v531, %v286
  %v537 = vmul.f32 %v534, %v286
  %v538 = vsub.f32 %v521, %v535
  %v539 = vsub.f32 %v522, %v536
  %v540 = vsub.f32 %v523, %v537
  %v541 = vmul.f32 %v538, %v538
  %v542 = vmul.f32 %v539, %v539
  %v543 = vmul.f32 %v540, %v540
  %v544 = vsel %vm50, %v541, 0.0
  %545 = vadd.xlane.f32.xlu0 %v544
  %v546 = vpop.xlane.xlu0 %545
  %v547 = vsel %vm50, %v542, 0.0
  %548 = vadd.xlane.f32.xlu0 %v547
  %v549 = vpop.xlane.xlu0 %548
  %v550 = vsel %vm50, %v543, 0.0
  %551 = vadd.xlane.f32.xlu0 %v550
  %v552 = vpop.xlane.xlu0 %551
  %v553 = vmul.f32 %v546, %v286
  %v554 = vmul.f32 %v549, %v286
  %v555 = vmul.f32 %v552, %v286
  %v557 = vlaneseq
  %v558 = vshrl.u32 %v557, 7
  %v559 = vsub.s32 0, %v558
  %v560 = vrot.slane %v524, %v559
  %v562 = vmul.f32 %v560, %v538
  %v563 = vmul.f32 %v560, %v539
  %v564 = vmul.f32 %v560, %v540
  %v565 = vadd.f32 %v553, 1e-05
  %v566 = vadd.f32 %v554, 1e-05
  %v567 = vadd.f32 %v555, 1e-05
  %v568 = vrsqrt.pop %v565
  %v569 = vrsqrt.pop %v566
  %v570 = vrsqrt.pop %v567
  %v571 = vmul.f32 %v562, %v568
  %v572 = vmul.f32 %v563, %v569
  %v573 = vmul.f32 %v564, %v570
  %v575 = vlaneseq
  %v576 = vshrl.u32 %v575, 7
  %v577 = vsub.s32 0, %v576
  %v578 = vrot.slane %v525, %v577
  %v580 = vadd.f32 %v571, %v578
  %v581 = vadd.f32 %v572, %v578
  %v582 = vadd.f32 %v573, %v578
  %v583 = vld [vmem:[%s11] sm:$0xff]
  %v585 = vsel %vm50, %v580, 0
  %v588 = vsel %vm50, %v581, 0
  %v591 = vsel %vm50, %v582, 0
  %593 = vmatprep.subr.mxu0 0.0
  %594 = vmatpush1.msra.mxu0 %v583
  %595 = vmatprep.subr.mxu0 0.0
  %596 = vmatpush1.msra.mxu0 0.0
  %597 = vmatprep.subr.mxu0 0.0
  %598 = vmatpush1.msra.mxu0 0.0
  %599 = vmatprep.subr.mxu0 0.0
  %600 = vmatpush1.msra.mxu0 0.0
  %601 = vmatprep.subr.mxu0 0.0
  %602 = vmatpush1.msra.mxu0 0.0
  %603 = vmatprep.subr.mxu0 0.0
  %604 = vmatpush1.msra.mxu0 0.0
  %605 = vmatprep.subr.mxu0 0.0
  %606 = vmatpush1.msra.mxu0 0.0
  %607 = vmatprep.subr.mxu0 0.0
  %608 = vmatpush1.msra.mxu0 0.0
  %609 = vmatprep.subr.mxu0 0.0
  %610 = vmatpush1.msra.mxu0 0.0
  %611 = vmatprep.subr.mxu0 0.0
  %612 = vmatpush1.msra.mxu0 0.0
  %613 = vmatprep.subr.mxu0 0.0
  %614 = vmatpush1.msra.mxu0 0.0
  %615 = vmatprep.subr.mxu0 0.0
  %616 = vmatpush1.msra.mxu0 0.0
  %617 = vmatprep.subr.mxu0 0.0
  %618 = vmatpush1.msra.mxu0 0.0
  %619 = vmatprep.subr.mxu0 0.0
  %620 = vmatpush1.msra.mxu0 0.0
  %621 = vmatprep.subr.mxu0 0.0
  %622 = vmatpush1.msra.mxu0 0.0
  %623 = vmatprep.subr.mxu0 0.0
  %624 = vmatpush1.msra.mxu0 0.0
  %625 = vmatprep.subr.mxu0 0.0
  %626 = vmatpush1.msra.mxu0 0.0
  %627 = vmatprep.subr.mxu0 0.0
  %628 = vmatpush1.msra.mxu0 0.0
  %629 = vmatprep.subr.mxu0 0.0
  %630 = vmatpush1.msra.mxu0 0.0
  %631 = vmatprep.subr.mxu0 0.0
  %632 = vmatpush1.msra.mxu0 0.0
  %633 = vmatprep.subr.mxu0 0.0
  %634 = vmatpush1.msra.mxu0 0.0
  %635 = vmatprep.subr.mxu0 0.0
  %636 = vmatpush1.msra.mxu0 0.0
  %637 = vmatprep.subr.mxu0 0.0
  %638 = vmatpush1.msra.mxu0 0.0
  %639 = vmatprep.subr.mxu0 0.0
  %640 = vmatpush1.msra.mxu0 0.0
  %641 = vmatprep.subr.mxu0 0.0
  %642 = vmatpush1.msra.mxu0 0.0
  %643 = vmatprep.subr.mxu0 0.0
  %644 = vmatpush1.msra.mxu0 0.0
  %645 = vmatprep.subr.mxu0 0.0
  %646 = vmatpush1.msra.mxu0 0.0
  %647 = vmatprep.subr.mxu0 0.0
  %648 = vmatpush1.msra.mxu0 0.0
  %649 = vmatprep.subr.mxu0 0.0
  %650 = vmatpush1.msra.mxu0 0.0
  %651 = vmatprep.subr.mxu0 0.0
  %652 = vmatpush1.msra.mxu0 0.0
  %653 = vmatprep.subr.mxu0 0.0
  %654 = vmatpush1.msra.mxu0 0.0
  %655 = vmatprep.subr.mxu0 0.0
  %656 = vmatpush1.msra.mxu0 0.0
  %657 = vmatprep.mubr.f32.mxu0 0.0
  %658 = vmatmul.mubr.f32.gmra.mrb[0].mxu0 %v585
  %v659 = vpop.f32.mrb[0].mxu0
  %v660 = vadd.f32 0.0, %v659
  %v661 = vpop.f32.mrb[0].mxu0
  %662 = vmatprep.mubr.f32.mxu0 0.0
  %663 = vmatmul.mubr.f32.gmra.mrb[0].mxu0 %v588
  %v664 = vpop.f32.mrb[0].mxu0
  %v665 = vadd.f32 0.0, %v664
  %v666 = vpop.f32.mrb[0].mxu0
  %667 = vmatprep.mubr.f32.mxu0 0.0
  %668 = vmatmul.mubr.f32.gmra.mrb[0].mxu0 %v591
  %v669 = vpop.f32.mrb[0].mxu0
  %v670 = vadd.f32 0.0, %v669
  %v671 = vpop.f32.mrb[0].mxu0
  %672 = vdwg.mxu0
  %v673 = vadd.f32 %v163, %v660
  %v674 = vadd.f32 %v164, %v665
  %v675 = vadd.f32 %v165, %v670
  %v676 = vld [vmem:[%s12] sm:$0x1]
  %v678 = vlaneseq
  %v679 = vshrl.u32 %v678, 7
  %v680 = vsub.s32 0, %v679
  %v681 = vrot.slane %v676, %v680
  %v683 = vadd.f32 %v673, %v681
  %v684 = vadd.f32 %v674, %v681
  %v685 = vadd.f32 %v675, %v681
  %s686 = scalar_lea.vmem %s3, 32
  %v687 = vld [vmem:[%s686] sm:$0xff]
  %v688 = vld [vmem:[%s686 + $0x8] sm:$0xff]
  %v689 = vld [vmem:[%s686 + $0x10] sm:$0xff]
  %v690 = vld [vmem:[%s686 + $0x18] sm:$0xff]
  %s691 = scalar_lea.vmem %s4, 1
  %v692 = vld [vmem:[%s691] sm:$0x1]
  %v694 = vlaneseq
  %v695 = vshrl.u32 %v694, 7
  %v696 = vsub.s32 0, %v695
  %v697 = vrot.slane %v692, %v696
  %v700 = vsel %vm67, %v683, 0
  %v703 = vsel %vm67, %v684, 0
  %v706 = vsel %vm67, %v685, 0
  %708 = vmatprep.subr.mxu0 0.0
  %709 = vmatpush1.msra.mxu0 %v687
  %710 = vmatprep.subr.mxu0 0.0
  %711 = vmatpush1.msra.mxu0 %v688
  %712 = vmatprep.subr.mxu0 0.0
  %713 = vmatpush1.msra.mxu0 %v689
  %714 = vmatprep.subr.mxu0 0.0
  %715 = vmatpush1.msra.mxu0 %v690
  %716 = vmatprep.subr.mxu0 0.0
  %717 = vmatpush1.msra.mxu0 0.0
  %718 = vmatprep.subr.mxu0 0.0
  %719 = vmatpush1.msra.mxu0 0.0
  %720 = vmatprep.subr.mxu0 0.0
  %721 = vmatpush1.msra.mxu0 0.0
  %722 = vmatprep.subr.mxu0 0.0
  %723 = vmatpush1.msra.mxu0 0.0
  %724 = vmatprep.subr.mxu0 0.0
  %725 = vmatpush1.msra.mxu0 0.0
  %726 = vmatprep.subr.mxu0 0.0
  %727 = vmatpush1.msra.mxu0 0.0
  %728 = vmatprep.subr.mxu0 0.0
  %729 = vmatpush1.msra.mxu0 0.0
  %730 = vmatprep.subr.mxu0 0.0
  %731 = vmatpush1.msra.mxu0 0.0
  %732 = vmatprep.subr.mxu0 0.0
  %733 = vmatpush1.msra.mxu0 0.0
  %734 = vmatprep.subr.mxu0 0.0
  %735 = vmatpush1.msra.mxu0 0.0
  %736 = vmatprep.subr.mxu0 0.0
  %737 = vmatpush1.msra.mxu0 0.0
  %738 = vmatprep.subr.mxu0 0.0
  %739 = vmatpush1.msra.mxu0 0.0
  %740 = vmatprep.subr.mxu0 0.0
  %741 = vmatpush1.msra.mxu0 0.0
  %742 = vmatprep.subr.mxu0 0.0
  %743 = vmatpush1.msra.mxu0 0.0
  %744 = vmatprep.subr.mxu0 0.0
  %745 = vmatpush1.msra.mxu0 0.0
  %746 = vmatprep.subr.mxu0 0.0
  %747 = vmatpush1.msra.mxu0 0.0
  %748 = vmatprep.subr.mxu0 0.0
  %749 = vmatpush1.msra.mxu0 0.0
  %750 = vmatprep.subr.mxu0 0.0
  %751 = vmatpush1.msra.mxu0 0.0
  %752 = vmatprep.subr.mxu0 0.0
  %753 = vmatpush1.msra.mxu0 0.0
  %754 = vmatprep.subr.mxu0 0.0
  %755 = vmatpush1.msra.mxu0 0.0
  %756 = vmatprep.subr.mxu0 0.0
  %757 = vmatpush1.msra.mxu0 0.0
  %758 = vmatprep.subr.mxu0 0.0
  %759 = vmatpush1.msra.mxu0 0.0
  %760 = vmatprep.subr.mxu0 0.0
  %761 = vmatpush1.msra.mxu0 0.0
  %762 = vmatprep.subr.mxu0 0.0
  %763 = vmatpush1.msra.mxu0 0.0
  %764 = vmatprep.subr.mxu0 0.0
  %765 = vmatpush1.msra.mxu0 0.0
  %766 = vmatprep.subr.mxu0 0.0
  %767 = vmatpush1.msra.mxu0 0.0
  %768 = vmatprep.subr.mxu0 0.0
  %769 = vmatpush1.msra.mxu0 0.0
  %770 = vmatprep.subr.mxu0 0.0
  %771 = vmatpush1.msra.mxu0 0.0
  %772 = vmatprep.mubr.f32.mxu0 0.0
  %773 = vmatmul.mubr.f32.gmra.mrb[0].mxu0 %v700
  %v774 = vpop.f32.mrb[0].mxu0
  %v775 = vadd.f32 %v697, %v774
  %v776 = vpop.f32.mrb[0].mxu0
  %777 = vmatprep.mubr.f32.mxu0 0.0
  %778 = vmatmul.mubr.f32.gmra.mrb[0].mxu0 %v703
  %v779 = vpop.f32.mrb[0].mxu0
  %v780 = vadd.f32 %v697, %v779
  %v781 = vpop.f32.mrb[0].mxu0
  %782 = vmatprep.mubr.f32.mxu0 0.0
  %783 = vmatmul.mubr.f32.gmra.mrb[0].mxu0 %v706
  %v784 = vpop.f32.mrb[0].mxu0
  %v785 = vadd.f32 %v697, %v784
  %v786 = vpop.f32.mrb[0].mxu0
  %787 = vdwg.mxu0
  %vm788 = vcmp.ge.f32.partialorder %v775, 0.0
  %vm789 = vcmp.ge.f32.partialorder %v780, 0.0
  %vm790 = vcmp.ge.f32.partialorder %v785, 0.0
  %v791 = vmul.f32 %v775, 0.25
  %v792 = vmul.f32 %v780, 0.25
  %v793 = vmul.f32 %v785, 0.25
  %v794 = vsel %vm788, %v775, %v791
  %v795 = vsel %vm789, %v780, %v792
  %v796 = vsel %vm790, %v785, %v793
  %s797 = scalar_lea.vmem %s5, 1
  %v798 = vld [vmem:[%s797] sm:$0x1]
  %s799 = scalar_lea.vmem %s6, 1
  %v800 = vld [vmem:[%s799] sm:$0x1]
  %v801 = vsel %vm50, %v794, 0.0
  %802 = vadd.xlane.f32.xlu0 %v801
  %v803 = vpop.xlane.xlu0 %802
  %v804 = vsel %vm50, %v795, 0.0
  %805 = vadd.xlane.f32.xlu0 %v804
  %v806 = vpop.xlane.xlu0 %805
  %v807 = vsel %vm50, %v796, 0.0
  %808 = vadd.xlane.f32.xlu0 %v807
  %v809 = vpop.xlane.xlu0 %808
  %v810 = vmul.f32 %v803, %v286
  %v811 = vmul.f32 %v806, %v286
  %v812 = vmul.f32 %v809, %v286
  %v813 = vsub.f32 %v794, %v810
  %v814 = vsub.f32 %v795, %v811
  %v815 = vsub.f32 %v796, %v812
  %v816 = vmul.f32 %v813, %v813
  %v817 = vmul.f32 %v814, %v814
  %v818 = vmul.f32 %v815, %v815
  %v819 = vsel %vm50, %v816, 0.0
  %820 = vadd.xlane.f32.xlu0 %v819
  %v821 = vpop.xlane.xlu0 %820
  %v822 = vsel %vm50, %v817, 0.0
  %823 = vadd.xlane.f32.xlu0 %v822
  %v824 = vpop.xlane.xlu0 %823
  %v825 = vsel %vm50, %v818, 0.0
  %826 = vadd.xlane.f32.xlu0 %v825
  %v827 = vpop.xlane.xlu0 %826
  %v828 = vmul.f32 %v821, %v286
  %v829 = vmul.f32 %v824, %v286
  %v830 = vmul.f32 %v827, %v286
  %v832 = vlaneseq
  %v833 = vshrl.u32 %v832, 7
  %v834 = vsub.s32 0, %v833
  %v835 = vrot.slane %v798, %v834
  %v837 = vmul.f32 %v835, %v813
  %v838 = vmul.f32 %v835, %v814
  %v839 = vmul.f32 %v835, %v815
  %v840 = vadd.f32 %v828, 1e-05
  %v841 = vadd.f32 %v829, 1e-05
  %v842 = vadd.f32 %v830, 1e-05
  %v843 = vrsqrt.pop %v840
  %v844 = vrsqrt.pop %v841
  %v845 = vrsqrt.pop %v842
  %v846 = vmul.f32 %v837, %v843
  %v847 = vmul.f32 %v838, %v844
  %v848 = vmul.f32 %v839, %v845
  %v850 = vlaneseq
  %v851 = vshrl.u32 %v850, 7
  %v852 = vsub.s32 0, %v851
  %v853 = vrot.slane %v800, %v852
  %v855 = vadd.f32 %v846, %v853
  %v856 = vadd.f32 %v847, %v853
  %v857 = vadd.f32 %v848, %v853
  %858 = vst.msk [vmem:[#allocation2 + $0x10] sm:$0xff] %vm50, %v855
  %859 = vst.msk [vmem:[#allocation2 + $0x18] sm:$0xff] %vm50, %v856
  %860 = vst.msk [vmem:[#allocation2 + $0x20] sm:$0xff] %vm50, %v857
  %v861 = vld [vmem:[#allocation2] sm:$0xff]
  %v862 = vld [vmem:[#allocation2 + $0x8] sm:$0xff]
  %v863 = vld [vmem:[#allocation2 + $0x10] sm:$0xff]
  %v864 = vld [vmem:[#allocation2 + $0x4] sm:$0xff]
  %v865 = vld [vmem:[#allocation2 + $0xc] sm:$0xff]
  %v866 = vld [vmem:[#allocation2 + $0x14] sm:$0xff]
  %v867 = vld [vmem:[#allocation2 + $0x18] sm:$0xff]
  %v868 = vld [vmem:[#allocation2 + $0x1c] sm:$0xff]
  %v869 = vld [vmem:[#allocation2 + $0x20] sm:$0xff]
  %873 = vrot.lane.b32.xlu0 %v864, 8
  %v874 = vpop.permute.xlu0 %873
  %875 = vrot.lane.b32.xlu0 %v865, 8
  %v876 = vpop.permute.xlu0 %875
  %877 = vrot.lane.b32.xlu0 %v866, 8
  %v878 = vpop.permute.xlu0 %877
  %885 = vrot.lane.b32.xlu0 %v862, 16
  %v886 = vpop.permute.xlu0 %885
  %887 = vrot.lane.b32.xlu0 %v863, 16
  %v888 = vpop.permute.xlu0 %887
  %889 = vrot.lane.b32.xlu0 %v867, 16
  %v890 = vpop.permute.xlu0 %889
  %895 = vrot.lane.b32.xlu0 %v865, 24
  %v896 = vpop.permute.xlu0 %895
  %897 = vrot.lane.b32.xlu0 %v866, 24
  %v898 = vpop.permute.xlu0 %897
  %899 = vrot.lane.b32.xlu0 %v868, 24
  %v900 = vpop.permute.xlu0 %899
  %905 = vrot.lane.b32.xlu0 %v863, 32
  %v906 = vpop.permute.xlu0 %905
  %907 = vrot.lane.b32.xlu0 %v867, 32
  %v908 = vpop.permute.xlu0 %907
  %909 = vrot.lane.b32.xlu0 %v869, 32
  %v910 = vpop.permute.xlu0 %909
  %v914 = vsel %vm50, %v861, %v874
  %v915 = vsel %vm50, %v862, %v876
  %v916 = vsel %vm50, %v863, %v878
  %v917 = vsel %vm402, %v914, %v886
  %v918 = vsel %vm402, %v915, %v888
  %v919 = vsel %vm402, %v916, %v890
  %v920 = vsel %vm406, %v917, %v896
  %v921 = vsel %vm406, %v918, %v898
  %v922 = vsel %vm406, %v919, %v900
  %v923 = vsel %vm67, %v920, %v906
  %v924 = vsel %vm67, %v921, %v908
  %v925 = vsel %vm67, %v922, %v910
  %s926 = scalar_lea.vmem %s7, 40
  %v927 = vld [vmem:[%s926] sm:$0xff]
  %v928 = vld [vmem:[%s926 + $0x8] sm:$0xff]
  %v929 = vld [vmem:[%s926 + $0x10] sm:$0xff]
  %v930 = vld [vmem:[%s926 + $0x18] sm:$0xff]
  %v931 = vld [vmem:[%s926 + $0x20] sm:$0xff]
  %s932 = scalar_lea.vmem %s8, 1
  %v933 = vld [vmem:[%s932] sm:$0x1]
  %v935 = vlaneseq
  %v936 = vshrl.u32 %v935, 7
  %v937 = vsub.s32 0, %v936
  %v938 = vrot.slane %v933, %v937
  %v941 = vsel %vm425, %v923, 0
  %v944 = vsel %vm425, %v924, 0
  %v947 = vsel %vm425, %v925, 0
  %949 = vmatprep.subr.mxu0 0.0
  %950 = vmatpush1.msra.mxu0 %v927
  %951 = vmatprep.subr.mxu0 0.0
  %952 = vmatpush1.msra.mxu0 %v928
  %953 = vmatprep.subr.mxu0 0.0
  %954 = vmatpush1.msra.mxu0 %v929
  %955 = vmatprep.subr.mxu0 0.0
  %956 = vmatpush1.msra.mxu0 %v930
  %957 = vmatprep.subr.mxu0 0.0
  %958 = vmatpush1.msra.mxu0 %v931
  %959 = vmatprep.subr.mxu0 0.0
  %960 = vmatpush1.msra.mxu0 0.0
  %961 = vmatprep.subr.mxu0 0.0
  %962 = vmatpush1.msra.mxu0 0.0
  %963 = vmatprep.subr.mxu0 0.0
  %964 = vmatpush1.msra.mxu0 0.0
  %965 = vmatprep.subr.mxu0 0.0
  %966 = vmatpush1.msra.mxu0 0.0
  %967 = vmatprep.subr.mxu0 0.0
  %968 = vmatpush1.msra.mxu0 0.0
  %969 = vmatprep.subr.mxu0 0.0
  %970 = vmatpush1.msra.mxu0 0.0
  %971 = vmatprep.subr.mxu0 0.0
  %972 = vmatpush1.msra.mxu0 0.0
  %973 = vmatprep.subr.mxu0 0.0
  %974 = vmatpush1.msra.mxu0 0.0
  %975 = vmatprep.subr.mxu0 0.0
  %976 = vmatpush1.msra.mxu0 0.0
  %977 = vmatprep.subr.mxu0 0.0
  %978 = vmatpush1.msra.mxu0 0.0
  %979 = vmatprep.subr.mxu0 0.0
  %980 = vmatpush1.msra.mxu0 0.0
  %981 = vmatprep.subr.mxu0 0.0
  %982 = vmatpush1.msra.mxu0 0.0
  %983 = vmatprep.subr.mxu0 0.0
  %984 = vmatpush1.msra.mxu0 0.0
  %985 = vmatprep.subr.mxu0 0.0
  %986 = vmatpush1.msra.mxu0 0.0
  %987 = vmatprep.subr.mxu0 0.0
  %988 = vmatpush1.msra.mxu0 0.0
  %989 = vmatprep.subr.mxu0 0.0
  %990 = vmatpush1.msra.mxu0 0.0
  %991 = vmatprep.subr.mxu0 0.0
  %992 = vmatpush1.msra.mxu0 0.0
  %993 = vmatprep.subr.mxu0 0.0
  %994 = vmatpush1.msra.mxu0 0.0
  %995 = vmatprep.subr.mxu0 0.0
  %996 = vmatpush1.msra.mxu0 0.0
  %997 = vmatprep.subr.mxu0 0.0
  %998 = vmatpush1.msra.mxu0 0.0
  %999 = vmatprep.subr.mxu0 0.0
  %1000 = vmatpush1.msra.mxu0 0.0
  %1001 = vmatprep.subr.mxu0 0.0
  %1002 = vmatpush1.msra.mxu0 0.0
  %1003 = vmatprep.subr.mxu0 0.0
  %1004 = vmatpush1.msra.mxu0 0.0
  %1005 = vmatprep.subr.mxu0 0.0
  %1006 = vmatpush1.msra.mxu0 0.0
  %1007 = vmatprep.subr.mxu0 0.0
  %1008 = vmatpush1.msra.mxu0 0.0
  %1009 = vmatprep.subr.mxu0 0.0
  %1010 = vmatpush1.msra.mxu0 0.0
  %1011 = vmatprep.subr.mxu0 0.0
  %1012 = vmatpush1.msra.mxu0 0.0
  %1013 = vmatprep.mubr.f32.mxu0 0.0
  %1014 = vmatmul.mubr.f32.gmra.mrb[0].mxu0 %v941
  %v1015 = vpop.f32.mrb[0].mxu0
  %v1016 = vadd.f32 %v938, %v1015
  %v1017 = vpop.f32.mrb[0].mxu0
  %1018 = vmatprep.mubr.f32.mxu0 0.0
  %1019 = vmatmul.mubr.f32.gmra.mrb[0].mxu0 %v944
  %v1020 = vpop.f32.mrb[0].mxu0
  %v1021 = vadd.f32 %v938, %v1020
  %v1022 = vpop.f32.mrb[0].mxu0
  %1023 = vmatprep.mubr.f32.mxu0 0.0
  %1024 = vmatmul.mubr.f32.gmra.mrb[0].mxu0 %v947
  %v1025 = vpop.f32.mrb[0].mxu0
  %v1026 = vadd.f32 %v938, %v1025
  %v1027 = vpop.f32.mrb[0].mxu0
  %1028 = vdwg.mxu0
  %vm1029 = vcmp.ge.f32.partialorder %v1016, 0.0
  %vm1030 = vcmp.ge.f32.partialorder %v1021, 0.0
  %vm1031 = vcmp.ge.f32.partialorder %v1026, 0.0
  %v1032 = vmul.f32 %v1016, 0.25
  %v1033 = vmul.f32 %v1021, 0.25
  %v1034 = vmul.f32 %v1026, 0.25
  %v1035 = vsel %vm1029, %v1016, %v1032
  %v1036 = vsel %vm1030, %v1021, %v1033
  %v1037 = vsel %vm1031, %v1026, %v1034
  %s1038 = scalar_lea.vmem %s9, 1
  %v1039 = vld [vmem:[%s1038] sm:$0x1]
  %s1040 = scalar_lea.vmem %s10, 1
  %v1041 = vld [vmem:[%s1040] sm:$0x1]
  %v1042 = vsel %vm50, %v1035, 0.0
  %1043 = vadd.xlane.f32.xlu0 %v1042
  %v1044 = vpop.xlane.xlu0 %1043
  %v1045 = vsel %vm50, %v1036, 0.0
  %1046 = vadd.xlane.f32.xlu0 %v1045
  %v1047 = vpop.xlane.xlu0 %1046
  %v1048 = vsel %vm50, %v1037, 0.0
  %1049 = vadd.xlane.f32.xlu0 %v1048
  %v1050 = vpop.xlane.xlu0 %1049
  %v1051 = vmul.f32 %v1044, %v286
  %v1052 = vmul.f32 %v1047, %v286
  %v1053 = vmul.f32 %v1050, %v286
  %v1054 = vsub.f32 %v1035, %v1051
  %v1055 = vsub.f32 %v1036, %v1052
  %v1056 = vsub.f32 %v1037, %v1053
  %v1057 = vmul.f32 %v1054, %v1054
  %v1058 = vmul.f32 %v1055, %v1055
  %v1059 = vmul.f32 %v1056, %v1056
  %v1060 = vsel %vm50, %v1057, 0.0
  %1061 = vadd.xlane.f32.xlu0 %v1060
  %v1062 = vpop.xlane.xlu0 %1061
  %v1063 = vsel %vm50, %v1058, 0.0
  %1064 = vadd.xlane.f32.xlu0 %v1063
  %v1065 = vpop.xlane.xlu0 %1064
  %v1066 = vsel %vm50, %v1059, 0.0
  %1067 = vadd.xlane.f32.xlu0 %v1066
  %v1068 = vpop.xlane.xlu0 %1067
  %v1069 = vmul.f32 %v1062, %v286
  %v1070 = vmul.f32 %v1065, %v286
  %v1071 = vmul.f32 %v1068, %v286
  %v1073 = vlaneseq
  %v1074 = vshrl.u32 %v1073, 7
  %v1075 = vsub.s32 0, %v1074
  %v1076 = vrot.slane %v1039, %v1075
  %v1078 = vmul.f32 %v1076, %v1054
  %v1079 = vmul.f32 %v1076, %v1055
  %v1080 = vmul.f32 %v1076, %v1056
  %v1081 = vadd.f32 %v1069, 1e-05
  %v1082 = vadd.f32 %v1070, 1e-05
  %v1083 = vadd.f32 %v1071, 1e-05
  %v1084 = vrsqrt.pop %v1081
  %v1085 = vrsqrt.pop %v1082
  %v1086 = vrsqrt.pop %v1083
  %v1087 = vmul.f32 %v1078, %v1084
  %v1088 = vmul.f32 %v1079, %v1085
  %v1089 = vmul.f32 %v1080, %v1086
  %v1091 = vlaneseq
  %v1092 = vshrl.u32 %v1091, 7
  %v1093 = vsub.s32 0, %v1092
  %v1094 = vrot.slane %v1041, %v1093
  %v1096 = vadd.f32 %v1087, %v1094
  %v1097 = vadd.f32 %v1088, %v1094
  %v1098 = vadd.f32 %v1089, %v1094
  %s1099 = scalar_lea.vmem %s11, 8
  %v1100 = vld [vmem:[%s1099] sm:$0xff]
  %v1102 = vsel %vm50, %v1096, 0
  %v1105 = vsel %vm50, %v1097, 0
  %v1108 = vsel %vm50, %v1098, 0
  %1110 = vmatprep.subr.mxu0 0.0
  %1111 = vmatpush1.msra.mxu0 %v1100
  %1112 = vmatprep.subr.mxu0 0.0
  %1113 = vmatpush1.msra.mxu0 0.0
  %1114 = vmatprep.subr.mxu0 0.0
  %1115 = vmatpush1.msra.mxu0 0.0
  %1116 = vmatprep.subr.mxu0 0.0
  %1117 = vmatpush1.msra.mxu0 0.0
  %1118 = vmatprep.subr.mxu0 0.0
  %1119 = vmatpush1.msra.mxu0 0.0
  %1120 = vmatprep.subr.mxu0 0.0
  %1121 = vmatpush1.msra.mxu0 0.0
  %1122 = vmatprep.subr.mxu0 0.0
  %1123 = vmatpush1.msra.mxu0 0.0
  %1124 = vmatprep.subr.mxu0 0.0
  %1125 = vmatpush1.msra.mxu0 0.0
  %1126 = vmatprep.subr.mxu0 0.0
  %1127 = vmatpush1.msra.mxu0 0.0
  %1128 = vmatprep.subr.mxu0 0.0
  %1129 = vmatpush1.msra.mxu0 0.0
  %1130 = vmatprep.subr.mxu0 0.0
  %1131 = vmatpush1.msra.mxu0 0.0
  %1132 = vmatprep.subr.mxu0 0.0
  %1133 = vmatpush1.msra.mxu0 0.0
  %1134 = vmatprep.subr.mxu0 0.0
  %1135 = vmatpush1.msra.mxu0 0.0
  %1136 = vmatprep.subr.mxu0 0.0
  %1137 = vmatpush1.msra.mxu0 0.0
  %1138 = vmatprep.subr.mxu0 0.0
  %1139 = vmatpush1.msra.mxu0 0.0
  %1140 = vmatprep.subr.mxu0 0.0
  %1141 = vmatpush1.msra.mxu0 0.0
  %1142 = vmatprep.subr.mxu0 0.0
  %1143 = vmatpush1.msra.mxu0 0.0
  %1144 = vmatprep.subr.mxu0 0.0
  %1145 = vmatpush1.msra.mxu0 0.0
  %1146 = vmatprep.subr.mxu0 0.0
  %1147 = vmatpush1.msra.mxu0 0.0
  %1148 = vmatprep.subr.mxu0 0.0
  %1149 = vmatpush1.msra.mxu0 0.0
  %1150 = vmatprep.subr.mxu0 0.0
  %1151 = vmatpush1.msra.mxu0 0.0
  %1152 = vmatprep.subr.mxu0 0.0
  %1153 = vmatpush1.msra.mxu0 0.0
  %1154 = vmatprep.subr.mxu0 0.0
  %1155 = vmatpush1.msra.mxu0 0.0
  %1156 = vmatprep.subr.mxu0 0.0
  %1157 = vmatpush1.msra.mxu0 0.0
  %1158 = vmatprep.subr.mxu0 0.0
  %1159 = vmatpush1.msra.mxu0 0.0
  %1160 = vmatprep.subr.mxu0 0.0
  %1161 = vmatpush1.msra.mxu0 0.0
  %1162 = vmatprep.subr.mxu0 0.0
  %1163 = vmatpush1.msra.mxu0 0.0
  %1164 = vmatprep.subr.mxu0 0.0
  %1165 = vmatpush1.msra.mxu0 0.0
  %1166 = vmatprep.subr.mxu0 0.0
  %1167 = vmatpush1.msra.mxu0 0.0
  %1168 = vmatprep.subr.mxu0 0.0
  %1169 = vmatpush1.msra.mxu0 0.0
  %1170 = vmatprep.subr.mxu0 0.0
  %1171 = vmatpush1.msra.mxu0 0.0
  %1172 = vmatprep.subr.mxu0 0.0
  %1173 = vmatpush1.msra.mxu0 0.0
  %1174 = vmatprep.mubr.f32.mxu0 0.0
  %1175 = vmatmul.mubr.f32.gmra.mrb[0].mxu0 %v1102
  %v1176 = vpop.f32.mrb[0].mxu0
  %v1177 = vadd.f32 0.0, %v1176
  %v1178 = vpop.f32.mrb[0].mxu0
  %1179 = vmatprep.mubr.f32.mxu0 0.0
  %1180 = vmatmul.mubr.f32.gmra.mrb[0].mxu0 %v1105
  %v1181 = vpop.f32.mrb[0].mxu0
  %v1182 = vadd.f32 0.0, %v1181
  %v1183 = vpop.f32.mrb[0].mxu0
  %1184 = vmatprep.mubr.f32.mxu0 0.0
  %1185 = vmatmul.mubr.f32.gmra.mrb[0].mxu0 %v1108
  %v1186 = vpop.f32.mrb[0].mxu0
  %v1187 = vadd.f32 0.0, %v1186
  %v1188 = vpop.f32.mrb[0].mxu0
  %1189 = vdwg.mxu0
  %v1190 = vadd.f32 %v683, %v1177
  %v1191 = vadd.f32 %v684, %v1182
  %v1192 = vadd.f32 %v685, %v1187
  %s1193 = scalar_lea.vmem %s12, 1
  %v1194 = vld [vmem:[%s1193] sm:$0x1]
  %v1196 = vlaneseq
  %v1197 = vshrl.u32 %v1196, 7
  %v1198 = vsub.s32 0, %v1197
  %v1199 = vrot.slane %v1194, %v1198
  %v1201 = vadd.f32 %v1190, %v1199
  %v1202 = vadd.f32 %v1191, %v1199
  %v1203 = vadd.f32 %v1192, %v1199
  %v1204 = vadd.f32 %v1201, 0.0
  %v1205 = vadd.f32 %v1202, 0.0
  %v1206 = vadd.f32 %v1203, 0.0
  %v1207 = vld [vmem:[%s13] sm:$0xff]
  %v1208 = vld [vmem:[%s13 + $0x8] sm:$0xff]
  %v1209 = vld [vmem:[%s13 + $0x10] sm:$0xff]
  %v1210 = vld [vmem:[%s13 + $0x18] sm:$0xff]
  %v1211 = vld [vmem:[%s14] sm:$0x1]
  %v1213 = vlaneseq
  %v1214 = vshrl.u32 %v1213, 7
  %v1215 = vsub.s32 0, %v1214
  %v1216 = vrot.slane %v1211, %v1215
  %v1219 = vsel %vm67, %v1204, 0
  %v1222 = vsel %vm67, %v1205, 0
  %v1225 = vsel %vm67, %v1206, 0
  %1227 = vmatprep.subr.mxu0 0.0
  %1228 = vmatpush1.msra.mxu0 %v1207
  %1229 = vmatprep.subr.mxu0 0.0
  %1230 = vmatpush1.msra.mxu0 %v1208
  %1231 = vmatprep.subr.mxu0 0.0
  %1232 = vmatpush1.msra.mxu0 %v1209
  %1233 = vmatprep.subr.mxu0 0.0
  %1234 = vmatpush1.msra.mxu0 %v1210
  %1235 = vmatprep.subr.mxu0 0.0
  %1236 = vmatpush1.msra.mxu0 0.0
  %1237 = vmatprep.subr.mxu0 0.0
  %1238 = vmatpush1.msra.mxu0 0.0
  %1239 = vmatprep.subr.mxu0 0.0
  %1240 = vmatpush1.msra.mxu0 0.0
  %1241 = vmatprep.subr.mxu0 0.0
  %1242 = vmatpush1.msra.mxu0 0.0
  %1243 = vmatprep.subr.mxu0 0.0
  %1244 = vmatpush1.msra.mxu0 0.0
  %1245 = vmatprep.subr.mxu0 0.0
  %1246 = vmatpush1.msra.mxu0 0.0
  %1247 = vmatprep.subr.mxu0 0.0
  %1248 = vmatpush1.msra.mxu0 0.0
  %1249 = vmatprep.subr.mxu0 0.0
  %1250 = vmatpush1.msra.mxu0 0.0
  %1251 = vmatprep.subr.mxu0 0.0
  %1252 = vmatpush1.msra.mxu0 0.0
  %1253 = vmatprep.subr.mxu0 0.0
  %1254 = vmatpush1.msra.mxu0 0.0
  %1255 = vmatprep.subr.mxu0 0.0
  %1256 = vmatpush1.msra.mxu0 0.0
  %1257 = vmatprep.subr.mxu0 0.0
  %1258 = vmatpush1.msra.mxu0 0.0
  %1259 = vmatprep.subr.mxu0 0.0
  %1260 = vmatpush1.msra.mxu0 0.0
  %1261 = vmatprep.subr.mxu0 0.0
  %1262 = vmatpush1.msra.mxu0 0.0
  %1263 = vmatprep.subr.mxu0 0.0
  %1264 = vmatpush1.msra.mxu0 0.0
  %1265 = vmatprep.subr.mxu0 0.0
  %1266 = vmatpush1.msra.mxu0 0.0
  %1267 = vmatprep.subr.mxu0 0.0
  %1268 = vmatpush1.msra.mxu0 0.0
  %1269 = vmatprep.subr.mxu0 0.0
  %1270 = vmatpush1.msra.mxu0 0.0
  %1271 = vmatprep.subr.mxu0 0.0
  %1272 = vmatpush1.msra.mxu0 0.0
  %1273 = vmatprep.subr.mxu0 0.0
  %1274 = vmatpush1.msra.mxu0 0.0
  %1275 = vmatprep.subr.mxu0 0.0
  %1276 = vmatpush1.msra.mxu0 0.0
  %1277 = vmatprep.subr.mxu0 0.0
  %1278 = vmatpush1.msra.mxu0 0.0
  %1279 = vmatprep.subr.mxu0 0.0
  %1280 = vmatpush1.msra.mxu0 0.0
  %1281 = vmatprep.subr.mxu0 0.0
  %1282 = vmatpush1.msra.mxu0 0.0
  %1283 = vmatprep.subr.mxu0 0.0
  %1284 = vmatpush1.msra.mxu0 0.0
  %1285 = vmatprep.subr.mxu0 0.0
  %1286 = vmatpush1.msra.mxu0 0.0
  %1287 = vmatprep.subr.mxu0 0.0
  %1288 = vmatpush1.msra.mxu0 0.0
  %1289 = vmatprep.subr.mxu0 0.0
  %1290 = vmatpush1.msra.mxu0 0.0
  %1291 = vmatprep.mubr.f32.mxu0 0.0
  %1292 = vmatmul.mubr.f32.gmra.mrb[0].mxu0 %v1219
  %v1293 = vpop.f32.mrb[0].mxu0
  %v1294 = vadd.f32 %v1216, %v1293
  %v1295 = vpop.f32.mrb[0].mxu0
  %1296 = vmatprep.mubr.f32.mxu0 0.0
  %1297 = vmatmul.mubr.f32.gmra.mrb[0].mxu0 %v1222
  %v1298 = vpop.f32.mrb[0].mxu0
  %v1299 = vadd.f32 %v1216, %v1298
  %v1300 = vpop.f32.mrb[0].mxu0
  %1301 = vmatprep.mubr.f32.mxu0 0.0
  %1302 = vmatmul.mubr.f32.gmra.mrb[0].mxu0 %v1225
  %v1303 = vpop.f32.mrb[0].mxu0
  %v1304 = vadd.f32 %v1216, %v1303
  %v1305 = vpop.f32.mrb[0].mxu0
  %1306 = vdwg.mxu0
  %1307 = vst.msk [vmem:[%s15] sm:$0xff] %vm67, %v1294
  %1308 = vst.msk [vmem:[%s15 + $0x8] sm:$0xff] %vm67, %v1299
  %1309 = vst.msk [vmem:[%s15 + $0x10] sm:$0xff] %vm67, %v1304
  // Predicated region
  $region62: #{compnet_forward.2} parent=0 // pred_check
    _
  $region63: #{compnet_forward.2} parent=0 // pred_check_branch
    %1311 = sbr.rel (0) target = $region65
  $region64: #{compnet_forward.2} parent=0 // pred_region
    _
  $region65: #{compnet_forward.2} parent=0 // pred_fallthru
    _
  // Predicated region
  $region66: #{compnet_forward.2} parent=0 // pred_check
    _
  $region67: #{compnet_forward.2} parent=0 // pred_check_branch
    %1313 = sbr.rel (0) target = $region69
  $region68: #{compnet_forward.2} parent=0 // pred_region
    _
  $region69: #{compnet_forward.2} parent=0 // pred_fallthru
    _

// kernel: compnet_forward.3
$region0: #{compnet_forward.3}
  #allocation0 [shape = 'u32[]', space=smem, size = 0x4, offset = 0x4, fixed_abs, tag = 'smem constant byte address 0x4 - core index']
  #allocation1 [shape = 'u32[144,128]{1,0:T(1,128)}', space=vmem, size = 0x12000, scoped, tag = 'internal scratch']
  #allocation2 [shape = 'f32[40,8]{1,0:T(8,128)}', space=vmem, size = 0x5000, scoped, tag = 'scratch operand']
  #allocation3 [shape = 'f32[24,128]{1,0:T(8,128)}', space=vmem, size = 0x3000, scoped, tag = 'scratch operand']
  %s0 = inlined_call_operand.smem [shape: u32[30], index: -1, kind: input, shape index: {}]
  %s1 = sld [smem:[%s0]]
  %s2 = scalar_lea.smem %s0, 1
  %s3 = sld [smem:[%s2]]
  %s4 = scalar_lea.smem %s0, 2
  %s5 = sld [smem:[%s4]]
  %s6 = scalar_lea.smem %s0, 3
  %s7 = sld [smem:[%s6]]
  %s8 = scalar_lea.smem %s0, 4
  %s9 = sld [smem:[%s8]]
  %s10 = scalar_lea.smem %s0, 5
  %s11 = sld [smem:[%s10]]
  %s12 = scalar_lea.smem %s0, 6
  %s13 = sld [smem:[%s12]]
  %s14 = scalar_lea.smem %s0, 7
  %s15 = sld [smem:[%s14]]
  %s16 = scalar_lea.smem %s0, 8
  %s17 = sld [smem:[%s16]]
  %s18 = scalar_lea.smem %s0, 9
  %s19 = sld [smem:[%s18]]
  %s20 = scalar_lea.smem %s0, 10
  %s21 = sld [smem:[%s20]]
  %s22 = scalar_lea.smem %s0, 11
  %s23 = sld [smem:[%s22]]
  %s24 = scalar_lea.smem %s0, 12
  %s25 = sld [smem:[%s24]]
  %s26 = scalar_lea.smem %s0, 13
  %s27 = sld [smem:[%s26]]
  %s28 = scalar_lea.smem %s0, 14
  %s29 = sld [smem:[%s28]]
  %s30 = scalar_lea.smem %s0, 15
  %s31 = sld [smem:[%s30]]
  %s32 = scalar_lea.smem %s0, 16
  %s33 = sld [smem:[%s32]]
  %s34 = scalar_lea.smem %s0, 17
  %s35 = sld [smem:[%s34]]
  %s36 = scalar_lea.smem %s0, 18
  %s37 = sld [smem:[%s36]]
  %s38 = scalar_lea.smem %s0, 19
  %s39 = sld [smem:[%s38]]
  %s40 = scalar_lea.smem %s0, 20
  %s41 = sld [smem:[%s40]]
  %s42 = scalar_lea.smem %s0, 21
  %s43 = sld [smem:[%s42]]
  %s44 = scalar_lea.smem %s0, 22
  %s45 = sld [smem:[%s44]]
  %s46 = scalar_lea.smem %s0, 23
  %s47 = sld [smem:[%s46]]
  %s48 = scalar_lea.smem %s0, 24
  %s49 = sld [smem:[%s48]]
  %s50 = scalar_lea.smem %s0, 25
  %s51 = sld [smem:[%s50]]
  %s52 = scalar_lea.smem %s0, 26
  %s53 = sld [smem:[%s52]]
  %s54 = scalar_lea.smem %s0, 27
  %s55 = sld [smem:[%s54]]
  %s56 = scalar_lea.smem %s0, 28
  %s57 = sld [smem:[%s56]]
  %s58 = scalar_lea.smem %s0, 29
  %s59 = sld [smem:[%s58]]
  %60 = xla_tuple %s57, %s59
  %s61 = sld [smem:[#allocation0]]
  $region130: #{compnet_forward.3} parent=0
    _
  %s63 = ssub.s32 1, %s61
  %s64 = scalar_select 0, %s63, %s61
  // Predicated region
  $region2: #{compnet_forward.3} parent=0 // pred_check
    _
  $region3: #{compnet_forward.3} parent=0 // pred_check_branch
    %66 = sbr.rel (0) target = $region5
  $region4: #{compnet_forward.3} parent=0 // pred_region
    _
  $region5: #{compnet_forward.3} parent=0 // pred_fallthru
    _
  // Predicated region
  $region6: #{compnet_forward.3} parent=0 // pred_check
    _
  $region7: #{compnet_forward.3} parent=0 // pred_check_branch
    %68 = sbr.rel (0) target = $region9
  $region8: #{compnet_forward.3} parent=0 // pred_region
    _
  $region9: #{compnet_forward.3} parent=0 // pred_fallthru
    _
  // Predicated region
  $region10: #{compnet_forward.3} parent=0 // pred_check
    _
  $region11: #{compnet_forward.3} parent=0 // pred_check_branch
    %70 = sbr.rel (0) target = $region13
  $region12: #{compnet_forward.3} parent=0 // pred_region
    _
  $region13: #{compnet_forward.3} parent=0 // pred_fallthru
    _
  // Predicated region
  $region14: #{compnet_forward.3} parent=0 // pred_check
    _
  $region15: #{compnet_forward.3} parent=0 // pred_check_branch
    %72 = sbr.rel (0) target = $region17
  $region16: #{compnet_forward.3} parent=0 // pred_region
    _
  $region17: #{compnet_forward.3} parent=0 // pred_fallthru
    _
  // Predicated region
  $region18: #{compnet_forward.3} parent=0 // pred_check
    _
  $region19: #{compnet_forward.3} parent=0 // pred_check_branch
    %74 = sbr.rel (0) target = $region21
  $region20: #{compnet_forward.3} parent=0 // pred_region
    _
  $region21: #{compnet_forward.3} parent=0 // pred_fallthru
    _
  // Predicated region
  $region22: #{compnet_forward.3} parent=0 // pred_check
    _
  $region23: #{compnet_forward.3} parent=0 // pred_check_branch
    %76 = sbr.rel (0) target = $region25
  $region24: #{compnet_forward.3} parent=0 // pred_region
    _
  $region25: #{compnet_forward.3} parent=0 // pred_fallthru
    _
  // Predicated region
  $region26: #{compnet_forward.3} parent=0 // pred_check
    _
  $region27: #{compnet_forward.3} parent=0 // pred_check_branch
    %78 = sbr.rel (0) target = $region29
  $region28: #{compnet_forward.3} parent=0 // pred_region
    _
  $region29: #{compnet_forward.3} parent=0 // pred_fallthru
    _
  // Predicated region
  $region30: #{compnet_forward.3} parent=0 // pred_check
    _
  $region31: #{compnet_forward.3} parent=0 // pred_check_branch
    %80 = sbr.rel (0) target = $region33
  $region32: #{compnet_forward.3} parent=0 // pred_region
    _
  $region33: #{compnet_forward.3} parent=0 // pred_fallthru
    _
  // Predicated region
  $region34: #{compnet_forward.3} parent=0 // pred_check
    _
  $region35: #{compnet_forward.3} parent=0 // pred_check_branch
    %82 = sbr.rel (0) target = $region37
  $region36: #{compnet_forward.3} parent=0 // pred_region
    _
  $region37: #{compnet_forward.3} parent=0 // pred_fallthru
    _
  // Predicated region
  $region38: #{compnet_forward.3} parent=0 // pred_check
    _
  $region39: #{compnet_forward.3} parent=0 // pred_check_branch
    %84 = sbr.rel (0) target = $region41
  $region40: #{compnet_forward.3} parent=0 // pred_region
    _
  $region41: #{compnet_forward.3} parent=0 // pred_fallthru
    _
  // Predicated region
  $region42: #{compnet_forward.3} parent=0 // pred_check
    _
  $region43: #{compnet_forward.3} parent=0 // pred_check_branch
    %86 = sbr.rel (0) target = $region45
  $region44: #{compnet_forward.3} parent=0 // pred_region
    _
  $region45: #{compnet_forward.3} parent=0 // pred_fallthru
    _
  // Predicated region
  $region46: #{compnet_forward.3} parent=0 // pred_check
    _
  $region47: #{compnet_forward.3} parent=0 // pred_check_branch
    %88 = sbr.rel (0) target = $region49
  $region48: #{compnet_forward.3} parent=0 // pred_region
    _
  $region49: #{compnet_forward.3} parent=0 // pred_fallthru
    _
  // Predicated region
  $region50: #{compnet_forward.3} parent=0 // pred_check
    _
  $region51: #{compnet_forward.3} parent=0 // pred_check_branch
    %90 = sbr.rel (0) target = $region53
  $region52: #{compnet_forward.3} parent=0 // pred_region
    _
  $region53: #{compnet_forward.3} parent=0 // pred_fallthru
    _
  // Predicated region
  $region54: #{compnet_forward.3} parent=0 // pred_check
    _
  $region55: #{compnet_forward.3} parent=0 // pred_check_branch
    %92 = sbr.rel (0) target = $region57
  $region56: #{compnet_forward.3} parent=0 // pred_region
    _
  $region57: #{compnet_forward.3} parent=0 // pred_fallthru
    _
  // Predicated region
  $region58: #{compnet_forward.3} parent=0 // pred_check
    _
  $region59: #{compnet_forward.3} parent=0 // pred_check_branch
    %94 = sbr.rel (0) target = $region61
  $region60: #{compnet_forward.3} parent=0 // pred_region
    _
  $region61: #{compnet_forward.3} parent=0 // pred_fallthru
    _
  // Predicated region
  $region62: #{compnet_forward.3} parent=0 // pred_check
    _
  $region63: #{compnet_forward.3} parent=0 // pred_check_branch
    %96 = sbr.rel (0) target = $region65
  $region64: #{compnet_forward.3} parent=0 // pred_region
    _
  $region65: #{compnet_forward.3} parent=0 // pred_fallthru
    _
  // Predicated region
  $region66: #{compnet_forward.3} parent=0 // pred_check
    _
  $region67: #{compnet_forward.3} parent=0 // pred_check_branch
    %98 = sbr.rel (0) target = $region69
  $region68: #{compnet_forward.3} parent=0 // pred_region
    _
  $region69: #{compnet_forward.3} parent=0 // pred_fallthru
    _
  // Predicated region
  $region70: #{compnet_forward.3} parent=0 // pred_check
    _
  $region71: #{compnet_forward.3} parent=0 // pred_check_branch
    %100 = sbr.rel (0) target = $region73
  $region72: #{compnet_forward.3} parent=0 // pred_region
    _
  $region73: #{compnet_forward.3} parent=0 // pred_fallthru
    _
  // Predicated region
  $region74: #{compnet_forward.3} parent=0 // pred_check
    _
  $region75: #{compnet_forward.3} parent=0 // pred_check_branch
    %102 = sbr.rel (0) target = $region77
  $region76: #{compnet_forward.3} parent=0 // pred_region
    _
  $region77: #{compnet_forward.3} parent=0 // pred_fallthru
    _
  // Predicated region
  $region78: #{compnet_forward.3} parent=0 // pred_check
    _
  $region79: #{compnet_forward.3} parent=0 // pred_check_branch
    %104 = sbr.rel (0) target = $region81
  $region80: #{compnet_forward.3} parent=0 // pred_region
    _
  $region81: #{compnet_forward.3} parent=0 // pred_fallthru
    _
  // Predicated region
  $region82: #{compnet_forward.3} parent=0 // pred_check
    _
  $region83: #{compnet_forward.3} parent=0 // pred_check_branch
    %106 = sbr.rel (0) target = $region85
  $region84: #{compnet_forward.3} parent=0 // pred_region
    _
  $region85: #{compnet_forward.3} parent=0 // pred_fallthru
    _
  // Predicated region
  $region86: #{compnet_forward.3} parent=0 // pred_check
    _
  $region87: #{compnet_forward.3} parent=0 // pred_check_branch
    %108 = sbr.rel (0) target = $region89
  $region88: #{compnet_forward.3} parent=0 // pred_region
    _
  $region89: #{compnet_forward.3} parent=0 // pred_fallthru
    _
  // Predicated region
  $region90: #{compnet_forward.3} parent=0 // pred_check
    _
  $region91: #{compnet_forward.3} parent=0 // pred_check_branch
    %110 = sbr.rel (0) target = $region93
  $region92: #{compnet_forward.3} parent=0 // pred_region
    _
  $region93: #{compnet_forward.3} parent=0 // pred_fallthru
    _
  // Predicated region
  $region94: #{compnet_forward.3} parent=0 // pred_check
    _
  $region95: #{compnet_forward.3} parent=0 // pred_check_branch
    %112 = sbr.rel (0) target = $region97
  $region96: #{compnet_forward.3} parent=0 // pred_region
    _
  $region97: #{compnet_forward.3} parent=0 // pred_fallthru
    _
  // Predicated region
  $region98: #{compnet_forward.3} parent=0 // pred_check
    _
  $region99: #{compnet_forward.3} parent=0 // pred_check_branch
    %114 = sbr.rel (0) target = $region101
  $region100: #{compnet_forward.3} parent=0 // pred_region
    _
  $region101: #{compnet_forward.3} parent=0 // pred_fallthru
    _
  // Predicated region
  $region102: #{compnet_forward.3} parent=0 // pred_check
    _
  $region103: #{compnet_forward.3} parent=0 // pred_check_branch
    %116 = sbr.rel (0) target = $region105
  $region104: #{compnet_forward.3} parent=0 // pred_region
    _
  $region105: #{compnet_forward.3} parent=0 // pred_fallthru
    _
  // Predicated region
  $region106: #{compnet_forward.3} parent=0 // pred_check
    _
  $region107: #{compnet_forward.3} parent=0 // pred_check_branch
    %118 = sbr.rel (0) target = $region109
  $region108: #{compnet_forward.3} parent=0 // pred_region
    _
  $region109: #{compnet_forward.3} parent=0 // pred_fallthru
    _
  // Predicated region
  $region110: #{compnet_forward.3} parent=0 // pred_check
    _
  $region111: #{compnet_forward.3} parent=0 // pred_check_branch
    %120 = sbr.rel (0) target = $region113
  $region112: #{compnet_forward.3} parent=0 // pred_region
    _
  $region113: #{compnet_forward.3} parent=0 // pred_fallthru
    _
  %vm121 = vcmask 64512
  %122 = vst.msk [vmem:[#allocation2] sm:$0xff] %vm121, 0.0
  %123 = vst.msk [vmem:[#allocation2 + $0x8] sm:$0xff] %vm121, 0.0
  %v124 = vld [vmem:[%s1] sm:$0xff]
  %v125 = vld [vmem:[%s1 + $0x8] sm:$0xff]
  %v126 = vld [vmem:[%s1 + $0x10] sm:$0xff]
  %v127 = vld [vmem:[%s5] sm:$0xff]
  %v128 = vld [vmem:[%s5 + $0x8] sm:$0xff]
  %v129 = vld [vmem:[%s5 + $0x10] sm:$0xff]
  %v130 = vld [vmem:[%s5 + $0x18] sm:$0xff]
  %vm131 = vcmask 261120
  %v133 = vsel %vm131, %v124, 0
  %v136 = vsel %vm131, %v125, 0
  %v139 = vsel %vm131, %v126, 0
  %141 = vmatprep.subr.mxu0 0.0
  %142 = vmatpush1.msra.mxu0 %v127
  %143 = vmatprep.subr.mxu0 0.0
  %144 = vmatpush1.msra.mxu0 %v128
  %145 = vmatprep.subr.mxu0 0.0
  %146 = vmatpush1.msra.mxu0 %v129
  %147 = vmatprep.subr.mxu0 0.0
  %148 = vmatpush1.msra.mxu0 %v130
  %149 = vmatprep.subr.mxu0 0.0
  %150 = vmatpush1.msra.mxu0 0.0
  %151 = vmatprep.subr.mxu0 0.0
  %152 = vmatpush1.msra.mxu0 0.0
  %153 = vmatprep.subr.mxu0 0.0
  %154 = vmatpush1.msra.mxu0 0.0
  %155 = vmatprep.subr.mxu0 0.0
  %156 = vmatpush1.msra.mxu0 0.0
  %157 = vmatprep.subr.mxu0 0.0
  %158 = vmatpush1.msra.mxu0 0.0
  %159 = vmatprep.subr.mxu0 0.0
  %160 = vmatpush1.msra.mxu0 0.0
  %161 = vmatprep.subr.mxu0 0.0
  %162 = vmatpush1.msra.mxu0 0.0
  %163 = vmatprep.subr.mxu0 0.0
  %164 = vmatpush1.msra.mxu0 0.0
  %165 = vmatprep.subr.mxu0 0.0
  %166 = vmatpush1.msra.mxu0 0.0
  %167 = vmatprep.subr.mxu0 0.0
  %168 = vmatpush1.msra.mxu0 0.0
  %169 = vmatprep.subr.mxu0 0.0
  %170 = vmatpush1.msra.mxu0 0.0
  %171 = vmatprep.subr.mxu0 0.0
  %172 = vmatpush1.msra.mxu0 0.0
  %173 = vmatprep.subr.mxu0 0.0
  %174 = vmatpush1.msra.mxu0 0.0
  %175 = vmatprep.subr.mxu0 0.0
  %176 = vmatpush1.msra.mxu0 0.0
  %177 = vmatprep.subr.mxu0 0.0
  %178 = vmatpush1.msra.mxu0 0.0
  %179 = vmatprep.subr.mxu0 0.0
  %180 = vmatpush1.msra.mxu0 0.0
  %181 = vmatprep.subr.mxu0 0.0
  %182 = vmatpush1.msra.mxu0 0.0
  %183 = vmatprep.subr.mxu0 0.0
  %184 = vmatpush1.msra.mxu0 0.0
  %185 = vmatprep.subr.mxu0 0.0
  %186 = vmatpush1.msra.mxu0 0.0
  %187 = vmatprep.subr.mxu0 0.0
  %188 = vmatpush1.msra.mxu0 0.0
  %189 = vmatprep.subr.mxu0 0.0
  %190 = vmatpush1.msra.mxu0 0.0
  %191 = vmatprep.subr.mxu0 0.0
  %192 = vmatpush1.msra.mxu0 0.0
  %193 = vmatprep.subr.mxu0 0.0
  %194 = vmatpush1.msra.mxu0 0.0
  %195 = vmatprep.subr.mxu0 0.0
  %196 = vmatpush1.msra.mxu0 0.0
  %197 = vmatprep.subr.mxu0 0.0
  %198 = vmatpush1.msra.mxu0 0.0
  %199 = vmatprep.subr.mxu0 0.0
  %200 = vmatpush1.msra.mxu0 0.0
  %201 = vmatprep.subr.mxu0 0.0
  %202 = vmatpush1.msra.mxu0 0.0
  %203 = vmatprep.subr.mxu0 0.0
  %204 = vmatpush1.msra.mxu0 0.0
  %205 = vmatprep.mubr.f32.mxu0 0.0
  %206 = vmatmul.mubr.f32.gmra.mrb[0].mxu0 %v133
  %v207 = vpop.f32.mrb[0].mxu0
  %v208 = vadd.f32 0.0, %v207
  %v209 = vpop.f32.mrb[0].mxu0
  %210 = vmatprep.mubr.f32.mxu0 0.0
  %211 = vmatmul.mubr.f32.gmra.mrb[0].mxu0 %v136
  %v212 = vpop.f32.mrb[0].mxu0
  %v213 = vadd.f32 0.0, %v212
  %v214 = vpop.f32.mrb[0].mxu0
  %215 = vmatprep.mubr.f32.mxu0 0.0
  %216 = vmatmul.mubr.f32.gmra.mrb[0].mxu0 %v139
  %v217 = vpop.f32.mrb[0].mxu0
  %v218 = vadd.f32 0.0, %v217
  %v219 = vpop.f32.mrb[0].mxu0
  %220 = vdwg.mxu0
  %v221 = vld [vmem:[%s3] sm:$0xff]
  %v222 = vld [vmem:[%s3 + $0x8] sm:$0xff]
  %v223 = vld [vmem:[%s3 + $0x10] sm:$0xff]
  %v225 = vsel %vm131, %v221, 0
  %v228 = vsel %vm131, %v222, 0
  %v231 = vsel %vm131, %v223, 0
  %233 = vmatprep.subr.mxu0 0.0
  %234 = vmatpush1.msra.mxu0 %v127
  %235 = vmatprep.subr.mxu0 0.0
  %236 = vmatpush1.msra.mxu0 %v128
  %237 = vmatprep.subr.mxu0 0.0
  %238 = vmatpush1.msra.mxu0 %v129
  %239 = vmatprep.subr.mxu0 0.0
  %240 = vmatpush1.msra.mxu0 %v130
  %241 = vmatprep.subr.mxu0 0.0
  %242 = vmatpush1.msra.mxu0 0.0
  %243 = vmatprep.subr.mxu0 0.0
  %244 = vmatpush1.msra.mxu0 0.0
  %245 = vmatprep.subr.mxu0 0.0
  %246 = vmatpush1.msra.mxu0 0.0
  %247 = vmatprep.subr.mxu0 0.0
  %248 = vmatpush1.msra.mxu0 0.0
  %249 = vmatprep.subr.mxu0 0.0
  %250 = vmatpush1.msra.mxu0 0.0
  %251 = vmatprep.subr.mxu0 0.0
  %252 = vmatpush1.msra.mxu0 0.0
  %253 = vmatprep.subr.mxu0 0.0
  %254 = vmatpush1.msra.mxu0 0.0
  %255 = vmatprep.subr.mxu0 0.0
  %256 = vmatpush1.msra.mxu0 0.0
  %257 = vmatprep.subr.mxu0 0.0
  %258 = vmatpush1.msra.mxu0 0.0
  %259 = vmatprep.subr.mxu0 0.0
  %260 = vmatpush1.msra.mxu0 0.0
  %261 = vmatprep.subr.mxu0 0.0
  %262 = vmatpush1.msra.mxu0 0.0
  %263 = vmatprep.subr.mxu0 0.0
  %264 = vmatpush1.msra.mxu0 0.0
  %265 = vmatprep.subr.mxu0 0.0
  %266 = vmatpush1.msra.mxu0 0.0
  %267 = vmatprep.subr.mxu0 0.0
  %268 = vmatpush1.msra.mxu0 0.0
  %269 = vmatprep.subr.mxu0 0.0
  %270 = vmatpush1.msra.mxu0 0.0
  %271 = vmatprep.subr.mxu0 0.0
  %272 = vmatpush1.msra.mxu0 0.0
  %273 = vmatprep.subr.mxu0 0.0
  %274 = vmatpush1.msra.mxu0 0.0
  %275 = vmatprep.subr.mxu0 0.0
  %276 = vmatpush1.msra.mxu0 0.0
  %277 = vmatprep.subr.mxu0 0.0
  %278 = vmatpush1.msra.mxu0 0.0
  %279 = vmatprep.subr.mxu0 0.0
  %280 = vmatpush1.msra.mxu0 0.0
  %281 = vmatprep.subr.mxu0 0.0
  %282 = vmatpush1.msra.mxu0 0.0
  %283 = vmatprep.subr.mxu0 0.0
  %284 = vmatpush1.msra.mxu0 0.0
  %285 = vmatprep.subr.mxu0 0.0
  %286 = vmatpush1.msra.mxu0 0.0
  %287 = vmatprep.subr.mxu0 0.0
  %288 = vmatpush1.msra.mxu0 0.0
  %289 = vmatprep.subr.mxu0 0.0
  %290 = vmatpush1.msra.mxu0 0.0
  %291 = vmatprep.subr.mxu0 0.0
  %292 = vmatpush1.msra.mxu0 0.0
  %293 = vmatprep.subr.mxu0 0.0
  %294 = vmatpush1.msra.mxu0 0.0
  %295 = vmatprep.subr.mxu0 0.0
  %296 = vmatpush1.msra.mxu0 0.0
  %297 = vmatprep.mubr.f32.mxu0 0.0
  %298 = vmatmul.mubr.f32.gmra.mrb[0].mxu0 %v225
  %v299 = vpop.f32.mrb[0].mxu0
  %v300 = vadd.f32 0.0, %v299
  %v301 = vpop.f32.mrb[0].mxu0
  %302 = vmatprep.mubr.f32.mxu0 0.0
  %303 = vmatmul.mubr.f32.gmra.mrb[0].mxu0 %v228
  %v304 = vpop.f32.mrb[0].mxu0
  %v305 = vadd.f32 0.0, %v304
  %v306 = vpop.f32.mrb[0].mxu0
  %307 = vmatprep.mubr.f32.mxu0 0.0
  %308 = vmatmul.mubr.f32.gmra.mrb[0].mxu0 %v231
  %v309 = vpop.f32.mrb[0].mxu0
  %v310 = vadd.f32 0.0, %v309
  %v311 = vpop.f32.mrb[0].mxu0
  %312 = vdwg.mxu0
  %v313 = vmul.f32 %v300, %v300
  %v314 = vmul.f32 %v305, %v305
  %v315 = vmul.f32 %v310, %v310
  %319 = vrot.lane.b32.xlu0 %v313, 111
  %v320 = vpop.permute.xlu0 %319
  %321 = vrot.lane.b32.xlu0 %v314, 111
  %v322 = vpop.permute.xlu0 %321
  %323 = vrot.lane.b32.xlu0 %v315, 111
  %v324 = vpop.permute.xlu0 %323
  %v328 = vadd.f32 %v313, %v320
  %v329 = vadd.f32 %v314, %v322
  %v330 = vadd.f32 %v315, %v324
  %v331 = vmul.f32 %v208, %v208
  %v332 = vmul.f32 %v213, %v213
  %v333 = vmul.f32 %v218, %v218
  %337 = vrot.lane.b32.xlu0 %v331, 111
  %v338 = vpop.permute.xlu0 %337
  %339 = vrot.lane.b32.xlu0 %v332, 111
  %v340 = vpop.permute.xlu0 %339
  %341 = vrot.lane.b32.xlu0 %v333, 111
  %v342 = vpop.permute.xlu0 %341
  %v346 = vadd.f32 %v331, %v338
  %v347 = vadd.f32 %v332, %v340
  %v348 = vadd.f32 %v333, %v342
  %v349 = vadd.f32 %v328, 1e-24
  %v350 = vadd.f32 %v329, 1e-24
  %v351 = vadd.f32 %v330, 1e-24
  %v352 = vrsqrt.pop %v349
  %v353 = vrsqrt.pop %v350
  %v354 = vrsqrt.pop %v351
  %v355 = vadd.f32 %v346, 1e-24
  %v356 = vadd.f32 %v347, 1e-24
  %v357 = vadd.f32 %v348, 1e-24
  %v358 = vrsqrt.pop %v355
  %v359 = vrsqrt.pop %v356
  %v360 = vrsqrt.pop %v357
  %v361 = vmul.f32 %v328, %v352
  %v362 = vmul.f32 %v329, %v353
  %v363 = vmul.f32 %v330, %v354
  %v364 = vmul.f32 %v346, %v358
  %v365 = vmul.f32 %v347, %v359
  %v366 = vmul.f32 %v348, %v360
  %v367 = vadd.f32 %v361, 1.1920929e-07
  %v368 = vadd.f32 %v362, 1.1920929e-07
  %v369 = vadd.f32 %v363, 1.1920929e-07
  %v370 = vrsqrt.pop %v367
  %v371 = vmul.f32 %v367, %v370
  %vm372 = vcmp.eq.f32.partialorder %v367, inf
  %v373 = vsel %vm372, %v367, %v371
  %vm374 = vcmp.eq.f32.partialorder %v367, 0.0
  %v375 = vand.u32 %v367, 2147483648
  %v376 = vsel %vm374, %v375, %v373
  %v377 = vrsqrt.pop %v368
  %v378 = vmul.f32 %v368, %v377
  %vm379 = vcmp.eq.f32.partialorder %v368, inf
  %v380 = vsel %vm379, %v368, %v378
  %vm381 = vcmp.eq.f32.partialorder %v368, 0.0
  %v382 = vand.u32 %v368, 2147483648
  %v383 = vsel %vm381, %v382, %v380
  %v384 = vrsqrt.pop %v369
  %v385 = vmul.f32 %v369, %v384
  %vm386 = vcmp.eq.f32.partialorder %v369, inf
  %v387 = vsel %vm386, %v369, %v385
  %vm388 = vcmp.eq.f32.partialorder %v369, 0.0
  %v389 = vand.u32 %v369, 2147483648
  %v390 = vsel %vm388, %v389, %v387
  %v391 = vadd.f32 %v364, 1.1920929e-07
  %v392 = vadd.f32 %v365, 1.1920929e-07
  %v393 = vadd.f32 %v366, 1.1920929e-07
  %v394 = vrsqrt.pop %v391
  %v395 = vmul.f32 %v391, %v394
  %vm396 = vcmp.eq.f32.partialorder %v391, inf
  %v397 = vsel %vm396, %v391, %v395
  %vm398 = vcmp.eq.f32.partialorder %v391, 0.0
  %v399 = vand.u32 %v391, 2147483648
  %v400 = vsel %vm398, %v399, %v397
  %v401 = vrsqrt.pop %v392
  %v402 = vmul.f32 %v392, %v401
  %vm403 = vcmp.eq.f32.partialorder %v392, inf
  %v404 = vsel %vm403, %v392, %v402
  %vm405 = vcmp.eq.f32.partialorder %v392, 0.0
  %v406 = vand.u32 %v392, 2147483648
  %v407 = vsel %vm405, %v406, %v404
  %v408 = vrsqrt.pop %v393
  %v409 = vmul.f32 %v393, %v408
  %vm410 = vcmp.eq.f32.partialorder %v393, inf
  %v411 = vsel %vm410, %v393, %v409
  %vm412 = vcmp.eq.f32.partialorder %v393, 0.0
  %v413 = vand.u32 %v393, 2147483648
  %v414 = vsel %vm412, %v413, %v411
  %vm415 = vcmp.gt.f32.partialorder %v361, 0.0
  %vm416 = vcmp.gt.f32.partialorder %v362, 0.0
  %vm417 = vcmp.gt.f32.partialorder %v363, 0.0
  %v418 = vmul.f32 %v300, %v352
  %v419 = vmul.f32 %v305, %v353
  %v420 = vmul.f32 %v310, %v354
  %v421 = vsel %vm415, %v418, 1.0
  %v422 = vsel %vm416, %v419, 1.0
  %v423 = vsel %vm417, %v420, 1.0
  %427 = vrot.lane.b32.xlu0 %v352, 17
  %v428 = vpop.permute.xlu0 %427
  %429 = vrot.lane.b32.xlu0 %v353, 17
  %v430 = vpop.permute.xlu0 %429
  %431 = vrot.lane.b32.xlu0 %v354, 17
  %v432 = vpop.permute.xlu0 %431
  %v436 = vmul.f32 %v300, %v428
  %v437 = vmul.f32 %v305, %v430
  %v438 = vmul.f32 %v310, %v432
  %442 = vrot.lane.b32.xlu0 %v436, 111
  %v443 = vpop.permute.xlu0 %442
  %444 = vrot.lane.b32.xlu0 %v437, 111
  %v445 = vpop.permute.xlu0 %444
  %446 = vrot.lane.b32.xlu0 %v438, 111
  %v447 = vpop.permute.xlu0 %446
  %v451 = vsel %vm415, %v443, 0.0
  %v452 = vsel %vm416, %v445, 0.0
  %v453 = vsel %vm417, %v447, 0.0
  %vm454 = vcmp.gt.f32.partialorder %v364, 0.0
  %vm455 = vcmp.gt.f32.partialorder %v365, 0.0
  %vm456 = vcmp.gt.f32.partialorder %v366, 0.0
  %v457 = vmul.f32 %v208, %v358
  %v458 = vmul.f32 %v213, %v359
  %v459 = vmul.f32 %v218, %v360
  %v460 = vsel %vm454, %v457, 1.0
  %v461 = vsel %vm455, %v458, 1.0
  %v462 = vsel %vm456, %v459, 1.0
  %466 = vrot.lane.b32.xlu0 %v358, 17
  %v467 = vpop.permute.xlu0 %466
  %468 = vrot.lane.b32.xlu0 %v359, 17
  %v469 = vpop.permute.xlu0 %468
  %470 = vrot.lane.b32.xlu0 %v360, 17
  %v471 = vpop.permute.xlu0 %470
  %v475 = vmul.f32 %v208, %v467
  %v476 = vmul.f32 %v213, %v469
  %v477 = vmul.f32 %v218, %v471
  %481 = vrot.lane.b32.xlu0 %v475, 111
  %v482 = vpop.permute.xlu0 %481
  %483 = vrot.lane.b32.xlu0 %v476, 111
  %v484 = vpop.permute.xlu0 %483
  %485 = vrot.lane.b32.xlu0 %v477, 111
  %v486 = vpop.permute.xlu0 %485
  %v490 = vsel %vm454, %v482, 0.0
  %v491 = vsel %vm455, %v484, 0.0
  %v492 = vsel %vm456, %v486, 0.0
  %v493 = vmul.f32 %v400, %v421
  %v494 = vmul.f32 %v407, %v422
  %v495 = vmul.f32 %v414, %v423
  %v496 = vmul.f32 %v400, %v451
  %v497 = vmul.f32 %v407, %v452
  %v498 = vmul.f32 %v414, %v453
  %v499 = vmul.f32 %v376, %v460
  %v500 = vmul.f32 %v383, %v461
  %v501 = vmul.f32 %v390, %v462
  %v502 = vmul.f32 %v376, %v490
  %v503 = vmul.f32 %v383, %v491
  %v504 = vmul.f32 %v390, %v492
  %vm505 = vcmask 138240
  %v506 = vsel %vm505, %v376, 0.0
  %v507 = vsel %vm505, %v383, 0.0
  %v508 = vsel %vm505, %v390, 0.0
  %509 = vst [vmem:[%s57] sm:$0xff] %v506
  %510 = vst [vmem:[%s57 + $0x8] sm:$0xff] %v507
  %511 = vst [vmem:[%s57 + $0x10] sm:$0xff] %v508
  %515 = vrot.lane.b32.xlu0 %v502, 17
  %v516 = vpop.permute.xlu0 %515
  %517 = vrot.lane.b32.xlu0 %v503, 17
  %v518 = vpop.permute.xlu0 %517
  %519 = vrot.lane.b32.xlu0 %v504, 17
  %v520 = vpop.permute.xlu0 %519
  %527 = vrot.lane.b32.xlu0 %v493, 34
  %v528 = vpop.permute.xlu0 %527
  %529 = vrot.lane.b32.xlu0 %v494, 34
  %v530 = vpop.permute.xlu0 %529
  %531 = vrot.lane.b32.xlu0 %v495, 34
  %v532 = vpop.permute.xlu0 %531
  %539 = vrot.lane.b32.xlu0 %v496, 51
  %v540 = vpop.permute.xlu0 %539
  %541 = vrot.lane.b32.xlu0 %v497, 51
  %v542 = vpop.permute.xlu0 %541
  %543 = vrot.lane.b32.xlu0 %v498, 51
  %v544 = vpop.permute.xlu0 %543
  %v548 = vsel %vm505, %v499, %v516
  %v549 = vsel %vm505, %v500, %v518
  %v550 = vsel %vm505, %v501, %v520
  %vm551 = vcmask 277504
  %v552 = vsel %vm551, %v548, %v528
  %v553 = vsel %vm551, %v549, %v530
  %v554 = vsel %vm551, %v550, %v532
  %vm555 = vcmask 416768
  %v556 = vsel %vm555, %v552, %v540
  %v557 = vsel %vm555, %v553, %v542
  %v558 = vsel %vm555, %v554, %v544
  %v559 = vld [vmem:[%s7] sm:$0xff]
  %v560 = vld [vmem:[%s7 + $0x8] sm:$0xff]
  %v561 = vld [vmem:[%s7 + $0x10] sm:$0xff]
  %v562 = vld [vmem:[%s7 + $0x18] sm:$0xff]
  %v563 = vld [vmem:[%s7 + $0x20] sm:$0xff]
  %v564 = vld [vmem:[%s7 + $0x28] sm:$0xff]
  %v565 = vld [vmem:[%s7 + $0x30] sm:$0xff]
  %v566 = vld [vmem:[%s7 + $0x38] sm:$0xff]
  %v567 = vld [vmem:[%s7 + $0x40] sm:$0xf]
  %v568 = vld [vmem:[%s9] sm:$0x1]
  %v570 = vlaneseq
  %v571 = vshrl.u32 %v570, 7
  %v572 = vsub.s32 0, %v571
  %v573 = vrot.slane %v568, %v572
  %vm575 = vcmask 556032
  %v577 = vsel %vm575, %v556, 0
  %v580 = vsel %vm575, %v557, 0
  %v583 = vsel %vm575, %v558, 0
  %vm585 = vcmask 1043456
  %v587 = vsel %vm585, %v567, 0
  %589 = vmatprep.subr.mxu0 0.0
  %590 = vmatpush1.msra.mxu0 %v559
  %591 = vmatprep.subr.mxu0 0.0
  %592 = vmatpush1.msra.mxu0 %v560
  %593 = vmatprep.subr.mxu0 0.0
  %594 = vmatpush1.msra.mxu0 %v561
  %595 = vmatprep.subr.mxu0 0.0
  %596 = vmatpush1.msra.mxu0 %v562
  %597 = vmatprep.subr.mxu0 0.0
  %598 = vmatpush1.msra.mxu0 %v563
  %599 = vmatprep.subr.mxu0 0.0
  %600 = vmatpush1.msra.mxu0 %v564
  %601 = vmatprep.subr.mxu0 0.0
  %602 = vmatpush1.msra.mxu0 %v565
  %603 = vmatprep.subr.mxu0 0.0
  %604 = vmatpush1.msra.mxu0 %v566
  %605 = vmatprep.subr.mxu0 0.0
  %606 = vmatpush1.msra.mxu0 %v587
  %607 = vmatprep.subr.mxu0 0.0
  %608 = vmatpush1.msra.mxu0 0.0
  %609 = vmatprep.subr.mxu0 0.0
  %610 = vmatpush1.msra.mxu0 0.0
  %611 = vmatprep.subr.mxu0 0.0
  %612 = vmatpush1.msra.mxu0 0.0
  %613 = vmatprep.subr.mxu0 0.0
  %614 = vmatpush1.msra.mxu0 0.0
  %615 = vmatprep.subr.mxu0 0.0
  %616 = vmatpush1.msra.mxu0 0.0
  %617 = vmatprep.subr.mxu0 0.0
  %618 = vmatpush1.msra.mxu0 0.0
  %619 = vmatprep.subr.mxu0 0.0
  %620 = vmatpush1.msra.mxu0 0.0
  %621 = vmatprep.subr.mxu0 0.0
  %622 = vmatpush1.msra.mxu0 0.0
  %623 = vmatprep.subr.mxu0 0.0
  %624 = vmatpush1.msra.mxu0 0.0
  %625 = vmatprep.subr.mxu0 0.0
  %626 = vmatpush1.msra.mxu0 0.0
  %627 = vmatprep.subr.mxu0 0.0
  %628 = vmatpush1.msra.mxu0 0.0
  %629 = vmatprep.subr.mxu0 0.0
  %630 = vmatpush1.msra.mxu0 0.0
  %631 = vmatprep.subr.mxu0 0.0
  %632 = vmatpush1.msra.mxu0 0.0
  %633 = vmatprep.subr.mxu0 0.0
  %634 = vmatpush1.msra.mxu0 0.0
  %635 = vmatprep.subr.mxu0 0.0
  %636 = vmatpush1.msra.mxu0 0.0
  %637 = vmatprep.subr.mxu0 0.0
  %638 = vmatpush1.msra.mxu0 0.0
  %639 = vmatprep.subr.mxu0 0.0
  %640 = vmatpush1.msra.mxu0 0.0
  %641 = vmatprep.subr.mxu0 0.0
  %642 = vmatpush1.msra.mxu0 0.0
  %643 = vmatprep.subr.mxu0 0.0
  %644 = vmatpush1.msra.mxu0 0.0
  %645 = vmatprep.subr.mxu0 0.0
  %646 = vmatpush1.msra.mxu0 0.0
  %647 = vmatprep.subr.mxu0 0.0
  %648 = vmatpush1.msra.mxu0 0.0
  %649 = vmatprep.subr.mxu0 0.0
  %650 = vmatpush1.msra.mxu0 0.0
  %651 = vmatprep.subr.mxu0 0.0
  %652 = vmatpush1.msra.mxu0 0.0
  %653 = vmatprep.mubr.f32.mxu0 0.0
  %654 = vmatmul.mubr.f32.gmra.mrb[0].mxu0 %v577
  %v655 = vpop.f32.mrb[0].mxu0
  %v656 = vadd.f32 %v573, %v655
  %v657 = vpop.f32.mrb[0].mxu0
  %658 = vmatprep.mubr.f32.mxu0 0.0
  %659 = vmatmul.mubr.f32.gmra.mrb[0].mxu0 %v580
  %v660 = vpop.f32.mrb[0].mxu0
  %v661 = vadd.f32 %v573, %v660
  %v662 = vpop.f32.mrb[0].mxu0
  %663 = vmatprep.mubr.f32.mxu0 0.0
  %664 = vmatmul.mubr.f32.gmra.mrb[0].mxu0 %v583
  %v665 = vpop.f32.mrb[0].mxu0
  %v666 = vadd.f32 %v573, %v665
  %v667 = vpop.f32.mrb[0].mxu0
  %668 = vdwg.mxu0
  %vm669 = vcmp.ge.f32.partialorder %v656, 0.0
  %vm670 = vcmp.ge.f32.partialorder %v661, 0.0
  %vm671 = vcmp.ge.f32.partialorder %v666, 0.0
  %v672 = vmul.f32 %v656, 0.25
  %v673 = vmul.f32 %v661, 0.25
  %v674 = vmul.f32 %v666, 0.25
  %v675 = vsel %vm669, %v656, %v672
  %v676 = vsel %vm670, %v661, %v673
  %v677 = vsel %vm671, %v666, %v674
  %681 = vrot.lane.b32.xlu0 %v376, 32
  %v682 = vpop.permute.xlu0 %681
  %683 = vrot.lane.b32.xlu0 %v383, 32
  %v684 = vpop.permute.xlu0 %683
  %685 = vrot.lane.b32.xlu0 %v390, 32
  %v686 = vpop.permute.xlu0 %685
  %v690 = vsel %vm131, %v675, %v682
  %v691 = vsel %vm131, %v676, %v684
  %v692 = vsel %vm131, %v677, %v686
  %v693 = vld [vmem:[%s11] sm:$0xff]
  %v694 = vld [vmem:[%s11 + $0x8] sm:$0xff]
  %v695 = vld [vmem:[%s11 + $0x10] sm:$0xff]
  %v696 = vld [vmem:[%s11 + $0x18] sm:$0xff]
  %v697 = vld [vmem:[%s11 + $0x20] sm:$0xff]
  %v698 = vld [vmem:[%s11 + $0x28] sm:$0xff]
  %v699 = vld [vmem:[%s11 + $0x30] sm:$0x1]
  %v700 = vld [vmem:[%s13] sm:$0x1]
  %v702 = vlaneseq
  %v703 = vshrl.u32 %v702, 7
  %v704 = vsub.s32 0, %v703
  %v705 = vrot.slane %v700, %v704
  %vm707 = vcmask 400384
  %v709 = vsel %vm707, %v690, 0
  %v712 = vsel %vm707, %v691, 0
  %v715 = vsel %vm707, %v692, 0
  %vm717 = vcmask 1040384
  %v719 = vsel %vm717, %v699, 0
  %721 = vmatprep.subr.mxu0 0.0
  %722 = vmatpush1.msra.mxu0 %v693
  %723 = vmatprep.subr.mxu0 0.0
  %724 = vmatpush1.msra.mxu0 %v694
  %725 = vmatprep.subr.mxu0 0.0
  %726 = vmatpush1.msra.mxu0 %v695
  %727 = vmatprep.subr.mxu0 0.0
  %728 = vmatpush1.msra.mxu0 %v696
  %729 = vmatprep.subr.mxu0 0.0
  %730 = vmatpush1.msra.mxu0 %v697
  %731 = vmatprep.subr.mxu0 0.0
  %732 = vmatpush1.msra.mxu0 %v698
  %733 = vmatprep.subr.mxu0 0.0
  %734 = vmatpush1.msra.mxu0 %v719
  %735 = vmatprep.subr.mxu0 0.0
  %736 = vmatpush1.msra.mxu0 0.0
  %737 = vmatprep.subr.mxu0 0.0
  %738 = vmatpush1.msra.mxu0 0.0
  %739 = vmatprep.subr.mxu0 0.0
  %740 = vmatpush1.msra.mxu0 0.0
  %741 = vmatprep.subr.mxu0 0.0
  %742 = vmatpush1.msra.mxu0 0.0
  %743 = vmatprep.subr.mxu0 0.0
  %744 = vmatpush1.msra.mxu0 0.0
  %745 = vmatprep.subr.mxu0 0.0
  %746 = vmatpush1.msra.mxu0 0.0
  %747 = vmatprep.subr.mxu0 0.0
  %748 = vmatpush1.msra.mxu0 0.0
  %749 = vmatprep.subr.mxu0 0.0
  %750 = vmatpush1.msra.mxu0 0.0
  %751 = vmatprep.subr.mxu0 0.0
  %752 = vmatpush1.msra.mxu0 0.0
  %753 = vmatprep.subr.mxu0 0.0
  %754 = vmatpush1.msra.mxu0 0.0
  %755 = vmatprep.subr.mxu0 0.0
  %756 = vmatpush1.msra.mxu0 0.0
  %757 = vmatprep.subr.mxu0 0.0
  %758 = vmatpush1.msra.mxu0 0.0
  %759 = vmatprep.subr.mxu0 0.0
  %760 = vmatpush1.msra.mxu0 0.0
  %761 = vmatprep.subr.mxu0 0.0
  %762 = vmatpush1.msra.mxu0 0.0
  %763 = vmatprep.subr.mxu0 0.0
  %764 = vmatpush1.msra.mxu0 0.0
  %765 = vmatprep.subr.mxu0 0.0
  %766 = vmatpush1.msra.mxu0 0.0
  %767 = vmatprep.subr.mxu0 0.0
  %768 = vmatpush1.msra.mxu0 0.0
  %769 = vmatprep.subr.mxu0 0.0
  %770 = vmatpush1.msra.mxu0 0.0
  %771 = vmatprep.subr.mxu0 0.0
  %772 = vmatpush1.msra.mxu0 0.0
  %773 = vmatprep.subr.mxu0 0.0
  %774 = vmatpush1.msra.mxu0 0.0
  %775 = vmatprep.subr.mxu0 0.0
  %776 = vmatpush1.msra.mxu0 0.0
  %777 = vmatprep.subr.mxu0 0.0
  %778 = vmatpush1.msra.mxu0 0.0
  %779 = vmatprep.subr.mxu0 0.0
  %780 = vmatpush1.msra.mxu0 0.0
  %781 = vmatprep.subr.mxu0 0.0
  %782 = vmatpush1.msra.mxu0 0.0
  %783 = vmatprep.subr.mxu0 0.0
  %784 = vmatpush1.msra.mxu0 0.0
  %785 = vmatprep.mubr.f32.mxu0 0.0
  %786 = vmatmul.mubr.f32.gmra.mrb[0].mxu0 %v709
  %v787 = vpop.f32.mrb[0].mxu0
  %v788 = vadd.f32 %v705, %v787
  %v789 = vpop.f32.mrb[0].mxu0
  %790 = vmatprep.mubr.f32.mxu0 0.0
  %791 = vmatmul.mubr.f32.gmra.mrb[0].mxu0 %v712
  %v792 = vpop.f32.mrb[0].mxu0
  %v793 = vadd.f32 %v705, %v792
  %v794 = vpop.f32.mrb[0].mxu0
  %795 = vmatprep.mubr.f32.mxu0 0.0
  %796 = vmatmul.mubr.f32.gmra.mrb[0].mxu0 %v715
  %v797 = vpop.f32.mrb[0].mxu0
  %v798 = vadd.f32 %v705, %v797
  %v799 = vpop.f32.mrb[0].mxu0
  %800 = vdwg.mxu0
  %801 = vrot.lane.b32.xlu0 %v493, 32
  %v802 = vpop.permute.xlu0 %801
  %803 = vrot.lane.b32.xlu0 %v494, 32
  %v804 = vpop.permute.xlu0 %803
  %805 = vrot.lane.b32.xlu0 %v495, 32
  %v806 = vpop.permute.xlu0 %805
  %810 = vrot.lane.b32.xlu0 %v496, 49
  %v811 = vpop.permute.xlu0 %810
  %812 = vrot.lane.b32.xlu0 %v497, 49
  %v813 = vpop.permute.xlu0 %812
  %814 = vrot.lane.b32.xlu0 %v498, 49
  %v815 = vpop.permute.xlu0 %814
  %v819 = vsel %vm131, %v675, %v802
  %v820 = vsel %vm131, %v676, %v804
  %v821 = vsel %vm131, %v677, %v806
  %v822 = vsel %vm707, %v819, %v811
  %v823 = vsel %vm707, %v820, %v813
  %v824 = vsel %vm707, %v821, %v815
  %v825 = vld [vmem:[%s15] sm:$0xff]
  %v826 = vld [vmem:[%s15 + $0x8] sm:$0xff]
  %v827 = vld [vmem:[%s15 + $0x10] sm:$0xff]
  %v828 = vld [vmem:[%s15 + $0x18] sm:$0xff]
  %v829 = vld [vmem:[%s15 + $0x20] sm:$0xff]
  %v830 = vld [vmem:[%s15 + $0x28] sm:$0xff]
  %v831 = vld [vmem:[%s15 + $0x30] sm:$0xff]
  %v832 = vld [vmem:[%s15 + $0x38] sm:$0xff]
  %v833 = vld [vmem:[%s15 + $0x40] sm:$0x3]
  %v834 = vld [vmem:[%s17] sm:$0x1]
  %v836 = vlaneseq
  %v837 = vshrl.u32 %v836, 7
  %v838 = vsub.s32 0, %v837
  %v839 = vrot.slane %v834, %v838
  %vm841 = vcmask 539648
  %v843 = vsel %vm841, %v822, 0
  %v846 = vsel %vm841, %v823, 0
  %v849 = vsel %vm841, %v824, 0
  %vm851 = vcmask 1041408
  %v853 = vsel %vm851, %v833, 0
  %855 = vmatprep.subr.mxu0 0.0
  %856 = vmatpush1.msra.mxu0 %v825
  %857 = vmatprep.subr.mxu0 0.0
  %858 = vmatpush1.msra.mxu0 %v826
  %859 = vmatprep.subr.mxu0 0.0
  %860 = vmatpush1.msra.mxu0 %v827
  %861 = vmatprep.subr.mxu0 0.0
  %862 = vmatpush1.msra.mxu0 %v828
  %863 = vmatprep.subr.mxu0 0.0
  %864 = vmatpush1.msra.mxu0 %v829
  %865 = vmatprep.subr.mxu0 0.0
  %866 = vmatpush1.msra.mxu0 %v830
  %867 = vmatprep.subr.mxu0 0.0
  %868 = vmatpush1.msra.mxu0 %v831
  %869 = vmatprep.subr.mxu0 0.0
  %870 = vmatpush1.msra.mxu0 %v832
  %871 = vmatprep.subr.mxu0 0.0
  %872 = vmatpush1.msra.mxu0 %v853
  %873 = vmatprep.subr.mxu0 0.0
  %874 = vmatpush1.msra.mxu0 0.0
  %875 = vmatprep.subr.mxu0 0.0
  %876 = vmatpush1.msra.mxu0 0.0
  %877 = vmatprep.subr.mxu0 0.0
  %878 = vmatpush1.msra.mxu0 0.0
  %879 = vmatprep.subr.mxu0 0.0
  %880 = vmatpush1.msra.mxu0 0.0
  %881 = vmatprep.subr.mxu0 0.0
  %882 = vmatpush1.msra.mxu0 0.0
  %883 = vmatprep.subr.mxu0 0.0
  %884 = vmatpush1.msra.mxu0 0.0
  %885 = vmatprep.subr.mxu0 0.0
  %886 = vmatpush1.msra.mxu0 0.0
  %887 = vmatprep.subr.mxu0 0.0
  %888 = vmatpush1.msra.mxu0 0.0
  %889 = vmatprep.subr.mxu0 0.0
  %890 = vmatpush1.msra.mxu0 0.0
  %891 = vmatprep.subr.mxu0 0.0
  %892 = vmatpush1.msra.mxu0 0.0
  %893 = vmatprep.subr.mxu0 0.0
  %894 = vmatpush1.msra.mxu0 0.0
  %895 = vmatprep.subr.mxu0 0.0
  %896 = vmatpush1.msra.mxu0 0.0
  %897 = vmatprep.subr.mxu0 0.0
  %898 = vmatpush1.msra.mxu0 0.0
  %899 = vmatprep.subr.mxu0 0.0
  %900 = vmatpush1.msra.mxu0 0.0
  %901 = vmatprep.subr.mxu0 0.0
  %902 = vmatpush1.msra.mxu0 0.0
  %903 = vmatprep.subr.mxu0 0.0
  %904 = vmatpush1.msra.mxu0 0.0
  %905 = vmatprep.subr.mxu0 0.0
  %906 = vmatpush1.msra.mxu0 0.0
  %907 = vmatprep.subr.mxu0 0.0
  %908 = vmatpush1.msra.mxu0 0.0
  %909 = vmatprep.subr.mxu0 0.0
  %910 = vmatpush1.msra.mxu0 0.0
  %911 = vmatprep.subr.mxu0 0.0
  %912 = vmatpush1.msra.mxu0 0.0
  %913 = vmatprep.subr.mxu0 0.0
  %914 = vmatpush1.msra.mxu0 0.0
  %915 = vmatprep.subr.mxu0 0.0
  %916 = vmatpush1.msra.mxu0 0.0
  %917 = vmatprep.subr.mxu0 0.0
  %918 = vmatpush1.msra.mxu0 0.0
  %919 = vmatprep.mubr.f32.mxu0 0.0
  %920 = vmatmul.mubr.f32.gmra.mrb[0].mxu0 %v843
  %v921 = vpop.f32.mrb[0].mxu0
  %v922 = vadd.f32 %v839, %v921
  %v923 = vpop.f32.mrb[0].mxu0
  %924 = vmatprep.mubr.f32.mxu0 0.0
  %925 = vmatmul.mubr.f32.gmra.mrb[0].mxu0 %v846
  %v926 = vpop.f32.mrb[0].mxu0
  %v927 = vadd.f32 %v839, %v926
  %v928 = vpop.f32.mrb[0].mxu0
  %929 = vmatprep.mubr.f32.mxu0 0.0
  %930 = vmatmul.mubr.f32.gmra.mrb[0].mxu0 %v849
  %v931 = vpop.f32.mrb[0].mxu0
  %v932 = vadd.f32 %v839, %v931
  %v933 = vpop.f32.mrb[0].mxu0
  %934 = vdwg.mxu0
  %v935 = vld [vmem:[%s19] sm:$0xff]
  %v936 = vld [vmem:[%s19 + $0x8] sm:$0xff]
  %v937 = vld [vmem:[%s19 + $0x10] sm:$0xff]
  %v938 = vld [vmem:[%s19 + $0x18] sm:$0xff]
  %v939 = vld [vmem:[%s21] sm:$0x1]
  %v941 = vlaneseq
  %v942 = vshrl.u32 %v941, 7
  %v943 = vsub.s32 0, %v942
  %v944 = vrot.slane %v939, %v943
  %v947 = vsel %vm131, %v788, 0
  %v950 = vsel %vm131, %v793, 0
  %v953 = vsel %vm131, %v798, 0
  %955 = vmatprep.subr.mxu0 0.0
  %956 = vmatpush1.msra.mxu0 %v935
  %957 = vmatprep.subr.mxu0 0.0
  %958 = vmatpush1.msra.mxu0 %v936
  %959 = vmatprep.subr.mxu0 0.0
  %960 = vmatpush1.msra.mxu0 %v937
  %961 = vmatprep.subr.mxu0 0.0
  %962 = vmatpush1.msra.mxu0 %v938
  %963 = vmatprep.subr.mxu0 0.0
  %964 = vmatpush1.msra.mxu0 0.0
  %965 = vmatprep.subr.mxu0 0.0
  %966 = vmatpush1.msra.mxu0 0.0
  %967 = vmatprep.subr.mxu0 0.0
  %968 = vmatpush1.msra.mxu0 0.0
  %969 = vmatprep.subr.mxu0 0.0
  %970 = vmatpush1.msra.mxu0 0.0
  %971 = vmatprep.subr.mxu0 0.0
  %972 = vmatpush1.msra.mxu0 0.0
  %973 = vmatprep.subr.mxu0 0.0
  %974 = vmatpush1.msra.mxu0 0.0
  %975 = vmatprep.subr.mxu0 0.0
  %976 = vmatpush1.msra.mxu0 0.0
  %977 = vmatprep.subr.mxu0 0.0
  %978 = vmatpush1.msra.mxu0 0.0
  %979 = vmatprep.subr.mxu0 0.0
  %980 = vmatpush1.msra.mxu0 0.0
  %981 = vmatprep.subr.mxu0 0.0
  %982 = vmatpush1.msra.mxu0 0.0
  %983 = vmatprep.subr.mxu0 0.0
  %984 = vmatpush1.msra.mxu0 0.0
  %985 = vmatprep.subr.mxu0 0.0
  %986 = vmatpush1.msra.mxu0 0.0
  %987 = vmatprep.subr.mxu0 0.0
  %988 = vmatpush1.msra.mxu0 0.0
  %989 = vmatprep.subr.mxu0 0.0
  %990 = vmatpush1.msra.mxu0 0.0
  %991 = vmatprep.subr.mxu0 0.0
  %992 = vmatpush1.msra.mxu0 0.0
  %993 = vmatprep.subr.mxu0 0.0
  %994 = vmatpush1.msra.mxu0 0.0
  %995 = vmatprep.subr.mxu0 0.0
  %996 = vmatpush1.msra.mxu0 0.0
  %997 = vmatprep.subr.mxu0 0.0
  %998 = vmatpush1.msra.mxu0 0.0
  %999 = vmatprep.subr.mxu0 0.0
  %1000 = vmatpush1.msra.mxu0 0.0
  %1001 = vmatprep.subr.mxu0 0.0
  %1002 = vmatpush1.msra.mxu0 0.0
  %1003 = vmatprep.subr.mxu0 0.0
  %1004 = vmatpush1.msra.mxu0 0.0
  %1005 = vmatprep.subr.mxu0 0.0
  %1006 = vmatpush1.msra.mxu0 0.0
  %1007 = vmatprep.subr.mxu0 0.0
  %1008 = vmatpush1.msra.mxu0 0.0
  %1009 = vmatprep.subr.mxu0 0.0
  %1010 = vmatpush1.msra.mxu0 0.0
  %1011 = vmatprep.subr.mxu0 0.0
  %1012 = vmatpush1.msra.mxu0 0.0
  %1013 = vmatprep.subr.mxu0 0.0
  %1014 = vmatpush1.msra.mxu0 0.0
  %1015 = vmatprep.subr.mxu0 0.0
  %1016 = vmatpush1.msra.mxu0 0.0
  %1017 = vmatprep.subr.mxu0 0.0
  %1018 = vmatpush1.msra.mxu0 0.0
  %1019 = vmatprep.mubr.f32.mxu0 0.0
  %1020 = vmatmul.mubr.f32.gmra.mrb[0].mxu0 %v947
  %v1021 = vpop.f32.mrb[0].mxu0
  %v1022 = vadd.f32 %v944, %v1021
  %v1023 = vpop.f32.mrb[0].mxu0
  %1024 = vmatprep.mubr.f32.mxu0 0.0
  %1025 = vmatmul.mubr.f32.gmra.mrb[0].mxu0 %v950
  %v1026 = vpop.f32.mrb[0].mxu0
  %v1027 = vadd.f32 %v944, %v1026
  %v1028 = vpop.f32.mrb[0].mxu0
  %1029 = vmatprep.mubr.f32.mxu0 0.0
  %1030 = vmatmul.mubr.f32.gmra.mrb[0].mxu0 %v953
  %v1031 = vpop.f32.mrb[0].mxu0
  %v1032 = vadd.f32 %v944, %v1031
  %v1033 = vpop.f32.mrb[0].mxu0
  %1034 = vdwg.mxu0
  %vm1035 = vcmp.ge.f32.partialorder %v1022, 0.0
  %vm1036 = vcmp.ge.f32.partialorder %v1027, 0.0
  %vm1037 = vcmp.ge.f32.partialorder %v1032, 0.0
  %v1038 = vmul.f32 %v1022, 0.25
  %v1039 = vmul.f32 %v1027, 0.25
  %v1040 = vmul.f32 %v1032, 0.25
  %v1041 = vsel %vm1035, %v1022, %v1038
  %v1042 = vsel %vm1036, %v1027, %v1039
  %v1043 = vsel %vm1037, %v1032, %v1040
  %v1044 = vld [vmem:[%s23] sm:$0x1]
  %v1045 = vld [vmem:[%s25] sm:$0x1]
  %v1046 = vsel %vm121, %v1041, 0.0
  %1047 = vadd.xlane.f32.xlu0 %v1046
  %v1048 = vpop.xlane.xlu0 %1047
  %v1049 = vsel %vm121, %v1042, 0.0
  %1050 = vadd.xlane.f32.xlu0 %v1049
  %v1051 = vpop.xlane.xlu0 %1050
  %v1052 = vsel %vm121, %v1043, 0.0
  %1053 = vadd.xlane.f32.xlu0 %v1052
  %v1054 = vpop.xlane.xlu0 %1053
  %v1055 = vrcp.pop 8.0
  %v1056 = vmul.f32 %v1048, %v1055
  %v1057 = vmul.f32 %v1051, %v1055
  %v1058 = vmul.f32 %v1054, %v1055
  %v1059 = vsub.f32 %v1041, %v1056
  %v1060 = vsub.f32 %v1042, %v1057
  %v1061 = vsub.f32 %v1043, %v1058
  %v1062 = vmul.f32 %v1059, %v1059
  %v1063 = vmul.f32 %v1060, %v1060
  %v1064 = vmul.f32 %v1061, %v1061
  %v1065 = vsel %vm121, %v1062, 0.0
  %1066 = vadd.xlane.f32.xlu0 %v1065
  %v1067 = vpop.xlane.xlu0 %1066
  %v1068 = vsel %vm121, %v1063, 0.0
  %1069 = vadd.xlane.f32.xlu0 %v1068
  %v1070 = vpop.xlane.xlu0 %1069
  %v1071 = vsel %vm121, %v1064, 0.0
  %1072 = vadd.xlane.f32.xlu0 %v1071
  %v1073 = vpop.xlane.xlu0 %1072
  %v1074 = vmul.f32 %v1067, %v1055
  %v1075 = vmul.f32 %v1070, %v1055
  %v1076 = vmul.f32 %v1073, %v1055
  %v1078 = vlaneseq
  %v1079 = vshrl.u32 %v1078, 7
  %v1080 = vsub.s32 0, %v1079
  %v1081 = vrot.slane %v1044, %v1080
  %v1083 = vmul.f32 %v1081, %v1059
  %v1084 = vmul.f32 %v1081, %v1060
  %v1085 = vmul.f32 %v1081, %v1061
  %v1086 = vadd.f32 %v1074, 1e-05
  %v1087 = vadd.f32 %v1075, 1e-05
  %v1088 = vadd.f32 %v1076, 1e-05
  %v1089 = vrsqrt.pop %v1086
  %v1090 = vrsqrt.pop %v1087
  %v1091 = vrsqrt.pop %v1088
  %v1092 = vmul.f32 %v1083, %v1089
  %v1093 = vmul.f32 %v1084, %v1090
  %v1094 = vmul.f32 %v1085, %v1091
  %v1096 = vlaneseq
  %v1097 = vshrl.u32 %v1096, 7
  %v1098 = vsub.s32 0, %v1097
  %v1099 = vrot.slane %v1045, %v1098
  %v1101 = vadd.f32 %v1092, %v1099
  %v1102 = vadd.f32 %v1093, %v1099
  %v1103 = vadd.f32 %v1094, %v1099
  %1104 = vst.msk [vmem:[#allocation2 + $0x10] sm:$0xff] %vm121, %v1101
  %1105 = vst.msk [vmem:[#allocation2 + $0x18] sm:$0xff] %vm121, %v1102
  %1106 = vst.msk [vmem:[#allocation2 + $0x20] sm:$0xff] %vm121, %v1103
  %v1107 = vld [vmem:[#allocation2 + $0x8] sm:$0xff]
  %v1108 = vld [vmem:[#allocation2 + $0x10] sm:$0xff]
  %v1109 = vld [vmem:[#allocation2 + $0x18] sm:$0xff]
  %v1110 = vld [vmem:[#allocation2 + $0xa] sm:$0xff]
  %v1111 = vld [vmem:[#allocation2 + $0x12] sm:$0xff]
  %v1112 = vld [vmem:[#allocation2 + $0x1a] sm:$0xff]
  %v1113 = vld [vmem:[#allocation2 + $0xc] sm:$0xff]
  %v1114 = vld [vmem:[#allocation2 + $0x14] sm:$0xff]
  %v1115 = vld [vmem:[#allocation2 + $0x1c] sm:$0xff]
  %v1116 = vld [vmem:[#allocation2 + $0xe] sm:$0xff]
  %v1117 = vld [vmem:[#allocation2 + $0x16] sm:$0xff]
  %v1118 = vld [vmem:[#allocation2 + $0x1e] sm:$0xff]
  %v1119 = vld [vmem:[#allocation2 + $0x20] sm:$0xff]
  %1123 = vrot.lane.b32.xlu0 %v1110, 8
  %v1124 = vpop.permute.xlu0 %1123
  %1125 = vrot.lane.b32.xlu0 %v1111, 8
  %v1126 = vpop.permute.xlu0 %1125
  %1127 = vrot.lane.b32.xlu0 %v1112, 8
  %v1128 = vpop.permute.xlu0 %1127
  %1135 = vrot.lane.b32.xlu0 %v1113, 16
  %v1136 = vpop.permute.xlu0 %1135
  %1137 = vrot.lane.b32.xlu0 %v1114, 16
  %v1138 = vpop.permute.xlu0 %1137
  %1139 = vrot.lane.b32.xlu0 %v1115, 16
  %v1140 = vpop.permute.xlu0 %1139
  %1147 = vrot.lane.b32.xlu0 %v1116, 24
  %v1148 = vpop.permute.xlu0 %1147
  %1149 = vrot.lane.b32.xlu0 %v1117, 24
  %v1150 = vpop.permute.xlu0 %1149
  %1151 = vrot.lane.b32.xlu0 %v1118, 24
  %v1152 = vpop.permute.xlu0 %1151
  %1159 = vrot.lane.b32.xlu0 %v1108, 32
  %v1160 = vpop.permute.xlu0 %1159
  %1161 = vrot.lane.b32.xlu0 %v1109, 32
  %v1162 = vpop.permute.xlu0 %1161
  %1163 = vrot.lane.b32.xlu0 %v1119, 32
  %v1164 = vpop.permute.xlu0 %1163
  %v1168 = vsel %vm121, %v1107, %v1124
  %v1169 = vsel %vm121, %v1108, %v1126
  %v1170 = vsel %vm121, %v1109, %v1128
  %vm1171 = vcmask 130048
  %v1172 = vsel %vm1171, %v1168, %v1136
  %v1173 = vsel %vm1171, %v1169, %v1138
  %v1174 = vsel %vm1171, %v1170, %v1140
  %vm1175 = vcmask 195584
  %v1176 = vsel %vm1175, %v1172, %v1148
  %v1177 = vsel %vm1175, %v1173, %v1150
  %v1178 = vsel %vm1175, %v1174, %v1152
  %v1179 = vsel %vm131, %v1176, %v1160
  %v1180 = vsel %vm131, %v1177, %v1162
  %v1181 = vsel %vm131, %v1178, %v1164
  %v1182 = vld [vmem:[%s27] sm:$0xff]
  %v1183 = vld [vmem:[%s27 + $0x8] sm:$0xff]
  %v1184 = vld [vmem:[%s27 + $0x10] sm:$0xff]
  %v1185 = vld [vmem:[%s27 + $0x18] sm:$0xff]
  %v1186 = vld [vmem:[%s27 + $0x20] sm:$0xff]
  %v1187 = vld [vmem:[%s29] sm:$0x1]
  %v1189 = vlaneseq
  %v1190 = vshrl.u32 %v1189, 7
  %v1191 = vsub.s32 0, %v1190
  %v1192 = vrot.slane %v1187, %v1191
  %vm1194 = vcmask 326656
  %v1196 = vsel %vm1194, %v1179, 0
  %v1199 = vsel %vm1194, %v1180, 0
  %v1202 = vsel %vm1194, %v1181, 0
  %1204 = vmatprep.subr.mxu0 0.0
  %1205 = vmatpush1.msra.mxu0 %v1182
  %1206 = vmatprep.subr.mxu0 0.0
  %1207 = vmatpush1.msra.mxu0 %v1183
  %1208 = vmatprep.subr.mxu0 0.0
  %1209 = vmatpush1.msra.mxu0 %v1184
  %1210 = vmatprep.subr.mxu0 0.0
  %1211 = vmatpush1.msra.mxu0 %v1185
  %1212 = vmatprep.subr.mxu0 0.0
  %1213 = vmatpush1.msra.mxu0 %v1186
  %1214 = vmatprep.subr.mxu0 0.0
  %1215 = vmatpush1.msra.mxu0 0.0
  %1216 = vmatprep.subr.mxu0 0.0
  %1217 = vmatpush1.msra.mxu0 0.0
  %1218 = vmatprep.subr.mxu0 0.0
  %1219 = vmatpush1.msra.mxu0 0.0
  %1220 = vmatprep.subr.mxu0 0.0
  %1221 = vmatpush1.msra.mxu0 0.0
  %1222 = vmatprep.subr.mxu0 0.0
  %1223 = vmatpush1.msra.mxu0 0.0
  %1224 = vmatprep.subr.mxu0 0.0
  %1225 = vmatpush1.msra.mxu0 0.0
  %1226 = vmatprep.subr.mxu0 0.0
  %1227 = vmatpush1.msra.mxu0 0.0
  %1228 = vmatprep.subr.mxu0 0.0
  %1229 = vmatpush1.msra.mxu0 0.0
  %1230 = vmatprep.subr.mxu0 0.0
  %1231 = vmatpush1.msra.mxu0 0.0
  %1232 = vmatprep.subr.mxu0 0.0
  %1233 = vmatpush1.msra.mxu0 0.0
  %1234 = vmatprep.subr.mxu0 0.0
  %1235 = vmatpush1.msra.mxu0 0.0
  %1236 = vmatprep.subr.mxu0 0.0
  %1237 = vmatpush1.msra.mxu0 0.0
  %1238 = vmatprep.subr.mxu0 0.0
  %1239 = vmatpush1.msra.mxu0 0.0
  %1240 = vmatprep.subr.mxu0 0.0
  %1241 = vmatpush1.msra.mxu0 0.0
  %1242 = vmatprep.subr.mxu0 0.0
  %1243 = vmatpush1.msra.mxu0 0.0
  %1244 = vmatprep.subr.mxu0 0.0
  %1245 = vmatpush1.msra.mxu0 0.0
  %1246 = vmatprep.subr.mxu0 0.0
  %1247 = vmatpush1.msra.mxu0 0.0
  %1248 = vmatprep.subr.mxu0 0.0
  %1249 = vmatpush1.msra.mxu0 0.0
  %1250 = vmatprep.subr.mxu0 0.0
  %1251 = vmatpush1.msra.mxu0 0.0
  %1252 = vmatprep.subr.mxu0 0.0
  %1253 = vmatpush1.msra.mxu0 0.0
  %1254 = vmatprep.subr.mxu0 0.0
  %1255 = vmatpush1.msra.mxu0 0.0
  %1256 = vmatprep.subr.mxu0 0.0
  %1257 = vmatpush1.msra.mxu0 0.0
  %1258 = vmatprep.subr.mxu0 0.0
  %1259 = vmatpush1.msra.mxu0 0.0
  %1260 = vmatprep.subr.mxu0 0.0
  %1261 = vmatpush1.msra.mxu0 0.0
  %1262 = vmatprep.subr.mxu0 0.0
  %1263 = vmatpush1.msra.mxu0 0.0
  %1264 = vmatprep.subr.mxu0 0.0
  %1265 = vmatpush1.msra.mxu0 0.0
  %1266 = vmatprep.subr.mxu0 0.0
  %1267 = vmatpush1.msra.mxu0 0.0
  %1268 = vmatprep.mubr.f32.mxu0 0.0
  %1269 = vmatmul.mubr.f32.gmra.mrb[0].mxu0 %v1196
  %v1270 = vpop.f32.mrb[0].mxu0
  %v1271 = vadd.f32 %v1192, %v1270
  %v1272 = vpop.f32.mrb[0].mxu0
  %1273 = vmatprep.mubr.f32.mxu0 0.0
  %1274 = vmatmul.mubr.f32.gmra.mrb[0].mxu0 %v1199
  %v1275 = vpop.f32.mrb[0].mxu0
  %v1276 = vadd.f32 %v1192, %v1275
  %v1277 = vpop.f32.mrb[0].mxu0
  %1278 = vmatprep.mubr.f32.mxu0 0.0
  %1279 = vmatmul.mubr.f32.gmra.mrb[0].mxu0 %v1202
  %v1280 = vpop.f32.mrb[0].mxu0
  %v1281 = vadd.f32 %v1192, %v1280
  %v1282 = vpop.f32.mrb[0].mxu0
  %1283 = vdwg.mxu0
  %vm1284 = vcmp.ge.f32.partialorder %v1271, 0.0
  %vm1285 = vcmp.ge.f32.partialorder %v1276, 0.0
  %vm1286 = vcmp.ge.f32.partialorder %v1281, 0.0
  %v1287 = vmul.f32 %v1271, 0.25
  %v1288 = vmul.f32 %v1276, 0.25
  %v1289 = vmul.f32 %v1281, 0.25
  %v1290 = vsel %vm1284, %v1271, %v1287
  %v1291 = vsel %vm1285, %v1276, %v1288
  %v1292 = vsel %vm1286, %v1281, %v1289
  %v1293 = vld [vmem:[%s31] sm:$0x1]
  %v1294 = vld [vmem:[%s33] sm:$0x1]
  %v1295 = vsel %vm121, %v1290, 0.0
  %1296 = vadd.xlane.f32.xlu0 %v1295
  %v1297 = vpop.xlane.xlu0 %1296
  %v1298 = vsel %vm121, %v1291, 0.0
  %1299 = vadd.xlane.f32.xlu0 %v1298
  %v1300 = vpop.xlane.xlu0 %1299
  %v1301 = vsel %vm121, %v1292, 0.0
  %1302 = vadd.xlane.f32.xlu0 %v1301
  %v1303 = vpop.xlane.xlu0 %1302
  %v1304 = vmul.f32 %v1297, %v1055
  %v1305 = vmul.f32 %v1300, %v1055
  %v1306 = vmul.f32 %v1303, %v1055
  %v1307 = vsub.f32 %v1290, %v1304
  %v1308 = vsub.f32 %v1291, %v1305
  %v1309 = vsub.f32 %v1292, %v1306
  %v1310 = vmul.f32 %v1307, %v1307
  %v1311 = vmul.f32 %v1308, %v1308
  %v1312 = vmul.f32 %v1309, %v1309
  %v1313 = vsel %vm121, %v1310, 0.0
  %1314 = vadd.xlane.f32.xlu0 %v1313
  %v1315 = vpop.xlane.xlu0 %1314
  %v1316 = vsel %vm121, %v1311, 0.0
  %1317 = vadd.xlane.f32.xlu0 %v1316
  %v1318 = vpop.xlane.xlu0 %1317
  %v1319 = vsel %vm121, %v1312, 0.0
  %1320 = vadd.xlane.f32.xlu0 %v1319
  %v1321 = vpop.xlane.xlu0 %1320
  %v1322 = vmul.f32 %v1315, %v1055
  %v1323 = vmul.f32 %v1318, %v1055
  %v1324 = vmul.f32 %v1321, %v1055
  %v1326 = vlaneseq
  %v1327 = vshrl.u32 %v1326, 7
  %v1328 = vsub.s32 0, %v1327
  %v1329 = vrot.slane %v1293, %v1328
  %v1331 = vmul.f32 %v1329, %v1307
  %v1332 = vmul.f32 %v1329, %v1308
  %v1333 = vmul.f32 %v1329, %v1309
  %v1334 = vadd.f32 %v1322, 1e-05
  %v1335 = vadd.f32 %v1323, 1e-05
  %v1336 = vadd.f32 %v1324, 1e-05
  %v1337 = vrsqrt.pop %v1334
  %v1338 = vrsqrt.pop %v1335
  %v1339 = vrsqrt.pop %v1336
  %v1340 = vmul.f32 %v1331, %v1337
  %v1341 = vmul.f32 %v1332, %v1338
  %v1342 = vmul.f32 %v1333, %v1339
  %v1344 = vlaneseq
  %v1345 = vshrl.u32 %v1344, 7
  %v1346 = vsub.s32 0, %v1345
  %v1347 = vrot.slane %v1294, %v1346
  %v1349 = vadd.f32 %v1340, %v1347
  %v1350 = vadd.f32 %v1341, %v1347
  %v1351 = vadd.f32 %v1342, %v1347
  %v1352 = vld [vmem:[%s35] sm:$0xff]
  %v1354 = vsel %vm121, %v1349, 0
  %v1357 = vsel %vm121, %v1350, 0
  %v1360 = vsel %vm121, %v1351, 0
  %1362 = vmatprep.subr.mxu0 0.0
  %1363 = vmatpush1.msra.mxu0 %v1352
  %1364 = vmatprep.subr.mxu0 0.0
  %1365 = vmatpush1.msra.mxu0 0.0
  %1366 = vmatprep.subr.mxu0 0.0
  %1367 = vmatpush1.msra.mxu0 0.0
  %1368 = vmatprep.subr.mxu0 0.0
  %1369 = vmatpush1.msra.mxu0 0.0
  %1370 = vmatprep.subr.mxu0 0.0
  %1371 = vmatpush1.msra.mxu0 0.0
  %1372 = vmatprep.subr.mxu0 0.0
  %1373 = vmatpush1.msra.mxu0 0.0
  %1374 = vmatprep.subr.mxu0 0.0
  %1375 = vmatpush1.msra.mxu0 0.0
  %1376 = vmatprep.subr.mxu0 0.0
  %1377 = vmatpush1.msra.mxu0 0.0
  %1378 = vmatprep.subr.mxu0 0.0
  %1379 = vmatpush1.msra.mxu0 0.0
  %1380 = vmatprep.subr.mxu0 0.0
  %1381 = vmatpush1.msra.mxu0 0.0
  %1382 = vmatprep.subr.mxu0 0.0
  %1383 = vmatpush1.msra.mxu0 0.0
  %1384 = vmatprep.subr.mxu0 0.0
  %1385 = vmatpush1.msra.mxu0 0.0
  %1386 = vmatprep.subr.mxu0 0.0
  %1387 = vmatpush1.msra.mxu0 0.0
  %1388 = vmatprep.subr.mxu0 0.0
  %1389 = vmatpush1.msra.mxu0 0.0
  %1390 = vmatprep.subr.mxu0 0.0
  %1391 = vmatpush1.msra.mxu0 0.0
  %1392 = vmatprep.subr.mxu0 0.0
  %1393 = vmatpush1.msra.mxu0 0.0
  %1394 = vmatprep.subr.mxu0 0.0
  %1395 = vmatpush1.msra.mxu0 0.0
  %1396 = vmatprep.subr.mxu0 0.0
  %1397 = vmatpush1.msra.mxu0 0.0
  %1398 = vmatprep.subr.mxu0 0.0
  %1399 = vmatpush1.msra.mxu0 0.0
  %1400 = vmatprep.subr.mxu0 0.0
  %1401 = vmatpush1.msra.mxu0 0.0
  %1402 = vmatprep.subr.mxu0 0.0
  %1403 = vmatpush1.msra.mxu0 0.0
  %1404 = vmatprep.subr.mxu0 0.0
  %1405 = vmatpush1.msra.mxu0 0.0
  %1406 = vmatprep.subr.mxu0 0.0
  %1407 = vmatpush1.msra.mxu0 0.0
  %1408 = vmatprep.subr.mxu0 0.0
  %1409 = vmatpush1.msra.mxu0 0.0
  %1410 = vmatprep.subr.mxu0 0.0
  %1411 = vmatpush1.msra.mxu0 0.0
  %1412 = vmatprep.subr.mxu0 0.0
  %1413 = vmatpush1.msra.mxu0 0.0
  %1414 = vmatprep.subr.mxu0 0.0
  %1415 = vmatpush1.msra.mxu0 0.0
  %1416 = vmatprep.subr.mxu0 0.0
  %1417 = vmatpush1.msra.mxu0 0.0
  %1418 = vmatprep.subr.mxu0 0.0
  %1419 = vmatpush1.msra.mxu0 0.0
  %1420 = vmatprep.subr.mxu0 0.0
  %1421 = vmatpush1.msra.mxu0 0.0
  %1422 = vmatprep.subr.mxu0 0.0
  %1423 = vmatpush1.msra.mxu0 0.0
  %1424 = vmatprep.subr.mxu0 0.0
  %1425 = vmatpush1.msra.mxu0 0.0
  %1426 = vmatprep.mubr.f32.mxu0 0.0
  %1427 = vmatmul.mubr.f32.gmra.mrb[0].mxu0 %v1354
  %v1428 = vpop.f32.mrb[0].mxu0
  %v1429 = vadd.f32 0.0, %v1428
  %v1430 = vpop.f32.mrb[0].mxu0
  %1431 = vmatprep.mubr.f32.mxu0 0.0
  %1432 = vmatmul.mubr.f32.gmra.mrb[0].mxu0 %v1357
  %v1433 = vpop.f32.mrb[0].mxu0
  %v1434 = vadd.f32 0.0, %v1433
  %v1435 = vpop.f32.mrb[0].mxu0
  %1436 = vmatprep.mubr.f32.mxu0 0.0
  %1437 = vmatmul.mubr.f32.gmra.mrb[0].mxu0 %v1360
  %v1438 = vpop.f32.mrb[0].mxu0
  %v1439 = vadd.f32 0.0, %v1438
  %v1440 = vpop.f32.mrb[0].mxu0
  %1441 = vdwg.mxu0
  %v1442 = vadd.f32 %v788, %v1429
  %v1443 = vadd.f32 %v793, %v1434
  %v1444 = vadd.f32 %v798, %v1439
  %v1445 = vld [vmem:[%s37] sm:$0x1]
  %v1447 = vlaneseq
  %v1448 = vshrl.u32 %v1447, 7
  %v1449 = vsub.s32 0, %v1448
  %v1450 = vrot.slane %v1445, %v1449
  %v1452 = vadd.f32 %v1442, %v1450
  %v1453 = vadd.f32 %v1443, %v1450
  %v1454 = vadd.f32 %v1444, %v1450
  %s1455 = scalar_lea.vmem %s19, 32
  %v1456 = vld [vmem:[%s1455] sm:$0xff]
  %v1457 = vld [vmem:[%s1455 + $0x8] sm:$0xff]
  %v1458 = vld [vmem:[%s1455 + $0x10] sm:$0xff]
  %v1459 = vld [vmem:[%s1455 + $0x18] sm:$0xff]
  %s1460 = scalar_lea.vmem %s21, 1
  %v1461 = vld [vmem:[%s1460] sm:$0x1]
  %v1463 = vlaneseq
  %v1464 = vshrl.u32 %v1463, 7
  %v1465 = vsub.s32 0, %v1464
  %v1466 = vrot.slane %v1461, %v1465
  %v1469 = vsel %vm131, %v1452, 0
  %v1472 = vsel %vm131, %v1453, 0
  %v1475 = vsel %vm131, %v1454, 0
  %1477 = vmatprep.subr.mxu0 0.0
  %1478 = vmatpush1.msra.mxu0 %v1456
  %1479 = vmatprep.subr.mxu0 0.0
  %1480 = vmatpush1.msra.mxu0 %v1457
  %1481 = vmatprep.subr.mxu0 0.0
  %1482 = vmatpush1.msra.mxu0 %v1458
  %1483 = vmatprep.subr.mxu0 0.0
  %1484 = vmatpush1.msra.mxu0 %v1459
  %1485 = vmatprep.subr.mxu0 0.0
  %1486 = vmatpush1.msra.mxu0 0.0
  %1487 = vmatprep.subr.mxu0 0.0
  %1488 = vmatpush1.msra.mxu0 0.0
  %1489 = vmatprep.subr.mxu0 0.0
  %1490 = vmatpush1.msra.mxu0 0.0
  %1491 = vmatprep.subr.mxu0 0.0
  %1492 = vmatpush1.msra.mxu0 0.0
  %1493 = vmatprep.subr.mxu0 0.0
  %1494 = vmatpush1.msra.mxu0 0.0
  %1495 = vmatprep.subr.mxu0 0.0
  %1496 = vmatpush1.msra.mxu0 0.0
  %1497 = vmatprep.subr.mxu0 0.0
  %1498 = vmatpush1.msra.mxu0 0.0
  %1499 = vmatprep.subr.mxu0 0.0
  %1500 = vmatpush1.msra.mxu0 0.0
  %1501 = vmatprep.subr.mxu0 0.0
  %1502 = vmatpush1.msra.mxu0 0.0
  %1503 = vmatprep.subr.mxu0 0.0
  %1504 = vmatpush1.msra.mxu0 0.0
  %1505 = vmatprep.subr.mxu0 0.0
  %1506 = vmatpush1.msra.mxu0 0.0
  %1507 = vmatprep.subr.mxu0 0.0
  %1508 = vmatpush1.msra.mxu0 0.0
  %1509 = vmatprep.subr.mxu0 0.0
  %1510 = vmatpush1.msra.mxu0 0.0
  %1511 = vmatprep.subr.mxu0 0.0
  %1512 = vmatpush1.msra.mxu0 0.0
  %1513 = vmatprep.subr.mxu0 0.0
  %1514 = vmatpush1.msra.mxu0 0.0
  %1515 = vmatprep.subr.mxu0 0.0
  %1516 = vmatpush1.msra.mxu0 0.0
  %1517 = vmatprep.subr.mxu0 0.0
  %1518 = vmatpush1.msra.mxu0 0.0
  %1519 = vmatprep.subr.mxu0 0.0
  %1520 = vmatpush1.msra.mxu0 0.0
  %1521 = vmatprep.subr.mxu0 0.0
  %1522 = vmatpush1.msra.mxu0 0.0
  %1523 = vmatprep.subr.mxu0 0.0
  %1524 = vmatpush1.msra.mxu0 0.0
  %1525 = vmatprep.subr.mxu0 0.0
  %1526 = vmatpush1.msra.mxu0 0.0
  %1527 = vmatprep.subr.mxu0 0.0
  %1528 = vmatpush1.msra.mxu0 0.0
  %1529 = vmatprep.subr.mxu0 0.0
  %1530 = vmatpush1.msra.mxu0 0.0
  %1531 = vmatprep.subr.mxu0 0.0
  %1532 = vmatpush1.msra.mxu0 0.0
  %1533 = vmatprep.subr.mxu0 0.0
  %1534 = vmatpush1.msra.mxu0 0.0
  %1535 = vmatprep.subr.mxu0 0.0
  %1536 = vmatpush1.msra.mxu0 0.0
  %1537 = vmatprep.subr.mxu0 0.0
  %1538 = vmatpush1.msra.mxu0 0.0
  %1539 = vmatprep.subr.mxu0 0.0
  %1540 = vmatpush1.msra.mxu0 0.0
  %1541 = vmatprep.mubr.f32.mxu0 0.0
  %1542 = vmatmul.mubr.f32.gmra.mrb[0].mxu0 %v1469
  %v1543 = vpop.f32.mrb[0].mxu0
  %v1544 = vadd.f32 %v1466, %v1543
  %v1545 = vpop.f32.mrb[0].mxu0
  %1546 = vmatprep.mubr.f32.mxu0 0.0
  %1547 = vmatmul.mubr.f32.gmra.mrb[0].mxu0 %v1472
  %v1548 = vpop.f32.mrb[0].mxu0
  %v1549 = vadd.f32 %v1466, %v1548
  %v1550 = vpop.f32.mrb[0].mxu0
  %1551 = vmatprep.mubr.f32.mxu0 0.0
  %1552 = vmatmul.mubr.f32.gmra.mrb[0].mxu0 %v1475
  %v1553 = vpop.f32.mrb[0].mxu0
  %v1554 = vadd.f32 %v1466, %v1553
  %v1555 = vpop.f32.mrb[0].mxu0
  %1556 = vdwg.mxu0
  %vm1557 = vcmp.ge.f32.partialorder %v1544, 0.0
  %vm1558 = vcmp.ge.f32.partialorder %v1549, 0.0
  %vm1559 = vcmp.ge.f32.partialorder %v1554, 0.0
  %v1560 = vmul.f32 %v1544, 0.25
  %v1561 = vmul.f32 %v1549, 0.25
  %v1562 = vmul.f32 %v1554, 0.25
  %v1563 = vsel %vm1557, %v1544, %v1560
  %v1564 = vsel %vm1558, %v1549, %v1561
  %v1565 = vsel %vm1559, %v1554, %v1562
  %s1566 = scalar_lea.vmem %s23, 1
  %v1567 = vld [vmem:[%s1566] sm:$0x1]
  %s1568 = scalar_lea.vmem %s25, 1
  %v1569 = vld [vmem:[%s1568] sm:$0x1]
  %v1570 = vsel %vm121, %v1563, 0.0
  %1571 = vadd.xlane.f32.xlu0 %v1570
  %v1572 = vpop.xlane.xlu0 %1571
  %v1573 = vsel %vm121, %v1564, 0.0
  %1574 = vadd.xlane.f32.xlu0 %v1573
  %v1575 = vpop.xlane.xlu0 %1574
  %v1576 = vsel %vm121, %v1565, 0.0
  %1577 = vadd.xlane.f32.xlu0 %v1576
  %v1578 = vpop.xlane.xlu0 %1577
  %v1579 = vmul.f32 %v1572, %v1055
  %v1580 = vmul.f32 %v1575, %v1055
  %v1581 = vmul.f32 %v1578, %v1055
  %v1582 = vsub.f32 %v1563, %v1579
  %v1583 = vsub.f32 %v1564, %v1580
  %v1584 = vsub.f32 %v1565, %v1581
  %v1585 = vmul.f32 %v1582, %v1582
  %v1586 = vmul.f32 %v1583, %v1583
  %v1587 = vmul.f32 %v1584, %v1584
  %v1588 = vsel %vm121, %v1585, 0.0
  %1589 = vadd.xlane.f32.xlu0 %v1588
  %v1590 = vpop.xlane.xlu0 %1589
  %v1591 = vsel %vm121, %v1586, 0.0
  %1592 = vadd.xlane.f32.xlu0 %v1591
  %v1593 = vpop.xlane.xlu0 %1592
  %v1594 = vsel %vm121, %v1587, 0.0
  %1595 = vadd.xlane.f32.xlu0 %v1594
  %v1596 = vpop.xlane.xlu0 %1595
  %v1597 = vmul.f32 %v1590, %v1055
  %v1598 = vmul.f32 %v1593, %v1055
  %v1599 = vmul.f32 %v1596, %v1055
  %v1601 = vlaneseq
  %v1602 = vshrl.u32 %v1601, 7
  %v1603 = vsub.s32 0, %v1602
  %v1604 = vrot.slane %v1567, %v1603
  %v1606 = vmul.f32 %v1604, %v1582
  %v1607 = vmul.f32 %v1604, %v1583
  %v1608 = vmul.f32 %v1604, %v1584
  %v1609 = vadd.f32 %v1597, 1e-05
  %v1610 = vadd.f32 %v1598, 1e-05
  %v1611 = vadd.f32 %v1599, 1e-05
  %v1612 = vrsqrt.pop %v1609
  %v1613 = vrsqrt.pop %v1610
  %v1614 = vrsqrt.pop %v1611
  %v1615 = vmul.f32 %v1606, %v1612
  %v1616 = vmul.f32 %v1607, %v1613
  %v1617 = vmul.f32 %v1608, %v1614
  %v1619 = vlaneseq
  %v1620 = vshrl.u32 %v1619, 7
  %v1621 = vsub.s32 0, %v1620
  %v1622 = vrot.slane %v1569, %v1621
  %v1624 = vadd.f32 %v1615, %v1622
  %v1625 = vadd.f32 %v1616, %v1622
  %v1626 = vadd.f32 %v1617, %v1622
  %1627 = vst.msk [vmem:[#allocation2 + $0x10] sm:$0xff] %vm121, %v1624
  %1628 = vst.msk [vmem:[#allocation2 + $0x18] sm:$0xff] %vm121, %v1625
  %1629 = vst.msk [vmem:[#allocation2 + $0x20] sm:$0xff] %vm121, %v1626
  %v1630 = vld [vmem:[#allocation2] sm:$0xff]
  %v1631 = vld [vmem:[#allocation2 + $0x8] sm:$0xff]
  %v1632 = vld [vmem:[#allocation2 + $0x10] sm:$0xff]
  %v1633 = vld [vmem:[#allocation2 + $0x4] sm:$0xff]
  %v1634 = vld [vmem:[#allocation2 + $0xc] sm:$0xff]
  %v1635 = vld [vmem:[#allocation2 + $0x14] sm:$0xff]
  %v1636 = vld [vmem:[#allocation2 + $0x18] sm:$0xff]
  %v1637 = vld [vmem:[#allocation2 + $0x1c] sm:$0xff]
  %v1638 = vld [vmem:[#allocation2 + $0x20] sm:$0xff]
  %1642 = vrot.lane.b32.xlu0 %v1633, 8
  %v1643 = vpop.permute.xlu0 %1642
  %1644 = vrot.lane.b32.xlu0 %v1634, 8
  %v1645 = vpop.permute.xlu0 %1644
  %1646 = vrot.lane.b32.xlu0 %v1635, 8
  %v1647 = vpop.permute.xlu0 %1646
  %1654 = vrot.lane.b32.xlu0 %v1631, 16
  %v1655 = vpop.permute.xlu0 %1654
  %1656 = vrot.lane.b32.xlu0 %v1632, 16
  %v1657 = vpop.permute.xlu0 %1656
  %1658 = vrot.lane.b32.xlu0 %v1636, 16
  %v1659 = vpop.permute.xlu0 %1658
  %1664 = vrot.lane.b32.xlu0 %v1634, 24
  %v1665 = vpop.permute.xlu0 %1664
  %1666 = vrot.lane.b32.xlu0 %v1635, 24
  %v1667 = vpop.permute.xlu0 %1666
  %1668 = vrot.lane.b32.xlu0 %v1637, 24
  %v1669 = vpop.permute.xlu0 %1668
  %1674 = vrot.lane.b32.xlu0 %v1632, 32
  %v1675 = vpop.permute.xlu0 %1674
  %1676 = vrot.lane.b32.xlu0 %v1636, 32
  %v1677 = vpop.permute.xlu0 %1676
  %1678 = vrot.lane.b32.xlu0 %v1638, 32
  %v1679 = vpop.permute.xlu0 %1678
  %v1683 = vsel %vm121, %v1630, %v1643
  %v1684 = vsel %vm121, %v1631, %v1645
  %v1685 = vsel %vm121, %v1632, %v1647
  %v1686 = vsel %vm1171, %v1683, %v1655
  %v1687 = vsel %vm1171, %v1684, %v1657
  %v1688 = vsel %vm1171, %v1685, %v1659
  %v1689 = vsel %vm1175, %v1686, %v1665
  %v1690 = vsel %vm1175, %v1687, %v1667
  %v1691 = vsel %vm1175, %v1688, %v1669
  %v1692 = vsel %vm131, %v1689, %v1675
  %v1693 = vsel %vm131, %v1690, %v1677
  %v1694 = vsel %vm131, %v1691, %v1679
  %s1695 = scalar_lea.vmem %s27, 40
  %v1696 = vld [vmem:[%s1695] sm:$0xff]
  %v1697 = vld [vmem:[%s1695 + $0x8] sm:$0xff]
  %v1698 = vld [vmem:[%s1695 + $0x10] sm:$0xff]
  %v1699 = vld [vmem:[%s1695 + $0x18] sm:$0xff]
  %v1700 = vld [vmem:[%s1695 + $0x20] sm:$0xff]
  %s1701 = scalar_lea.vmem %s29, 1
  %v1702 = vld [vmem:[%s1701] sm:$0x1]
  %v1704 = vlaneseq
  %v1705 = vshrl.u32 %v1704, 7
  %v1706 = vsub.s32 0, %v1705
  %v1707 = vrot.slane %v1702, %v1706
  %v1710 = vsel %vm1194, %v1692, 0
  %v1713 = vsel %vm1194, %v1693, 0
  %v1716 = vsel %vm1194, %v1694, 0
  %1718 = vmatprep.subr.mxu0 0.0
  %1719 = vmatpush1.msra.mxu0 %v1696
  %1720 = vmatprep.subr.mxu0 0.0
  %1721 = vmatpush1.msra.mxu0 %v1697
  %1722 = vmatprep.subr.mxu0 0.0
  %1723 = vmatpush1.msra.mxu0 %v1698
  %1724 = vmatprep.subr.mxu0 0.0
  %1725 = vmatpush1.msra.mxu0 %v1699
  %1726 = vmatprep.subr.mxu0 0.0
  %1727 = vmatpush1.msra.mxu0 %v1700
  %1728 = vmatprep.subr.mxu0 0.0
  %1729 = vmatpush1.msra.mxu0 0.0
  %1730 = vmatprep.subr.mxu0 0.0
  %1731 = vmatpush1.msra.mxu0 0.0
  %1732 = vmatprep.subr.mxu0 0.0
  %1733 = vmatpush1.msra.mxu0 0.0
  %1734 = vmatprep.subr.mxu0 0.0
  %1735 = vmatpush1.msra.mxu0 0.0
  %1736 = vmatprep.subr.mxu0 0.0
  %1737 = vmatpush1.msra.mxu0 0.0
  %1738 = vmatprep.subr.mxu0 0.0
  %1739 = vmatpush1.msra.mxu0 0.0
  %1740 = vmatprep.subr.mxu0 0.0
  %1741 = vmatpush1.msra.mxu0 0.0
  %1742 = vmatprep.subr.mxu0 0.0
  %1743 = vmatpush1.msra.mxu0 0.0
  %1744 = vmatprep.subr.mxu0 0.0
  %1745 = vmatpush1.msra.mxu0 0.0
  %1746 = vmatprep.subr.mxu0 0.0
  %1747 = vmatpush1.msra.mxu0 0.0
  %1748 = vmatprep.subr.mxu0 0.0
  %1749 = vmatpush1.msra.mxu0 0.0
  %1750 = vmatprep.subr.mxu0 0.0
  %1751 = vmatpush1.msra.mxu0 0.0
  %1752 = vmatprep.subr.mxu0 0.0
  %1753 = vmatpush1.msra.mxu0 0.0
  %1754 = vmatprep.subr.mxu0 0.0
  %1755 = vmatpush1.msra.mxu0 0.0
  %1756 = vmatprep.subr.mxu0 0.0
  %1757 = vmatpush1.msra.mxu0 0.0
  %1758 = vmatprep.subr.mxu0 0.0
  %1759 = vmatpush1.msra.mxu0 0.0
  %1760 = vmatprep.subr.mxu0 0.0
  %1761 = vmatpush1.msra.mxu0 0.0
  %1762 = vmatprep.subr.mxu0 0.0
  %1763 = vmatpush1.msra.mxu0 0.0
  %1764 = vmatprep.subr.mxu0 0.0
  %1765 = vmatpush1.msra.mxu0 0.0
  %1766 = vmatprep.subr.mxu0 0.0
  %1767 = vmatpush1.msra.mxu0 0.0
  %1768 = vmatprep.subr.mxu0 0.0
  %1769 = vmatpush1.msra.mxu0 0.0
  %1770 = vmatprep.subr.mxu0 0.0
  %1771 = vmatpush1.msra.mxu0 0.0
  %1772 = vmatprep.subr.mxu0 0.0
  %1773 = vmatpush1.msra.mxu0 0.0
  %1774 = vmatprep.subr.mxu0 0.0
  %1775 = vmatpush1.msra.mxu0 0.0
  %1776 = vmatprep.subr.mxu0 0.0
  %1777 = vmatpush1.msra.mxu0 0.0
  %1778 = vmatprep.subr.mxu0 0.0
  %1779 = vmatpush1.msra.mxu0 0.0
  %1780 = vmatprep.subr.mxu0 0.0
  %1781 = vmatpush1.msra.mxu0 0.0
  %1782 = vmatprep.mubr.f32.mxu0 0.0
  %1783 = vmatmul.mubr.f32.gmra.mrb[0].mxu0 %v1710
  %v1784 = vpop.f32.mrb[0].mxu0
  %v1785 = vadd.f32 %v1707, %v1784
  %v1786 = vpop.f32.mrb[0].mxu0
  %1787 = vmatprep.mubr.f32.mxu0 0.0
  %1788 = vmatmul.mubr.f32.gmra.mrb[0].mxu0 %v1713
  %v1789 = vpop.f32.mrb[0].mxu0
  %v1790 = vadd.f32 %v1707, %v1789
  %v1791 = vpop.f32.mrb[0].mxu0
  %1792 = vmatprep.mubr.f32.mxu0 0.0
  %1793 = vmatmul.mubr.f32.gmra.mrb[0].mxu0 %v1716
  %v1794 = vpop.f32.mrb[0].mxu0
  %v1795 = vadd.f32 %v1707, %v1794
  %v1796 = vpop.f32.mrb[0].mxu0
  %1797 = vdwg.mxu0
  %vm1798 = vcmp.ge.f32.partialorder %v1785, 0.0
  %vm1799 = vcmp.ge.f32.partialorder %v1790, 0.0
  %vm1800 = vcmp.ge.f32.partialorder %v1795, 0.0
  %v1801 = vmul.f32 %v1785, 0.25
  %v1802 = vmul.f32 %v1790, 0.25
  %v1803 = vmul.f32 %v1795, 0.25
  %v1804 = vsel %vm1798, %v1785, %v1801
  %v1805 = vsel %vm1799, %v1790, %v1802
  %v1806 = vsel %vm1800, %v1795, %v1803
  %s1807 = scalar_lea.vmem %s31, 1
  %v1808 = vld [vmem:[%s1807] sm:$0x1]
  %s1809 = scalar_lea.vmem %s33, 1
  %v1810 = vld [vmem:[%s1809] sm:$0x1]
  %v1811 = vsel %vm121, %v1804, 0.0
  %1812 = vadd.xlane.f32.xlu0 %v1811
  %v1813 = vpop.xlane.xlu0 %1812
  %v1814 = vsel %vm121, %v1805, 0.0
  %1815 = vadd.xlane.f32.xlu0 %v1814
  %v1816 = vpop.xlane.xlu0 %1815
  %v1817 = vsel %vm121, %v1806, 0.0
  %1818 = vadd.xlane.f32.xlu0 %v1817
  %v1819 = vpop.xlane.xlu0 %1818
  %v1820 = vmul.f32 %v1813, %v1055
  %v1821 = vmul.f32 %v1816, %v1055
  %v1822 = vmul.f32 %v1819, %v1055
  %v1823 = vsub.f32 %v1804, %v1820
  %v1824 = vsub.f32 %v1805, %v1821
  %v1825 = vsub.f32 %v1806, %v1822
  %v1826 = vmul.f32 %v1823, %v1823
  %v1827 = vmul.f32 %v1824, %v1824
  %v1828 = vmul.f32 %v1825, %v1825
  %v1829 = vsel %vm121, %v1826, 0.0
  %1830 = vadd.xlane.f32.xlu0 %v1829
  %v1831 = vpop.xlane.xlu0 %1830
  %v1832 = vsel %vm121, %v1827, 0.0
  %1833 = vadd.xlane.f32.xlu0 %v1832
  %v1834 = vpop.xlane.xlu0 %1833
  %v1835 = vsel %vm121, %v1828, 0.0
  %1836 = vadd.xlane.f32.xlu0 %v1835
  %v1837 = vpop.xlane.xlu0 %1836
  %v1838 = vmul.f32 %v1831, %v1055
  %v1839 = vmul.f32 %v1834, %v1055
  %v1840 = vmul.f32 %v1837, %v1055
  %v1842 = vlaneseq
  %v1843 = vshrl.u32 %v1842, 7
  %v1844 = vsub.s32 0, %v1843
  %v1845 = vrot.slane %v1808, %v1844
  %v1847 = vmul.f32 %v1845, %v1823
  %v1848 = vmul.f32 %v1845, %v1824
  %v1849 = vmul.f32 %v1845, %v1825
  %v1850 = vadd.f32 %v1838, 1e-05
  %v1851 = vadd.f32 %v1839, 1e-05
  %v1852 = vadd.f32 %v1840, 1e-05
  %v1853 = vrsqrt.pop %v1850
  %v1854 = vrsqrt.pop %v1851
  %v1855 = vrsqrt.pop %v1852
  %v1856 = vmul.f32 %v1847, %v1853
  %v1857 = vmul.f32 %v1848, %v1854
  %v1858 = vmul.f32 %v1849, %v1855
  %v1860 = vlaneseq
  %v1861 = vshrl.u32 %v1860, 7
  %v1862 = vsub.s32 0, %v1861
  %v1863 = vrot.slane %v1810, %v1862
  %v1865 = vadd.f32 %v1856, %v1863
  %v1866 = vadd.f32 %v1857, %v1863
  %v1867 = vadd.f32 %v1858, %v1863
  %s1868 = scalar_lea.vmem %s35, 8
  %v1869 = vld [vmem:[%s1868] sm:$0xff]
  %v1871 = vsel %vm121, %v1865, 0
  %v1874 = vsel %vm121, %v1866, 0
  %v1877 = vsel %vm121, %v1867, 0
  %1879 = vmatprep.subr.mxu0 0.0
  %1880 = vmatpush1.msra.mxu0 %v1869
  %1881 = vmatprep.subr.mxu0 0.0
  %1882 = vmatpush1.msra.mxu0 0.0
  %1883 = vmatprep.subr.mxu0 0.0
  %1884 = vmatpush1.msra.mxu0 0.0
  %1885 = vmatprep.subr.mxu0 0.0
  %1886 = vmatpush1.msra.mxu0 0.0
  %1887 = vmatprep.subr.mxu0 0.0
  %1888 = vmatpush1.msra.mxu0 0.0
  %1889 = vmatprep.subr.mxu0 0.0
  %1890 = vmatpush1.msra.mxu0 0.0
  %1891 = vmatprep.subr.mxu0 0.0
  %1892 = vmatpush1.msra.mxu0 0.0
  %1893 = vmatprep.subr.mxu0 0.0
  %1894 = vmatpush1.msra.mxu0 0.0
  %1895 = vmatprep.subr.mxu0 0.0
  %1896 = vmatpush1.msra.mxu0 0.0
  %1897 = vmatprep.subr.mxu0 0.0
  %1898 = vmatpush1.msra.mxu0 0.0
  %1899 = vmatprep.subr.mxu0 0.0
  %1900 = vmatpush1.msra.mxu0 0.0
  %1901 = vmatprep.subr.mxu0 0.0
  %1902 = vmatpush1.msra.mxu0 0.0
  %1903 = vmatprep.subr.mxu0 0.0
  %1904 = vmatpush1.msra.mxu0 0.0
  %1905 = vmatprep.subr.mxu0 0.0
  %1906 = vmatpush1.msra.mxu0 0.0
  %1907 = vmatprep.subr.mxu0 0.0
  %1908 = vmatpush1.msra.mxu0 0.0
  %1909 = vmatprep.subr.mxu0 0.0
  %1910 = vmatpush1.msra.mxu0 0.0
  %1911 = vmatprep.subr.mxu0 0.0
  %1912 = vmatpush1.msra.mxu0 0.0
  %1913 = vmatprep.subr.mxu0 0.0
  %1914 = vmatpush1.msra.mxu0 0.0
  %1915 = vmatprep.subr.mxu0 0.0
  %1916 = vmatpush1.msra.mxu0 0.0
  %1917 = vmatprep.subr.mxu0 0.0
  %1918 = vmatpush1.msra.mxu0 0.0
  %1919 = vmatprep.subr.mxu0 0.0
  %1920 = vmatpush1.msra.mxu0 0.0
  %1921 = vmatprep.subr.mxu0 0.0
  %1922 = vmatpush1.msra.mxu0 0.0
  %1923 = vmatprep.subr.mxu0 0.0
  %1924 = vmatpush1.msra.mxu0 0.0
  %1925 = vmatprep.subr.mxu0 0.0
  %1926 = vmatpush1.msra.mxu0 0.0
  %1927 = vmatprep.subr.mxu0 0.0
  %1928 = vmatpush1.msra.mxu0 0.0
  %1929 = vmatprep.subr.mxu0 0.0
  %1930 = vmatpush1.msra.mxu0 0.0
  %1931 = vmatprep.subr.mxu0 0.0
  %1932 = vmatpush1.msra.mxu0 0.0
  %1933 = vmatprep.subr.mxu0 0.0
  %1934 = vmatpush1.msra.mxu0 0.0
  %1935 = vmatprep.subr.mxu0 0.0
  %1936 = vmatpush1.msra.mxu0 0.0
  %1937 = vmatprep.subr.mxu0 0.0
  %1938 = vmatpush1.msra.mxu0 0.0
  %1939 = vmatprep.subr.mxu0 0.0
  %1940 = vmatpush1.msra.mxu0 0.0
  %1941 = vmatprep.subr.mxu0 0.0
  %1942 = vmatpush1.msra.mxu0 0.0
  %1943 = vmatprep.mubr.f32.mxu0 0.0
  %1944 = vmatmul.mubr.f32.gmra.mrb[0].mxu0 %v1871
  %v1945 = vpop.f32.mrb[0].mxu0
  %v1946 = vadd.f32 0.0, %v1945
  %v1947 = vpop.f32.mrb[0].mxu0
  %1948 = vmatprep.mubr.f32.mxu0 0.0
  %1949 = vmatmul.mubr.f32.gmra.mrb[0].mxu0 %v1874
  %v1950 = vpop.f32.mrb[0].mxu0
  %v1951 = vadd.f32 0.0, %v1950
  %v1952 = vpop.f32.mrb[0].mxu0
  %1953 = vmatprep.mubr.f32.mxu0 0.0
  %1954 = vmatmul.mubr.f32.gmra.mrb[0].mxu0 %v1877
  %v1955 = vpop.f32.mrb[0].mxu0
  %v1956 = vadd.f32 0.0, %v1955
  %v1957 = vpop.f32.mrb[0].mxu0
  %1958 = vdwg.mxu0
  %v1959 = vadd.f32 %v1452, %v1946
  %v1960 = vadd.f32 %v1453, %v1951
  %v1961 = vadd.f32 %v1454, %v1956
  %s1962 = scalar_lea.vmem %s37, 1
  %v1963 = vld [vmem:[%s1962] sm:$0x1]
  %v1965 = vlaneseq
  %v1966 = vshrl.u32 %v1965, 7
  %v1967 = vsub.s32 0, %v1966
  %v1968 = vrot.slane %v1963, %v1967
  %v1970 = vadd.f32 %v1959, %v1968
  %v1971 = vadd.f32 %v1960, %v1968
  %v1972 = vadd.f32 %v1961, %v1968
  %s1973 = scalar_lea.vmem %s19, 64
  %v1974 = vld [vmem:[%s1973] sm:$0xff]
  %v1975 = vld [vmem:[%s1973 + $0x8] sm:$0xff]
  %v1976 = vld [vmem:[%s1973 + $0x10] sm:$0xff]
  %v1977 = vld [vmem:[%s1973 + $0x18] sm:$0xff]
  %s1978 = scalar_lea.vmem %s21, 2
  %v1979 = vld [vmem:[%s1978] sm:$0x1]
  %v1981 = vlaneseq
  %v1982 = vshrl.u32 %v1981, 7
  %v1983 = vsub.s32 0, %v1982
  %v1984 = vrot.slane %v1979, %v1983
  %v1987 = vsel %vm131, %v922, 0
  %v1990 = vsel %vm131, %v927, 0
  %v1993 = vsel %vm131, %v932, 0
  %1995 = vmatprep.subr.mxu0 0.0
  %1996 = vmatpush1.msra.mxu0 %v1974
  %1997 = vmatprep.subr.mxu0 0.0
  %1998 = vmatpush1.msra.mxu0 %v1975
  %1999 = vmatprep.subr.mxu0 0.0
  %2000 = vmatpush1.msra.mxu0 %v1976
  %2001 = vmatprep.subr.mxu0 0.0
  %2002 = vmatpush1.msra.mxu0 %v1977
  %2003 = vmatprep.subr.mxu0 0.0
  %2004 = vmatpush1.msra.mxu0 0.0
  %2005 = vmatprep.subr.mxu0 0.0
  %2006 = vmatpush1.msra.mxu0 0.0
  %2007 = vmatprep.subr.mxu0 0.0
  %2008 = vmatpush1.msra.mxu0 0.0
  %2009 = vmatprep.subr.mxu0 0.0
  %2010 = vmatpush1.msra.mxu0 0.0
  %2011 = vmatprep.subr.mxu0 0.0
  %2012 = vmatpush1.msra.mxu0 0.0
  %2013 = vmatprep.subr.mxu0 0.0
  %2014 = vmatpush1.msra.mxu0 0.0
  %2015 = vmatprep.subr.mxu0 0.0
  %2016 = vmatpush1.msra.mxu0 0.0
  %2017 = vmatprep.subr.mxu0 0.0
  %2018 = vmatpush1.msra.mxu0 0.0
  %2019 = vmatprep.subr.mxu0 0.0
  %2020 = vmatpush1.msra.mxu0 0.0
  %2021 = vmatprep.subr.mxu0 0.0
  %2022 = vmatpush1.msra.mxu0 0.0
  %2023 = vmatprep.subr.mxu0 0.0
  %2024 = vmatpush1.msra.mxu0 0.0
  %2025 = vmatprep.subr.mxu0 0.0
  %2026 = vmatpush1.msra.mxu0 0.0
  %2027 = vmatprep.subr.mxu0 0.0
  %2028 = vmatpush1.msra.mxu0 0.0
  %2029 = vmatprep.subr.mxu0 0.0
  %2030 = vmatpush1.msra.mxu0 0.0
  %2031 = vmatprep.subr.mxu0 0.0
  %2032 = vmatpush1.msra.mxu0 0.0
  %2033 = vmatprep.subr.mxu0 0.0
  %2034 = vmatpush1.msra.mxu0 0.0
  %2035 = vmatprep.subr.mxu0 0.0
  %2036 = vmatpush1.msra.mxu0 0.0
  %2037 = vmatprep.subr.mxu0 0.0
  %2038 = vmatpush1.msra.mxu0 0.0
  %2039 = vmatprep.subr.mxu0 0.0
  %2040 = vmatpush1.msra.mxu0 0.0
  %2041 = vmatprep.subr.mxu0 0.0
  %2042 = vmatpush1.msra.mxu0 0.0
  %2043 = vmatprep.subr.mxu0 0.0
  %2044 = vmatpush1.msra.mxu0 0.0
  %2045 = vmatprep.subr.mxu0 0.0
  %2046 = vmatpush1.msra.mxu0 0.0
  %2047 = vmatprep.subr.mxu0 0.0
  %2048 = vmatpush1.msra.mxu0 0.0
  %2049 = vmatprep.subr.mxu0 0.0
  %2050 = vmatpush1.msra.mxu0 0.0
  %2051 = vmatprep.subr.mxu0 0.0
  %2052 = vmatpush1.msra.mxu0 0.0
  %2053 = vmatprep.subr.mxu0 0.0
  %2054 = vmatpush1.msra.mxu0 0.0
  %2055 = vmatprep.subr.mxu0 0.0
  %2056 = vmatpush1.msra.mxu0 0.0
  %2057 = vmatprep.subr.mxu0 0.0
  %2058 = vmatpush1.msra.mxu0 0.0
  %2059 = vmatprep.mubr.f32.mxu0 0.0
  %2060 = vmatmul.mubr.f32.gmra.mrb[0].mxu0 %v1987
  %v2061 = vpop.f32.mrb[0].mxu0
  %v2062 = vadd.f32 %v1984, %v2061
  %v2063 = vpop.f32.mrb[0].mxu0
  %2064 = vmatprep.mubr.f32.mxu0 0.0
  %2065 = vmatmul.mubr.f32.gmra.mrb[0].mxu0 %v1990
  %v2066 = vpop.f32.mrb[0].mxu0
  %v2067 = vadd.f32 %v1984, %v2066
  %v2068 = vpop.f32.mrb[0].mxu0
  %2069 = vmatprep.mubr.f32.mxu0 0.0
  %2070 = vmatmul.mubr.f32.gmra.mrb[0].mxu0 %v1993
  %v2071 = vpop.f32.mrb[0].mxu0
  %v2072 = vadd.f32 %v1984, %v2071
  %v2073 = vpop.f32.mrb[0].mxu0
  %2074 = vdwg.mxu0
  %vm2075 = vcmp.ge.f32.partialorder %v2062, 0.0
  %vm2076 = vcmp.ge.f32.partialorder %v2067, 0.0
  %vm2077 = vcmp.ge.f32.partialorder %v2072, 0.0
  %v2078 = vmul.f32 %v2062, 0.25
  %v2079 = vmul.f32 %v2067, 0.25
  %v2080 = vmul.f32 %v2072, 0.25
  %v2081 = vsel %vm2075, %v2062, %v2078
  %v2082 = vsel %vm2076, %v2067, %v2079
  %v2083 = vsel %vm2077, %v2072, %v2080
  %s2084 = scalar_lea.vmem %s23, 2
  %v2085 = vld [vmem:[%s2084] sm:$0x1]
  %s2086 = scalar_lea.vmem %s25, 2
  %v2087 = vld [vmem:[%s2086] sm:$0x1]
  %v2088 = vsel %vm121, %v2081, 0.0
  %2089 = vadd.xlane.f32.xlu0 %v2088
  %v2090 = vpop.xlane.xlu0 %2089
  %v2091 = vsel %vm121, %v2082, 0.0
  %2092 = vadd.xlane.f32.xlu0 %v2091
  %v2093 = vpop.xlane.xlu0 %2092
  %v2094 = vsel %vm121, %v2083, 0.0
  %2095 = vadd.xlane.f32.xlu0 %v2094
  %v2096 = vpop.xlane.xlu0 %2095
  %v2097 = vmul.f32 %v2090, %v1055
  %v2098 = vmul.f32 %v2093, %v1055
  %v2099 = vmul.f32 %v2096, %v1055
  %v2100 = vsub.f32 %v2081, %v2097
  %v2101 = vsub.f32 %v2082, %v2098
  %v2102 = vsub.f32 %v2083, %v2099
  %v2103 = vmul.f32 %v2100, %v2100
  %v2104 = vmul.f32 %v2101, %v2101
  %v2105 = vmul.f32 %v2102, %v2102
  %v2106 = vsel %vm121, %v2103, 0.0
  %2107 = vadd.xlane.f32.xlu0 %v2106
  %v2108 = vpop.xlane.xlu0 %2107
  %v2109 = vsel %vm121, %v2104, 0.0
  %2110 = vadd.xlane.f32.xlu0 %v2109
  %v2111 = vpop.xlane.xlu0 %2110
  %v2112 = vsel %vm121, %v2105, 0.0
  %2113 = vadd.xlane.f32.xlu0 %v2112
  %v2114 = vpop.xlane.xlu0 %2113
  %v2115 = vmul.f32 %v2108, %v1055
  %v2116 = vmul.f32 %v2111, %v1055
  %v2117 = vmul.f32 %v2114, %v1055
  %v2119 = vlaneseq
  %v2120 = vshrl.u32 %v2119, 7
  %v2121 = vsub.s32 0, %v2120
  %v2122 = vrot.slane %v2085, %v2121
  %v2124 = vmul.f32 %v2122, %v2100
  %v2125 = vmul.f32 %v2122, %v2101
  %v2126 = vmul.f32 %v2122, %v2102
  %v2127 = vadd.f32 %v2115, 1e-05
  %v2128 = vadd.f32 %v2116, 1e-05
  %v2129 = vadd.f32 %v2117, 1e-05
  %v2130 = vrsqrt.pop %v2127
  %v2131 = vrsqrt.pop %v2128
  %v2132 = vrsqrt.pop %v2129
  %v2133 = vmul.f32 %v2124, %v2130
  %v2134 = vmul.f32 %v2125, %v2131
  %v2135 = vmul.f32 %v2126, %v2132
  %v2137 = vlaneseq
  %v2138 = vshrl.u32 %v2137, 7
  %v2139 = vsub.s32 0, %v2138
  %v2140 = vrot.slane %v2087, %v2139
  %v2142 = vadd.f32 %v2133, %v2140
  %v2143 = vadd.f32 %v2134, %v2140
  %v2144 = vadd.f32 %v2135, %v2140
  %2145 = vst.msk [vmem:[#allocation2 + $0x10] sm:$0xff] %vm121, %v2142
  %2146 = vst.msk [vmem:[#allocation2 + $0x18] sm:$0xff] %vm121, %v2143
  %2147 = vst.msk [vmem:[#allocation2 + $0x20] sm:$0xff] %vm121, %v2144
  %v2148 = vld [vmem:[#allocation2 + $0x8] sm:$0xff]
  %v2149 = vld [vmem:[#allocation2 + $0x10] sm:$0xff]
  %v2150 = vld [vmem:[#allocation2 + $0x18] sm:$0xff]
  %v2151 = vld [vmem:[#allocation2 + $0xa] sm:$0xff]
  %v2152 = vld [vmem:[#allocation2 + $0x12] sm:$0xff]
  %v2153 = vld [vmem:[#allocation2 + $0x1a] sm:$0xff]
  %v2154 = vld [vmem:[#allocation2 + $0xc] sm:$0xff]
  %v2155 = vld [vmem:[#allocation2 + $0x14] sm:$0xff]
  %v2156 = vld [vmem:[#allocation2 + $0x1c] sm:$0xff]
  %v2157 = vld [vmem:[#allocation2 + $0xe] sm:$0xff]
  %v2158 = vld [vmem:[#allocation2 + $0x16] sm:$0xff]
  %v2159 = vld [vmem:[#allocation2 + $0x1e] sm:$0xff]
  %v2160 = vld [vmem:[#allocation2 + $0x20] sm:$0xff]
  %2164 = vrot.lane.b32.xlu0 %v2151, 8
  %v2165 = vpop.permute.xlu0 %2164
  %2166 = vrot.lane.b32.xlu0 %v2152, 8
  %v2167 = vpop.permute.xlu0 %2166
  %2168 = vrot.lane.b32.xlu0 %v2153, 8
  %v2169 = vpop.permute.xlu0 %2168
  %2176 = vrot.lane.b32.xlu0 %v2154, 16
  %v2177 = vpop.permute.xlu0 %2176
  %2178 = vrot.lane.b32.xlu0 %v2155, 16
  %v2179 = vpop.permute.xlu0 %2178
  %2180 = vrot.lane.b32.xlu0 %v2156, 16
  %v2181 = vpop.permute.xlu0 %2180
  %2188 = vrot.lane.b32.xlu0 %v2157, 24
  %v2189 = vpop.permute.xlu0 %2188
  %2190 = vrot.lane.b32.xlu0 %v2158, 24
  %v2191 = vpop.permute.xlu0 %2190
  %2192 = vrot.lane.b32.xlu0 %v2159, 24
  %v2193 = vpop.permute.xlu0 %2192
  %2200 = vrot.lane.b32.xlu0 %v2149, 32
  %v2201 = vpop.permute.xlu0 %2200
  %2202 = vrot.lane.b32.xlu0 %v2150, 32
  %v2203 = vpop.permute.xlu0 %2202
  %2204 = vrot.lane.b32.xlu0 %v2160, 32
  %v2205 = vpop.permute.xlu0 %2204
  %v2209 = vsel %vm121, %v2148, %v2165
  %v2210 = vsel %vm121, %v2149, %v2167
  %v2211 = vsel %vm121, %v2150, %v2169
  %v2212 = vsel %vm1171, %v2209, %v2177
  %v2213 = vsel %vm1171, %v2210, %v2179
  %v2214 = vsel %vm1171, %v2211, %v2181
  %v2215 = vsel %vm1175, %v2212, %v2189
  %v2216 = vsel %vm1175, %v2213, %v2191
  %v2217 = vsel %vm1175, %v2214, %v2193
  %v2218 = vsel %vm131, %v2215, %v2201
  %v2219 = vsel %vm131, %v2216, %v2203
  %v2220 = vsel %vm131, %v2217, %v2205
  %s2221 = scalar_lea.vmem %s27, 80
  %v2222 = vld [vmem:[%s2221] sm:$0xff]
  %v2223 = vld [vmem:[%s2221 + $0x8] sm:$0xff]
  %v2224 = vld [vmem:[%s2221 + $0x10] sm:$0xff]
  %v2225 = vld [vmem:[%s2221 + $0x18] sm:$0xff]
  %v2226 = vld [vmem:[%s2221 + $0x20] sm:$0xff]
  %s2227 = scalar_lea.vmem %s29, 2
  %v2228 = vld [vmem:[%s2227] sm:$0x1]
  %v2230 = vlaneseq
  %v2231 = vshrl.u32 %v2230, 7
  %v2232 = vsub.s32 0, %v2231
  %v2233 = vrot.slane %v2228, %v2232
  %v2236 = vsel %vm1194, %v2218, 0
  %v2239 = vsel %vm1194, %v2219, 0
  %v2242 = vsel %vm1194, %v2220, 0
  %2244 = vmatprep.subr.mxu0 0.0
  %2245 = vmatpush1.msra.mxu0 %v2222
  %2246 = vmatprep.subr.mxu0 0.0
  %2247 = vmatpush1.msra.mxu0 %v2223
  %2248 = vmatprep.subr.mxu0 0.0
  %2249 = vmatpush1.msra.mxu0 %v2224
  %2250 = vmatprep.subr.mxu0 0.0
  %2251 = vmatpush1.msra.mxu0 %v2225
  %2252 = vmatprep.subr.mxu0 0.0
  %2253 = vmatpush1.msra.mxu0 %v2226
  %2254 = vmatprep.subr.mxu0 0.0
  %2255 = vmatpush1.msra.mxu0 0.0
  %2256 = vmatprep.subr.mxu0 0.0
  %2257 = vmatpush1.msra.mxu0 0.0
  %2258 = vmatprep.subr.mxu0 0.0
  %2259 = vmatpush1.msra.mxu0 0.0
  %2260 = vmatprep.subr.mxu0 0.0
  %2261 = vmatpush1.msra.mxu0 0.0
  %2262 = vmatprep.subr.mxu0 0.0
  %2263 = vmatpush1.msra.mxu0 0.0
  %2264 = vmatprep.subr.mxu0 0.0
  %2265 = vmatpush1.msra.mxu0 0.0
  %2266 = vmatprep.subr.mxu0 0.0
  %2267 = vmatpush1.msra.mxu0 0.0
  %2268 = vmatprep.subr.mxu0 0.0
  %2269 = vmatpush1.msra.mxu0 0.0
  %2270 = vmatprep.subr.mxu0 0.0
  %2271 = vmatpush1.msra.mxu0 0.0
  %2272 = vmatprep.subr.mxu0 0.0
  %2273 = vmatpush1.msra.mxu0 0.0
  %2274 = vmatprep.subr.mxu0 0.0
  %2275 = vmatpush1.msra.mxu0 0.0
  %2276 = vmatprep.subr.mxu0 0.0
  %2277 = vmatpush1.msra.mxu0 0.0
  %2278 = vmatprep.subr.mxu0 0.0
  %2279 = vmatpush1.msra.mxu0 0.0
  %2280 = vmatprep.subr.mxu0 0.0
  %2281 = vmatpush1.msra.mxu0 0.0
  %2282 = vmatprep.subr.mxu0 0.0
  %2283 = vmatpush1.msra.mxu0 0.0
  %2284 = vmatprep.subr.mxu0 0.0
  %2285 = vmatpush1.msra.mxu0 0.0
  %2286 = vmatprep.subr.mxu0 0.0
  %2287 = vmatpush1.msra.mxu0 0.0
  %2288 = vmatprep.subr.mxu0 0.0
  %2289 = vmatpush1.msra.mxu0 0.0
  %2290 = vmatprep.subr.mxu0 0.0
  %2291 = vmatpush1.msra.mxu0 0.0
  %2292 = vmatprep.subr.mxu0 0.0
  %2293 = vmatpush1.msra.mxu0 0.0
  %2294 = vmatprep.subr.mxu0 0.0
  %2295 = vmatpush1.msra.mxu0 0.0
  %2296 = vmatprep.subr.mxu0 0.0
  %2297 = vmatpush1.msra.mxu0 0.0
  %2298 = vmatprep.subr.mxu0 0.0
  %2299 = vmatpush1.msra.mxu0 0.0
  %2300 = vmatprep.subr.mxu0 0.0
  %2301 = vmatpush1.msra.mxu0 0.0
  %2302 = vmatprep.subr.mxu0 0.0
  %2303 = vmatpush1.msra.mxu0 0.0
  %2304 = vmatprep.subr.mxu0 0.0
  %2305 = vmatpush1.msra.mxu0 0.0
  %2306 = vmatprep.subr.mxu0 0.0
  %2307 = vmatpush1.msra.mxu0 0.0
  %2308 = vmatprep.mubr.f32.mxu0 0.0
  %2309 = vmatmul.mubr.f32.gmra.mrb[0].mxu0 %v2236
  %v2310 = vpop.f32.mrb[0].mxu0
  %v2311 = vadd.f32 %v2233, %v2310
  %v2312 = vpop.f32.mrb[0].mxu0
  %2313 = vmatprep.mubr.f32.mxu0 0.0
  %2314 = vmatmul.mubr.f32.gmra.mrb[0].mxu0 %v2239
  %v2315 = vpop.f32.mrb[0].mxu0
  %v2316 = vadd.f32 %v2233, %v2315
  %v2317 = vpop.f32.mrb[0].mxu0
  %2318 = vmatprep.mubr.f32.mxu0 0.0
  %2319 = vmatmul.mubr.f32.gmra.mrb[0].mxu0 %v2242
  %v2320 = vpop.f32.mrb[0].mxu0
  %v2321 = vadd.f32 %v2233, %v2320
  %v2322 = vpop.f32.mrb[0].mxu0
  %2323 = vdwg.mxu0
  %vm2324 = vcmp.ge.f32.partialorder %v2311, 0.0
  %vm2325 = vcmp.ge.f32.partialorder %v2316, 0.0
  %vm2326 = vcmp.ge.f32.partialorder %v2321, 0.0
  %v2327 = vmul.f32 %v2311, 0.25
  %v2328 = vmul.f32 %v2316, 0.25
  %v2329 = vmul.f32 %v2321, 0.25
  %v2330 = vsel %vm2324, %v2311, %v2327
  %v2331 = vsel %vm2325, %v2316, %v2328
  %v2332 = vsel %vm2326, %v2321, %v2329
  %s2333 = scalar_lea.vmem %s31, 2
  %v2334 = vld [vmem:[%s2333] sm:$0x1]
  %s2335 = scalar_lea.vmem %s33, 2
  %v2336 = vld [vmem:[%s2335] sm:$0x1]
  %v2337 = vsel %vm121, %v2330, 0.0
  %2338 = vadd.xlane.f32.xlu0 %v2337
  %v2339 = vpop.xlane.xlu0 %2338
  %v2340 = vsel %vm121, %v2331, 0.0
  %2341 = vadd.xlane.f32.xlu0 %v2340
  %v2342 = vpop.xlane.xlu0 %2341
  %v2343 = vsel %vm121, %v2332, 0.0
  %2344 = vadd.xlane.f32.xlu0 %v2343
  %v2345 = vpop.xlane.xlu0 %2344
  %v2346 = vmul.f32 %v2339, %v1055
  %v2347 = vmul.f32 %v2342, %v1055
  %v2348 = vmul.f32 %v2345, %v1055
  %v2349 = vsub.f32 %v2330, %v2346
  %v2350 = vsub.f32 %v2331, %v2347
  %v2351 = vsub.f32 %v2332, %v2348
  %v2352 = vmul.f32 %v2349, %v2349
  %v2353 = vmul.f32 %v2350, %v2350
  %v2354 = vmul.f32 %v2351, %v2351
  %v2355 = vsel %vm121, %v2352, 0.0
  %2356 = vadd.xlane.f32.xlu0 %v2355
  %v2357 = vpop.xlane.xlu0 %2356
  %v2358 = vsel %vm121, %v2353, 0.0
  %2359 = vadd.xlane.f32.xlu0 %v2358
  %v2360 = vpop.xlane.xlu0 %2359
  %v2361 = vsel %vm121, %v2354, 0.0
  %2362 = vadd.xlane.f32.xlu0 %v2361
  %v2363 = vpop.xlane.xlu0 %2362
  %v2364 = vmul.f32 %v2357, %v1055
  %v2365 = vmul.f32 %v2360, %v1055
  %v2366 = vmul.f32 %v2363, %v1055
  %v2368 = vlaneseq
  %v2369 = vshrl.u32 %v2368, 7
  %v2370 = vsub.s32 0, %v2369
  %v2371 = vrot.slane %v2334, %v2370
  %v2373 = vmul.f32 %v2371, %v2349
  %v2374 = vmul.f32 %v2371, %v2350
  %v2375 = vmul.f32 %v2371, %v2351
  %v2376 = vadd.f32 %v2364, 1e-05
  %v2377 = vadd.f32 %v2365, 1e-05
  %v2378 = vadd.f32 %v2366, 1e-05
  %v2379 = vrsqrt.pop %v2376
  %v2380 = vrsqrt.pop %v2377
  %v2381 = vrsqrt.pop %v2378
  %v2382 = vmul.f32 %v2373, %v2379
  %v2383 = vmul.f32 %v2374, %v2380
  %v2384 = vmul.f32 %v2375, %v2381
  %v2386 = vlaneseq
  %v2387 = vshrl.u32 %v2386, 7
  %v2388 = vsub.s32 0, %v2387
  %v2389 = vrot.slane %v2336, %v2388
  %v2391 = vadd.f32 %v2382, %v2389
  %v2392 = vadd.f32 %v2383, %v2389
  %v2393 = vadd.f32 %v2384, %v2389
  %s2394 = scalar_lea.vmem %s35, 16
  %v2395 = vld [vmem:[%s2394] sm:$0xff]
  %v2397 = vsel %vm121, %v2391, 0
  %v2400 = vsel %vm121, %v2392, 0
  %v2403 = vsel %vm121, %v2393, 0
  %2405 = vmatprep.subr.mxu0 0.0
  %2406 = vmatpush1.msra.mxu0 %v2395
  %2407 = vmatprep.subr.mxu0 0.0
  %2408 = vmatpush1.msra.mxu0 0.0
  %2409 = vmatprep.subr.mxu0 0.0
  %2410 = vmatpush1.msra.mxu0 0.0
  %2411 = vmatprep.subr.mxu0 0.0
  %2412 = vmatpush1.msra.mxu0 0.0
  %2413 = vmatprep.subr.mxu0 0.0
  %2414 = vmatpush1.msra.mxu0 0.0
  %2415 = vmatprep.subr.mxu0 0.0
  %2416 = vmatpush1.msra.mxu0 0.0
  %2417 = vmatprep.subr.mxu0 0.0
  %2418 = vmatpush1.msra.mxu0 0.0
  %2419 = vmatprep.subr.mxu0 0.0
  %2420 = vmatpush1.msra.mxu0 0.0
  %2421 = vmatprep.subr.mxu0 0.0
  %2422 = vmatpush1.msra.mxu0 0.0
  %2423 = vmatprep.subr.mxu0 0.0
  %2424 = vmatpush1.msra.mxu0 0.0
  %2425 = vmatprep.subr.mxu0 0.0
  %2426 = vmatpush1.msra.mxu0 0.0
  %2427 = vmatprep.subr.mxu0 0.0
  %2428 = vmatpush1.msra.mxu0 0.0
  %2429 = vmatprep.subr.mxu0 0.0
  %2430 = vmatpush1.msra.mxu0 0.0
  %2431 = vmatprep.subr.mxu0 0.0
  %2432 = vmatpush1.msra.mxu0 0.0
  %2433 = vmatprep.subr.mxu0 0.0
  %2434 = vmatpush1.msra.mxu0 0.0
  %2435 = vmatprep.subr.mxu0 0.0
  %2436 = vmatpush1.msra.mxu0 0.0
  %2437 = vmatprep.subr.mxu0 0.0
  %2438 = vmatpush1.msra.mxu0 0.0
  %2439 = vmatprep.subr.mxu0 0.0
  %2440 = vmatpush1.msra.mxu0 0.0
  %2441 = vmatprep.subr.mxu0 0.0
  %2442 = vmatpush1.msra.mxu0 0.0
  %2443 = vmatprep.subr.mxu0 0.0
  %2444 = vmatpush1.msra.mxu0 0.0
  %2445 = vmatprep.subr.mxu0 0.0
  %2446 = vmatpush1.msra.mxu0 0.0
  %2447 = vmatprep.subr.mxu0 0.0
  %2448 = vmatpush1.msra.mxu0 0.0
  %2449 = vmatprep.subr.mxu0 0.0
  %2450 = vmatpush1.msra.mxu0 0.0
  %2451 = vmatprep.subr.mxu0 0.0
  %2452 = vmatpush1.msra.mxu0 0.0
  %2453 = vmatprep.subr.mxu0 0.0
  %2454 = vmatpush1.msra.mxu0 0.0
  %2455 = vmatprep.subr.mxu0 0.0
  %2456 = vmatpush1.msra.mxu0 0.0
  %2457 = vmatprep.subr.mxu0 0.0
  %2458 = vmatpush1.msra.mxu0 0.0
  %2459 = vmatprep.subr.mxu0 0.0
  %2460 = vmatpush1.msra.mxu0 0.0
  %2461 = vmatprep.subr.mxu0 0.0
  %2462 = vmatpush1.msra.mxu0 0.0
  %2463 = vmatprep.subr.mxu0 0.0
  %2464 = vmatpush1.msra.mxu0 0.0
  %2465 = vmatprep.subr.mxu0 0.0
  %2466 = vmatpush1.msra.mxu0 0.0
  %2467 = vmatprep.subr.mxu0 0.0
  %2468 = vmatpush1.msra.mxu0 0.0
  %2469 = vmatprep.mubr.f32.mxu0 0.0
  %2470 = vmatmul.mubr.f32.gmra.mrb[0].mxu0 %v2397
  %v2471 = vpop.f32.mrb[0].mxu0
  %v2472 = vadd.f32 0.0, %v2471
  %v2473 = vpop.f32.mrb[0].mxu0
  %2474 = vmatprep.mubr.f32.mxu0 0.0
  %2475 = vmatmul.mubr.f32.gmra.mrb[0].mxu0 %v2400
  %v2476 = vpop.f32.mrb[0].mxu0
  %v2477 = vadd.f32 0.0, %v2476
  %v2478 = vpop.f32.mrb[0].mxu0
  %2479 = vmatprep.mubr.f32.mxu0 0.0
  %2480 = vmatmul.mubr.f32.gmra.mrb[0].mxu0 %v2403
  %v2481 = vpop.f32.mrb[0].mxu0
  %v2482 = vadd.f32 0.0, %v2481
  %v2483 = vpop.f32.mrb[0].mxu0
  %2484 = vdwg.mxu0
  %v2485 = vadd.f32 %v922, %v2472
  %v2486 = vadd.f32 %v927, %v2477
  %v2487 = vadd.f32 %v932, %v2482
  %s2488 = scalar_lea.vmem %s37, 2
  %v2489 = vld [vmem:[%s2488] sm:$0x1]
  %v2491 = vlaneseq
  %v2492 = vshrl.u32 %v2491, 7
  %v2493 = vsub.s32 0, %v2492
  %v2494 = vrot.slane %v2489, %v2493
  %v2496 = vadd.f32 %v2485, %v2494
  %v2497 = vadd.f32 %v2486, %v2494
  %v2498 = vadd.f32 %v2487, %v2494
  %s2499 = scalar_lea.vmem %s19, 96
  %v2500 = vld [vmem:[%s2499] sm:$0xff]
  %v2501 = vld [vmem:[%s2499 + $0x8] sm:$0xff]
  %v2502 = vld [vmem:[%s2499 + $0x10] sm:$0xff]
  %v2503 = vld [vmem:[%s2499 + $0x18] sm:$0xff]
  %s2504 = scalar_lea.vmem %s21, 3
  %v2505 = vld [vmem:[%s2504] sm:$0x1]
  %v2507 = vlaneseq
  %v2508 = vshrl.u32 %v2507, 7
  %v2509 = vsub.s32 0, %v2508
  %v2510 = vrot.slane %v2505, %v2509
  %v2513 = vsel %vm131, %v2496, 0
  %v2516 = vsel %vm131, %v2497, 0
  %v2519 = vsel %vm131, %v2498, 0
  %2521 = vmatprep.subr.mxu0 0.0
  %2522 = vmatpush1.msra.mxu0 %v2500
  %2523 = vmatprep.subr.mxu0 0.0
  %2524 = vmatpush1.msra.mxu0 %v2501
  %2525 = vmatprep.subr.mxu0 0.0
  %2526 = vmatpush1.msra.mxu0 %v2502
  %2527 = vmatprep.subr.mxu0 0.0
  %2528 = vmatpush1.msra.mxu0 %v2503
  %2529 = vmatprep.subr.mxu0 0.0
  %2530 = vmatpush1.msra.mxu0 0.0
  %2531 = vmatprep.subr.mxu0 0.0
  %2532 = vmatpush1.msra.mxu0 0.0
  %2533 = vmatprep.subr.mxu0 0.0
  %2534 = vmatpush1.msra.mxu0 0.0
  %2535 = vmatprep.subr.mxu0 0.0
  %2536 = vmatpush1.msra.mxu0 0.0
  %2537 = vmatprep.subr.mxu0 0.0
  %2538 = vmatpush1.msra.mxu0 0.0
  %2539 = vmatprep.subr.mxu0 0.0
  %2540 = vmatpush1.msra.mxu0 0.0
  %2541 = vmatprep.subr.mxu0 0.0
  %2542 = vmatpush1.msra.mxu0 0.0
  %2543 = vmatprep.subr.mxu0 0.0
  %2544 = vmatpush1.msra.mxu0 0.0
  %2545 = vmatprep.subr.mxu0 0.0
  %2546 = vmatpush1.msra.mxu0 0.0
  %2547 = vmatprep.subr.mxu0 0.0
  %2548 = vmatpush1.msra.mxu0 0.0
  %2549 = vmatprep.subr.mxu0 0.0
  %2550 = vmatpush1.msra.mxu0 0.0
  %2551 = vmatprep.subr.mxu0 0.0
  %2552 = vmatpush1.msra.mxu0 0.0
  %2553 = vmatprep.subr.mxu0 0.0
  %2554 = vmatpush1.msra.mxu0 0.0
  %2555 = vmatprep.subr.mxu0 0.0
  %2556 = vmatpush1.msra.mxu0 0.0
  %2557 = vmatprep.subr.mxu0 0.0
  %2558 = vmatpush1.msra.mxu0 0.0
  %2559 = vmatprep.subr.mxu0 0.0
  %2560 = vmatpush1.msra.mxu0 0.0
  %2561 = vmatprep.subr.mxu0 0.0
  %2562 = vmatpush1.msra.mxu0 0.0
  %2563 = vmatprep.subr.mxu0 0.0
  %2564 = vmatpush1.msra.mxu0 0.0
  %2565 = vmatprep.subr.mxu0 0.0
  %2566 = vmatpush1.msra.mxu0 0.0
  %2567 = vmatprep.subr.mxu0 0.0
  %2568 = vmatpush1.msra.mxu0 0.0
  %2569 = vmatprep.subr.mxu0 0.0
  %2570 = vmatpush1.msra.mxu0 0.0
  %2571 = vmatprep.subr.mxu0 0.0
  %2572 = vmatpush1.msra.mxu0 0.0
  %2573 = vmatprep.subr.mxu0 0.0
  %2574 = vmatpush1.msra.mxu0 0.0
  %2575 = vmatprep.subr.mxu0 0.0
  %2576 = vmatpush1.msra.mxu0 0.0
  %2577 = vmatprep.subr.mxu0 0.0
  %2578 = vmatpush1.msra.mxu0 0.0
  %2579 = vmatprep.subr.mxu0 0.0
  %2580 = vmatpush1.msra.mxu0 0.0
  %2581 = vmatprep.subr.mxu0 0.0
  %2582 = vmatpush1.msra.mxu0 0.0
  %2583 = vmatprep.subr.mxu0 0.0
  %2584 = vmatpush1.msra.mxu0 0.0
  %2585 = vmatprep.mubr.f32.mxu0 0.0
  %2586 = vmatmul.mubr.f32.gmra.mrb[0].mxu0 %v2513
  %v2587 = vpop.f32.mrb[0].mxu0
  %v2588 = vadd.f32 %v2510, %v2587
  %v2589 = vpop.f32.mrb[0].mxu0
  %2590 = vmatprep.mubr.f32.mxu0 0.0
  %2591 = vmatmul.mubr.f32.gmra.mrb[0].mxu0 %v2516
  %v2592 = vpop.f32.mrb[0].mxu0
  %v2593 = vadd.f32 %v2510, %v2592
  %v2594 = vpop.f32.mrb[0].mxu0
  %2595 = vmatprep.mubr.f32.mxu0 0.0
  %2596 = vmatmul.mubr.f32.gmra.mrb[0].mxu0 %v2519
  %v2597 = vpop.f32.mrb[0].mxu0
  %v2598 = vadd.f32 %v2510, %v2597
  %v2599 = vpop.f32.mrb[0].mxu0
  %2600 = vdwg.mxu0
  %vm2601 = vcmp.ge.f32.partialorder %v2588, 0.0
  %vm2602 = vcmp.ge.f32.partialorder %v2593, 0.0
  %vm2603 = vcmp.ge.f32.partialorder %v2598, 0.0
  %v2604 = vmul.f32 %v2588, 0.25
  %v2605 = vmul.f32 %v2593, 0.25
  %v2606 = vmul.f32 %v2598, 0.25
  %v2607 = vsel %vm2601, %v2588, %v2604
  %v2608 = vsel %vm2602, %v2593, %v2605
  %v2609 = vsel %vm2603, %v2598, %v2606
  %s2610 = scalar_lea.vmem %s23, 3
  %v2611 = vld [vmem:[%s2610] sm:$0x1]
  %s2612 = scalar_lea.vmem %s25, 3
  %v2613 = vld [vmem:[%s2612] sm:$0x1]
  %v2614 = vsel %vm121, %v2607, 0.0
  %2615 = vadd.xlane.f32.xlu0 %v2614
  %v2616 = vpop.xlane.xlu0 %2615
  %v2617 = vsel %vm121, %v2608, 0.0
  %2618 = vadd.xlane.f32.xlu0 %v2617
  %v2619 = vpop.xlane.xlu0 %2618
  %v2620 = vsel %vm121, %v2609, 0.0
  %2621 = vadd.xlane.f32.xlu0 %v2620
  %v2622 = vpop.xlane.xlu0 %2621
  %v2623 = vmul.f32 %v2616, %v1055
  %v2624 = vmul.f32 %v2619, %v1055
  %v2625 = vmul.f32 %v2622, %v1055
  %v2626 = vsub.f32 %v2607, %v2623
  %v2627 = vsub.f32 %v2608, %v2624
  %v2628 = vsub.f32 %v2609, %v2625
  %v2629 = vmul.f32 %v2626, %v2626
  %v2630 = vmul.f32 %v2627, %v2627
  %v2631 = vmul.f32 %v2628, %v2628
  %v2632 = vsel %vm121, %v2629, 0.0
  %2633 = vadd.xlane.f32.xlu0 %v2632
  %v2634 = vpop.xlane.xlu0 %2633
  %v2635 = vsel %vm121, %v2630, 0.0
  %2636 = vadd.xlane.f32.xlu0 %v2635
  %v2637 = vpop.xlane.xlu0 %2636
  %v2638 = vsel %vm121, %v2631, 0.0
  %2639 = vadd.xlane.f32.xlu0 %v2638
  %v2640 = vpop.xlane.xlu0 %2639
  %v2641 = vmul.f32 %v2634, %v1055
  %v2642 = vmul.f32 %v2637, %v1055
  %v2643 = vmul.f32 %v2640, %v1055
  %v2645 = vlaneseq
  %v2646 = vshrl.u32 %v2645, 7
  %v2647 = vsub.s32 0, %v2646
  %v2648 = vrot.slane %v2611, %v2647
  %v2650 = vmul.f32 %v2648, %v2626
  %v2651 = vmul.f32 %v2648, %v2627
  %v2652 = vmul.f32 %v2648, %v2628
  %v2653 = vadd.f32 %v2641, 1e-05
  %v2654 = vadd.f32 %v2642, 1e-05
  %v2655 = vadd.f32 %v2643, 1e-05
  %v2656 = vrsqrt.pop %v2653
  %v2657 = vrsqrt.pop %v2654
  %v2658 = vrsqrt.pop %v2655
  %v2659 = vmul.f32 %v2650, %v2656
  %v2660 = vmul.f32 %v2651, %v2657
  %v2661 = vmul.f32 %v2652, %v2658
  %v2663 = vlaneseq
  %v2664 = vshrl.u32 %v2663, 7
  %v2665 = vsub.s32 0, %v2664
  %v2666 = vrot.slane %v2613, %v2665
  %v2668 = vadd.f32 %v2659, %v2666
  %v2669 = vadd.f32 %v2660, %v2666
  %v2670 = vadd.f32 %v2661, %v2666
  %2671 = vst.msk [vmem:[#allocation2 + $0x10] sm:$0xff] %vm121, %v2668
  %2672 = vst.msk [vmem:[#allocation2 + $0x18] sm:$0xff] %vm121, %v2669
  %2673 = vst.msk [vmem:[#allocation2 + $0x20] sm:$0xff] %vm121, %v2670
  %v2674 = vld [vmem:[#allocation2] sm:$0xff]
  %v2675 = vld [vmem:[#allocation2 + $0x8] sm:$0xff]
  %v2676 = vld [vmem:[#allocation2 + $0x10] sm:$0xff]
  %v2677 = vld [vmem:[#allocation2 + $0x4] sm:$0xff]
  %v2678 = vld [vmem:[#allocation2 + $0xc] sm:$0xff]
  %v2679 = vld [vmem:[#allocation2 + $0x14] sm:$0xff]
  %v2680 = vld [vmem:[#allocation2 + $0x18] sm:$0xff]
  %v2681 = vld [vmem:[#allocation2 + $0x1c] sm:$0xff]
  %v2682 = vld [vmem:[#allocation2 + $0x20] sm:$0xff]
  %2686 = vrot.lane.b32.xlu0 %v2677, 8
  %v2687 = vpop.permute.xlu0 %2686
  %2688 = vrot.lane.b32.xlu0 %v2678, 8
  %v2689 = vpop.permute.xlu0 %2688
  %2690 = vrot.lane.b32.xlu0 %v2679, 8
  %v2691 = vpop.permute.xlu0 %2690
  %2698 = vrot.lane.b32.xlu0 %v2675, 16
  %v2699 = vpop.permute.xlu0 %2698
  %2700 = vrot.lane.b32.xlu0 %v2676, 16
  %v2701 = vpop.permute.xlu0 %2700
  %2702 = vrot.lane.b32.xlu0 %v2680, 16
  %v2703 = vpop.permute.xlu0 %2702
  %2708 = vrot.lane.b32.xlu0 %v2678, 24
  %v2709 = vpop.permute.xlu0 %2708
  %2710 = vrot.lane.b32.xlu0 %v2679, 24
  %v2711 = vpop.permute.xlu0 %2710
  %2712 = vrot.lane.b32.xlu0 %v2681, 24
  %v2713 = vpop.permute.xlu0 %2712
  %2718 = vrot.lane.b32.xlu0 %v2676, 32
  %v2719 = vpop.permute.xlu0 %2718
  %2720 = vrot.lane.b32.xlu0 %v2680, 32
  %v2721 = vpop.permute.xlu0 %2720
  %2722 = vrot.lane.b32.xlu0 %v2682, 32
  %v2723 = vpop.permute.xlu0 %2722
  %v2727 = vsel %vm121, %v2674, %v2687
  %v2728 = vsel %vm121, %v2675, %v2689
  %v2729 = vsel %vm121, %v2676, %v2691
  %v2730 = vsel %vm1171, %v2727, %v2699
  %v2731 = vsel %vm1171, %v2728, %v2701
  %v2732 = vsel %vm1171, %v2729, %v2703
  %v2733 = vsel %vm1175, %v2730, %v2709
  %v2734 = vsel %vm1175, %v2731, %v2711
  %v2735 = vsel %vm1175, %v2732, %v2713
  %v2736 = vsel %vm131, %v2733, %v2719
  %v2737 = vsel %vm131, %v2734, %v2721
  %v2738 = vsel %vm131, %v2735, %v2723
  %s2739 = scalar_lea.vmem %s27, 120
  %v2740 = vld [vmem:[%s2739] sm:$0xff]
  %v2741 = vld [vmem:[%s2739 + $0x8] sm:$0xff]
  %v2742 = vld [vmem:[%s2739 + $0x10] sm:$0xff]
  %v2743 = vld [vmem:[%s2739 + $0x18] sm:$0xff]
  %v2744 = vld [vmem:[%s2739 + $0x20] sm:$0xff]
  %s2745 = scalar_lea.vmem %s29, 3
  %v2746 = vld [vmem:[%s2745] sm:$0x1]
  %v2748 = vlaneseq
  %v2749 = vshrl.u32 %v2748, 7
  %v2750 = vsub.s32 0, %v2749
  %v2751 = vrot.slane %v2746, %v2750
  %v2754 = vsel %vm1194, %v2736, 0
  %v2757 = vsel %vm1194, %v2737, 0
  %v2760 = vsel %vm1194, %v2738, 0
  %2762 = vmatprep.subr.mxu0 0.0
  %2763 = vmatpush1.msra.mxu0 %v2740
  %2764 = vmatprep.subr.mxu0 0.0
  %2765 = vmatpush1.msra.mxu0 %v2741
  %2766 = vmatprep.subr.mxu0 0.0
  %2767 = vmatpush1.msra.mxu0 %v2742
  %2768 = vmatprep.subr.mxu0 0.0
  %2769 = vmatpush1.msra.mxu0 %v2743
  %2770 = vmatprep.subr.mxu0 0.0
  %2771 = vmatpush1.msra.mxu0 %v2744
  %2772 = vmatprep.subr.mxu0 0.0
  %2773 = vmatpush1.msra.mxu0 0.0
  %2774 = vmatprep.subr.mxu0 0.0
  %2775 = vmatpush1.msra.mxu0 0.0
  %2776 = vmatprep.subr.mxu0 0.0
  %2777 = vmatpush1.msra.mxu0 0.0
  %2778 = vmatprep.subr.mxu0 0.0
  %2779 = vmatpush1.msra.mxu0 0.0
  %2780 = vmatprep.subr.mxu0 0.0
  %2781 = vmatpush1.msra.mxu0 0.0
  %2782 = vmatprep.subr.mxu0 0.0
  %2783 = vmatpush1.msra.mxu0 0.0
  %2784 = vmatprep.subr.mxu0 0.0
  %2785 = vmatpush1.msra.mxu0 0.0
  %2786 = vmatprep.subr.mxu0 0.0
  %2787 = vmatpush1.msra.mxu0 0.0
  %2788 = vmatprep.subr.mxu0 0.0
  %2789 = vmatpush1.msra.mxu0 0.0
  %2790 = vmatprep.subr.mxu0 0.0
  %2791 = vmatpush1.msra.mxu0 0.0
  %2792 = vmatprep.subr.mxu0 0.0
  %2793 = vmatpush1.msra.mxu0 0.0
  %2794 = vmatprep.subr.mxu0 0.0
  %2795 = vmatpush1.msra.mxu0 0.0
  %2796 = vmatprep.subr.mxu0 0.0
  %2797 = vmatpush1.msra.mxu0 0.0
  %2798 = vmatprep.subr.mxu0 0.0
  %2799 = vmatpush1.msra.mxu0 0.0
  %2800 = vmatprep.subr.mxu0 0.0
  %2801 = vmatpush1.msra.mxu0 0.0
  %2802 = vmatprep.subr.mxu0 0.0
  %2803 = vmatpush1.msra.mxu0 0.0
  %2804 = vmatprep.subr.mxu0 0.0
  %2805 = vmatpush1.msra.mxu0 0.0
  %2806 = vmatprep.subr.mxu0 0.0
  %2807 = vmatpush1.msra.mxu0 0.0
  %2808 = vmatprep.subr.mxu0 0.0
  %2809 = vmatpush1.msra.mxu0 0.0
  %2810 = vmatprep.subr.mxu0 0.0
  %2811 = vmatpush1.msra.mxu0 0.0
  %2812 = vmatprep.subr.mxu0 0.0
  %2813 = vmatpush1.msra.mxu0 0.0
  %2814 = vmatprep.subr.mxu0 0.0
  %2815 = vmatpush1.msra.mxu0 0.0
  %2816 = vmatprep.subr.mxu0 0.0
  %2817 = vmatpush1.msra.mxu0 0.0
  %2818 = vmatprep.subr.mxu0 0.0
  %2819 = vmatpush1.msra.mxu0 0.0
  %2820 = vmatprep.subr.mxu0 0.0
  %2821 = vmatpush1.msra.mxu0 0.0
  %2822 = vmatprep.subr.mxu0 0.0
  %2823 = vmatpush1.msra.mxu0 0.0
  %2824 = vmatprep.subr.mxu0 0.0
  %2825 = vmatpush1.msra.mxu0 0.0
  %2826 = vmatprep.mubr.f32.mxu0 0.0
  %2827 = vmatmul.mubr.f32.gmra.mrb[0].mxu0 %v2754
  %v2828 = vpop.f32.mrb[0].mxu0
  %v2829 = vadd.f32 %v2751, %v2828
  %v2830 = vpop.f32.mrb[0].mxu0
  %2831 = vmatprep.mubr.f32.mxu0 0.0
  %2832 = vmatmul.mubr.f32.gmra.mrb[0].mxu0 %v2757
  %v2833 = vpop.f32.mrb[0].mxu0
  %v2834 = vadd.f32 %v2751, %v2833
  %v2835 = vpop.f32.mrb[0].mxu0
  %2836 = vmatprep.mubr.f32.mxu0 0.0
  %2837 = vmatmul.mubr.f32.gmra.mrb[0].mxu0 %v2760
  %v2838 = vpop.f32.mrb[0].mxu0
  %v2839 = vadd.f32 %v2751, %v2838
  %v2840 = vpop.f32.mrb[0].mxu0
  %2841 = vdwg.mxu0
  %vm2842 = vcmp.ge.f32.partialorder %v2829, 0.0
  %vm2843 = vcmp.ge.f32.partialorder %v2834, 0.0
  %vm2844 = vcmp.ge.f32.partialorder %v2839, 0.0
  %v2845 = vmul.f32 %v2829, 0.25
  %v2846 = vmul.f32 %v2834, 0.25
  %v2847 = vmul.f32 %v2839, 0.25
  %v2848 = vsel %vm2842, %v2829, %v2845
  %v2849 = vsel %vm2843, %v2834, %v2846
  %v2850 = vsel %vm2844, %v2839, %v2847
  %s2851 = scalar_lea.vmem %s31, 3
  %v2852 = vld [vmem:[%s2851] sm:$0x1]
  %s2853 = scalar_lea.vmem %s33, 3
  %v2854 = vld [vmem:[%s2853] sm:$0x1]
  %v2855 = vsel %vm121, %v2848, 0.0
  %2856 = vadd.xlane.f32.xlu0 %v2855
  %v2857 = vpop.xlane.xlu0 %2856
  %v2858 = vsel %vm121, %v2849, 0.0
  %2859 = vadd.xlane.f32.xlu0 %v2858
  %v2860 = vpop.xlane.xlu0 %2859
  %v2861 = vsel %vm121, %v2850, 0.0
  %2862 = vadd.xlane.f32.xlu0 %v2861
  %v2863 = vpop.xlane.xlu0 %2862
  %v2864 = vmul.f32 %v2857, %v1055
  %v2865 = vmul.f32 %v2860, %v1055
  %v2866 = vmul.f32 %v2863, %v1055
  %v2867 = vsub.f32 %v2848, %v2864
  %v2868 = vsub.f32 %v2849, %v2865
  %v2869 = vsub.f32 %v2850, %v2866
  %v2870 = vmul.f32 %v2867, %v2867
  %v2871 = vmul.f32 %v2868, %v2868
  %v2872 = vmul.f32 %v2869, %v2869
  %v2873 = vsel %vm121, %v2870, 0.0
  %2874 = vadd.xlane.f32.xlu0 %v2873
  %v2875 = vpop.xlane.xlu0 %2874
  %v2876 = vsel %vm121, %v2871, 0.0
  %2877 = vadd.xlane.f32.xlu0 %v2876
  %v2878 = vpop.xlane.xlu0 %2877
  %v2879 = vsel %vm121, %v2872, 0.0
  %2880 = vadd.xlane.f32.xlu0 %v2879
  %v2881 = vpop.xlane.xlu0 %2880
  %v2882 = vmul.f32 %v2875, %v1055
  %v2883 = vmul.f32 %v2878, %v1055
  %v2884 = vmul.f32 %v2881, %v1055
  %v2886 = vlaneseq
  %v2887 = vshrl.u32 %v2886, 7
  %v2888 = vsub.s32 0, %v2887
  %v2889 = vrot.slane %v2852, %v2888
  %v2891 = vmul.f32 %v2889, %v2867
  %v2892 = vmul.f32 %v2889, %v2868
  %v2893 = vmul.f32 %v2889, %v2869
  %v2894 = vadd.f32 %v2882, 1e-05
  %v2895 = vadd.f32 %v2883, 1e-05
  %v2896 = vadd.f32 %v2884, 1e-05
  %v2897 = vrsqrt.pop %v2894
  %v2898 = vrsqrt.pop %v2895
  %v2899 = vrsqrt.pop %v2896
  %v2900 = vmul.f32 %v2891, %v2897
  %v2901 = vmul.f32 %v2892, %v2898
  %v2902 = vmul.f32 %v2893, %v2899
  %v2904 = vlaneseq
  %v2905 = vshrl.u32 %v2904, 7
  %v2906 = vsub.s32 0, %v2905
  %v2907 = vrot.slane %v2854, %v2906
  %v2909 = vadd.f32 %v2900, %v2907
  %v2910 = vadd.f32 %v2901, %v2907
  %v2911 = vadd.f32 %v2902, %v2907
  %s2912 = scalar_lea.vmem %s35, 24
  %v2913 = vld [vmem:[%s2912] sm:$0xff]
  %v2915 = vsel %vm121, %v2909, 0
  %v2918 = vsel %vm121, %v2910, 0
  %v2921 = vsel %vm121, %v2911, 0
  %2923 = vmatprep.subr.mxu0 0.0
  %2924 = vmatpush1.msra.mxu0 %v2913
  %2925 = vmatprep.subr.mxu0 0.0
  %2926 = vmatpush1.msra.mxu0 0.0
  %2927 = vmatprep.subr.mxu0 0.0
  %2928 = vmatpush1.msra.mxu0 0.0
  %2929 = vmatprep.subr.mxu0 0.0
  %2930 = vmatpush1.msra.mxu0 0.0
  %2931 = vmatprep.subr.mxu0 0.0
  %2932 = vmatpush1.msra.mxu0 0.0
  %2933 = vmatprep.subr.mxu0 0.0
  %2934 = vmatpush1.msra.mxu0 0.0
  %2935 = vmatprep.subr.mxu0 0.0
  %2936 = vmatpush1.msra.mxu0 0.0
  %2937 = vmatprep.subr.mxu0 0.0
  %2938 = vmatpush1.msra.mxu0 0.0
  %2939 = vmatprep.subr.mxu0 0.0
  %2940 = vmatpush1.msra.mxu0 0.0
  %2941 = vmatprep.subr.mxu0 0.0
  %2942 = vmatpush1.msra.mxu0 0.0
  %2943 = vmatprep.subr.mxu0 0.0
  %2944 = vmatpush1.msra.mxu0 0.0
  %2945 = vmatprep.subr.mxu0 0.0
  %2946 = vmatpush1.msra.mxu0 0.0
  %2947 = vmatprep.subr.mxu0 0.0
  %2948 = vmatpush1.msra.mxu0 0.0
  %2949 = vmatprep.subr.mxu0 0.0
  %2950 = vmatpush1.msra.mxu0 0.0
  %2951 = vmatprep.subr.mxu0 0.0
  %2952 = vmatpush1.msra.mxu0 0.0
  %2953 = vmatprep.subr.mxu0 0.0
  %2954 = vmatpush1.msra.mxu0 0.0
  %2955 = vmatprep.subr.mxu0 0.0
  %2956 = vmatpush1.msra.mxu0 0.0
  %2957 = vmatprep.subr.mxu0 0.0
  %2958 = vmatpush1.msra.mxu0 0.0
  %2959 = vmatprep.subr.mxu0 0.0
  %2960 = vmatpush1.msra.mxu0 0.0
  %2961 = vmatprep.subr.mxu0 0.0
  %2962 = vmatpush1.msra.mxu0 0.0
  %2963 = vmatprep.subr.mxu0 0.0
  %2964 = vmatpush1.msra.mxu0 0.0
  %2965 = vmatprep.subr.mxu0 0.0
  %2966 = vmatpush1.msra.mxu0 0.0
  %2967 = vmatprep.subr.mxu0 0.0
  %2968 = vmatpush1.msra.mxu0 0.0
  %2969 = vmatprep.subr.mxu0 0.0
  %2970 = vmatpush1.msra.mxu0 0.0
  %2971 = vmatprep.subr.mxu0 0.0
  %2972 = vmatpush1.msra.mxu0 0.0
  %2973 = vmatprep.subr.mxu0 0.0
  %2974 = vmatpush1.msra.mxu0 0.0
  %2975 = vmatprep.subr.mxu0 0.0
  %2976 = vmatpush1.msra.mxu0 0.0
  %2977 = vmatprep.subr.mxu0 0.0
  %2978 = vmatpush1.msra.mxu0 0.0
  %2979 = vmatprep.subr.mxu0 0.0
  %2980 = vmatpush1.msra.mxu0 0.0
  %2981 = vmatprep.subr.mxu0 0.0
  %2982 = vmatpush1.msra.mxu0 0.0
  %2983 = vmatprep.subr.mxu0 0.0
  %2984 = vmatpush1.msra.mxu0 0.0
  %2985 = vmatprep.subr.mxu0 0.0
  %2986 = vmatpush1.msra.mxu0 0.0
  %2987 = vmatprep.mubr.f32.mxu0 0.0
  %2988 = vmatmul.mubr.f32.gmra.mrb[0].mxu0 %v2915
  %v2989 = vpop.f32.mrb[0].mxu0
  %v2990 = vadd.f32 0.0, %v2989
  %v2991 = vpop.f32.mrb[0].mxu0
  %2992 = vmatprep.mubr.f32.mxu0 0.0
  %2993 = vmatmul.mubr.f32.gmra.mrb[0].mxu0 %v2918
  %v2994 = vpop.f32.mrb[0].mxu0
  %v2995 = vadd.f32 0.0, %v2994
  %v2996 = vpop.f32.mrb[0].mxu0
  %2997 = vmatprep.mubr.f32.mxu0 0.0
  %2998 = vmatmul.mubr.f32.gmra.mrb[0].mxu0 %v2921
  %v2999 = vpop.f32.mrb[0].mxu0
  %v3000 = vadd.f32 0.0, %v2999
  %v3001 = vpop.f32.mrb[0].mxu0
  %3002 = vdwg.mxu0
  %v3003 = vadd.f32 %v2496, %v2990
  %v3004 = vadd.f32 %v2497, %v2995
  %v3005 = vadd.f32 %v2498, %v3000
  %s3006 = scalar_lea.vmem %s37, 3
  %v3007 = vld [vmem:[%s3006] sm:$0x1]
  %v3009 = vlaneseq
  %v3010 = vshrl.u32 %v3009, 7
  %v3011 = vsub.s32 0, %v3010
  %v3012 = vrot.slane %v3007, %v3011
  %v3014 = vadd.f32 %v3003, %v3012
  %v3015 = vadd.f32 %v3004, %v3012
  %v3016 = vadd.f32 %v3005, %v3012
  %v3017 = vld [vmem:[%s39] sm:$0xff]
  %v3018 = vld [vmem:[%s39 + $0x8] sm:$0xff]
  %v3019 = vld [vmem:[%s39 + $0x10] sm:$0xff]
  %v3020 = vld [vmem:[%s39 + $0x18] sm:$0xff]
  %v3021 = vld [vmem:[%s41] sm:$0x1]
  %v3023 = vlaneseq
  %v3024 = vshrl.u32 %v3023, 7
  %v3025 = vsub.s32 0, %v3024
  %v3026 = vrot.slane %v3021, %v3025
  %v3029 = vsel %vm131, %v1970, 0
  %v3032 = vsel %vm131, %v1971, 0
  %v3035 = vsel %vm131, %v1972, 0
  %3037 = vmatprep.subr.mxu0 0.0
  %3038 = vmatpush1.msra.mxu0 %v3017
  %3039 = vmatprep.subr.mxu0 0.0
  %3040 = vmatpush1.msra.mxu0 %v3018
  %3041 = vmatprep.subr.mxu0 0.0
  %3042 = vmatpush1.msra.mxu0 %v3019
  %3043 = vmatprep.subr.mxu0 0.0
  %3044 = vmatpush1.msra.mxu0 %v3020
  %3045 = vmatprep.subr.mxu0 0.0
  %3046 = vmatpush1.msra.mxu0 0.0
  %3047 = vmatprep.subr.mxu0 0.0
  %3048 = vmatpush1.msra.mxu0 0.0
  %3049 = vmatprep.subr.mxu0 0.0
  %3050 = vmatpush1.msra.mxu0 0.0
  %3051 = vmatprep.subr.mxu0 0.0
  %3052 = vmatpush1.msra.mxu0 0.0
  %3053 = vmatprep.subr.mxu0 0.0
  %3054 = vmatpush1.msra.mxu0 0.0
  %3055 = vmatprep.subr.mxu0 0.0
  %3056 = vmatpush1.msra.mxu0 0.0
  %3057 = vmatprep.subr.mxu0 0.0
  %3058 = vmatpush1.msra.mxu0 0.0
  %3059 = vmatprep.subr.mxu0 0.0
  %3060 = vmatpush1.msra.mxu0 0.0
  %3061 = vmatprep.subr.mxu0 0.0
  %3062 = vmatpush1.msra.mxu0 0.0
  %3063 = vmatprep.subr.mxu0 0.0
  %3064 = vmatpush1.msra.mxu0 0.0
  %3065 = vmatprep.subr.mxu0 0.0
  %3066 = vmatpush1.msra.mxu0 0.0
  %3067 = vmatprep.subr.mxu0 0.0
  %3068 = vmatpush1.msra.mxu0 0.0
  %3069 = vmatprep.subr.mxu0 0.0
  %3070 = vmatpush1.msra.mxu0 0.0
  %3071 = vmatprep.subr.mxu0 0.0
  %3072 = vmatpush1.msra.mxu0 0.0
  %3073 = vmatprep.subr.mxu0 0.0
  %3074 = vmatpush1.msra.mxu0 0.0
  %3075 = vmatprep.subr.mxu0 0.0
  %3076 = vmatpush1.msra.mxu0 0.0
  %3077 = vmatprep.subr.mxu0 0.0
  %3078 = vmatpush1.msra.mxu0 0.0
  %3079 = vmatprep.subr.mxu0 0.0
  %3080 = vmatpush1.msra.mxu0 0.0
  %3081 = vmatprep.subr.mxu0 0.0
  %3082 = vmatpush1.msra.mxu0 0.0
  %3083 = vmatprep.subr.mxu0 0.0
  %3084 = vmatpush1.msra.mxu0 0.0
  %3085 = vmatprep.subr.mxu0 0.0
  %3086 = vmatpush1.msra.mxu0 0.0
  %3087 = vmatprep.subr.mxu0 0.0
  %3088 = vmatpush1.msra.mxu0 0.0
  %3089 = vmatprep.subr.mxu0 0.0
  %3090 = vmatpush1.msra.mxu0 0.0
  %3091 = vmatprep.subr.mxu0 0.0
  %3092 = vmatpush1.msra.mxu0 0.0
  %3093 = vmatprep.subr.mxu0 0.0
  %3094 = vmatpush1.msra.mxu0 0.0
  %3095 = vmatprep.subr.mxu0 0.0
  %3096 = vmatpush1.msra.mxu0 0.0
  %3097 = vmatprep.subr.mxu0 0.0
  %3098 = vmatpush1.msra.mxu0 0.0
  %3099 = vmatprep.subr.mxu0 0.0
  %3100 = vmatpush1.msra.mxu0 0.0
  %3101 = vmatprep.mubr.f32.mxu0 0.0
  %3102 = vmatmul.mubr.f32.gmra.mrb[0].mxu0 %v3029
  %v3103 = vpop.f32.mrb[0].mxu0
  %v3104 = vadd.f32 %v3026, %v3103
  %v3105 = vpop.f32.mrb[0].mxu0
  %3106 = vmatprep.mubr.f32.mxu0 0.0
  %3107 = vmatmul.mubr.f32.gmra.mrb[0].mxu0 %v3032
  %v3108 = vpop.f32.mrb[0].mxu0
  %v3109 = vadd.f32 %v3026, %v3108
  %v3110 = vpop.f32.mrb[0].mxu0
  %3111 = vmatprep.mubr.f32.mxu0 0.0
  %3112 = vmatmul.mubr.f32.gmra.mrb[0].mxu0 %v3035
  %v3113 = vpop.f32.mrb[0].mxu0
  %v3114 = vadd.f32 %v3026, %v3113
  %v3115 = vpop.f32.mrb[0].mxu0
  %3116 = vdwg.mxu0
  %v3117 = vxor.u32 %v3104, 2147483648
  %v3118 = vxor.u32 %v3109, 2147483648
  %v3119 = vxor.u32 %v3114, 2147483648
  %v3120 = vmul.f32 %v3117, 1.442695
  %v3121 = vpow.pop %v3120
  %v3122 = vmul.f32 %v3118, 1.442695
  %v3123 = vpow.pop %v3122
  %v3124 = vmul.f32 %v3119, 1.442695
  %v3125 = vpow.pop %v3124
  %v3126 = vadd.f32 %v3121, 1.0
  %v3127 = vadd.f32 %v3123, 1.0
  %v3128 = vadd.f32 %v3125, 1.0
  %v3129 = vrcp.pop %v3126
  %v3130 = vmul.f32 1.0, %v3129
  %v3131 = vrcp.pop %v3127
  %v3132 = vmul.f32 1.0, %v3131
  %v3133 = vrcp.pop %v3128
  %v3134 = vmul.f32 1.0, %v3133
  %v3135 = vld [vmem:[%s43] sm:$0xff]
  %v3136 = vld [vmem:[%s43 + $0x8] sm:$0xff]
  %v3137 = vld [vmem:[%s43 + $0x10] sm:$0xff]
  %v3138 = vld [vmem:[%s43 + $0x18] sm:$0xff]
  %v3139 = vld [vmem:[%s45] sm:$0x1]
  %v3141 = vlaneseq
  %v3142 = vshrl.u32 %v3141, 7
  %v3143 = vsub.s32 0, %v3142
  %v3144 = vrot.slane %v3139, %v3143
  %v3147 = vsel %vm131, %v3014, 0
  %v3150 = vsel %vm131, %v3015, 0
  %v3153 = vsel %vm131, %v3016, 0
  %3155 = vmatprep.subr.mxu0 0.0
  %3156 = vmatpush1.msra.mxu0 %v3135
  %3157 = vmatprep.subr.mxu0 0.0
  %3158 = vmatpush1.msra.mxu0 %v3136
  %3159 = vmatprep.subr.mxu0 0.0
  %3160 = vmatpush1.msra.mxu0 %v3137
  %3161 = vmatprep.subr.mxu0 0.0
  %3162 = vmatpush1.msra.mxu0 %v3138
  %3163 = vmatprep.subr.mxu0 0.0
  %3164 = vmatpush1.msra.mxu0 0.0
  %3165 = vmatprep.subr.mxu0 0.0
  %3166 = vmatpush1.msra.mxu0 0.0
  %3167 = vmatprep.subr.mxu0 0.0
  %3168 = vmatpush1.msra.mxu0 0.0
  %3169 = vmatprep.subr.mxu0 0.0
  %3170 = vmatpush1.msra.mxu0 0.0
  %3171 = vmatprep.subr.mxu0 0.0
  %3172 = vmatpush1.msra.mxu0 0.0
  %3173 = vmatprep.subr.mxu0 0.0
  %3174 = vmatpush1.msra.mxu0 0.0
  %3175 = vmatprep.subr.mxu0 0.0
  %3176 = vmatpush1.msra.mxu0 0.0
  %3177 = vmatprep.subr.mxu0 0.0
  %3178 = vmatpush1.msra.mxu0 0.0
  %3179 = vmatprep.subr.mxu0 0.0
  %3180 = vmatpush1.msra.mxu0 0.0
  %3181 = vmatprep.subr.mxu0 0.0
  %3182 = vmatpush1.msra.mxu0 0.0
  %3183 = vmatprep.subr.mxu0 0.0
  %3184 = vmatpush1.msra.mxu0 0.0
  %3185 = vmatprep.subr.mxu0 0.0
  %3186 = vmatpush1.msra.mxu0 0.0
  %3187 = vmatprep.subr.mxu0 0.0
  %3188 = vmatpush1.msra.mxu0 0.0
  %3189 = vmatprep.subr.mxu0 0.0
  %3190 = vmatpush1.msra.mxu0 0.0
  %3191 = vmatprep.subr.mxu0 0.0
  %3192 = vmatpush1.msra.mxu0 0.0
  %3193 = vmatprep.subr.mxu0 0.0
  %3194 = vmatpush1.msra.mxu0 0.0
  %3195 = vmatprep.subr.mxu0 0.0
  %3196 = vmatpush1.msra.mxu0 0.0
  %3197 = vmatprep.subr.mxu0 0.0
  %3198 = vmatpush1.msra.mxu0 0.0
  %3199 = vmatprep.subr.mxu0 0.0
  %3200 = vmatpush1.msra.mxu0 0.0
  %3201 = vmatprep.subr.mxu0 0.0
  %3202 = vmatpush1.msra.mxu0 0.0
  %3203 = vmatprep.subr.mxu0 0.0
  %3204 = vmatpush1.msra.mxu0 0.0
  %3205 = vmatprep.subr.mxu0 0.0
  %3206 = vmatpush1.msra.mxu0 0.0
  %3207 = vmatprep.subr.mxu0 0.0
  %3208 = vmatpush1.msra.mxu0 0.0
  %3209 = vmatprep.subr.mxu0 0.0
  %3210 = vmatpush1.msra.mxu0 0.0
  %3211 = vmatprep.subr.mxu0 0.0
  %3212 = vmatpush1.msra.mxu0 0.0
  %3213 = vmatprep.subr.mxu0 0.0
  %3214 = vmatpush1.msra.mxu0 0.0
  %3215 = vmatprep.subr.mxu0 0.0
  %3216 = vmatpush1.msra.mxu0 0.0
  %3217 = vmatprep.subr.mxu0 0.0
  %3218 = vmatpush1.msra.mxu0 0.0
  %3219 = vmatprep.mubr.f32.mxu0 0.0
  %3220 = vmatmul.mubr.f32.gmra.mrb[0].mxu0 %v3147
  %v3221 = vpop.f32.mrb[0].mxu0
  %v3222 = vadd.f32 %v3144, %v3221
  %v3223 = vpop.f32.mrb[0].mxu0
  %3224 = vmatprep.mubr.f32.mxu0 0.0
  %3225 = vmatmul.mubr.f32.gmra.mrb[0].mxu0 %v3150
  %v3226 = vpop.f32.mrb[0].mxu0
  %v3227 = vadd.f32 %v3144, %v3226
  %v3228 = vpop.f32.mrb[0].mxu0
  %3229 = vmatprep.mubr.f32.mxu0 0.0
  %3230 = vmatmul.mubr.f32.gmra.mrb[0].mxu0 %v3153
  %v3231 = vpop.f32.mrb[0].mxu0
  %v3232 = vadd.f32 %v3144, %v3231
  %v3233 = vpop.f32.mrb[0].mxu0
  %3234 = vdwg.mxu0
  %v3235 = vmul.f32 %v493, %v3130
  %v3236 = vmul.f32 %v494, %v3132
  %v3237 = vmul.f32 %v495, %v3134
  %v3238 = vmul.f32 %v496, %v3130
  %v3239 = vmul.f32 %v497, %v3132
  %v3240 = vmul.f32 %v498, %v3134
  %v3241 = vadd.f32 %v499, %v3222
  %v3242 = vadd.f32 %v500, %v3227
  %v3243 = vadd.f32 %v501, %v3232
  %3247 = vrot.lane.b32.xlu0 %v3222, 111
  %v3248 = vpop.permute.xlu0 %3247
  %3249 = vrot.lane.b32.xlu0 %v3227, 111
  %v3250 = vpop.permute.xlu0 %3249
  %3251 = vrot.lane.b32.xlu0 %v3232, 111
  %v3252 = vpop.permute.xlu0 %3251
  %v3256 = vadd.f32 %v502, %v3248
  %v3257 = vadd.f32 %v503, %v3250
  %v3258 = vadd.f32 %v504, %v3252
  %3262 = vrot.lane.b32.xlu0 %v3241, 17
  %v3263 = vpop.permute.xlu0 %3262
  %3264 = vrot.lane.b32.xlu0 %v3242, 17
  %v3265 = vpop.permute.xlu0 %3264
  %3266 = vrot.lane.b32.xlu0 %v3243, 17
  %v3267 = vpop.permute.xlu0 %3266
  %3274 = vrot.lane.b32.xlu0 %v3238, 34
  %v3275 = vpop.permute.xlu0 %3274
  %3276 = vrot.lane.b32.xlu0 %v3239, 34
  %v3277 = vpop.permute.xlu0 %3276
  %3278 = vrot.lane.b32.xlu0 %v3240, 34
  %v3279 = vpop.permute.xlu0 %3278
  %3286 = vrot.lane.b32.xlu0 %v3256, 51
  %v3287 = vpop.permute.xlu0 %3286
  %3288 = vrot.lane.b32.xlu0 %v3257, 51
  %v3289 = vpop.permute.xlu0 %3288
  %3290 = vrot.lane.b32.xlu0 %v3258, 51
  %v3291 = vpop.permute.xlu0 %3290
  %v3295 = vsel %vm505, %v3235, %v3263
  %v3296 = vsel %vm505, %v3236, %v3265
  %v3297 = vsel %vm505, %v3237, %v3267
  %v3298 = vsel %vm551, %v3295, %v3275
  %v3299 = vsel %vm551, %v3296, %v3277
  %v3300 = vsel %vm551, %v3297, %v3279
  %v3301 = vsel %vm555, %v3298, %v3287
  %v3302 = vsel %vm555, %v3299, %v3289
  %v3303 = vsel %vm555, %v3300, %v3291
  %v3304 = vld [vmem:[%s47] sm:$0xff]
  %v3305 = vld [vmem:[%s47 + $0x8] sm:$0xff]
  %v3306 = vld [vmem:[%s47 + $0x10] sm:$0xff]
  %v3307 = vld [vmem:[%s47 + $0x18] sm:$0xff]
  %v3308 = vld [vmem:[%s47 + $0x20] sm:$0xff]
  %v3309 = vld [vmem:[%s47 + $0x28] sm:$0xff]
  %v3310 = vld [vmem:[%s47 + $0x30] sm:$0xff]
  %v3311 = vld [vmem:[%s47 + $0x38] sm:$0xff]
  %v3312 = vld [vmem:[%s47 + $0x40] sm:$0xff]
  %v3313 = vld [vmem:[%s47 + $0x48] sm:$0xff]
  %v3314 = vld [vmem:[%s47 + $0x50] sm:$0xff]
  %v3315 = vld [vmem:[%s47 + $0x58] sm:$0xff]
  %v3316 = vld [vmem:[%s47 + $0x60] sm:$0xff]
  %v3317 = vld [vmem:[%s47 + $0x68] sm:$0xff]
  %v3318 = vld [vmem:[%s47 + $0x70] sm:$0xff]
  %v3319 = vld [vmem:[%s47 + $0x78] sm:$0xff]
  %v3320 = vld [vmem:[%s47 + $0x80] sm:$0xff]
  %v3321 = vld [vmem:[%s47 + $0x88] sm:$0xff]
  %v3322 = vld [vmem:[%s47 + $0x90] sm:$0xff]
  %v3323 = vld [vmem:[%s47 + $0x98] sm:$0xff]
  %v3324 = vld [vmem:[%s47 + $0xa0] sm:$0xff]
  %v3325 = vld [vmem:[%s47 + $0xa8] sm:$0xff]
  %v3326 = vld [vmem:[%s47 + $0xb0] sm:$0xff]
  %v3327 = vld [vmem:[%s47 + $0xb8] sm:$0xff]
  %v3328 = vld [vmem:[%s47 + $0xc0] sm:$0xf]
  %v3329 = vld [vmem:[%s47 + $0xc8] sm:$0xf]
  %v3330 = vld [vmem:[%s47 + $0xd0] sm:$0xf]
  %v3331 = vld [vmem:[%s49] sm:$0x7]
  %v3333 = vlaneseq
  %v3334 = vshrl.u32 %v3333, 7
  %v3335 = vsub.s32 0, %v3334
  %v3336 = vrot.slane %v3331, %v3335
  %v3337 = vlaneseq
  %v3338 = vshrl.u32 %v3337, 7
  %v3339 = vsub.s32 1, %v3338
  %v3340 = vrot.slane %v3331, %v3339
  %v3341 = vlaneseq
  %v3342 = vshrl.u32 %v3341, 7
  %v3343 = vsub.s32 2, %v3342
  %v3344 = vrot.slane %v3331, %v3343
  %v3349 = vsel %vm575, %v3301, 0
  %v3352 = vsel %vm575, %v3302, 0
  %v3355 = vsel %vm575, %v3303, 0
  %v3358 = vsel %vm585, %v3328, 0
  %v3361 = vsel %vm585, %v3329, 0
  %v3364 = vsel %vm585, %v3330, 0
  %3366 = vmatprep.subr.mxu0 %v3305
  %3367 = vmatpush1.msra.mxu0 %v3304
  %3368 = vmatprep.subr.mxu0 %v3308
  %3369 = vmatpush1.msra.mxu0 %v3307
  %3370 = vmatprep.subr.mxu0 %v3311
  %3371 = vmatpush1.msra.mxu0 %v3310
  %3372 = vmatprep.subr.mxu0 %v3314
  %3373 = vmatpush1.msra.mxu0 %v3313
  %3374 = vmatprep.subr.mxu0 %v3317
  %3375 = vmatpush1.msra.mxu0 %v3316
  %3376 = vmatprep.subr.mxu0 %v3320
  %3377 = vmatpush1.msra.mxu0 %v3319
  %3378 = vmatprep.subr.mxu0 %v3323
  %3379 = vmatpush1.msra.mxu0 %v3322
  %3380 = vmatprep.subr.mxu0 %v3326
  %3381 = vmatpush1.msra.mxu0 %v3325
  %3382 = vmatprep.subr.mxu0 %v3361
  %3383 = vmatpush1.msra.mxu0 %v3358
  %3384 = vmatprep.subr.mxu0 0.0
  %3385 = vmatpush1.msra.mxu0 0.0
  %3386 = vmatprep.subr.mxu0 0.0
  %3387 = vmatpush1.msra.mxu0 0.0
  %3388 = vmatprep.subr.mxu0 0.0
  %3389 = vmatpush1.msra.mxu0 0.0
  %3390 = vmatprep.subr.mxu0 0.0
  %3391 = vmatpush1.msra.mxu0 0.0
  %3392 = vmatprep.subr.mxu0 0.0
  %3393 = vmatpush1.msra.mxu0 0.0
  %3394 = vmatprep.subr.mxu0 0.0
  %3395 = vmatpush1.msra.mxu0 0.0
  %3396 = vmatprep.subr.mxu0 0.0
  %3397 = vmatpush1.msra.mxu0 0.0
  %3398 = vmatprep.subr.mxu0 0.0
  %3399 = vmatpush1.msra.mxu0 0.0
  %3400 = vmatprep.subr.mxu0 0.0
  %3401 = vmatpush1.msra.mxu0 0.0
  %3402 = vmatprep.subr.mxu0 0.0
  %3403 = vmatpush1.msra.mxu0 0.0
  %3404 = vmatprep.subr.mxu0 0.0
  %3405 = vmatpush1.msra.mxu0 0.0
  %3406 = vmatprep.subr.mxu0 0.0
  %3407 = vmatpush1.msra.mxu0 0.0
  %3408 = vmatprep.subr.mxu0 0.0
  %3409 = vmatpush1.msra.mxu0 0.0
  %3410 = vmatprep.subr.mxu0 0.0
  %3411 = vmatpush1.msra.mxu0 0.0
  %3412 = vmatprep.subr.mxu0 0.0
  %3413 = vmatpush1.msra.mxu0 0.0
  %3414 = vmatprep.subr.mxu0 0.0
  %3415 = vmatpush1.msra.mxu0 0.0
  %3416 = vmatprep.subr.mxu0 0.0
  %3417 = vmatpush1.msra.mxu0 0.0
  %3418 = vmatprep.subr.mxu0 0.0
  %3419 = vmatpush1.msra.mxu0 0.0
  %3420 = vmatprep.subr.mxu0 0.0
  %3421 = vmatpush1.msra.mxu0 0.0
  %3422 = vmatprep.subr.mxu0 0.0
  %3423 = vmatpush1.msra.mxu0 0.0
  %3424 = vmatprep.subr.mxu0 0.0
  %3425 = vmatpush1.msra.mxu0 0.0
  %3426 = vmatprep.subr.mxu0 0.0
  %3427 = vmatpush1.msra.mxu0 0.0
  %3428 = vmatprep.subr.mxu0 0.0
  %3429 = vmatpush1.msra.mxu0 0.0
  %3430 = vmatprep.mubr.f32.mxu0 0.0
  %3431 = vmatmul.mubr.f32.gmra.mrb[0].mxu0 %v3349
  %v3432 = vpop.f32.mrb[0].mxu0
  %v3433 = vadd.f32 %v3336, %v3432
  %v3434 = vpop.f32.mrb[0].mxu0
  %v3435 = vadd.f32 %v3340, %v3434
  %3436 = vmatprep.mubr.f32.mxu0 0.0
  %3437 = vmatmul.mubr.f32.gmra.mrb[0].mxu0 %v3352
  %v3438 = vpop.f32.mrb[0].mxu0
  %v3439 = vadd.f32 %v3336, %v3438
  %v3440 = vpop.f32.mrb[0].mxu0
  %v3441 = vadd.f32 %v3340, %v3440
  %3442 = vmatprep.mubr.f32.mxu0 0.0
  %3443 = vmatmul.mubr.f32.gmra.mrb[0].mxu0 %v3355
  %v3444 = vpop.f32.mrb[0].mxu0
  %v3445 = vadd.f32 %v3336, %v3444
  %v3446 = vpop.f32.mrb[0].mxu0
  %v3447 = vadd.f32 %v3340, %v3446
  %3448 = vdwg.mxu0
  %3449 = vmatprep.subr.mxu0 0.0
  %3450 = vmatpush1.msra.mxu0 %v3306
  %3451 = vmatprep.subr.mxu0 0.0
  %3452 = vmatpush1.msra.mxu0 %v3309
  %3453 = vmatprep.subr.mxu0 0.0
  %3454 = vmatpush1.msra.mxu0 %v3312
  %3455 = vmatprep.subr.mxu0 0.0
  %3456 = vmatpush1.msra.mxu0 %v3315
  %3457 = vmatprep.subr.mxu0 0.0
  %3458 = vmatpush1.msra.mxu0 %v3318
  %3459 = vmatprep.subr.mxu0 0.0
  %3460 = vmatpush1.msra.mxu0 %v3321
  %3461 = vmatprep.subr.mxu0 0.0
  %3462 = vmatpush1.msra.mxu0 %v3324
  %3463 = vmatprep.subr.mxu0 0.0
  %3464 = vmatpush1.msra.mxu0 %v3327
  %3465 = vmatprep.subr.mxu0 0.0
  %3466 = vmatpush1.msra.mxu0 %v3364
  %3467 = vmatprep.subr.mxu0 0.0
  %3468 = vmatpush1.msra.mxu0 0.0
  %3469 = vmatprep.subr.mxu0 0.0
  %3470 = vmatpush1.msra.mxu0 0.0
  %3471 = vmatprep.subr.mxu0 0.0
  %3472 = vmatpush1.msra.mxu0 0.0
  %3473 = vmatprep.subr.mxu0 0.0
  %3474 = vmatpush1.msra.mxu0 0.0
  %3475 = vmatprep.subr.mxu0 0.0
  %3476 = vmatpush1.msra.mxu0 0.0
  %3477 = vmatprep.subr.mxu0 0.0
  %3478 = vmatpush1.msra.mxu0 0.0
  %3479 = vmatprep.subr.mxu0 0.0
  %3480 = vmatpush1.msra.mxu0 0.0
  %3481 = vmatprep.subr.mxu0 0.0
  %3482 = vmatpush1.msra.mxu0 0.0
  %3483 = vmatprep.subr.mxu0 0.0
  %3484 = vmatpush1.msra.mxu0 0.0
  %3485 = vmatprep.subr.mxu0 0.0
  %3486 = vmatpush1.msra.mxu0 0.0
  %3487 = vmatprep.subr.mxu0 0.0
  %3488 = vmatpush1.msra.mxu0 0.0
  %3489 = vmatprep.subr.mxu0 0.0
  %3490 = vmatpush1.msra.mxu0 0.0
  %3491 = vmatprep.subr.mxu0 0.0
  %3492 = vmatpush1.msra.mxu0 0.0
  %3493 = vmatprep.subr.mxu0 0.0
  %3494 = vmatpush1.msra.mxu0 0.0
  %3495 = vmatprep.subr.mxu0 0.0
  %3496 = vmatpush1.msra.mxu0 0.0
  %3497 = vmatprep.subr.mxu0 0.0
  %3498 = vmatpush1.msra.mxu0 0.0
  %3499 = vmatprep.subr.mxu0 0.0
  %3500 = vmatpush1.msra.mxu0 0.0
  %3501 = vmatprep.subr.mxu0 0.0
  %3502 = vmatpush1.msra.mxu0 0.0
  %3503 = vmatprep.subr.mxu0 0.0
  %3504 = vmatpush1.msra.mxu0 0.0
  %3505 = vmatprep.subr.mxu0 0.0
  %3506 = vmatpush1.msra.mxu0 0.0
  %3507 = vmatprep.subr.mxu0 0.0
  %3508 = vmatpush1.msra.mxu0 0.0
  %3509 = vmatprep.subr.mxu0 0.0
  %3510 = vmatpush1.msra.mxu0 0.0
  %3511 = vmatprep.subr.mxu0 0.0
  %3512 = vmatpush1.msra.mxu0 0.0
  %3513 = vmatprep.mubr.f32.mxu0 0.0
  %3514 = vmatmul.mubr.f32.gmra.mrb[0].mxu0 %v3349
  %v3515 = vpop.f32.mrb[0].mxu0
  %v3516 = vadd.f32 %v3344, %v3515
  %v3517 = vpop.f32.mrb[0].mxu0
  %3518 = vmatprep.mubr.f32.mxu0 0.0
  %3519 = vmatmul.mubr.f32.gmra.mrb[0].mxu0 %v3352
  %v3520 = vpop.f32.mrb[0].mxu0
  %v3521 = vadd.f32 %v3344, %v3520
  %v3522 = vpop.f32.mrb[0].mxu0
  %3523 = vmatprep.mubr.f32.mxu0 0.0
  %3524 = vmatmul.mubr.f32.gmra.mrb[0].mxu0 %v3355
  %v3525 = vpop.f32.mrb[0].mxu0
  %v3526 = vadd.f32 %v3344, %v3525
  %v3527 = vpop.f32.mrb[0].mxu0
  %3528 = vdwg.mxu0
  %3529 = vst [vmem:[#allocation3] sm:$0xff] 0.0
  %3530 = vst [vmem:[#allocation3 + $0x8] sm:$0xff] 0.0
  %3531 = vst [vmem:[#allocation3 + $0x10] sm:$0xff] 0.0
  %v3532 = vld [vmem:[%s51] sm:$0xff]
  %v3533 = vld [vmem:[%s51 + $0x8] sm:$0xff]
  %v3534 = vld [vmem:[%s51 + $0x10] sm:$0xff]
  %v3535 = vld [vmem:[%s51 + $0x18] sm:$0xff]
  %v3536 = vld [vmem:[%s51 + $0x20] sm:$0xff]
  %v3537 = vld [vmem:[%s51 + $0x28] sm:$0xff]
  %v3538 = vld [vmem:[%s51 + $0x30] sm:$0xff]
  %v3539 = vld [vmem:[%s51 + $0x38] sm:$0xff]
  %v3540 = vld [vmem:[%s51 + $0x40] sm:$0xff]
  %v3541 = vld [vmem:[%s51 + $0x48] sm:$0xff]
  %v3542 = vld [vmem:[%s51 + $0x50] sm:$0xff]
  %v3543 = vld [vmem:[%s51 + $0x58] sm:$0xff]
  %v3544 = vld [vmem:[%s51 + $0x60] sm:$0xff]
  %v3545 = vld [vmem:[%s51 + $0x68] sm:$0xff]
  %v3546 = vld [vmem:[%s51 + $0x70] sm:$0xff]
  %v3547 = vld [vmem:[%s51 + $0x78] sm:$0xff]
  %v3548 = vld [vmem:[%s51 + $0x80] sm:$0xff]
  %v3549 = vld [vmem:[%s51 + $0x88] sm:$0xff]
  %v3550 = vld [vmem:[%s51 + $0x90] sm:$0xff]
  %v3551 = vld [vmem:[%s51 + $0x98] sm:$0xff]
  %v3552 = vld [vmem:[%s51 + $0xa0] sm:$0xff]
  %v3553 = vld [vmem:[%s51 + $0xa8] sm:$0xff]
  %v3554 = vld [vmem:[%s51 + $0xb0] sm:$0xff]
  %v3555 = vld [vmem:[%s51 + $0xb8] sm:$0xff]
  %v3556 = vld [vmem:[%s51 + $0xc0] sm:$0xff]
  %v3557 = vld [vmem:[%s51 + $0xc8] sm:$0xff]
  %v3558 = vld [vmem:[%s51 + $0xd0] sm:$0xff]
  %v3559 = vld [vmem:[%s51 + $0xd8] sm:$0xff]
  %v3560 = vld [vmem:[%s51 + $0xe0] sm:$0xff]
  %v3561 = vld [vmem:[%s51 + $0xe8] sm:$0xff]
  %v3562 = vld [vmem:[%s51 + $0xf0] sm:$0xff]
  %v3563 = vld [vmem:[%s51 + $0xf8] sm:$0xff]
  %v3564 = vld [vmem:[%s51 + $0x100] sm:$0xff]
  %v3565 = vld [vmem:[%s51 + $0x108] sm:$0xff]
  %v3566 = vld [vmem:[%s51 + $0x110] sm:$0xff]
  %v3567 = vld [vmem:[%s51 + $0x118] sm:$0xff]
  %v3568 = vld [vmem:[%s51 + $0x120] sm:$0xff]
  %v3569 = vld [vmem:[%s51 + $0x128] sm:$0xff]
  %v3570 = vld [vmem:[%s51 + $0x130] sm:$0xff]
  %v3571 = vld [vmem:[%s51 + $0x138] sm:$0xff]
  %v3572 = vld [vmem:[%s51 + $0x140] sm:$0xff]
  %v3573 = vld [vmem:[%s51 + $0x148] sm:$0xff]
  %v3574 = vld [vmem:[%s51 + $0x150] sm:$0xff]
  %v3575 = vld [vmem:[%s51 + $0x158] sm:$0xff]
  %v3576 = vld [vmem:[%s51 + $0x160] sm:$0xff]
  %v3577 = vld [vmem:[%s51 + $0x168] sm:$0xff]
  %v3578 = vld [vmem:[%s51 + $0x170] sm:$0xff]
  %v3579 = vld [vmem:[%s51 + $0x178] sm:$0xff]
  %v3580 = vld [vmem:[%s53] sm:$0x7]
  %v3582 = vlaneseq
  %v3583 = vshrl.u32 %v3582, 7
  %v3584 = vsub.s32 0, %v3583
  %v3585 = vrot.slane %v3580, %v3584
  %v3586 = vlaneseq
  %v3587 = vshrl.u32 %v3586, 7
  %v3588 = vsub.s32 1, %v3587
  %v3589 = vrot.slane %v3580, %v3588
  %v3590 = vlaneseq
  %v3591 = vshrl.u32 %v3590, 7
  %v3592 = vsub.s32 2, %v3591
  %v3593 = vrot.slane %v3580, %v3592
  %3597 = vmatprep.subr.mxu0 %v3533
  %3598 = vmatpush1.msra.mxu0 %v3532
  %3599 = vmatprep.subr.mxu0 %v3536
  %3600 = vmatpush1.msra.mxu0 %v3535
  %3601 = vmatprep.subr.mxu0 %v3539
  %3602 = vmatpush1.msra.mxu0 %v3538
  %3603 = vmatprep.subr.mxu0 %v3542
  %3604 = vmatpush1.msra.mxu0 %v3541
  %3605 = vmatprep.subr.mxu0 %v3545
  %3606 = vmatpush1.msra.mxu0 %v3544
  %3607 = vmatprep.subr.mxu0 %v3548
  %3608 = vmatpush1.msra.mxu0 %v3547
  %3609 = vmatprep.subr.mxu0 %v3551
  %3610 = vmatpush1.msra.mxu0 %v3550
  %3611 = vmatprep.subr.mxu0 %v3554
  %3612 = vmatpush1.msra.mxu0 %v3553
  %3613 = vmatprep.subr.mxu0 %v3557
  %3614 = vmatpush1.msra.mxu0 %v3556
  %3615 = vmatprep.subr.mxu0 %v3560
  %3616 = vmatpush1.msra.mxu0 %v3559
  %3617 = vmatprep.subr.mxu0 %v3563
  %3618 = vmatpush1.msra.mxu0 %v3562
  %3619 = vmatprep.subr.mxu0 %v3566
  %3620 = vmatpush1.msra.mxu0 %v3565
  %3621 = vmatprep.subr.mxu0 %v3569
  %3622 = vmatpush1.msra.mxu0 %v3568
  %3623 = vmatprep.subr.mxu0 %v3572
  %3624 = vmatpush1.msra.mxu0 %v3571
  %3625 = vmatprep.subr.mxu0 %v3575
  %3626 = vmatpush1.msra.mxu0 %v3574
  %3627 = vmatprep.subr.mxu0 %v3578
  %3628 = vmatpush1.msra.mxu0 %v3577
  %3629 = vmatprep.subr.mxu0 0.0
  %3630 = vmatpush1.msra.mxu0 0.0
  %3631 = vmatprep.subr.mxu0 0.0
  %3632 = vmatpush1.msra.mxu0 0.0
  %3633 = vmatprep.subr.mxu0 0.0
  %3634 = vmatpush1.msra.mxu0 0.0
  %3635 = vmatprep.subr.mxu0 0.0
  %3636 = vmatpush1.msra.mxu0 0.0
  %3637 = vmatprep.subr.mxu0 0.0
  %3638 = vmatpush1.msra.mxu0 0.0
  %3639 = vmatprep.subr.mxu0 0.0
  %3640 = vmatpush1.msra.mxu0 0.0
  %3641 = vmatprep.subr.mxu0 0.0
  %3642 = vmatpush1.msra.mxu0 0.0
  %3643 = vmatprep.subr.mxu0 0.0
  %3644 = vmatpush1.msra.mxu0 0.0
  %3645 = vmatprep.subr.mxu0 0.0
  %3646 = vmatpush1.msra.mxu0 0.0
  %3647 = vmatprep.subr.mxu0 0.0
  %3648 = vmatpush1.msra.mxu0 0.0
  %3649 = vmatprep.subr.mxu0 0.0
  %3650 = vmatpush1.msra.mxu0 0.0
  %3651 = vmatprep.subr.mxu0 0.0
  %3652 = vmatpush1.msra.mxu0 0.0
  %3653 = vmatprep.subr.mxu0 0.0
  %3654 = vmatpush1.msra.mxu0 0.0
  %3655 = vmatprep.subr.mxu0 0.0
  %3656 = vmatpush1.msra.mxu0 0.0
  %3657 = vmatprep.subr.mxu0 0.0
  %3658 = vmatpush1.msra.mxu0 0.0
  %3659 = vmatprep.subr.mxu0 0.0
  %3660 = vmatpush1.msra.mxu0 0.0
  %3661 = vmatprep.mubr.f32.mxu0 0.0
  %3662 = vmatmul.mubr.f32.gmra.mrb[0].mxu0 0.0
  %v3663 = vpop.f32.mrb[0].mxu0
  %v3664 = vadd.f32 %v3585, %v3663
  %v3665 = vpop.f32.mrb[0].mxu0
  %v3666 = vadd.f32 %v3589, %v3665
  %3667 = vdwg.mxu0
  %3668 = vmatprep.subr.mxu0 0.0
  %3669 = vmatpush1.msra.mxu0 %v3534
  %3670 = vmatprep.subr.mxu0 0.0
  %3671 = vmatpush1.msra.mxu0 %v3537
  %3672 = vmatprep.subr.mxu0 0.0
  %3673 = vmatpush1.msra.mxu0 %v3540
  %3674 = vmatprep.subr.mxu0 0.0
  %3675 = vmatpush1.msra.mxu0 %v3543
  %3676 = vmatprep.subr.mxu0 0.0
  %3677 = vmatpush1.msra.mxu0 %v3546
  %3678 = vmatprep.subr.mxu0 0.0
  %3679 = vmatpush1.msra.mxu0 %v3549
  %3680 = vmatprep.subr.mxu0 0.0
  %3681 = vmatpush1.msra.mxu0 %v3552
  %3682 = vmatprep.subr.mxu0 0.0
  %3683 = vmatpush1.msra.mxu0 %v3555
  %3684 = vmatprep.subr.mxu0 0.0
  %3685 = vmatpush1.msra.mxu0 %v3558
  %3686 = vmatprep.subr.mxu0 0.0
  %3687 = vmatpush1.msra.mxu0 %v3561
  %3688 = vmatprep.subr.mxu0 0.0
  %3689 = vmatpush1.msra.mxu0 %v3564
  %3690 = vmatprep.subr.mxu0 0.0
  %3691 = vmatpush1.msra.mxu0 %v3567
  %3692 = vmatprep.subr.mxu0 0.0
  %3693 = vmatpush1.msra.mxu0 %v3570
  %3694 = vmatprep.subr.mxu0 0.0
  %3695 = vmatpush1.msra.mxu0 %v3573
  %3696 = vmatprep.subr.mxu0 0.0
  %3697 = vmatpush1.msra.mxu0 %v3576
  %3698 = vmatprep.subr.mxu0 0.0
  %3699 = vmatpush1.msra.mxu0 %v3579
  %3700 = vmatprep.subr.mxu0 0.0
  %3701 = vmatpush1.msra.mxu0 0.0
  %3702 = vmatprep.subr.mxu0 0.0
  %3703 = vmatpush1.msra.mxu0 0.0
  %3704 = vmatprep.subr.mxu0 0.0
  %3705 = vmatpush1.msra.mxu0 0.0
  %3706 = vmatprep.subr.mxu0 0.0
  %3707 = vmatpush1.msra.mxu0 0.0
  %3708 = vmatprep.subr.mxu0 0.0
  %3709 = vmatpush1.msra.mxu0 0.0
  %3710 = vmatprep.subr.mxu0 0.0
  %3711 = vmatpush1.msra.mxu0 0.0
  %3712 = vmatprep.subr.mxu0 0.0
  %3713 = vmatpush1.msra.mxu0 0.0
  %3714 = vmatprep.subr.mxu0 0.0
  %3715 = vmatpush1.msra.mxu0 0.0
  %3716 = vmatprep.subr.mxu0 0.0
  %3717 = vmatpush1.msra.mxu0 0.0
  %3718 = vmatprep.subr.mxu0 0.0
  %3719 = vmatpush1.msra.mxu0 0.0
  %3720 = vmatprep.subr.mxu0 0.0
  %3721 = vmatpush1.msra.mxu0 0.0
  %3722 = vmatprep.subr.mxu0 0.0
  %3723 = vmatpush1.msra.mxu0 0.0
  %3724 = vmatprep.subr.mxu0 0.0
  %3725 = vmatpush1.msra.mxu0 0.0
  %3726 = vmatprep.subr.mxu0 0.0
  %3727 = vmatpush1.msra.mxu0 0.0
  %3728 = vmatprep.subr.mxu0 0.0
  %3729 = vmatpush1.msra.mxu0 0.0
  %3730 = vmatprep.subr.mxu0 0.0
  %3731 = vmatpush1.msra.mxu0 0.0
  %3732 = vmatprep.mubr.f32.mxu0 0.0
  %3733 = vmatmul.mubr.f32.gmra.mrb[0].mxu0 0.0
  %v3734 = vpop.f32.mrb[0].mxu0
  %v3735 = vadd.f32 %v3593, %v3734
  %v3736 = vpop.f32.mrb[0].mxu0
  %3737 = vdwg.mxu0
  %v3738 = vadd.f32 %v3433, %v3664
  %v3739 = vxor.u32 %v3738, 2147483648
  %v3740 = vmul.f32 %v3739, 1.442695
  %v3741 = vpow.pop %v3740
  %v3742 = vadd.f32 %v3741, 1.0
  %v3743 = vrcp.pop %v3742
  %v3744 = vmul.f32 1.0, %v3743
  %v3745 = vadd.f32 %v3435, %v3666
  %v3746 = vxor.u32 %v3745, 2147483648
  %v3747 = vmul.f32 %v3746, 1.442695
  %v3748 = vpow.pop %v3747
  %v3749 = vadd.f32 %v3748, 1.0
  %v3750 = vrcp.pop %v3749
  %v3751 = vmul.f32 1.0, %v3750
  %v3752 = vmul.f32 %v3744, %v3735
  %v3753 = vadd.f32 %v3516, %v3752
  %v3754 = vtanh.pop %v3753
  %v3755 = vsub.f32 1.0, %v3751
  %v3756 = vmul.f32 %v3755, %v3754
  %v3757 = vmul.f32 %v3751, 0.0
  %v3758 = vadd.f32 %v3756, %v3757
  %3759 = vst [vmem:[#allocation3] sm:$0x3] %v3758
  %3760 = vmatprep.subr.mxu0 %v3533
  %3761 = vmatpush1.msra.mxu0 %v3532
  %3762 = vmatprep.subr.mxu0 %v3536
  %3763 = vmatpush1.msra.mxu0 %v3535
  %3764 = vmatprep.subr.mxu0 %v3539
  %3765 = vmatpush1.msra.mxu0 %v3538
  %3766 = vmatprep.subr.mxu0 %v3542
  %3767 = vmatpush1.msra.mxu0 %v3541
  %3768 = vmatprep.subr.mxu0 %v3545
  %3769 = vmatpush1.msra.mxu0 %v3544
  %3770 = vmatprep.subr.mxu0 %v3548
  %3771 = vmatpush1.msra.mxu0 %v3547
  %3772 = vmatprep.subr.mxu0 %v3551
  %3773 = vmatpush1.msra.mxu0 %v3550
  %3774 = vmatprep.subr.mxu0 %v3554
  %3775 = vmatpush1.msra.mxu0 %v3553
  %3776 = vmatprep.subr.mxu0 %v3557
  %3777 = vmatpush1.msra.mxu0 %v3556
  %3778 = vmatprep.subr.mxu0 %v3560
  %3779 = vmatpush1.msra.mxu0 %v3559
  %3780 = vmatprep.subr.mxu0 %v3563
  %3781 = vmatpush1.msra.mxu0 %v3562
  %3782 = vmatprep.subr.mxu0 %v3566
  %3783 = vmatpush1.msra.mxu0 %v3565
  %3784 = vmatprep.subr.mxu0 %v3569
  %3785 = vmatpush1.msra.mxu0 %v3568
  %3786 = vmatprep.subr.mxu0 %v3572
  %3787 = vmatpush1.msra.mxu0 %v3571
  %3788 = vmatprep.subr.mxu0 %v3575
  %3789 = vmatpush1.msra.mxu0 %v3574
  %3790 = vmatprep.subr.mxu0 %v3578
  %3791 = vmatpush1.msra.mxu0 %v3577
  %3792 = vmatprep.subr.mxu0 0.0
  %3793 = vmatpush1.msra.mxu0 0.0
  %3794 = vmatprep.subr.mxu0 0.0
  %3795 = vmatpush1.msra.mxu0 0.0
  %3796 = vmatprep.subr.mxu0 0.0
  %3797 = vmatpush1.msra.mxu0 0.0
  %3798 = vmatprep.subr.mxu0 0.0
  %3799 = vmatpush1.msra.mxu0 0.0
  %3800 = vmatprep.subr.mxu0 0.0
  %3801 = vmatpush1.msra.mxu0 0.0
  %3802 = vmatprep.subr.mxu0 0.0
  %3803 = vmatpush1.msra.mxu0 0.0
  %3804 = vmatprep.subr.mxu0 0.0
  %3805 = vmatpush1.msra.mxu0 0.0
  %3806 = vmatprep.subr.mxu0 0.0
  %3807 = vmatpush1.msra.mxu0 0.0
  %3808 = vmatprep.subr.mxu0 0.0
  %3809 = vmatpush1.msra.mxu0 0.0
  %3810 = vmatprep.subr.mxu0 0.0
  %3811 = vmatpush1.msra.mxu0 0.0
  %3812 = vmatprep.subr.mxu0 0.0
  %3813 = vmatpush1.msra.mxu0 0.0
  %3814 = vmatprep.subr.mxu0 0.0
  %3815 = vmatpush1.msra.mxu0 0.0
  %3816 = vmatprep.subr.mxu0 0.0
  %3817 = vmatpush1.msra.mxu0 0.0
  %3818 = vmatprep.subr.mxu0 0.0
  %3819 = vmatpush1.msra.mxu0 0.0
  %3820 = vmatprep.subr.mxu0 0.0
  %3821 = vmatpush1.msra.mxu0 0.0
  %3822 = vmatprep.subr.mxu0 0.0
  %3823 = vmatpush1.msra.mxu0 0.0
  %3824 = vmatprep.mubr.f32.mxu0 0.0
  %3825 = vmatmul.mubr.f32.gmra.mrb[0].mxu0 %v3758
  %v3826 = vpop.f32.mrb[0].mxu0
  %v3827 = vadd.f32 %v3585, %v3826
  %v3828 = vpop.f32.mrb[0].mxu0
  %v3829 = vadd.f32 %v3589, %v3828
  %3830 = vdwg.mxu0
  %3831 = vmatprep.subr.mxu0 0.0
  %3832 = vmatpush1.msra.mxu0 %v3534
  %3833 = vmatprep.subr.mxu0 0.0
  %3834 = vmatpush1.msra.mxu0 %v3537
  %3835 = vmatprep.subr.mxu0 0.0
  %3836 = vmatpush1.msra.mxu0 %v3540
  %3837 = vmatprep.subr.mxu0 0.0
  %3838 = vmatpush1.msra.mxu0 %v3543
  %3839 = vmatprep.subr.mxu0 0.0
  %3840 = vmatpush1.msra.mxu0 %v3546
  %3841 = vmatprep.subr.mxu0 0.0
  %3842 = vmatpush1.msra.mxu0 %v3549
  %3843 = vmatprep.subr.mxu0 0.0
  %3844 = vmatpush1.msra.mxu0 %v3552
  %3845 = vmatprep.subr.mxu0 0.0
  %3846 = vmatpush1.msra.mxu0 %v3555
  %3847 = vmatprep.subr.mxu0 0.0
  %3848 = vmatpush1.msra.mxu0 %v3558
  %3849 = vmatprep.subr.mxu0 0.0
  %3850 = vmatpush1.msra.mxu0 %v3561
  %3851 = vmatprep.subr.mxu0 0.0
  %3852 = vmatpush1.msra.mxu0 %v3564
  %3853 = vmatprep.subr.mxu0 0.0
  %3854 = vmatpush1.msra.mxu0 %v3567
  %3855 = vmatprep.subr.mxu0 0.0
  %3856 = vmatpush1.msra.mxu0 %v3570
  %3857 = vmatprep.subr.mxu0 0.0
  %3858 = vmatpush1.msra.mxu0 %v3573
  %3859 = vmatprep.subr.mxu0 0.0
  %3860 = vmatpush1.msra.mxu0 %v3576
  %3861 = vmatprep.subr.mxu0 0.0
  %3862 = vmatpush1.msra.mxu0 %v3579
  %3863 = vmatprep.subr.mxu0 0.0
  %3864 = vmatpush1.msra.mxu0 0.0
  %3865 = vmatprep.subr.mxu0 0.0
  %3866 = vmatpush1.msra.mxu0 0.0
  %3867 = vmatprep.subr.mxu0 0.0
  %3868 = vmatpush1.msra.mxu0 0.0
  %3869 = vmatprep.subr.mxu0 0.0
  %3870 = vmatpush1.msra.mxu0 0.0
  %3871 = vmatprep.subr.mxu0 0.0
  %3872 = vmatpush1.msra.mxu0 0.0
  %3873 = vmatprep.subr.mxu0 0.0
  %3874 = vmatpush1.msra.mxu0 0.0
  %3875 = vmatprep.subr.mxu0 0.0
  %3876 = vmatpush1.msra.mxu0 0.0
  %3877 = vmatprep.subr.mxu0 0.0
  %3878 = vmatpush1.msra.mxu0 0.0
  %3879 = vmatprep.subr.mxu0 0.0
  %3880 = vmatpush1.msra.mxu0 0.0
  %3881 = vmatprep.subr.mxu0 0.0
  %3882 = vmatpush1.msra.mxu0 0.0
  %3883 = vmatprep.subr.mxu0 0.0
  %3884 = vmatpush1.msra.mxu0 0.0
  %3885 = vmatprep.subr.mxu0 0.0
  %3886 = vmatpush1.msra.mxu0 0.0
  %3887 = vmatprep.subr.mxu0 0.0
  %3888 = vmatpush1.msra.mxu0 0.0
  %3889 = vmatprep.subr.mxu0 0.0
  %3890 = vmatpush1.msra.mxu0 0.0
  %3891 = vmatprep.subr.mxu0 0.0
  %3892 = vmatpush1.msra.mxu0 0.0
  %3893 = vmatprep.subr.mxu0 0.0
  %3894 = vmatpush1.msra.mxu0 0.0
  %3895 = vmatprep.mubr.f32.mxu0 0.0
  %3896 = vmatmul.mubr.f32.gmra.mrb[0].mxu0 %v3758
  %v3897 = vpop.f32.mrb[0].mxu0
  %v3898 = vadd.f32 %v3593, %v3897
  %v3899 = vpop.f32.mrb[0].mxu0
  %3900 = vdwg.mxu0
  %v3902 = vrot.slane %v3827, 6
  %v3904 = vadd.f32 %v3433, %v3902
  %v3905 = vxor.u32 %v3904, 2147483648
  %v3906 = vmul.f32 %v3905, 1.442695
  %v3907 = vpow.pop %v3906
  %v3908 = vadd.f32 %v3907, 1.0
  %v3909 = vrcp.pop %v3908
  %v3910 = vmul.f32 1.0, %v3909
  %v3912 = vrot.slane %v3829, 6
  %v3914 = vadd.f32 %v3435, %v3912
  %v3915 = vxor.u32 %v3914, 2147483648
  %v3916 = vmul.f32 %v3915, 1.442695
  %v3917 = vpow.pop %v3916
  %v3918 = vadd.f32 %v3917, 1.0
  %v3919 = vrcp.pop %v3918
  %v3920 = vmul.f32 1.0, %v3919
  %v3922 = vrot.slane %v3898, 6
  %v3924 = vmul.f32 %v3910, %v3922
  %v3925 = vadd.f32 %v3516, %v3924
  %v3926 = vtanh.pop %v3925
  %v3927 = vsub.f32 1.0, %v3920
  %v3928 = vmul.f32 %v3927, %v3926
  %v3930 = vrot.slane %v3758, 6
  %v3932 = vmul.f32 %v3920, %v3930
  %v3933 = vadd.f32 %v3928, %v3932
  %3934 = vst [vmem:[#allocation3] sm:$0xc] %v3933
  %v3936 = vrot.slane %v3933, 2
  %3938 = vmatprep.subr.mxu0 %v3533
  %3939 = vmatpush1.msra.mxu0 %v3532
  %3940 = vmatprep.subr.mxu0 %v3536
  %3941 = vmatpush1.msra.mxu0 %v3535
  %3942 = vmatprep.subr.mxu0 %v3539
  %3943 = vmatpush1.msra.mxu0 %v3538
  %3944 = vmatprep.subr.mxu0 %v3542
  %3945 = vmatpush1.msra.mxu0 %v3541
  %3946 = vmatprep.subr.mxu0 %v3545
  %3947 = vmatpush1.msra.mxu0 %v3544
  %3948 = vmatprep.subr.mxu0 %v3548
  %3949 = vmatpush1.msra.mxu0 %v3547
  %3950 = vmatprep.subr.mxu0 %v3551
  %3951 = vmatpush1.msra.mxu0 %v3550
  %3952 = vmatprep.subr.mxu0 %v3554
  %3953 = vmatpush1.msra.mxu0 %v3553
  %3954 = vmatprep.subr.mxu0 %v3557
  %3955 = vmatpush1.msra.mxu0 %v3556
  %3956 = vmatprep.subr.mxu0 %v3560
  %3957 = vmatpush1.msra.mxu0 %v3559
  %3958 = vmatprep.subr.mxu0 %v3563
  %3959 = vmatpush1.msra.mxu0 %v3562
  %3960 = vmatprep.subr.mxu0 %v3566
  %3961 = vmatpush1.msra.mxu0 %v3565
  %3962 = vmatprep.subr.mxu0 %v3569
  %3963 = vmatpush1.msra.mxu0 %v3568
  %3964 = vmatprep.subr.mxu0 %v3572
  %3965 = vmatpush1.msra.mxu0 %v3571
  %3966 = vmatprep.subr.mxu0 %v3575
  %3967 = vmatpush1.msra.mxu0 %v3574
  %3968 = vmatprep.subr.mxu0 %v3578
  %3969 = vmatpush1.msra.mxu0 %v3577
  %3970 = vmatprep.subr.mxu0 0.0
  %3971 = vmatpush1.msra.mxu0 0.0
  %3972 = vmatprep.subr.mxu0 0.0
  %3973 = vmatpush1.msra.mxu0 0.0
  %3974 = vmatprep.subr.mxu0 0.0
  %3975 = vmatpush1.msra.mxu0 0.0
  %3976 = vmatprep.subr.mxu0 0.0
  %3977 = vmatpush1.msra.mxu0 0.0
  %3978 = vmatprep.subr.mxu0 0.0
  %3979 = vmatpush1.msra.mxu0 0.0
  %3980 = vmatprep.subr.mxu0 0.0
  %3981 = vmatpush1.msra.mxu0 0.0
  %3982 = vmatprep.subr.mxu0 0.0
  %3983 = vmatpush1.msra.mxu0 0.0
  %3984 = vmatprep.subr.mxu0 0.0
  %3985 = vmatpush1.msra.mxu0 0.0
  %3986 = vmatprep.subr.mxu0 0.0
  %3987 = vmatpush1.msra.mxu0 0.0
  %3988 = vmatprep.subr.mxu0 0.0
  %3989 = vmatpush1.msra.mxu0 0.0
  %3990 = vmatprep.subr.mxu0 0.0
  %3991 = vmatpush1.msra.mxu0 0.0
  %3992 = vmatprep.subr.mxu0 0.0
  %3993 = vmatpush1.msra.mxu0 0.0
  %3994 = vmatprep.subr.mxu0 0.0
  %3995 = vmatpush1.msra.mxu0 0.0
  %3996 = vmatprep.subr.mxu0 0.0
  %3997 = vmatpush1.msra.mxu0 0.0
  %3998 = vmatprep.subr.mxu0 0.0
  %3999 = vmatpush1.msra.mxu0 0.0
  %4000 = vmatprep.subr.mxu0 0.0
  %4001 = vmatpush1.msra.mxu0 0.0
  %4002 = vmatprep.mubr.f32.mxu0 0.0
  %4003 = vmatmul.mubr.f32.gmra.mrb[0].mxu0 %v3936
  %v4004 = vpop.f32.mrb[0].mxu0
  %v4005 = vadd.f32 %v3585, %v4004
  %v4006 = vpop.f32.mrb[0].mxu0
  %v4007 = vadd.f32 %v3589, %v4006
  %4008 = vdwg.mxu0
  %4009 = vmatprep.subr.mxu0 0.0
  %4010 = vmatpush1.msra.mxu0 %v3534
  %4011 = vmatprep.subr.mxu0 0.0
  %4012 = vmatpush1.msra.mxu0 %v3537
  %4013 = vmatprep.subr.mxu0 0.0
  %4014 = vmatpush1.msra.mxu0 %v3540
  %4015 = vmatprep.subr.mxu0 0.0
  %4016 = vmatpush1.msra.mxu0 %v3543
  %4017 = vmatprep.subr.mxu0 0.0
  %4018 = vmatpush1.msra.mxu0 %v3546
  %4019 = vmatprep.subr.mxu0 0.0
  %4020 = vmatpush1.msra.mxu0 %v3549
  %4021 = vmatprep.subr.mxu0 0.0
  %4022 = vmatpush1.msra.mxu0 %v3552
  %4023 = vmatprep.subr.mxu0 0.0
  %4024 = vmatpush1.msra.mxu0 %v3555
  %4025 = vmatprep.subr.mxu0 0.0
  %4026 = vmatpush1.msra.mxu0 %v3558
  %4027 = vmatprep.subr.mxu0 0.0
  %4028 = vmatpush1.msra.mxu0 %v3561
  %4029 = vmatprep.subr.mxu0 0.0
  %4030 = vmatpush1.msra.mxu0 %v3564
  %4031 = vmatprep.subr.mxu0 0.0
  %4032 = vmatpush1.msra.mxu0 %v3567
  %4033 = vmatprep.subr.mxu0 0.0
  %4034 = vmatpush1.msra.mxu0 %v3570
  %4035 = vmatprep.subr.mxu0 0.0
  %4036 = vmatpush1.msra.mxu0 %v3573
  %4037 = vmatprep.subr.mxu0 0.0
  %4038 = vmatpush1.msra.mxu0 %v3576
  %4039 = vmatprep.subr.mxu0 0.0
  %4040 = vmatpush1.msra.mxu0 %v3579
  %4041 = vmatprep.subr.mxu0 0.0
  %4042 = vmatpush1.msra.mxu0 0.0
  %4043 = vmatprep.subr.mxu0 0.0
  %4044 = vmatpush1.msra.mxu0 0.0
  %4045 = vmatprep.subr.mxu0 0.0
  %4046 = vmatpush1.msra.mxu0 0.0
  %4047 = vmatprep.subr.mxu0 0.0
  %4048 = vmatpush1.msra.mxu0 0.0
  %4049 = vmatprep.subr.mxu0 0.0
  %4050 = vmatpush1.msra.mxu0 0.0
  %4051 = vmatprep.subr.mxu0 0.0
  %4052 = vmatpush1.msra.mxu0 0.0
  %4053 = vmatprep.subr.mxu0 0.0
  %4054 = vmatpush1.msra.mxu0 0.0
  %4055 = vmatprep.subr.mxu0 0.0
  %4056 = vmatpush1.msra.mxu0 0.0
  %4057 = vmatprep.subr.mxu0 0.0
  %4058 = vmatpush1.msra.mxu0 0.0
  %4059 = vmatprep.subr.mxu0 0.0
  %4060 = vmatpush1.msra.mxu0 0.0
  %4061 = vmatprep.subr.mxu0 0.0
  %4062 = vmatpush1.msra.mxu0 0.0
  %4063 = vmatprep.subr.mxu0 0.0
  %4064 = vmatpush1.msra.mxu0 0.0
  %4065 = vmatprep.subr.mxu0 0.0
  %4066 = vmatpush1.msra.mxu0 0.0
  %4067 = vmatprep.subr.mxu0 0.0
  %4068 = vmatpush1.msra.mxu0 0.0
  %4069 = vmatprep.subr.mxu0 0.0
  %4070 = vmatpush1.msra.mxu0 0.0
  %4071 = vmatprep.subr.mxu0 0.0
  %4072 = vmatpush1.msra.mxu0 0.0
  %4073 = vmatprep.mubr.f32.mxu0 0.0
  %4074 = vmatmul.mubr.f32.gmra.mrb[0].mxu0 %v3936
  %v4075 = vpop.f32.mrb[0].mxu0
  %v4076 = vadd.f32 %v3593, %v4075
  %v4077 = vpop.f32.mrb[0].mxu0
  %4078 = vdwg.mxu0
  %v4080 = vrot.slane %v4005, 4
  %v4082 = vadd.f32 %v3433, %v4080
  %v4083 = vxor.u32 %v4082, 2147483648
  %v4084 = vmul.f32 %v4083, 1.442695
  %v4085 = vpow.pop %v4084
  %v4086 = vadd.f32 %v4085, 1.0
  %v4087 = vrcp.pop %v4086
  %v4088 = vmul.f32 1.0, %v4087
  %v4090 = vrot.slane %v4007, 4
  %v4092 = vadd.f32 %v3435, %v4090
  %v4093 = vxor.u32 %v4092, 2147483648
  %v4094 = vmul.f32 %v4093, 1.442695
  %v4095 = vpow.pop %v4094
  %v4096 = vadd.f32 %v4095, 1.0
  %v4097 = vrcp.pop %v4096
  %v4098 = vmul.f32 1.0, %v4097
  %v4100 = vrot.slane %v4076, 4
  %v4102 = vmul.f32 %v4088, %v4100
  %v4103 = vadd.f32 %v3516, %v4102
  %v4104 = vtanh.pop %v4103
  %v4105 = vsub.f32 1.0, %v4098
  %v4106 = vmul.f32 %v4105, %v4104
  %v4107 = vrot.slane %v3933, 6
  %v4109 = vmul.f32 %v4098, %v4107
  %v4110 = vadd.f32 %v4106, %v4109
  %4111 = vst [vmem:[#allocation3] sm:$0x30] %v4110
  %v4113 = vrot.slane %v4110, 4
  %4115 = vmatprep.subr.mxu0 %v3533
  %4116 = vmatpush1.msra.mxu0 %v3532
  %4117 = vmatprep.subr.mxu0 %v3536
  %4118 = vmatpush1.msra.mxu0 %v3535
  %4119 = vmatprep.subr.mxu0 %v3539
  %4120 = vmatpush1.msra.mxu0 %v3538
  %4121 = vmatprep.subr.mxu0 %v3542
  %4122 = vmatpush1.msra.mxu0 %v3541
  %4123 = vmatprep.subr.mxu0 %v3545
  %4124 = vmatpush1.msra.mxu0 %v3544
  %4125 = vmatprep.subr.mxu0 %v3548
  %4126 = vmatpush1.msra.mxu0 %v3547
  %4127 = vmatprep.subr.mxu0 %v3551
  %4128 = vmatpush1.msra.mxu0 %v3550
  %4129 = vmatprep.subr.mxu0 %v3554
  %4130 = vmatpush1.msra.mxu0 %v3553
  %4131 = vmatprep.subr.mxu0 %v3557
  %4132 = vmatpush1.msra.mxu0 %v3556
  %4133 = vmatprep.subr.mxu0 %v3560
  %4134 = vmatpush1.msra.mxu0 %v3559
  %4135 = vmatprep.subr.mxu0 %v3563
  %4136 = vmatpush1.msra.mxu0 %v3562
  %4137 = vmatprep.subr.mxu0 %v3566
  %4138 = vmatpush1.msra.mxu0 %v3565
  %4139 = vmatprep.subr.mxu0 %v3569
  %4140 = vmatpush1.msra.mxu0 %v3568
  %4141 = vmatprep.subr.mxu0 %v3572
  %4142 = vmatpush1.msra.mxu0 %v3571
  %4143 = vmatprep.subr.mxu0 %v3575
  %4144 = vmatpush1.msra.mxu0 %v3574
  %4145 = vmatprep.subr.mxu0 %v3578
  %4146 = vmatpush1.msra.mxu0 %v3577
  %4147 = vmatprep.subr.mxu0 0.0
  %4148 = vmatpush1.msra.mxu0 0.0
  %4149 = vmatprep.subr.mxu0 0.0
  %4150 = vmatpush1.msra.mxu0 0.0
  %4151 = vmatprep.subr.mxu0 0.0
  %4152 = vmatpush1.msra.mxu0 0.0
  %4153 = vmatprep.subr.mxu0 0.0
  %4154 = vmatpush1.msra.mxu0 0.0
  %4155 = vmatprep.subr.mxu0 0.0
  %4156 = vmatpush1.msra.mxu0 0.0
  %4157 = vmatprep.subr.mxu0 0.0
  %4158 = vmatpush1.msra.mxu0 0.0
  %4159 = vmatprep.subr.mxu0 0.0
  %4160 = vmatpush1.msra.mxu0 0.0
  %4161 = vmatprep.subr.mxu0 0.0
  %4162 = vmatpush1.msra.mxu0 0.0
  %4163 = vmatprep.subr.mxu0 0.0
  %4164 = vmatpush1.msra.mxu0 0.0
  %4165 = vmatprep.subr.mxu0 0.0
  %4166 = vmatpush1.msra.mxu0 0.0
  %4167 = vmatprep.subr.mxu0 0.0
  %4168 = vmatpush1.msra.mxu0 0.0
  %4169 = vmatprep.subr.mxu0 0.0
  %4170 = vmatpush1.msra.mxu0 0.0
  %4171 = vmatprep.subr.mxu0 0.0
  %4172 = vmatpush1.msra.mxu0 0.0
  %4173 = vmatprep.subr.mxu0 0.0
  %4174 = vmatpush1.msra.mxu0 0.0
  %4175 = vmatprep.subr.mxu0 0.0
  %4176 = vmatpush1.msra.mxu0 0.0
  %4177 = vmatprep.subr.mxu0 0.0
  %4178 = vmatpush1.msra.mxu0 0.0
  %4179 = vmatprep.mubr.f32.mxu0 0.0
  %4180 = vmatmul.mubr.f32.gmra.mrb[0].mxu0 %v4113
  %v4181 = vpop.f32.mrb[0].mxu0
  %v4182 = vadd.f32 %v3585, %v4181
  %v4183 = vpop.f32.mrb[0].mxu0
  %v4184 = vadd.f32 %v3589, %v4183
  %4185 = vdwg.mxu0
  %4186 = vmatprep.subr.mxu0 0.0
  %4187 = vmatpush1.msra.mxu0 %v3534
  %4188 = vmatprep.subr.mxu0 0.0
  %4189 = vmatpush1.msra.mxu0 %v3537
  %4190 = vmatprep.subr.mxu0 0.0
  %4191 = vmatpush1.msra.mxu0 %v3540
  %4192 = vmatprep.subr.mxu0 0.0
  %4193 = vmatpush1.msra.mxu0 %v3543
  %4194 = vmatprep.subr.mxu0 0.0
  %4195 = vmatpush1.msra.mxu0 %v3546
  %4196 = vmatprep.subr.mxu0 0.0
  %4197 = vmatpush1.msra.mxu0 %v3549
  %4198 = vmatprep.subr.mxu0 0.0
  %4199 = vmatpush1.msra.mxu0 %v3552
  %4200 = vmatprep.subr.mxu0 0.0
  %4201 = vmatpush1.msra.mxu0 %v3555
  %4202 = vmatprep.subr.mxu0 0.0
  %4203 = vmatpush1.msra.mxu0 %v3558
  %4204 = vmatprep.subr.mxu0 0.0
  %4205 = vmatpush1.msra.mxu0 %v3561
  %4206 = vmatprep.subr.mxu0 0.0
  %4207 = vmatpush1.msra.mxu0 %v3564
  %4208 = vmatprep.subr.mxu0 0.0
  %4209 = vmatpush1.msra.mxu0 %v3567
  %4210 = vmatprep.subr.mxu0 0.0
  %4211 = vmatpush1.msra.mxu0 %v3570
  %4212 = vmatprep.subr.mxu0 0.0
  %4213 = vmatpush1.msra.mxu0 %v3573
  %4214 = vmatprep.subr.mxu0 0.0
  %4215 = vmatpush1.msra.mxu0 %v3576
  %4216 = vmatprep.subr.mxu0 0.0
  %4217 = vmatpush1.msra.mxu0 %v3579
  %4218 = vmatprep.subr.mxu0 0.0
  %4219 = vmatpush1.msra.mxu0 0.0
  %4220 = vmatprep.subr.mxu0 0.0
  %4221 = vmatpush1.msra.mxu0 0.0
  %4222 = vmatprep.subr.mxu0 0.0
  %4223 = vmatpush1.msra.mxu0 0.0
  %4224 = vmatprep.subr.mxu0 0.0
  %4225 = vmatpush1.msra.mxu0 0.0
  %4226 = vmatprep.subr.mxu0 0.0
  %4227 = vmatpush1.msra.mxu0 0.0
  %4228 = vmatprep.subr.mxu0 0.0
  %4229 = vmatpush1.msra.mxu0 0.0
  %4230 = vmatprep.subr.mxu0 0.0
  %4231 = vmatpush1.msra.mxu0 0.0
  %4232 = vmatprep.subr.mxu0 0.0
  %4233 = vmatpush1.msra.mxu0 0.0
  %4234 = vmatprep.subr.mxu0 0.0
  %4235 = vmatpush1.msra.mxu0 0.0
  %4236 = vmatprep.subr.mxu0 0.0
  %4237 = vmatpush1.msra.mxu0 0.0
  %4238 = vmatprep.subr.mxu0 0.0
  %4239 = vmatpush1.msra.mxu0 0.0
  %4240 = vmatprep.subr.mxu0 0.0
  %4241 = vmatpush1.msra.mxu0 0.0
  %4242 = vmatprep.subr.mxu0 0.0
  %4243 = vmatpush1.msra.mxu0 0.0
  %4244 = vmatprep.subr.mxu0 0.0
  %4245 = vmatpush1.msra.mxu0 0.0
  %4246 = vmatprep.subr.mxu0 0.0
  %4247 = vmatpush1.msra.mxu0 0.0
  %4248 = vmatprep.subr.mxu0 0.0
  %4249 = vmatpush1.msra.mxu0 0.0
  %4250 = vmatprep.mubr.f32.mxu0 0.0
  %4251 = vmatmul.mubr.f32.gmra.mrb[0].mxu0 %v4113
  %v4252 = vpop.f32.mrb[0].mxu0
  %v4253 = vadd.f32 %v3593, %v4252
  %v4254 = vpop.f32.mrb[0].mxu0
  %4255 = vdwg.mxu0
  %v4257 = vrot.slane %v4182, 2
  %v4259 = vadd.f32 %v3433, %v4257
  %v4260 = vxor.u32 %v4259, 2147483648
  %v4261 = vmul.f32 %v4260, 1.442695
  %v4262 = vpow.pop %v4261
  %v4263 = vadd.f32 %v4262, 1.0
  %v4264 = vrcp.pop %v4263
  %v4265 = vmul.f32 1.0, %v4264
  %v4267 = vrot.slane %v4184, 2
  %v4269 = vadd.f32 %v3435, %v4267
  %v4270 = vxor.u32 %v4269, 2147483648
  %v4271 = vmul.f32 %v4270, 1.442695
  %v4272 = vpow.pop %v4271
  %v4273 = vadd.f32 %v4272, 1.0
  %v4274 = vrcp.pop %v4273
  %v4275 = vmul.f32 1.0, %v4274
  %v4277 = vrot.slane %v4253, 2
  %v4279 = vmul.f32 %v4265, %v4277
  %v4280 = vadd.f32 %v3516, %v4279
  %v4281 = vtanh.pop %v4280
  %v4282 = vsub.f32 1.0, %v4275
  %v4283 = vmul.f32 %v4282, %v4281
  %v4284 = vrot.slane %v4110, 6
  %v4286 = vmul.f32 %v4275, %v4284
  %v4287 = vadd.f32 %v4283, %v4286
  %4288 = vst [vmem:[#allocation3] sm:$0xc0] %v4287
  %v4290 = vrot.slane %v4287, 6
  %4292 = vmatprep.subr.mxu0 %v3533
  %4293 = vmatpush1.msra.mxu0 %v3532
  %4294 = vmatprep.subr.mxu0 %v3536
  %4295 = vmatpush1.msra.mxu0 %v3535
  %4296 = vmatprep.subr.mxu0 %v3539
  %4297 = vmatpush1.msra.mxu0 %v3538
  %4298 = vmatprep.subr.mxu0 %v3542
  %4299 = vmatpush1.msra.mxu0 %v3541
  %4300 = vmatprep.subr.mxu0 %v3545
  %4301 = vmatpush1.msra.mxu0 %v3544
  %4302 = vmatprep.subr.mxu0 %v3548
  %4303 = vmatpush1.msra.mxu0 %v3547
  %4304 = vmatprep.subr.mxu0 %v3551
  %4305 = vmatpush1.msra.mxu0 %v3550
  %4306 = vmatprep.subr.mxu0 %v3554
  %4307 = vmatpush1.msra.mxu0 %v3553
  %4308 = vmatprep.subr.mxu0 %v3557
  %4309 = vmatpush1.msra.mxu0 %v3556
  %4310 = vmatprep.subr.mxu0 %v3560
  %4311 = vmatpush1.msra.mxu0 %v3559
  %4312 = vmatprep.subr.mxu0 %v3563
  %4313 = vmatpush1.msra.mxu0 %v3562
  %4314 = vmatprep.subr.mxu0 %v3566
  %4315 = vmatpush1.msra.mxu0 %v3565
  %4316 = vmatprep.subr.mxu0 %v3569
  %4317 = vmatpush1.msra.mxu0 %v3568
  %4318 = vmatprep.subr.mxu0 %v3572
  %4319 = vmatpush1.msra.mxu0 %v3571
  %4320 = vmatprep.subr.mxu0 %v3575
  %4321 = vmatpush1.msra.mxu0 %v3574
  %4322 = vmatprep.subr.mxu0 %v3578
  %4323 = vmatpush1.msra.mxu0 %v3577
  %4324 = vmatprep.subr.mxu0 0.0
  %4325 = vmatpush1.msra.mxu0 0.0
  %4326 = vmatprep.subr.mxu0 0.0
  %4327 = vmatpush1.msra.mxu0 0.0
  %4328 = vmatprep.subr.mxu0 0.0
  %4329 = vmatpush1.msra.mxu0 0.0
  %4330 = vmatprep.subr.mxu0 0.0
  %4331 = vmatpush1.msra.mxu0 0.0
  %4332 = vmatprep.subr.mxu0 0.0
  %4333 = vmatpush1.msra.mxu0 0.0
  %4334 = vmatprep.subr.mxu0 0.0
  %4335 = vmatpush1.msra.mxu0 0.0
  %4336 = vmatprep.subr.mxu0 0.0
  %4337 = vmatpush1.msra.mxu0 0.0
  %4338 = vmatprep.subr.mxu0 0.0
  %4339 = vmatpush1.msra.mxu0 0.0
  %4340 = vmatprep.subr.mxu0 0.0
  %4341 = vmatpush1.msra.mxu0 0.0
  %4342 = vmatprep.subr.mxu0 0.0
  %4343 = vmatpush1.msra.mxu0 0.0
  %4344 = vmatprep.subr.mxu0 0.0
  %4345 = vmatpush1.msra.mxu0 0.0
  %4346 = vmatprep.subr.mxu0 0.0
  %4347 = vmatpush1.msra.mxu0 0.0
  %4348 = vmatprep.subr.mxu0 0.0
  %4349 = vmatpush1.msra.mxu0 0.0
  %4350 = vmatprep.subr.mxu0 0.0
  %4351 = vmatpush1.msra.mxu0 0.0
  %4352 = vmatprep.subr.mxu0 0.0
  %4353 = vmatpush1.msra.mxu0 0.0
  %4354 = vmatprep.subr.mxu0 0.0
  %4355 = vmatpush1.msra.mxu0 0.0
  %4356 = vmatprep.mubr.f32.mxu0 0.0
  %4357 = vmatmul.mubr.f32.gmra.mrb[0].mxu0 %v4290
  %v4358 = vpop.f32.mrb[0].mxu0
  %v4359 = vadd.f32 %v3585, %v4358
  %v4360 = vpop.f32.mrb[0].mxu0
  %v4361 = vadd.f32 %v3589, %v4360
  %4362 = vdwg.mxu0
  %4363 = vmatprep.subr.mxu0 0.0
  %4364 = vmatpush1.msra.mxu0 %v3534
  %4365 = vmatprep.subr.mxu0 0.0
  %4366 = vmatpush1.msra.mxu0 %v3537
  %4367 = vmatprep.subr.mxu0 0.0
  %4368 = vmatpush1.msra.mxu0 %v3540
  %4369 = vmatprep.subr.mxu0 0.0
  %4370 = vmatpush1.msra.mxu0 %v3543
  %4371 = vmatprep.subr.mxu0 0.0
  %4372 = vmatpush1.msra.mxu0 %v3546
  %4373 = vmatprep.subr.mxu0 0.0
  %4374 = vmatpush1.msra.mxu0 %v3549
  %4375 = vmatprep.subr.mxu0 0.0
  %4376 = vmatpush1.msra.mxu0 %v3552
  %4377 = vmatprep.subr.mxu0 0.0
  %4378 = vmatpush1.msra.mxu0 %v3555
  %4379 = vmatprep.subr.mxu0 0.0
  %4380 = vmatpush1.msra.mxu0 %v3558
  %4381 = vmatprep.subr.mxu0 0.0
  %4382 = vmatpush1.msra.mxu0 %v3561
  %4383 = vmatprep.subr.mxu0 0.0
  %4384 = vmatpush1.msra.mxu0 %v3564
  %4385 = vmatprep.subr.mxu0 0.0
  %4386 = vmatpush1.msra.mxu0 %v3567
  %4387 = vmatprep.subr.mxu0 0.0
  %4388 = vmatpush1.msra.mxu0 %v3570
  %4389 = vmatprep.subr.mxu0 0.0
  %4390 = vmatpush1.msra.mxu0 %v3573
  %4391 = vmatprep.subr.mxu0 0.0
  %4392 = vmatpush1.msra.mxu0 %v3576
  %4393 = vmatprep.subr.mxu0 0.0
  %4394 = vmatpush1.msra.mxu0 %v3579
  %4395 = vmatprep.subr.mxu0 0.0
  %4396 = vmatpush1.msra.mxu0 0.0
  %4397 = vmatprep.subr.mxu0 0.0
  %4398 = vmatpush1.msra.mxu0 0.0
  %4399 = vmatprep.subr.mxu0 0.0
  %4400 = vmatpush1.msra.mxu0 0.0
  %4401 = vmatprep.subr.mxu0 0.0
  %4402 = vmatpush1.msra.mxu0 0.0
  %4403 = vmatprep.subr.mxu0 0.0
  %4404 = vmatpush1.msra.mxu0 0.0
  %4405 = vmatprep.subr.mxu0 0.0
  %4406 = vmatpush1.msra.mxu0 0.0
  %4407 = vmatprep.subr.mxu0 0.0
  %4408 = vmatpush1.msra.mxu0 0.0
  %4409 = vmatprep.subr.mxu0 0.0
  %4410 = vmatpush1.msra.mxu0 0.0
  %4411 = vmatprep.subr.mxu0 0.0
  %4412 = vmatpush1.msra.mxu0 0.0
  %4413 = vmatprep.subr.mxu0 0.0
  %4414 = vmatpush1.msra.mxu0 0.0
  %4415 = vmatprep.subr.mxu0 0.0
  %4416 = vmatpush1.msra.mxu0 0.0
  %4417 = vmatprep.subr.mxu0 0.0
  %4418 = vmatpush1.msra.mxu0 0.0
  %4419 = vmatprep.subr.mxu0 0.0
  %4420 = vmatpush1.msra.mxu0 0.0
  %4421 = vmatprep.subr.mxu0 0.0
  %4422 = vmatpush1.msra.mxu0 0.0
  %4423 = vmatprep.subr.mxu0 0.0
  %4424 = vmatpush1.msra.mxu0 0.0
  %4425 = vmatprep.subr.mxu0 0.0
  %4426 = vmatpush1.msra.mxu0 0.0
  %4427 = vmatprep.mubr.f32.mxu0 0.0
  %4428 = vmatmul.mubr.f32.gmra.mrb[0].mxu0 %v4290
  %v4429 = vpop.f32.mrb[0].mxu0
  %v4430 = vadd.f32 %v3593, %v4429
  %v4431 = vpop.f32.mrb[0].mxu0
  %4432 = vdwg.mxu0
  %v4433 = vadd.f32 %v3439, %v4359
  %v4434 = vxor.u32 %v4433, 2147483648
  %v4435 = vmul.f32 %v4434, 1.442695
  %v4436 = vpow.pop %v4435
  %v4437 = vadd.f32 %v4436, 1.0
  %v4438 = vrcp.pop %v4437
  %v4439 = vmul.f32 1.0, %v4438
  %v4440 = vadd.f32 %v3441, %v4361
  %v4441 = vxor.u32 %v4440, 2147483648
  %v4442 = vmul.f32 %v4441, 1.442695
  %v4443 = vpow.pop %v4442
  %v4444 = vadd.f32 %v4443, 1.0
  %v4445 = vrcp.pop %v4444
  %v4446 = vmul.f32 1.0, %v4445
  %v4447 = vmul.f32 %v4439, %v4430
  %v4448 = vadd.f32 %v3521, %v4447
  %v4449 = vtanh.pop %v4448
  %v4450 = vsub.f32 1.0, %v4446
  %v4451 = vmul.f32 %v4450, %v4449
  %v4452 = vmul.f32 %v4446, %v4290
  %v4453 = vadd.f32 %v4451, %v4452
  %4454 = vst [vmem:[#allocation3 + $0x8] sm:$0x3] %v4453
  %4455 = vmatprep.subr.mxu0 %v3533
  %4456 = vmatpush1.msra.mxu0 %v3532
  %4457 = vmatprep.subr.mxu0 %v3536
  %4458 = vmatpush1.msra.mxu0 %v3535
  %4459 = vmatprep.subr.mxu0 %v3539
  %4460 = vmatpush1.msra.mxu0 %v3538
  %4461 = vmatprep.subr.mxu0 %v3542
  %4462 = vmatpush1.msra.mxu0 %v3541
  %4463 = vmatprep.subr.mxu0 %v3545
  %4464 = vmatpush1.msra.mxu0 %v3544
  %4465 = vmatprep.subr.mxu0 %v3548
  %4466 = vmatpush1.msra.mxu0 %v3547
  %4467 = vmatprep.subr.mxu0 %v3551
  %4468 = vmatpush1.msra.mxu0 %v3550
  %4469 = vmatprep.subr.mxu0 %v3554
  %4470 = vmatpush1.msra.mxu0 %v3553
  %4471 = vmatprep.subr.mxu0 %v3557
  %4472 = vmatpush1.msra.mxu0 %v3556
  %4473 = vmatprep.subr.mxu0 %v3560
  %4474 = vmatpush1.msra.mxu0 %v3559
  %4475 = vmatprep.subr.mxu0 %v3563
  %4476 = vmatpush1.msra.mxu0 %v3562
  %4477 = vmatprep.subr.mxu0 %v3566
  %4478 = vmatpush1.msra.mxu0 %v3565
  %4479 = vmatprep.subr.mxu0 %v3569
  %4480 = vmatpush1.msra.mxu0 %v3568
  %4481 = vmatprep.subr.mxu0 %v3572
  %4482 = vmatpush1.msra.mxu0 %v3571
  %4483 = vmatprep.subr.mxu0 %v3575
  %4484 = vmatpush1.msra.mxu0 %v3574
  %4485 = vmatprep.subr.mxu0 %v3578
  %4486 = vmatpush1.msra.mxu0 %v3577
  %4487 = vmatprep.subr.mxu0 0.0
  %4488 = vmatpush1.msra.mxu0 0.0
  %4489 = vmatprep.subr.mxu0 0.0
  %4490 = vmatpush1.msra.mxu0 0.0
  %4491 = vmatprep.subr.mxu0 0.0
  %4492 = vmatpush1.msra.mxu0 0.0
  %4493 = vmatprep.subr.mxu0 0.0
  %4494 = vmatpush1.msra.mxu0 0.0
  %4495 = vmatprep.subr.mxu0 0.0
  %4496 = vmatpush1.msra.mxu0 0.0
  %4497 = vmatprep.subr.mxu0 0.0
  %4498 = vmatpush1.msra.mxu0 0.0
  %4499 = vmatprep.subr.mxu0 0.0
  %4500 = vmatpush1.msra.mxu0 0.0
  %4501 = vmatprep.subr.mxu0 0.0
  %4502 = vmatpush1.msra.mxu0 0.0
  %4503 = vmatprep.subr.mxu0 0.0
  %4504 = vmatpush1.msra.mxu0 0.0
  %4505 = vmatprep.subr.mxu0 0.0
  %4506 = vmatpush1.msra.mxu0 0.0
  %4507 = vmatprep.subr.mxu0 0.0
  %4508 = vmatpush1.msra.mxu0 0.0
  %4509 = vmatprep.subr.mxu0 0.0
  %4510 = vmatpush1.msra.mxu0 0.0
  %4511 = vmatprep.subr.mxu0 0.0
  %4512 = vmatpush1.msra.mxu0 0.0
  %4513 = vmatprep.subr.mxu0 0.0
  %4514 = vmatpush1.msra.mxu0 0.0
  %4515 = vmatprep.subr.mxu0 0.0
  %4516 = vmatpush1.msra.mxu0 0.0
  %4517 = vmatprep.subr.mxu0 0.0
  %4518 = vmatpush1.msra.mxu0 0.0
  %4519 = vmatprep.mubr.f32.mxu0 0.0
  %4520 = vmatmul.mubr.f32.gmra.mrb[0].mxu0 %v4453
  %v4521 = vpop.f32.mrb[0].mxu0
  %v4522 = vadd.f32 %v3585, %v4521
  %v4523 = vpop.f32.mrb[0].mxu0
  %v4524 = vadd.f32 %v3589, %v4523
  %4525 = vdwg.mxu0
  %4526 = vmatprep.subr.mxu0 0.0
  %4527 = vmatpush1.msra.mxu0 %v3534
  %4528 = vmatprep.subr.mxu0 0.0
  %4529 = vmatpush1.msra.mxu0 %v3537
  %4530 = vmatprep.subr.mxu0 0.0
  %4531 = vmatpush1.msra.mxu0 %v3540
  %4532 = vmatprep.subr.mxu0 0.0
  %4533 = vmatpush1.msra.mxu0 %v3543
  %4534 = vmatprep.subr.mxu0 0.0
  %4535 = vmatpush1.msra.mxu0 %v3546
  %4536 = vmatprep.subr.mxu0 0.0
  %4537 = vmatpush1.msra.mxu0 %v3549
  %4538 = vmatprep.subr.mxu0 0.0
  %4539 = vmatpush1.msra.mxu0 %v3552
  %4540 = vmatprep.subr.mxu0 0.0
  %4541 = vmatpush1.msra.mxu0 %v3555
  %4542 = vmatprep.subr.mxu0 0.0
  %4543 = vmatpush1.msra.mxu0 %v3558
  %4544 = vmatprep.subr.mxu0 0.0
  %4545 = vmatpush1.msra.mxu0 %v3561
  %4546 = vmatprep.subr.mxu0 0.0
  %4547 = vmatpush1.msra.mxu0 %v3564
  %4548 = vmatprep.subr.mxu0 0.0
  %4549 = vmatpush1.msra.mxu0 %v3567
  %4550 = vmatprep.subr.mxu0 0.0
  %4551 = vmatpush1.msra.mxu0 %v3570
  %4552 = vmatprep.subr.mxu0 0.0
  %4553 = vmatpush1.msra.mxu0 %v3573
  %4554 = vmatprep.subr.mxu0 0.0
  %4555 = vmatpush1.msra.mxu0 %v3576
  %4556 = vmatprep.subr.mxu0 0.0
  %4557 = vmatpush1.msra.mxu0 %v3579
  %4558 = vmatprep.subr.mxu0 0.0
  %4559 = vmatpush1.msra.mxu0 0.0
  %4560 = vmatprep.subr.mxu0 0.0
  %4561 = vmatpush1.msra.mxu0 0.0
  %4562 = vmatprep.subr.mxu0 0.0
  %4563 = vmatpush1.msra.mxu0 0.0
  %4564 = vmatprep.subr.mxu0 0.0
  %4565 = vmatpush1.msra.mxu0 0.0
  %4566 = vmatprep.subr.mxu0 0.0
  %4567 = vmatpush1.msra.mxu0 0.0
  %4568 = vmatprep.subr.mxu0 0.0
  %4569 = vmatpush1.msra.mxu0 0.0
  %4570 = vmatprep.subr.mxu0 0.0
  %4571 = vmatpush1.msra.mxu0 0.0
  %4572 = vmatprep.subr.mxu0 0.0
  %4573 = vmatpush1.msra.mxu0 0.0
  %4574 = vmatprep.subr.mxu0 0.0
  %4575 = vmatpush1.msra.mxu0 0.0
  %4576 = vmatprep.subr.mxu0 0.0
  %4577 = vmatpush1.msra.mxu0 0.0
  %4578 = vmatprep.subr.mxu0 0.0
  %4579 = vmatpush1.msra.mxu0 0.0
  %4580 = vmatprep.subr.mxu0 0.0
  %4581 = vmatpush1.msra.mxu0 0.0
  %4582 = vmatprep.subr.mxu0 0.0
  %4583 = vmatpush1.msra.mxu0 0.0
  %4584 = vmatprep.subr.mxu0 0.0
  %4585 = vmatpush1.msra.mxu0 0.0
  %4586 = vmatprep.subr.mxu0 0.0
  %4587 = vmatpush1.msra.mxu0 0.0
  %4588 = vmatprep.subr.mxu0 0.0
  %4589 = vmatpush1.msra.mxu0 0.0
  %4590 = vmatprep.mubr.f32.mxu0 0.0
  %4591 = vmatmul.mubr.f32.gmra.mrb[0].mxu0 %v4453
  %v4592 = vpop.f32.mrb[0].mxu0
  %v4593 = vadd.f32 %v3593, %v4592
  %v4594 = vpop.f32.mrb[0].mxu0
  %4595 = vdwg.mxu0
  %v4597 = vrot.slane %v4522, 6
  %v4599 = vadd.f32 %v3439, %v4597
  %v4600 = vxor.u32 %v4599, 2147483648
  %v4601 = vmul.f32 %v4600, 1.442695
  %v4602 = vpow.pop %v4601
  %v4603 = vadd.f32 %v4602, 1.0
  %v4604 = vrcp.pop %v4603
  %v4605 = vmul.f32 1.0, %v4604
  %v4607 = vrot.slane %v4524, 6
  %v4609 = vadd.f32 %v3441, %v4607
  %v4610 = vxor.u32 %v4609, 2147483648
  %v4611 = vmul.f32 %v4610, 1.442695
  %v4612 = vpow.pop %v4611
  %v4613 = vadd.f32 %v4612, 1.0
  %v4614 = vrcp.pop %v4613
  %v4615 = vmul.f32 1.0, %v4614
  %v4617 = vrot.slane %v4593, 6
  %v4619 = vmul.f32 %v4605, %v4617
  %v4620 = vadd.f32 %v3521, %v4619
  %v4621 = vtanh.pop %v4620
  %v4622 = vsub.f32 1.0, %v4615
  %v4623 = vmul.f32 %v4622, %v4621
  %v4625 = vrot.slane %v4453, 6
  %v4627 = vmul.f32 %v4615, %v4625
  %v4628 = vadd.f32 %v4623, %v4627
  %4629 = vst [vmem:[#allocation3 + $0x8] sm:$0xc] %v4628
  %v4631 = vrot.slane %v4628, 2
  %4633 = vmatprep.subr.mxu0 %v3533
  %4634 = vmatpush1.msra.mxu0 %v3532
  %4635 = vmatprep.subr.mxu0 %v3536
  %4636 = vmatpush1.msra.mxu0 %v3535
  %4637 = vmatprep.subr.mxu0 %v3539
  %4638 = vmatpush1.msra.mxu0 %v3538
  %4639 = vmatprep.subr.mxu0 %v3542
  %4640 = vmatpush1.msra.mxu0 %v3541
  %4641 = vmatprep.subr.mxu0 %v3545
  %4642 = vmatpush1.msra.mxu0 %v3544
  %4643 = vmatprep.subr.mxu0 %v3548
  %4644 = vmatpush1.msra.mxu0 %v3547
  %4645 = vmatprep.subr.mxu0 %v3551
  %4646 = vmatpush1.msra.mxu0 %v3550
  %4647 = vmatprep.subr.mxu0 %v3554
  %4648 = vmatpush1.msra.mxu0 %v3553
  %4649 = vmatprep.subr.mxu0 %v3557
  %4650 = vmatpush1.msra.mxu0 %v3556
  %4651 = vmatprep.subr.mxu0 %v3560
  %4652 = vmatpush1.msra.mxu0 %v3559
  %4653 = vmatprep.subr.mxu0 %v3563
  %4654 = vmatpush1.msra.mxu0 %v3562
  %4655 = vmatprep.subr.mxu0 %v3566
  %4656 = vmatpush1.msra.mxu0 %v3565
  %4657 = vmatprep.subr.mxu0 %v3569
  %4658 = vmatpush1.msra.mxu0 %v3568
  %4659 = vmatprep.subr.mxu0 %v3572
  %4660 = vmatpush1.msra.mxu0 %v3571
  %4661 = vmatprep.subr.mxu0 %v3575
  %4662 = vmatpush1.msra.mxu0 %v3574
  %4663 = vmatprep.subr.mxu0 %v3578
  %4664 = vmatpush1.msra.mxu0 %v3577
  %4665 = vmatprep.subr.mxu0 0.0
  %4666 = vmatpush1.msra.mxu0 0.0
  %4667 = vmatprep.subr.mxu0 0.0
  %4668 = vmatpush1.msra.mxu0 0.0
  %4669 = vmatprep.subr.mxu0 0.0
  %4670 = vmatpush1.msra.mxu0 0.0
  %4671 = vmatprep.subr.mxu0 0.0
  %4672 = vmatpush1.msra.mxu0 0.0
  %4673 = vmatprep.subr.mxu0 0.0
  %4674 = vmatpush1.msra.mxu0 0.0
  %4675 = vmatprep.subr.mxu0 0.0
  %4676 = vmatpush1.msra.mxu0 0.0
  %4677 = vmatprep.subr.mxu0 0.0
  %4678 = vmatpush1.msra.mxu0 0.0
  %4679 = vmatprep.subr.mxu0 0.0
  %4680 = vmatpush1.msra.mxu0 0.0
  %4681 = vmatprep.subr.mxu0 0.0
  %4682 = vmatpush1.msra.mxu0 0.0
  %4683 = vmatprep.subr.mxu0 0.0
  %4684 = vmatpush1.msra.mxu0 0.0
  %4685 = vmatprep.subr.mxu0 0.0
  %4686 = vmatpush1.msra.mxu0 0.0
  %4687 = vmatprep.subr.mxu0 0.0
  %4688 = vmatpush1.msra.mxu0 0.0
  %4689 = vmatprep.subr.mxu0 0.0
  %4690 = vmatpush1.msra.mxu0 0.0
  %4691 = vmatprep.subr.mxu0 0.0
  %4692 = vmatpush1.msra.mxu0 0.0
  %4693 = vmatprep.subr.mxu0 0.0
  %4694 = vmatpush1.msra.mxu0 0.0
  %4695 = vmatprep.subr.mxu0 0.0
  %4696 = vmatpush1.msra.mxu0 0.0
  %4697 = vmatprep.mubr.f32.mxu0 0.0
  %4698 = vmatmul.mubr.f32.gmra.mrb[0].mxu0 %v4631
  %v4699 = vpop.f32.mrb[0].mxu0
  %v4700 = vadd.f32 %v3585, %v4699
  %v4701 = vpop.f32.mrb[0].mxu0
  %v4702 = vadd.f32 %v3589, %v4701
  %4703 = vdwg.mxu0
  %4704 = vmatprep.subr.mxu0 0.0
  %4705 = vmatpush1.msra.mxu0 %v3534
  %4706 = vmatprep.subr.mxu0 0.0
  %4707 = vmatpush1.msra.mxu0 %v3537
  %4708 = vmatprep.subr.mxu0 0.0
  %4709 = vmatpush1.msra.mxu0 %v3540
  %4710 = vmatprep.subr.mxu0 0.0
  %4711 = vmatpush1.msra.mxu0 %v3543
  %4712 = vmatprep.subr.mxu0 0.0
  %4713 = vmatpush1.msra.mxu0 %v3546
  %4714 = vmatprep.subr.mxu0 0.0
  %4715 = vmatpush1.msra.mxu0 %v3549
  %4716 = vmatprep.subr.mxu0 0.0
  %4717 = vmatpush1.msra.mxu0 %v3552
  %4718 = vmatprep.subr.mxu0 0.0
  %4719 = vmatpush1.msra.mxu0 %v3555
  %4720 = vmatprep.subr.mxu0 0.0
  %4721 = vmatpush1.msra.mxu0 %v3558
  %4722 = vmatprep.subr.mxu0 0.0
  %4723 = vmatpush1.msra.mxu0 %v3561
  %4724 = vmatprep.subr.mxu0 0.0
  %4725 = vmatpush1.msra.mxu0 %v3564
  %4726 = vmatprep.subr.mxu0 0.0
  %4727 = vmatpush1.msra.mxu0 %v3567
  %4728 = vmatprep.subr.mxu0 0.0
  %4729 = vmatpush1.msra.mxu0 %v3570
  %4730 = vmatprep.subr.mxu0 0.0
  %4731 = vmatpush1.msra.mxu0 %v3573
  %4732 = vmatprep.subr.mxu0 0.0
  %4733 = vmatpush1.msra.mxu0 %v3576
  %4734 = vmatprep.subr.mxu0 0.0
  %4735 = vmatpush1.msra.mxu0 %v3579
  %4736 = vmatprep.subr.mxu0 0.0
  %4737 = vmatpush1.msra.mxu0 0.0
  %4738 = vmatprep.subr.mxu0 0.0
  %4739 = vmatpush1.msra.mxu0 0.0
  %4740 = vmatprep.subr.mxu0 0.0
  %4741 = vmatpush1.msra.mxu0 0.0
  %4742 = vmatprep.subr.mxu0 0.0
  %4743 = vmatpush1.msra.mxu0 0.0
  %4744 = vmatprep.subr.mxu0 0.0
  %4745 = vmatpush1.msra.mxu0 0.0
  %4746 = vmatprep.subr.mxu0 0.0
  %4747 = vmatpush1.msra.mxu0 0.0
  %4748 = vmatprep.subr.mxu0 0.0
  %4749 = vmatpush1.msra.mxu0 0.0
  %4750 = vmatprep.subr.mxu0 0.0
  %4751 = vmatpush1.msra.mxu0 0.0
  %4752 = vmatprep.subr.mxu0 0.0
  %4753 = vmatpush1.msra.mxu0 0.0
  %4754 = vmatprep.subr.mxu0 0.0
  %4755 = vmatpush1.msra.mxu0 0.0
  %4756 = vmatprep.subr.mxu0 0.0
  %4757 = vmatpush1.msra.mxu0 0.0
  %4758 = vmatprep.subr.mxu0 0.0
  %4759 = vmatpush1.msra.mxu0 0.0
  %4760 = vmatprep.subr.mxu0 0.0
  %4761 = vmatpush1.msra.mxu0 0.0
  %4762 = vmatprep.subr.mxu0 0.0
  %4763 = vmatpush1.msra.mxu0 0.0
  %4764 = vmatprep.subr.mxu0 0.0
  %4765 = vmatpush1.msra.mxu0 0.0
  %4766 = vmatprep.subr.mxu0 0.0
  %4767 = vmatpush1.msra.mxu0 0.0
  %4768 = vmatprep.mubr.f32.mxu0 0.0
  %4769 = vmatmul.mubr.f32.gmra.mrb[0].mxu0 %v4631
  %v4770 = vpop.f32.mrb[0].mxu0
  %v4771 = vadd.f32 %v3593, %v4770
  %v4772 = vpop.f32.mrb[0].mxu0
  %4773 = vdwg.mxu0
  %v4775 = vrot.slane %v4700, 4
  %v4777 = vadd.f32 %v3439, %v4775
  %v4778 = vxor.u32 %v4777, 2147483648
  %v4779 = vmul.f32 %v4778, 1.442695
  %v4780 = vpow.pop %v4779
  %v4781 = vadd.f32 %v4780, 1.0
  %v4782 = vrcp.pop %v4781
  %v4783 = vmul.f32 1.0, %v4782
  %v4785 = vrot.slane %v4702, 4
  %v4787 = vadd.f32 %v3441, %v4785
  %v4788 = vxor.u32 %v4787, 2147483648
  %v4789 = vmul.f32 %v4788, 1.442695
  %v4790 = vpow.pop %v4789
  %v4791 = vadd.f32 %v4790, 1.0
  %v4792 = vrcp.pop %v4791
  %v4793 = vmul.f32 1.0, %v4792
  %v4795 = vrot.slane %v4771, 4
  %v4797 = vmul.f32 %v4783, %v4795
  %v4798 = vadd.f32 %v3521, %v4797
  %v4799 = vtanh.pop %v4798
  %v4800 = vsub.f32 1.0, %v4793
  %v4801 = vmul.f32 %v4800, %v4799
  %v4802 = vrot.slane %v4628, 6
  %v4804 = vmul.f32 %v4793, %v4802
  %v4805 = vadd.f32 %v4801, %v4804
  %4806 = vst [vmem:[#allocation3 + $0x8] sm:$0x30] %v4805
  %v4808 = vrot.slane %v4805, 4
  %4810 = vmatprep.subr.mxu0 %v3533
  %4811 = vmatpush1.msra.mxu0 %v3532
  %4812 = vmatprep.subr.mxu0 %v3536
  %4813 = vmatpush1.msra.mxu0 %v3535
  %4814 = vmatprep.subr.mxu0 %v3539
  %4815 = vmatpush1.msra.mxu0 %v3538
  %4816 = vmatprep.subr.mxu0 %v3542
  %4817 = vmatpush1.msra.mxu0 %v3541
  %4818 = vmatprep.subr.mxu0 %v3545
  %4819 = vmatpush1.msra.mxu0 %v3544
  %4820 = vmatprep.subr.mxu0 %v3548
  %4821 = vmatpush1.msra.mxu0 %v3547
  %4822 = vmatprep.subr.mxu0 %v3551
  %4823 = vmatpush1.msra.mxu0 %v3550
  %4824 = vmatprep.subr.mxu0 %v3554
  %4825 = vmatpush1.msra.mxu0 %v3553
  %4826 = vmatprep.subr.mxu0 %v3557
  %4827 = vmatpush1.msra.mxu0 %v3556
  %4828 = vmatprep.subr.mxu0 %v3560
  %4829 = vmatpush1.msra.mxu0 %v3559
  %4830 = vmatprep.subr.mxu0 %v3563
  %4831 = vmatpush1.msra.mxu0 %v3562
  %4832 = vmatprep.subr.mxu0 %v3566
  %4833 = vmatpush1.msra.mxu0 %v3565
  %4834 = vmatprep.subr.mxu0 %v3569
  %4835 = vmatpush1.msra.mxu0 %v3568
  %4836 = vmatprep.subr.mxu0 %v3572
  %4837 = vmatpush1.msra.mxu0 %v3571
  %4838 = vmatprep.subr.mxu0 %v3575
  %4839 = vmatpush1.msra.mxu0 %v3574
  %4840 = vmatprep.subr.mxu0 %v3578
  %4841 = vmatpush1.msra.mxu0 %v3577
  %4842 = vmatprep.subr.mxu0 0.0
  %4843 = vmatpush1.msra.mxu0 0.0
  %4844 = vmatprep.subr.mxu0 0.0
  %4845 = vmatpush1.msra.mxu0 0.0
  %4846 = vmatprep.subr.mxu0 0.0
  %4847 = vmatpush1.msra.mxu0 0.0
  %4848 = vmatprep.subr.mxu0 0.0
  %4849 = vmatpush1.msra.mxu0 0.0
  %4850 = vmatprep.subr.mxu0 0.0
  %4851 = vmatpush1.msra.mxu0 0.0
  %4852 = vmatprep.subr.mxu0 0.0
  %4853 = vmatpush1.msra.mxu0 0.0
  %4854 = vmatprep.subr.mxu0 0.0
  %4855 = vmatpush1.msra.mxu0 0.0
  %4856 = vmatprep.subr.mxu0 0.0
  %4857 = vmatpush1.msra.mxu0 0.0
  %4858 = vmatprep.subr.mxu0 0.0
  %4859 = vmatpush1.msra.mxu0 0.0
  %4860 = vmatprep.subr.mxu0 0.0
  %4861 = vmatpush1.msra.mxu0 0.0
  %4862 = vmatprep.subr.mxu0 0.0
  %4863 = vmatpush1.msra.mxu0 0.0
  %4864 = vmatprep.subr.mxu0 0.0
  %4865 = vmatpush1.msra.mxu0 0.0
  %4866 = vmatprep.subr.mxu0 0.0
  %4867 = vmatpush1.msra.mxu0 0.0
  %4868 = vmatprep.subr.mxu0 0.0
  %4869 = vmatpush1.msra.mxu0 0.0
  %4870 = vmatprep.subr.mxu0 0.0
  %4871 = vmatpush1.msra.mxu0 0.0
  %4872 = vmatprep.subr.mxu0 0.0
  %4873 = vmatpush1.msra.mxu0 0.0
  %4874 = vmatprep.mubr.f32.mxu0 0.0
  %4875 = vmatmul.mubr.f32.gmra.mrb[0].mxu0 %v4808
  %v4876 = vpop.f32.mrb[0].mxu0
  %v4877 = vadd.f32 %v3585, %v4876
  %v4878 = vpop.f32.mrb[0].mxu0
  %v4879 = vadd.f32 %v3589, %v4878
  %4880 = vdwg.mxu0
  %4881 = vmatprep.subr.mxu0 0.0
  %4882 = vmatpush1.msra.mxu0 %v3534
  %4883 = vmatprep.subr.mxu0 0.0
  %4884 = vmatpush1.msra.mxu0 %v3537
  %4885 = vmatprep.subr.mxu0 0.0
  %4886 = vmatpush1.msra.mxu0 %v3540
  %4887 = vmatprep.subr.mxu0 0.0
  %4888 = vmatpush1.msra.mxu0 %v3543
  %4889 = vmatprep.subr.mxu0 0.0
  %4890 = vmatpush1.msra.mxu0 %v3546
  %4891 = vmatprep.subr.mxu0 0.0
  %4892 = vmatpush1.msra.mxu0 %v3549
  %4893 = vmatprep.subr.mxu0 0.0
  %4894 = vmatpush1.msra.mxu0 %v3552
  %4895 = vmatprep.subr.mxu0 0.0
  %4896 = vmatpush1.msra.mxu0 %v3555
  %4897 = vmatprep.subr.mxu0 0.0
  %4898 = vmatpush1.msra.mxu0 %v3558
  %4899 = vmatprep.subr.mxu0 0.0
  %4900 = vmatpush1.msra.mxu0 %v3561
  %4901 = vmatprep.subr.mxu0 0.0
  %4902 = vmatpush1.msra.mxu0 %v3564
  %4903 = vmatprep.subr.mxu0 0.0
  %4904 = vmatpush1.msra.mxu0 %v3567
  %4905 = vmatprep.subr.mxu0 0.0
  %4906 = vmatpush1.msra.mxu0 %v3570
  %4907 = vmatprep.subr.mxu0 0.0
  %4908 = vmatpush1.msra.mxu0 %v3573
  %4909 = vmatprep.subr.mxu0 0.0
  %4910 = vmatpush1.msra.mxu0 %v3576
  %4911 = vmatprep.subr.mxu0 0.0
  %4912 = vmatpush1.msra.mxu0 %v3579
  %4913 = vmatprep.subr.mxu0 0.0
  %4914 = vmatpush1.msra.mxu0 0.0
  %4915 = vmatprep.subr.mxu0 0.0
  %4916 = vmatpush1.msra.mxu0 0.0
  %4917 = vmatprep.subr.mxu0 0.0
  %4918 = vmatpush1.msra.mxu0 0.0
  %4919 = vmatprep.subr.mxu0 0.0
  %4920 = vmatpush1.msra.mxu0 0.0
  %4921 = vmatprep.subr.mxu0 0.0
  %4922 = vmatpush1.msra.mxu0 0.0
  %4923 = vmatprep.subr.mxu0 0.0
  %4924 = vmatpush1.msra.mxu0 0.0
  %4925 = vmatprep.subr.mxu0 0.0
  %4926 = vmatpush1.msra.mxu0 0.0
  %4927 = vmatprep.subr.mxu0 0.0
  %4928 = vmatpush1.msra.mxu0 0.0
  %4929 = vmatprep.subr.mxu0 0.0
  %4930 = vmatpush1.msra.mxu0 0.0
  %4931 = vmatprep.subr.mxu0 0.0
  %4932 = vmatpush1.msra.mxu0 0.0
  %4933 = vmatprep.subr.mxu0 0.0
  %4934 = vmatpush1.msra.mxu0 0.0
  %4935 = vmatprep.subr.mxu0 0.0
  %4936 = vmatpush1.msra.mxu0 0.0
  %4937 = vmatprep.subr.mxu0 0.0
  %4938 = vmatpush1.msra.mxu0 0.0
  %4939 = vmatprep.subr.mxu0 0.0
  %4940 = vmatpush1.msra.mxu0 0.0
  %4941 = vmatprep.subr.mxu0 0.0
  %4942 = vmatpush1.msra.mxu0 0.0
  %4943 = vmatprep.subr.mxu0 0.0
  %4944 = vmatpush1.msra.mxu0 0.0
  %4945 = vmatprep.mubr.f32.mxu0 0.0
  %4946 = vmatmul.mubr.f32.gmra.mrb[0].mxu0 %v4808
  %v4947 = vpop.f32.mrb[0].mxu0
  %v4948 = vadd.f32 %v3593, %v4947
  %v4949 = vpop.f32.mrb[0].mxu0
  %4950 = vdwg.mxu0
  %v4952 = vrot.slane %v4877, 2
  %v4954 = vadd.f32 %v3439, %v4952
  %v4955 = vxor.u32 %v4954, 2147483648
  %v4956 = vmul.f32 %v4955, 1.442695
  %v4957 = vpow.pop %v4956
  %v4958 = vadd.f32 %v4957, 1.0
  %v4959 = vrcp.pop %v4958
  %v4960 = vmul.f32 1.0, %v4959
  %v4962 = vrot.slane %v4879, 2
  %v4964 = vadd.f32 %v3441, %v4962
  %v4965 = vxor.u32 %v4964, 2147483648
  %v4966 = vmul.f32 %v4965, 1.442695
  %v4967 = vpow.pop %v4966
  %v4968 = vadd.f32 %v4967, 1.0
  %v4969 = vrcp.pop %v4968
  %v4970 = vmul.f32 1.0, %v4969
  %v4972 = vrot.slane %v4948, 2
  %v4974 = vmul.f32 %v4960, %v4972
  %v4975 = vadd.f32 %v3521, %v4974
  %v4976 = vtanh.pop %v4975
  %v4977 = vsub.f32 1.0, %v4970
  %v4978 = vmul.f32 %v4977, %v4976
  %v4979 = vrot.slane %v4805, 6
  %v4981 = vmul.f32 %v4970, %v4979
  %v4982 = vadd.f32 %v4978, %v4981
  %4983 = vst [vmem:[#allocation3 + $0x8] sm:$0xc0] %v4982
  %v4985 = vrot.slane %v4982, 6
  %4987 = vmatprep.subr.mxu0 %v3533
  %4988 = vmatpush1.msra.mxu0 %v3532
  %4989 = vmatprep.subr.mxu0 %v3536
  %4990 = vmatpush1.msra.mxu0 %v3535
  %4991 = vmatprep.subr.mxu0 %v3539
  %4992 = vmatpush1.msra.mxu0 %v3538
  %4993 = vmatprep.subr.mxu0 %v3542
  %4994 = vmatpush1.msra.mxu0 %v3541
  %4995 = vmatprep.subr.mxu0 %v3545
  %4996 = vmatpush1.msra.mxu0 %v3544
  %4997 = vmatprep.subr.mxu0 %v3548
  %4998 = vmatpush1.msra.mxu0 %v3547
  %4999 = vmatprep.subr.mxu0 %v3551
  %5000 = vmatpush1.msra.mxu0 %v3550
  %5001 = vmatprep.subr.mxu0 %v3554
  %5002 = vmatpush1.msra.mxu0 %v3553
  %5003 = vmatprep.subr.mxu0 %v3557
  %5004 = vmatpush1.msra.mxu0 %v3556
  %5005 = vmatprep.subr.mxu0 %v3560
  %5006 = vmatpush1.msra.mxu0 %v3559
  %5007 = vmatprep.subr.mxu0 %v3563
  %5008 = vmatpush1.msra.mxu0 %v3562
  %5009 = vmatprep.subr.mxu0 %v3566
  %5010 = vmatpush1.msra.mxu0 %v3565
  %5011 = vmatprep.subr.mxu0 %v3569
  %5012 = vmatpush1.msra.mxu0 %v3568
  %5013 = vmatprep.subr.mxu0 %v3572
  %5014 = vmatpush1.msra.mxu0 %v3571
  %5015 = vmatprep.subr.mxu0 %v3575
  %5016 = vmatpush1.msra.mxu0 %v3574
  %5017 = vmatprep.subr.mxu0 %v3578
  %5018 = vmatpush1.msra.mxu0 %v3577
  %5019 = vmatprep.subr.mxu0 0.0
  %5020 = vmatpush1.msra.mxu0 0.0
  %5021 = vmatprep.subr.mxu0 0.0
  %5022 = vmatpush1.msra.mxu0 0.0
  %5023 = vmatprep.subr.mxu0 0.0
  %5024 = vmatpush1.msra.mxu0 0.0
  %5025 = vmatprep.subr.mxu0 0.0
  %5026 = vmatpush1.msra.mxu0 0.0
  %5027 = vmatprep.subr.mxu0 0.0
  %5028 = vmatpush1.msra.mxu0 0.0
  %5029 = vmatprep.subr.mxu0 0.0
  %5030 = vmatpush1.msra.mxu0 0.0
  %5031 = vmatprep.subr.mxu0 0.0
  %5032 = vmatpush1.msra.mxu0 0.0
  %5033 = vmatprep.subr.mxu0 0.0
  %5034 = vmatpush1.msra.mxu0 0.0
  %5035 = vmatprep.subr.mxu0 0.0
  %5036 = vmatpush1.msra.mxu0 0.0
  %5037 = vmatprep.subr.mxu0 0.0
  %5038 = vmatpush1.msra.mxu0 0.0
  %5039 = vmatprep.subr.mxu0 0.0
  %5040 = vmatpush1.msra.mxu0 0.0
  %5041 = vmatprep.subr.mxu0 0.0
  %5042 = vmatpush1.msra.mxu0 0.0
  %5043 = vmatprep.subr.mxu0 0.0
  %5044 = vmatpush1.msra.mxu0 0.0
  %5045 = vmatprep.subr.mxu0 0.0
  %5046 = vmatpush1.msra.mxu0 0.0
  %5047 = vmatprep.subr.mxu0 0.0
  %5048 = vmatpush1.msra.mxu0 0.0
  %5049 = vmatprep.subr.mxu0 0.0
  %5050 = vmatpush1.msra.mxu0 0.0
  %5051 = vmatprep.mubr.f32.mxu0 0.0
  %5052 = vmatmul.mubr.f32.gmra.mrb[0].mxu0 %v4985
  %v5053 = vpop.f32.mrb[0].mxu0
  %v5054 = vadd.f32 %v3585, %v5053
  %v5055 = vpop.f32.mrb[0].mxu0
  %v5056 = vadd.f32 %v3589, %v5055
  %5057 = vdwg.mxu0
  %5058 = vmatprep.subr.mxu0 0.0
  %5059 = vmatpush1.msra.mxu0 %v3534
  %5060 = vmatprep.subr.mxu0 0.0
  %5061 = vmatpush1.msra.mxu0 %v3537
  %5062 = vmatprep.subr.mxu0 0.0
  %5063 = vmatpush1.msra.mxu0 %v3540
  %5064 = vmatprep.subr.mxu0 0.0
  %5065 = vmatpush1.msra.mxu0 %v3543
  %5066 = vmatprep.subr.mxu0 0.0
  %5067 = vmatpush1.msra.mxu0 %v3546
  %5068 = vmatprep.subr.mxu0 0.0
  %5069 = vmatpush1.msra.mxu0 %v3549
  %5070 = vmatprep.subr.mxu0 0.0
  %5071 = vmatpush1.msra.mxu0 %v3552
  %5072 = vmatprep.subr.mxu0 0.0
  %5073 = vmatpush1.msra.mxu0 %v3555
  %5074 = vmatprep.subr.mxu0 0.0
  %5075 = vmatpush1.msra.mxu0 %v3558
  %5076 = vmatprep.subr.mxu0 0.0
  %5077 = vmatpush1.msra.mxu0 %v3561
  %5078 = vmatprep.subr.mxu0 0.0
  %5079 = vmatpush1.msra.mxu0 %v3564
  %5080 = vmatprep.subr.mxu0 0.0
  %5081 = vmatpush1.msra.mxu0 %v3567
  %5082 = vmatprep.subr.mxu0 0.0
  %5083 = vmatpush1.msra.mxu0 %v3570
  %5084 = vmatprep.subr.mxu0 0.0
  %5085 = vmatpush1.msra.mxu0 %v3573
  %5086 = vmatprep.subr.mxu0 0.0
  %5087 = vmatpush1.msra.mxu0 %v3576
  %5088 = vmatprep.subr.mxu0 0.0
  %5089 = vmatpush1.msra.mxu0 %v3579
  %5090 = vmatprep.subr.mxu0 0.0
  %5091 = vmatpush1.msra.mxu0 0.0
  %5092 = vmatprep.subr.mxu0 0.0
  %5093 = vmatpush1.msra.mxu0 0.0
  %5094 = vmatprep.subr.mxu0 0.0
  %5095 = vmatpush1.msra.mxu0 0.0
  %5096 = vmatprep.subr.mxu0 0.0
  %5097 = vmatpush1.msra.mxu0 0.0
  %5098 = vmatprep.subr.mxu0 0.0
  %5099 = vmatpush1.msra.mxu0 0.0
  %5100 = vmatprep.subr.mxu0 0.0
  %5101 = vmatpush1.msra.mxu0 0.0
  %5102 = vmatprep.subr.mxu0 0.0
  %5103 = vmatpush1.msra.mxu0 0.0
  %5104 = vmatprep.subr.mxu0 0.0
  %5105 = vmatpush1.msra.mxu0 0.0
  %5106 = vmatprep.subr.mxu0 0.0
  %5107 = vmatpush1.msra.mxu0 0.0
  %5108 = vmatprep.subr.mxu0 0.0
  %5109 = vmatpush1.msra.mxu0 0.0
  %5110 = vmatprep.subr.mxu0 0.0
  %5111 = vmatpush1.msra.mxu0 0.0
  %5112 = vmatprep.subr.mxu0 0.0
  %5113 = vmatpush1.msra.mxu0 0.0
  %5114 = vmatprep.subr.mxu0 0.0
  %5115 = vmatpush1.msra.mxu0 0.0
  %5116 = vmatprep.subr.mxu0 0.0
  %5117 = vmatpush1.msra.mxu0 0.0
  %5118 = vmatprep.subr.mxu0 0.0
  %5119 = vmatpush1.msra.mxu0 0.0
  %5120 = vmatprep.subr.mxu0 0.0
  %5121 = vmatpush1.msra.mxu0 0.0
  %5122 = vmatprep.mubr.f32.mxu0 0.0
  %5123 = vmatmul.mubr.f32.gmra.mrb[0].mxu0 %v4985
  %v5124 = vpop.f32.mrb[0].mxu0
  %v5125 = vadd.f32 %v3593, %v5124
  %v5126 = vpop.f32.mrb[0].mxu0
  %5127 = vdwg.mxu0
  %v5128 = vadd.f32 %v3445, %v5054
  %v5129 = vxor.u32 %v5128, 2147483648
  %v5130 = vmul.f32 %v5129, 1.442695
  %v5131 = vpow.pop %v5130
  %v5132 = vadd.f32 %v5131, 1.0
  %v5133 = vrcp.pop %v5132
  %v5134 = vmul.f32 1.0, %v5133
  %v5135 = vadd.f32 %v3447, %v5056
  %v5136 = vxor.u32 %v5135, 2147483648
  %v5137 = vmul.f32 %v5136, 1.442695
  %v5138 = vpow.pop %v5137
  %v5139 = vadd.f32 %v5138, 1.0
  %v5140 = vrcp.pop %v5139
  %v5141 = vmul.f32 1.0, %v5140
  %v5142 = vmul.f32 %v5134, %v5125
  %v5143 = vadd.f32 %v3526, %v5142
  %v5144 = vtanh.pop %v5143
  %v5145 = vsub.f32 1.0, %v5141
  %v5146 = vmul.f32 %v5145, %v5144
  %v5147 = vmul.f32 %v5141, %v4985
  %v5148 = vadd.f32 %v5146, %v5147
  %5149 = vst [vmem:[#allocation3 + $0x10] sm:$0x3] %v5148
  %5150 = vmatprep.subr.mxu0 %v3533
  %5151 = vmatpush1.msra.mxu0 %v3532
  %5152 = vmatprep.subr.mxu0 %v3536
  %5153 = vmatpush1.msra.mxu0 %v3535
  %5154 = vmatprep.subr.mxu0 %v3539
  %5155 = vmatpush1.msra.mxu0 %v3538
  %5156 = vmatprep.subr.mxu0 %v3542
  %5157 = vmatpush1.msra.mxu0 %v3541
  %5158 = vmatprep.subr.mxu0 %v3545
  %5159 = vmatpush1.msra.mxu0 %v3544
  %5160 = vmatprep.subr.mxu0 %v3548
  %5161 = vmatpush1.msra.mxu0 %v3547
  %5162 = vmatprep.subr.mxu0 %v3551
  %5163 = vmatpush1.msra.mxu0 %v3550
  %5164 = vmatprep.subr.mxu0 %v3554
  %5165 = vmatpush1.msra.mxu0 %v3553
  %5166 = vmatprep.subr.mxu0 %v3557
  %5167 = vmatpush1.msra.mxu0 %v3556
  %5168 = vmatprep.subr.mxu0 %v3560
  %5169 = vmatpush1.msra.mxu0 %v3559
  %5170 = vmatprep.subr.mxu0 %v3563
  %5171 = vmatpush1.msra.mxu0 %v3562
  %5172 = vmatprep.subr.mxu0 %v3566
  %5173 = vmatpush1.msra.mxu0 %v3565
  %5174 = vmatprep.subr.mxu0 %v3569
  %5175 = vmatpush1.msra.mxu0 %v3568
  %5176 = vmatprep.subr.mxu0 %v3572
  %5177 = vmatpush1.msra.mxu0 %v3571
  %5178 = vmatprep.subr.mxu0 %v3575
  %5179 = vmatpush1.msra.mxu0 %v3574
  %5180 = vmatprep.subr.mxu0 %v3578
  %5181 = vmatpush1.msra.mxu0 %v3577
  %5182 = vmatprep.subr.mxu0 0.0
  %5183 = vmatpush1.msra.mxu0 0.0
  %5184 = vmatprep.subr.mxu0 0.0
  %5185 = vmatpush1.msra.mxu0 0.0
  %5186 = vmatprep.subr.mxu0 0.0
  %5187 = vmatpush1.msra.mxu0 0.0
  %5188 = vmatprep.subr.mxu0 0.0
  %5189 = vmatpush1.msra.mxu0 0.0
  %5190 = vmatprep.subr.mxu0 0.0
  %5191 = vmatpush1.msra.mxu0 0.0
  %5192 = vmatprep.subr.mxu0 0.0
  %5193 = vmatpush1.msra.mxu0 0.0
  %5194 = vmatprep.subr.mxu0 0.0
  %5195 = vmatpush1.msra.mxu0 0.0
  %5196 = vmatprep.subr.mxu0 0.0
  %5197 = vmatpush1.msra.mxu0 0.0
  %5198 = vmatprep.subr.mxu0 0.0
  %5199 = vmatpush1.msra.mxu0 0.0
  %5200 = vmatprep.subr.mxu0 0.0
  %5201 = vmatpush1.msra.mxu0 0.0
  %5202 = vmatprep.subr.mxu0 0.0
  %5203 = vmatpush1.msra.mxu0 0.0
  %5204 = vmatprep.subr.mxu0 0.0
  %5205 = vmatpush1.msra.mxu0 0.0
  %5206 = vmatprep.subr.mxu0 0.0
  %5207 = vmatpush1.msra.mxu0 0.0
  %5208 = vmatprep.subr.mxu0 0.0
  %5209 = vmatpush1.msra.mxu0 0.0
  %5210 = vmatprep.subr.mxu0 0.0
  %5211 = vmatpush1.msra.mxu0 0.0
  %5212 = vmatprep.subr.mxu0 0.0
  %5213 = vmatpush1.msra.mxu0 0.0
  %5214 = vmatprep.mubr.f32.mxu0 0.0
  %5215 = vmatmul.mubr.f32.gmra.mrb[0].mxu0 %v5148
  %v5216 = vpop.f32.mrb[0].mxu0
  %v5217 = vadd.f32 %v3585, %v5216
  %v5218 = vpop.f32.mrb[0].mxu0
  %v5219 = vadd.f32 %v3589, %v5218
  %5220 = vdwg.mxu0
  %5221 = vmatprep.subr.mxu0 0.0
  %5222 = vmatpush1.msra.mxu0 %v3534
  %5223 = vmatprep.subr.mxu0 0.0
  %5224 = vmatpush1.msra.mxu0 %v3537
  %5225 = vmatprep.subr.mxu0 0.0
  %5226 = vmatpush1.msra.mxu0 %v3540
  %5227 = vmatprep.subr.mxu0 0.0
  %5228 = vmatpush1.msra.mxu0 %v3543
  %5229 = vmatprep.subr.mxu0 0.0
  %5230 = vmatpush1.msra.mxu0 %v3546
  %5231 = vmatprep.subr.mxu0 0.0
  %5232 = vmatpush1.msra.mxu0 %v3549
  %5233 = vmatprep.subr.mxu0 0.0
  %5234 = vmatpush1.msra.mxu0 %v3552
  %5235 = vmatprep.subr.mxu0 0.0
  %5236 = vmatpush1.msra.mxu0 %v3555
  %5237 = vmatprep.subr.mxu0 0.0
  %5238 = vmatpush1.msra.mxu0 %v3558
  %5239 = vmatprep.subr.mxu0 0.0
  %5240 = vmatpush1.msra.mxu0 %v3561
  %5241 = vmatprep.subr.mxu0 0.0
  %5242 = vmatpush1.msra.mxu0 %v3564
  %5243 = vmatprep.subr.mxu0 0.0
  %5244 = vmatpush1.msra.mxu0 %v3567
  %5245 = vmatprep.subr.mxu0 0.0
  %5246 = vmatpush1.msra.mxu0 %v3570
  %5247 = vmatprep.subr.mxu0 0.0
  %5248 = vmatpush1.msra.mxu0 %v3573
  %5249 = vmatprep.subr.mxu0 0.0
  %5250 = vmatpush1.msra.mxu0 %v3576
  %5251 = vmatprep.subr.mxu0 0.0
  %5252 = vmatpush1.msra.mxu0 %v3579
  %5253 = vmatprep.subr.mxu0 0.0
  %5254 = vmatpush1.msra.mxu0 0.0
  %5255 = vmatprep.subr.mxu0 0.0
  %5256 = vmatpush1.msra.mxu0 0.0
  %5257 = vmatprep.subr.mxu0 0.0
  %5258 = vmatpush1.msra.mxu0 0.0
  %5259 = vmatprep.subr.mxu0 0.0
  %5260 = vmatpush1.msra.mxu0 0.0
  %5261 = vmatprep.subr.mxu0 0.0
  %5262 = vmatpush1.msra.mxu0 0.0
  %5263 = vmatprep.subr.mxu0 0.0
  %5264 = vmatpush1.msra.mxu0 0.0
  %5265 = vmatprep.subr.mxu0 0.0
  %5266 = vmatpush1.msra.mxu0 0.0
  %5267 = vmatprep.subr.mxu0 0.0
  %5268 = vmatpush1.msra.mxu0 0.0
  %5269 = vmatprep.subr.mxu0 0.0
  %5270 = vmatpush1.msra.mxu0 0.0
  %5271 = vmatprep.subr.mxu0 0.0
  %5272 = vmatpush1.msra.mxu0 0.0
  %5273 = vmatprep.subr.mxu0 0.0
  %5274 = vmatpush1.msra.mxu0 0.0
  %5275 = vmatprep.subr.mxu0 0.0
  %5276 = vmatpush1.msra.mxu0 0.0
  %5277 = vmatprep.subr.mxu0 0.0
  %5278 = vmatpush1.msra.mxu0 0.0
  %5279 = vmatprep.subr.mxu0 0.0
  %5280 = vmatpush1.msra.mxu0 0.0
  %5281 = vmatprep.subr.mxu0 0.0
  %5282 = vmatpush1.msra.mxu0 0.0
  %5283 = vmatprep.subr.mxu0 0.0
  %5284 = vmatpush1.msra.mxu0 0.0
  %5285 = vmatprep.mubr.f32.mxu0 0.0
  %5286 = vmatmul.mubr.f32.gmra.mrb[0].mxu0 %v5148
  %v5287 = vpop.f32.mrb[0].mxu0
  %v5288 = vadd.f32 %v3593, %v5287
  %v5289 = vpop.f32.mrb[0].mxu0
  %5290 = vdwg.mxu0
  %v5292 = vrot.slane %v5217, 6
  %v5294 = vadd.f32 %v3445, %v5292
  %v5295 = vxor.u32 %v5294, 2147483648
  %v5296 = vmul.f32 %v5295, 1.442695
  %v5297 = vpow.pop %v5296
  %v5298 = vadd.f32 %v5297, 1.0
  %v5299 = vrcp.pop %v5298
  %v5300 = vmul.f32 1.0, %v5299
  %v5302 = vrot.slane %v5219, 6
  %v5304 = vadd.f32 %v3447, %v5302
  %v5305 = vxor.u32 %v5304, 2147483648
  %v5306 = vmul.f32 %v5305, 1.442695
  %v5307 = vpow.pop %v5306
  %v5308 = vadd.f32 %v5307, 1.0
  %v5309 = vrcp.pop %v5308
  %v5310 = vmul.f32 1.0, %v5309
  %v5312 = vrot.slane %v5288, 6
  %v5314 = vmul.f32 %v5300, %v5312
  %v5315 = vadd.f32 %v3526, %v5314
  %v5316 = vtanh.pop %v5315
  %v5317 = vsub.f32 1.0, %v5310
  %v5318 = vmul.f32 %v5317, %v5316
  %v5320 = vrot.slane %v5148, 6
  %v5322 = vmul.f32 %v5310, %v5320
  %v5323 = vadd.f32 %v5318, %v5322
  %5324 = vst [vmem:[#allocation3 + $0x10] sm:$0xc] %v5323
  %v5326 = vrot.slane %v5323, 2
  %5328 = vmatprep.subr.mxu0 %v3533
  %5329 = vmatpush1.msra.mxu0 %v3532
  %5330 = vmatprep.subr.mxu0 %v3536
  %5331 = vmatpush1.msra.mxu0 %v3535
  %5332 = vmatprep.subr.mxu0 %v3539
  %5333 = vmatpush1.msra.mxu0 %v3538
  %5334 = vmatprep.subr.mxu0 %v3542
  %5335 = vmatpush1.msra.mxu0 %v3541
  %5336 = vmatprep.subr.mxu0 %v3545
  %5337 = vmatpush1.msra.mxu0 %v3544
  %5338 = vmatprep.subr.mxu0 %v3548
  %5339 = vmatpush1.msra.mxu0 %v3547
  %5340 = vmatprep.subr.mxu0 %v3551
  %5341 = vmatpush1.msra.mxu0 %v3550
  %5342 = vmatprep.subr.mxu0 %v3554
  %5343 = vmatpush1.msra.mxu0 %v3553
  %5344 = vmatprep.subr.mxu0 %v3557
  %5345 = vmatpush1.msra.mxu0 %v3556
  %5346 = vmatprep.subr.mxu0 %v3560
  %5347 = vmatpush1.msra.mxu0 %v3559
  %5348 = vmatprep.subr.mxu0 %v3563
  %5349 = vmatpush1.msra.mxu0 %v3562
  %5350 = vmatprep.subr.mxu0 %v3566
  %5351 = vmatpush1.msra.mxu0 %v3565
  %5352 = vmatprep.subr.mxu0 %v3569
  %5353 = vmatpush1.msra.mxu0 %v3568
  %5354 = vmatprep.subr.mxu0 %v3572
  %5355 = vmatpush1.msra.mxu0 %v3571
  %5356 = vmatprep.subr.mxu0 %v3575
  %5357 = vmatpush1.msra.mxu0 %v3574
  %5358 = vmatprep.subr.mxu0 %v3578
  %5359 = vmatpush1.msra.mxu0 %v3577
  %5360 = vmatprep.subr.mxu0 0.0
  %5361 = vmatpush1.msra.mxu0 0.0
  %5362 = vmatprep.subr.mxu0 0.0
  %5363 = vmatpush1.msra.mxu0 0.0
  %5364 = vmatprep.subr.mxu0 0.0
  %5365 = vmatpush1.msra.mxu0 0.0
  %5366 = vmatprep.subr.mxu0 0.0
  %5367 = vmatpush1.msra.mxu0 0.0
  %5368 = vmatprep.subr.mxu0 0.0
  %5369 = vmatpush1.msra.mxu0 0.0
  %5370 = vmatprep.subr.mxu0 0.0
  %5371 = vmatpush1.msra.mxu0 0.0
  %5372 = vmatprep.subr.mxu0 0.0
  %5373 = vmatpush1.msra.mxu0 0.0
  %5374 = vmatprep.subr.mxu0 0.0
  %5375 = vmatpush1.msra.mxu0 0.0
  %5376 = vmatprep.subr.mxu0 0.0
  %5377 = vmatpush1.msra.mxu0 0.0
  %5378 = vmatprep.subr.mxu0 0.0
  %5379 = vmatpush1.msra.mxu0 0.0
  %5380 = vmatprep.subr.mxu0 0.0
  %5381 = vmatpush1.msra.mxu0 0.0
  %5382 = vmatprep.subr.mxu0 0.0
  %5383 = vmatpush1.msra.mxu0 0.0
  %5384 = vmatprep.subr.mxu0 0.0
  %5385 = vmatpush1.msra.mxu0 0.0
  %5386 = vmatprep.subr.mxu0 0.0
  %5387 = vmatpush1.msra.mxu0 0.0
  %5388 = vmatprep.subr.mxu0 0.0
  %5389 = vmatpush1.msra.mxu0 0.0
  %5390 = vmatprep.subr.mxu0 0.0
  %5391 = vmatpush1.msra.mxu0 0.0
  %5392 = vmatprep.mubr.f32.mxu0 0.0
  %5393 = vmatmul.mubr.f32.gmra.mrb[0].mxu0 %v5326
  %v5394 = vpop.f32.mrb[0].mxu0
  %v5395 = vadd.f32 %v3585, %v5394
  %v5396 = vpop.f32.mrb[0].mxu0
  %v5397 = vadd.f32 %v3589, %v5396
  %5398 = vdwg.mxu0
  %5399 = vmatprep.subr.mxu0 0.0
  %5400 = vmatpush1.msra.mxu0 %v3534
  %5401 = vmatprep.subr.mxu0 0.0
  %5402 = vmatpush1.msra.mxu0 %v3537
  %5403 = vmatprep.subr.mxu0 0.0
  %5404 = vmatpush1.msra.mxu0 %v3540
  %5405 = vmatprep.subr.mxu0 0.0
  %5406 = vmatpush1.msra.mxu0 %v3543
  %5407 = vmatprep.subr.mxu0 0.0
  %5408 = vmatpush1.msra.mxu0 %v3546
  %5409 = vmatprep.subr.mxu0 0.0
  %5410 = vmatpush1.msra.mxu0 %v3549
  %5411 = vmatprep.subr.mxu0 0.0
  %5412 = vmatpush1.msra.mxu0 %v3552
  %5413 = vmatprep.subr.mxu0 0.0
  %5414 = vmatpush1.msra.mxu0 %v3555
  %5415 = vmatprep.subr.mxu0 0.0
  %5416 = vmatpush1.msra.mxu0 %v3558
  %5417 = vmatprep.subr.mxu0 0.0
  %5418 = vmatpush1.msra.mxu0 %v3561
  %5419 = vmatprep.subr.mxu0 0.0
  %5420 = vmatpush1.msra.mxu0 %v3564
  %5421 = vmatprep.subr.mxu0 0.0
  %5422 = vmatpush1.msra.mxu0 %v3567
  %5423 = vmatprep.subr.mxu0 0.0
  %5424 = vmatpush1.msra.mxu0 %v3570
  %5425 = vmatprep.subr.mxu0 0.0
  %5426 = vmatpush1.msra.mxu0 %v3573
  %5427 = vmatprep.subr.mxu0 0.0
  %5428 = vmatpush1.msra.mxu0 %v3576
  %5429 = vmatprep.subr.mxu0 0.0
  %5430 = vmatpush1.msra.mxu0 %v3579
  %5431 = vmatprep.subr.mxu0 0.0
  %5432 = vmatpush1.msra.mxu0 0.0
  %5433 = vmatprep.subr.mxu0 0.0
  %5434 = vmatpush1.msra.mxu0 0.0
  %5435 = vmatprep.subr.mxu0 0.0
  %5436 = vmatpush1.msra.mxu0 0.0
  %5437 = vmatprep.subr.mxu0 0.0
  %5438 = vmatpush1.msra.mxu0 0.0
  %5439 = vmatprep.subr.mxu0 0.0
  %5440 = vmatpush1.msra.mxu0 0.0
  %5441 = vmatprep.subr.mxu0 0.0
  %5442 = vmatpush1.msra.mxu0 0.0
  %5443 = vmatprep.subr.mxu0 0.0
  %5444 = vmatpush1.msra.mxu0 0.0
  %5445 = vmatprep.subr.mxu0 0.0
  %5446 = vmatpush1.msra.mxu0 0.0
  %5447 = vmatprep.subr.mxu0 0.0
  %5448 = vmatpush1.msra.mxu0 0.0
  %5449 = vmatprep.subr.mxu0 0.0
  %5450 = vmatpush1.msra.mxu0 0.0
  %5451 = vmatprep.subr.mxu0 0.0
  %5452 = vmatpush1.msra.mxu0 0.0
  %5453 = vmatprep.subr.mxu0 0.0
  %5454 = vmatpush1.msra.mxu0 0.0
  %5455 = vmatprep.subr.mxu0 0.0
  %5456 = vmatpush1.msra.mxu0 0.0
  %5457 = vmatprep.subr.mxu0 0.0
  %5458 = vmatpush1.msra.mxu0 0.0
  %5459 = vmatprep.subr.mxu0 0.0
  %5460 = vmatpush1.msra.mxu0 0.0
  %5461 = vmatprep.subr.mxu0 0.0
  %5462 = vmatpush1.msra.mxu0 0.0
  %5463 = vmatprep.mubr.f32.mxu0 0.0
  %5464 = vmatmul.mubr.f32.gmra.mrb[0].mxu0 %v5326
  %v5465 = vpop.f32.mrb[0].mxu0
  %v5466 = vadd.f32 %v3593, %v5465
  %v5467 = vpop.f32.mrb[0].mxu0
  %5468 = vdwg.mxu0
  %v5470 = vrot.slane %v5395, 4
  %v5472 = vadd.f32 %v3445, %v5470
  %v5473 = vxor.u32 %v5472, 2147483648
  %v5474 = vmul.f32 %v5473, 1.442695
  %v5475 = vpow.pop %v5474
  %v5476 = vadd.f32 %v5475, 1.0
  %v5477 = vrcp.pop %v5476
  %v5478 = vmul.f32 1.0, %v5477
  %v5480 = vrot.slane %v5397, 4
  %v5482 = vadd.f32 %v3447, %v5480
  %v5483 = vxor.u32 %v5482, 2147483648
  %v5484 = vmul.f32 %v5483, 1.442695
  %v5485 = vpow.pop %v5484
  %v5486 = vadd.f32 %v5485, 1.0
  %v5487 = vrcp.pop %v5486
  %v5488 = vmul.f32 1.0, %v5487
  %v5490 = vrot.slane %v5466, 4
  %v5492 = vmul.f32 %v5478, %v5490
  %v5493 = vadd.f32 %v3526, %v5492
  %v5494 = vtanh.pop %v5493
  %v5495 = vsub.f32 1.0, %v5488
  %v5496 = vmul.f32 %v5495, %v5494
  %v5497 = vrot.slane %v5323, 6
  %v5499 = vmul.f32 %v5488, %v5497
  %v5500 = vadd.f32 %v5496, %v5499
  %5501 = vst [vmem:[#allocation3 + $0x10] sm:$0x30] %v5500
  %v5502 = vld [vmem:[#allocation3] sm:$0xff]
  %v5503 = vld [vmem:[#allocation3 + $0x8] sm:$0xff]
  %v5504 = vld [vmem:[#allocation3 + $0x10] sm:$0xff]
  %v5505 = vld [vmem:[%s55] sm:$0xff]
  %v5506 = vld [vmem:[%s55 + $0x8] sm:$0xff]
  %v5507 = vld [vmem:[%s55 + $0x10] sm:$0xff]
  %v5508 = vld [vmem:[%s55 + $0x18] sm:$0xff]
  %v5509 = vld [vmem:[%s55 + $0x20] sm:$0xff]
  %v5510 = vld [vmem:[%s55 + $0x28] sm:$0xff]
  %v5511 = vld [vmem:[%s55 + $0x30] sm:$0xff]
  %v5512 = vld [vmem:[%s55 + $0x38] sm:$0xff]
  %v5513 = vld [vmem:[%s55 + $0x40] sm:$0xff]
  %v5514 = vld [vmem:[%s55 + $0x48] sm:$0xff]
  %v5515 = vld [vmem:[%s55 + $0x50] sm:$0xff]
  %v5516 = vld [vmem:[%s55 + $0x58] sm:$0xff]
  %v5517 = vld [vmem:[%s55 + $0x60] sm:$0xff]
  %v5518 = vld [vmem:[%s55 + $0x68] sm:$0xff]
  %v5519 = vld [vmem:[%s55 + $0x70] sm:$0xff]
  %v5520 = vld [vmem:[%s55 + $0x78] sm:$0xff]
  %5521 = vmatprep.subr.mxu0 0.0
  %5522 = vmatpush1.msra.mxu0 %v5505
  %5523 = vmatprep.subr.mxu0 0.0
  %5524 = vmatpush1.msra.mxu0 %v5506
  %5525 = vmatprep.subr.mxu0 0.0
  %5526 = vmatpush1.msra.mxu0 %v5507
  %5527 = vmatprep.subr.mxu0 0.0
  %5528 = vmatpush1.msra.mxu0 %v5508
  %5529 = vmatprep.subr.mxu0 0.0
  %5530 = vmatpush1.msra.mxu0 %v5509
  %5531 = vmatprep.subr.mxu0 0.0
  %5532 = vmatpush1.msra.mxu0 %v5510
  %5533 = vmatprep.subr.mxu0 0.0
  %5534 = vmatpush1.msra.mxu0 %v5511
  %5535 = vmatprep.subr.mxu0 0.0
  %5536 = vmatpush1.msra.mxu0 %v5512
  %5537 = vmatprep.subr.mxu0 0.0
  %5538 = vmatpush1.msra.mxu0 %v5513
  %5539 = vmatprep.subr.mxu0 0.0
  %5540 = vmatpush1.msra.mxu0 %v5514
  %5541 = vmatprep.subr.mxu0 0.0
  %5542 = vmatpush1.msra.mxu0 %v5515
  %5543 = vmatprep.subr.mxu0 0.0
  %5544 = vmatpush1.msra.mxu0 %v5516
  %5545 = vmatprep.subr.mxu0 0.0
  %5546 = vmatpush1.msra.mxu0 %v5517
  %5547 = vmatprep.subr.mxu0 0.0
  %5548 = vmatpush1.msra.mxu0 %v5518
  %5549 = vmatprep.subr.mxu0 0.0
  %5550 = vmatpush1.msra.mxu0 %v5519
  %5551 = vmatprep.subr.mxu0 0.0
  %5552 = vmatpush1.msra.mxu0 %v5520
  %5553 = vmatprep.subr.mxu0 0.0
  %5554 = vmatpush1.msra.mxu0 0.0
  %5555 = vmatprep.subr.mxu0 0.0
  %5556 = vmatpush1.msra.mxu0 0.0
  %5557 = vmatprep.subr.mxu0 0.0
  %5558 = vmatpush1.msra.mxu0 0.0
  %5559 = vmatprep.subr.mxu0 0.0
  %5560 = vmatpush1.msra.mxu0 0.0
  %5561 = vmatprep.subr.mxu0 0.0
  %5562 = vmatpush1.msra.mxu0 0.0
  %5563 = vmatprep.subr.mxu0 0.0
  %5564 = vmatpush1.msra.mxu0 0.0
  %5565 = vmatprep.subr.mxu0 0.0
  %5566 = vmatpush1.msra.mxu0 0.0
  %5567 = vmatprep.subr.mxu0 0.0
  %5568 = vmatpush1.msra.mxu0 0.0
  %5569 = vmatprep.subr.mxu0 0.0
  %5570 = vmatpush1.msra.mxu0 0.0
  %5571 = vmatprep.subr.mxu0 0.0
  %5572 = vmatpush1.msra.mxu0 0.0
  %5573 = vmatprep.subr.mxu0 0.0
  %5574 = vmatpush1.msra.mxu0 0.0
  %5575 = vmatprep.subr.mxu0 0.0
  %5576 = vmatpush1.msra.mxu0 0.0
  %5577 = vmatprep.subr.mxu0 0.0
  %5578 = vmatpush1.msra.mxu0 0.0
  %5579 = vmatprep.subr.mxu0 0.0
  %5580 = vmatpush1.msra.mxu0 0.0
  %5581 = vmatprep.subr.mxu0 0.0
  %5582 = vmatpush1.msra.mxu0 0.0
  %5583 = vmatprep.subr.mxu0 0.0
  %5584 = vmatpush1.msra.mxu0 0.0
  %5585 = vmatprep.mubr.f32.mxu0 0.0
  %5586 = vmatmul.mubr.f32.gmra.mrb[0].mxu0 %v5502
  %v5587 = vpop.f32.mrb[0].mxu0
  %v5588 = vadd.f32 0.0, %v5587
  %v5589 = vpop.f32.mrb[0].mxu0
  %5590 = vmatprep.mubr.f32.mxu0 0.0
  %5591 = vmatmul.mubr.f32.gmra.mrb[0].mxu0 %v5503
  %v5592 = vpop.f32.mrb[0].mxu0
  %v5593 = vadd.f32 0.0, %v5592
  %v5594 = vpop.f32.mrb[0].mxu0
  %5595 = vmatprep.mubr.f32.mxu0 0.0
  %5596 = vmatmul.mubr.f32.gmra.mrb[0].mxu0 %v5504
  %v5597 = vpop.f32.mrb[0].mxu0
  %v5598 = vadd.f32 0.0, %v5597
  %v5599 = vpop.f32.mrb[0].mxu0
  %5600 = vdwg.mxu0
  %5601 = vst [vmem:[%s59] sm:$0xff] %v5588
  %5602 = vst [vmem:[%s59 + $0x8] sm:$0xff] %v5593
  %5603 = vst [vmem:[%s59 + $0x10] sm:$0xff] %v5598
  // Predicated region
  $region114: #{compnet_forward.3} parent=0 // pred_check
    _
  $region115: #{compnet_forward.3} parent=0 // pred_check_branch
    %5605 = sbr.rel (0) target = $region117
  $region116: #{compnet_forward.3} parent=0 // pred_region
    _
  $region117: #{compnet_forward.3} parent=0 // pred_fallthru
    _
  // Predicated region
  $region118: #{compnet_forward.3} parent=0 // pred_check
    _
  $region119: #{compnet_forward.3} parent=0 // pred_check_branch
    %5607 = sbr.rel (0) target = $region121
  $region120: #{compnet_forward.3} parent=0 // pred_region
    _
  $region121: #{compnet_forward.3} parent=0 // pred_fallthru
    _
  // Predicated region
  $region122: #{compnet_forward.3} parent=0 // pred_check
    _
  $region123: #{compnet_forward.3} parent=0 // pred_check_branch
    %5609 = sbr.rel (0) target = $region125
  $region124: #{compnet_forward.3} parent=0 // pred_region
    _
  $region125: #{compnet_forward.3} parent=0 // pred_fallthru
    _
  // Predicated region
  $region126: #{compnet_forward.3} parent=0 // pred_check
    _
  $region127: #{compnet_forward.3} parent=0 // pred_check_branch
    %5611 = sbr.rel (0) target = $region129
  $region128: #{compnet_forward.3} parent=0 // pred_region
    _
  $region129: #{compnet_forward.3} parent=0 // pred_fallthru
    _

</llo_original>
